<compile_context>
chip_gen: v6e
topology: v6e:2x2x1
jax: 0.10.0
libtpu: 0.0.40
codegen_flags: <defaults>
</compile_context>

<pallas_src>
import functools

import jax
import jax.numpy as jnp
from jax.experimental import pallas as pl
from jax.experimental.pallas import tpu as pltpu


# ----------------------------------------------------------------------------
# helpers
# ----------------------------------------------------------------------------
def _round_up(x, m):
    return ((x + m - 1) // m) * m


def _apply_act(x, act):
    if act == "relu":
        return jnp.maximum(x, 0.0)
    if act == "sigmoid":
        return jax.nn.sigmoid(x)
    return x


# ----------------------------------------------------------------------------
# Pallas kernels
# ----------------------------------------------------------------------------
def _matmul_bias_act_kernel(x_ref, w_ref, b_ref, o_ref, *, act):
    # (TM, K) bf16 @ (K, Np) bf16 -> f32 acc -> +bias -> activation -> store.
    acc = jnp.dot(x_ref[...], w_ref[...], preferred_element_type=jnp.float32)
    acc = acc + b_ref[...]
    acc = _apply_act(acc, act)
    o_ref[...] = acc.astype(o_ref.dtype)


def _latent_kernel(h_ref, w_ref, b_ref, eps_ref, mu_ref, lv_ref, z_ref, *, half):
    # Fused fc_mu ‖ fc_log_var (one matmul, lane-packed) + reparameterization.
    acc = jnp.dot(h_ref[...], w_ref[...], preferred_element_type=jnp.float32)
    acc = acc + b_ref[...]
    mu = acc[:, :half]
    lv = acc[:, half:]
    mu_ref[...] = mu
    lv_ref[...] = lv
    z_ref[...] = mu + eps_ref[...] * jnp.exp(0.5 * lv)


def _decoder_head_kernel(z_ref, w1_ref, b1_ref, w2_ref, b2_ref, o_ref):
    # Fused decoder_input (Linear, no act) -> decoder Linear -> ReLU.
    h = jnp.dot(z_ref[...], w1_ref[...], preferred_element_type=jnp.float32)
    h = h + b1_ref[...]
    h = h.astype(jnp.bfloat16)
    o = jnp.dot(h, w2_ref[...], preferred_element_type=jnp.float32)
    o = o + b2_ref[...]
    o_ref[...] = jnp.maximum(o, 0.0)


# ----------------------------------------------------------------------------
# dense: tiled matmul + bias + activation
# ----------------------------------------------------------------------------
def dense(x, w, b, act="none", tm=256):
    """x: (M, K), w: (K, N), b: (N,) -> (M, N) f32 (bf16 inputs, f32 accum)."""
    M, K = x.shape
    N = w.shape[1]
    Np = _round_up(N, 128)            # lane-dense output stores
    Mp = _round_up(M, 16)             # bf16 sublane packing
    tm = min(tm, Mp)
    Mp = _round_up(Mp, tm)

    xp = jnp.pad(x.astype(jnp.bfloat16), ((0, Mp - M), (0, 0)))
    wp = jnp.pad(w.astype(jnp.bfloat16), ((0, 0), (0, Np - N)))
    bp = jnp.pad(b.astype(jnp.float32), (0, Np - N)).reshape(1, Np)

    out = pl.pallas_call(
        functools.partial(_matmul_bias_act_kernel, act=act),
        out_shape=jax.ShapeDtypeStruct((Mp, Np), jnp.float32),
        grid=(Mp // tm,),
        in_specs=[
            pl.BlockSpec((tm, K), lambda i: (i, 0)),
            pl.BlockSpec((K, Np), lambda i: (0, 0)),
            pl.BlockSpec((1, Np), lambda i: (0, 0)),
        ],
        out_specs=pl.BlockSpec((tm, Np), lambda i: (i, 0)),
        compiler_params=pltpu.CompilerParams(
            dimension_semantics=("parallel",)),
    )(xp, wp, bp)
    return out[:M, :N]


# ----------------------------------------------------------------------------
# fused encoder tail: mu / log_var / reparameterize in one kernel
# ----------------------------------------------------------------------------
def latent_head(h, w_mu, b_mu, w_lv, b_lv, eps, latent):
    B, K = h.shape
    Lp = _round_up(latent, 128)
    Mp = _round_up(B, 16)

    w_cat = jnp.zeros((K, 2 * Lp), jnp.bfloat16)
    w_cat = w_cat.at[:, :latent].set(w_mu.astype(jnp.bfloat16))
    w_cat = w_cat.at[:, Lp:Lp + latent].set(w_lv.astype(jnp.bfloat16))
    b_cat = jnp.zeros((1, 2 * Lp), jnp.float32)
    b_cat = b_cat.at[0, :latent].set(b_mu.astype(jnp.float32))
    b_cat = b_cat.at[0, Lp:Lp + latent].set(b_lv.astype(jnp.float32))

    hp = jnp.pad(h.astype(jnp.bfloat16), ((0, Mp - B), (0, 0)))
    eps_p = jnp.pad(eps.astype(jnp.float32), ((0, Mp - B), (0, Lp - latent)))

    mu_p, lv_p, z_p = pl.pallas_call(
        functools.partial(_latent_kernel, half=Lp),
        out_shape=(jax.ShapeDtypeStruct((Mp, Lp), jnp.float32),
                   jax.ShapeDtypeStruct((Mp, Lp), jnp.float32),
                   jax.ShapeDtypeStruct((Mp, Lp), jnp.float32)),
        grid=(1,),
        in_specs=[
            pl.BlockSpec((Mp, K), lambda i: (0, 0)),
            pl.BlockSpec((K, 2 * Lp), lambda i: (0, 0)),
            pl.BlockSpec((1, 2 * Lp), lambda i: (0, 0)),
            pl.BlockSpec((Mp, Lp), lambda i: (0, 0)),
        ],
        out_specs=[pl.BlockSpec((Mp, Lp), lambda i: (0, 0))] * 3,
        compiler_params=pltpu.CompilerParams(
            dimension_semantics=("arbitrary",)),
    )(hp, w_cat, b_cat, eps_p)
    return (mu_p[:B, :latent], lv_p[:B, :latent], z_p[:B, :latent])


# ----------------------------------------------------------------------------
# fused decoder head: decoder_input -> Linear(256, 2048) + ReLU
# ----------------------------------------------------------------------------
def decoder_head(z, w1, b1, w2, b2):
    B, K1 = z.shape
    N1 = w1.shape[1]
    N2 = w2.shape[1]
    Mp = _round_up(B, 16)
    zp = jnp.pad(z.astype(jnp.bfloat16), ((0, Mp - B), (0, 0)))

    out = pl.pallas_call(
        _decoder_head_kernel,
        out_shape=jax.ShapeDtypeStruct((Mp, N2), jnp.float32),
        grid=(1,),
        in_specs=[
            pl.BlockSpec((Mp, K1), lambda i: (0, 0)),
            pl.BlockSpec((K1, N1), lambda i: (0, 0)),
            pl.BlockSpec((1, N1), lambda i: (0, 0)),
            pl.BlockSpec((N1, N2), lambda i: (0, 0)),
            pl.BlockSpec((1, N2), lambda i: (0, 0)),
        ],
        out_specs=pl.BlockSpec((Mp, N2), lambda i: (0, 0)),
        compiler_params=pltpu.CompilerParams(
            dimension_semantics=("arbitrary",)),
    )(zp, w1.astype(jnp.bfloat16), b1.astype(jnp.float32).reshape(1, N1),
      w2.astype(jnp.bfloat16), b2.astype(jnp.float32).reshape(1, N2))
    return out[:B]


# ----------------------------------------------------------------------------
# Conv / transposed-conv lowering (NHWC, im2col glue in JAX, matmul in Pallas)
# ----------------------------------------------------------------------------
# TODO(synk): fold the k*k patch gather into the Pallas kernel (strided VMEM
# reads per tap) instead of materializing the im2col columns with XLA slices.
def _im2col_nhwc(x, k, stride, pad):
    B, H, W, C = x.shape
    xp = jnp.pad(x, ((0, 0), (pad, pad), (pad, pad), (0, 0)))
    Ho = (H + 2 * pad - k) // stride + 1
    Wo = (W + 2 * pad - k) // stride + 1
    patches = []
    for di in range(k):
        for dj in range(k):
            patches.append(xp[:, di:di + stride * (Ho - 1) + 1:stride,
                               dj:dj + stride * (Wo - 1) + 1:stride, :])
    cols = jnp.stack(patches, axis=3)                  # (B, Ho, Wo, k*k, C)
    cols = cols.reshape(B * Ho * Wo, k * k * C)        # K index = (di*k+dj)*C + c
    return cols, Ho, Wo


def conv2d(x, w, b, stride, pad, act):
    """x: (B, H, W, Cin) NHWC, w: (Cout, Cin, k, k) [PyTorch], b: (Cout,)."""
    out_c, in_c, k, _ = w.shape
    B = x.shape[0]
    cols, Ho, Wo = _im2col_nhwc(x, k, stride, pad)
    w_mat = jnp.transpose(w, (2, 3, 1, 0)).reshape(k * k * in_c, out_c)
    y = dense(cols, w_mat, b, act=act)                 # (B*Ho*Wo, Cout)
    return y.reshape(B, Ho, Wo, out_c)


def _build_deconv_weight(w_pt):
    """(Cin, Cout, 4, 4) ConvTranspose weight -> (9*Cin, 4*Cout) sub-pixel
    weight for a 3x3/stride-1 conv that emits all 4 output parities at once."""
    Cin, Cout, k, _ = w_pt.shape  # k == 4, stride 2, pad 1
    zero = jnp.zeros((Cin, Cout), w_pt.dtype)
    # (output parity, patch offset r in 0..2 where input offset = r-1) -> ki
    ki_map = {(0, 0): 3, (0, 1): 1, (1, 1): 2, (1, 2): 0}
    rows = []
    for r in range(3):
        cols_s = []
        for s in range(3):
            blocks_a = []
            for a in range(2):
                blocks_b = []
                for bb in range(2):
                    ki = ki_map.get((a, r))
                    kj = ki_map.get((bb, s))
                    if ki is None or kj is None:
                        blocks_b.append(zero)
                    else:
                        blocks_b.append(w_pt[:, :, ki, kj])
                blocks_a.append(jnp.stack(blocks_b, axis=1))   # (Cin, 2, Cout)
            cols_s.append(jnp.stack(blocks_a, axis=1))          # (Cin, 2, 2, Cout)
        rows.append(jnp.stack(cols_s, axis=0))                  # (3, Cin, 2, 2, Cout)
    Wb = jnp.stack(rows, axis=0)                                # (3, 3, Cin, 2, 2, Cout)
    return Wb.reshape(9 * Cin, 4 * Cout)


def conv_transpose2d(x, w_pt, b, act):
    """ConvTranspose2d(k=4, stride=2, pad=1) on NHWC input, via sub-pixel
    decomposition (no zero-dilated input)."""
    B, H, W, Cin = x.shape
    Cout = w_pt.shape[1]
    cols, _, _ = _im2col_nhwc(x, 3, stride=1, pad=1)   # (B*H*W, 9*Cin)
    Wb = _build_deconv_weight(w_pt)                    # (9*Cin, 4*Cout)
    bb = jnp.tile(b, 4)                                # each parity gets bias once
    y = dense(cols, Wb, bb, act=act)                   # (B*H*W, 4*Cout)
    y = y.reshape(B, H, W, 2, 2, Cout)
    y = y.transpose(0, 1, 3, 2, 4, 5).reshape(B, 2 * H, 2 * W, Cout)
    return y


# ----------------------------------------------------------------------------
# Parameter initialization (deterministic, synthetic)
# ----------------------------------------------------------------------------
def _init_linear(key, fin, fout):
    kw, kb = jax.random.split(key)
    bound = 1.0 / jnp.sqrt(fin)
    w = jax.random.uniform(kw, (fin, fout), jnp.float32, -bound, bound)
    b = jax.random.uniform(kb, (fout,), jnp.float32, -bound, bound)
    return w, b


def _init_conv(key, cin, cout, k):
    kw, kb = jax.random.split(key)
    bound = 1.0 / jnp.sqrt(cin * k * k)
    w = jax.random.uniform(kw, (cout, cin, k, k), jnp.float32, -bound, bound)
    b = jax.random.uniform(kb, (cout,), jnp.float32, -bound, bound)
    return w, b


def _init_deconv(key, cin, cout, k):
    kw, kb = jax.random.split(key)
    bound = 1.0 / jnp.sqrt(cin * k * k)
    w = jax.random.uniform(kw, (cin, cout, k, k), jnp.float32, -bound, bound)
    b = jax.random.uniform(kb, (cout,), jnp.float32, -bound, bound)
    return w, b


def init_params(key, latent_dims):
    ks = jax.random.split(key, 11)
    p = {}
    p["enc_c1_w"], p["enc_c1_b"] = _init_conv(ks[0], 3, 32, 4)
    p["enc_c2_w"], p["enc_c2_b"] = _init_conv(ks[1], 32, 64, 4)
    p["enc_c3_w"], p["enc_c3_b"] = _init_conv(ks[2], 64, 128, 4)
    p["enc_fc_w"], p["enc_fc_b"] = _init_linear(ks[3], 128 * 4 * 4, 256)
    p["fc_mu_w"], p["fc_mu_b"] = _init_linear(ks[4], 256, latent_dims)
    p["fc_lv_w"], p["fc_lv_b"] = _init_linear(ks[5], 256, latent_dims)
    p["dec_in_w"], p["dec_in_b"] = _init_linear(ks[6], latent_dims, 256)
    p["dec_fc_w"], p["dec_fc_b"] = _init_linear(ks[7], 256, 128 * 4 * 4)
    p["dec_d1_w"], p["dec_d1_b"] = _init_deconv(ks[8], 128, 64, 4)
    p["dec_d2_w"], p["dec_d2_b"] = _init_deconv(ks[9], 64, 32, 4)
    p["dec_d3_w"], p["dec_d3_b"] = _init_deconv(ks[10], 32, 3, 4)
    return p


# ----------------------------------------------------------------------------
# BetaVAE forward pass
# ----------------------------------------------------------------------------
def beta_vae_forward(params, x, eps):
    """x: (B, 3, 32, 32) NCHW, eps: (B, latent_dims) standard normal."""
    p = params
    B = x.shape[0]
    latent = eps.shape[1]

    xh = jnp.transpose(x, (0, 2, 3, 1))                                       # NHWC once

    # --- encoder ---
    h = conv2d(xh, p["enc_c1_w"], p["enc_c1_b"], stride=2, pad=1, act="relu")  # (B,16,16,32)
    h = conv2d(h, p["enc_c2_w"], p["enc_c2_b"], stride=2, pad=1, act="relu")   # (B,8,8,64)
    h = conv2d(h, p["enc_c3_w"], p["enc_c3_b"], stride=2, pad=1, act="relu")   # (B,4,4,128)
    h = jnp.transpose(h, (0, 3, 1, 2)).reshape(B, -1)                          # PyTorch Flatten order
    h = dense(h, p["enc_fc_w"], p["enc_fc_b"], act="relu")                     # (B,256)

    # --- fused mu / log_var / reparameterize ---
    mu, log_var, z = latent_head(h, p["fc_mu_w"], p["fc_mu_b"],
                                 p["fc_lv_w"], p["fc_lv_b"], eps, latent)

    # --- decoder ---
    d = decoder_head(z, p["dec_in_w"], p["dec_in_b"],
                     p["dec_fc_w"], p["dec_fc_b"])                             # (B,2048)
    d = d.reshape(B, 128, 4, 4).transpose(0, 2, 3, 1)                          # Unflatten -> NHWC
    d = conv_transpose2d(d, p["dec_d1_w"], p["dec_d1_b"], act="relu")          # (B,8,8,64)
    d = conv_transpose2d(d, p["dec_d2_w"], p["dec_d2_b"], act="relu")          # (B,16,16,32)
    d = conv_transpose2d(d, p["dec_d3_w"], p["dec_d3_b"], act="sigmoid")       # (B,32,32,3)
    recon = jnp.transpose(d, (0, 3, 1, 2))                                     # back to NCHW
    return recon, mu, log_var


# ----------------------------------------------------------------------------
if __name__ == "__main__":
    latent_dims = 16
    batch = 2

    key = jax.random.PRNGKey(0)
    k_params, k_x, k_eps = jax.random.split(key, 3)

    params = init_params(k_params, latent_dims)
    x = jax.random.uniform(k_x, (batch, 3, 32, 32), jnp.float32)   # NCHW, like PyTorch
    eps = jax.random.normal(k_eps, (batch, latent_dims), jnp.float32)

    fwd = jax.jit(beta_vae_forward)
    recon, mu, log_var = fwd(params, x, eps)
    jax.block_until_ready((recon, mu, log_var))

    assert recon.shape == (batch, 3, 32, 32)
    assert mu.shape == (batch, latent_dims)
    assert log_var.shape == (batch, latent_dims)
    assert bool(jnp.all(jnp.isfinite(recon)))
    assert bool(jnp.all((recon >= 0.0) & (recon <= 1.0)))

    print("KERNEL_OK")
</pallas_src>

<mosaic_0001>
module attributes {stable_mosaic.version = 11 : i64} {
  func.func @_matmul_bias_act_kernel(%arg0: i32, %arg1: memref<256x48xbf16, #tpu.memory_space<vmem>>, %arg2: memref<48x128xbf16, #tpu.memory_space<vmem>>, %arg3: memref<1x128xf32, #tpu.memory_space<vmem>>, %arg4: memref<256x128xf32, #tpu.memory_space<vmem>>) attributes {dimension_semantics = [#tpu.dimension_semantics<parallel>], iteration_bounds = array<i64: 2>, scalar_prefetch = 0 : i64, scratch_operands = 0 : i64, tpu.core_type = #tpu.core_type<tc>, window_params = [{transform_indices = @transform_0, window_bounds = array<i64: 256, 48>}, {pipeline_mode = #tpu.pipeline_mode<synchronous>, transform_indices = @transform_1, window_bounds = array<i64: 48, 128>}, {pipeline_mode = #tpu.pipeline_mode<synchronous>, transform_indices = @transform_2, window_bounds = array<i64: 1, 128>}, {transform_indices = @transform_3, window_bounds = array<i64: 256, 128>}]} {
    %c0 = arith.constant 0 : index
    %c0_0 = arith.constant 0 : index
    %0 = vector.load %arg1[%c0, %c0_0] : memref<256x48xbf16, #tpu.memory_space<vmem>>, vector<256x48xbf16>
    %c0_1 = arith.constant 0 : index
    %c0_2 = arith.constant 0 : index
    %1 = vector.load %arg2[%c0_1, %c0_2] : memref<48x128xbf16, #tpu.memory_space<vmem>>, vector<48x128xbf16>
    %cst = arith.constant dense<0.000000e+00> : vector<256x128xf32>
    %2 = tpu.matmul %0, %1, %cst {dimension_numbers = #tpu.dot_dimension_numbers<[1], [0], [0], [1], [0, 0, 1, 1], [], []>} : vector<256x48xbf16>, vector<48x128xbf16>, vector<256x128xf32> -> vector<256x128xf32>
    %c0_3 = arith.constant 0 : index
    %c0_4 = arith.constant 0 : index
    %3 = vector.load %arg3[%c0_3, %c0_4] : memref<1x128xf32, #tpu.memory_space<vmem>>, vector<1x128xf32>
    %4 = vector.broadcast %3 : vector<1x128xf32> to vector<256x128xf32>
    %5 = arith.addf %2, %4 : vector<256x128xf32>
    %cst_5 = arith.constant 0.000000e+00 : f32
    %6 = vector.broadcast %cst_5 : f32 to vector<256x128xf32>
    %7 = arith.maximumf %5, %6 : vector<256x128xf32>
    %c0_6 = arith.constant 0 : index
    %c0_7 = arith.constant 0 : index
    %8 = vector.load %arg4[%c0_6, %c0_7] : memref<256x128xf32, #tpu.memory_space<vmem>>, vector<256x128xf32>
    tpu.vector_store %arg4[%c0_6, %c0_7], %7 {strides = array<i32>} : memref<256x128xf32, #tpu.memory_space<vmem>>, vector<256x128xf32>,
    return
  }
  func.func @transform_0(%arg0: i32) -> (i32, i32) {
    %c0_i32 = arith.constant 0 : i32
    %c0_i32_0 = arith.constant 0 : i32
    return %arg0, %c0_i32 : i32, i32
  }
  func.func @transform_1(%arg0: i32) -> (i32, i32) {
    %c0_i32 = arith.constant 0 : i32
    %c0_i32_0 = arith.constant 0 : i32
    %c0_i32_1 = arith.constant 0 : i32
    return %c0_i32, %c0_i32_0 : i32, i32
  }
  func.func @transform_2(%arg0: i32) -> (i32, i32) {
    %c0_i32 = arith.constant 0 : i32
    %c0_i32_0 = arith.constant 0 : i32
    %c0_i32_1 = arith.constant 0 : i32
    return %c0_i32, %c0_i32_0 : i32, i32
  }
  func.func @transform_3(%arg0: i32) -> (i32, i32) {
    %c0_i32 = arith.constant 0 : i32
    %c0_i32_0 = arith.constant 0 : i32
    return %arg0, %c0_i32 : i32, i32
  }
}

module attributes {stable_mosaic.version = 11 : i64} {
  func.func @_matmul_bias_act_kernel(%arg0: i32, %arg1: memref<128x512xbf16, #tpu.memory_space<vmem>>, %arg2: memref<512x128xbf16, #tpu.memory_space<vmem>>, %arg3: memref<1x128xf32, #tpu.memory_space<vmem>>, %arg4: memref<128x128xf32, #tpu.memory_space<vmem>>) attributes {dimension_semantics = [#tpu.dimension_semantics<parallel>], iteration_bounds = array<i64: 1>, scalar_prefetch = 0 : i64, scratch_operands = 0 : i64, tpu.core_type = #tpu.core_type<tc>, window_params = [{transform_indices = @transform_0, window_bounds = array<i64: 128, 512>}, {pipeline_mode = #tpu.pipeline_mode<synchronous>, transform_indices = @transform_1, window_bounds = array<i64: 512, 128>}, {pipeline_mode = #tpu.pipeline_mode<synchronous>, transform_indices = @transform_2, window_bounds = array<i64: 1, 128>}, {transform_indices = @transform_3, window_bounds = array<i64: 128, 128>}]} {
    %c0 = arith.constant 0 : index
    %c0_0 = arith.constant 0 : index
    %0 = vector.load %arg1[%c0, %c0_0] : memref<128x512xbf16, #tpu.memory_space<vmem>>, vector<128x512xbf16>
    %c0_1 = arith.constant 0 : index
    %c0_2 = arith.constant 0 : index
    %1 = vector.load %arg2[%c0_1, %c0_2] : memref<512x128xbf16, #tpu.memory_space<vmem>>, vector<512x128xbf16>
    %cst = arith.constant dense<0.000000e+00> : vector<128x128xf32>
    %2 = tpu.matmul %0, %1, %cst {dimension_numbers = #tpu.dot_dimension_numbers<[1], [0], [0], [1], [0, 0, 1, 1], [], []>} : vector<128x512xbf16>, vector<512x128xbf16>, vector<128x128xf32> -> vector<128x128xf32>
    %c0_3 = arith.constant 0 : index
    %c0_4 = arith.constant 0 : index
    %3 = vector.load %arg3[%c0_3, %c0_4] : memref<1x128xf32, #tpu.memory_space<vmem>>, vector<1x128xf32>
    %4 = vector.broadcast %3 : vector<1x128xf32> to vector<128x128xf32>
    %5 = arith.addf %2, %4 : vector<128x128xf32>
    %cst_5 = arith.constant 0.000000e+00 : f32
    %6 = vector.broadcast %cst_5 : f32 to vector<128x128xf32>
    %7 = arith.maximumf %5, %6 : vector<128x128xf32>
    %c0_6 = arith.constant 0 : index
    %c0_7 = arith.constant 0 : index
    %8 = vector.load %arg4[%c0_6, %c0_7] : memref<128x128xf32, #tpu.memory_space<vmem>>, vector<128x128xf32>
    tpu.vector_store %arg4[%c0_6, %c0_7], %7 {strides = array<i32>} : memref<128x128xf32, #tpu.memory_space<vmem>>, vector<128x128xf32>,
    return
  }
  func.func @transform_0(%arg0: i32) -> (i32, i32) {
    %c0_i32 = arith.constant 0 : i32
    %c0_i32_0 = arith.constant 0 : i32
    return %arg0, %c0_i32 : i32, i32
  }
  func.func @transform_1(%arg0: i32) -> (i32, i32) {
    %c0_i32 = arith.constant 0 : i32
    %c0_i32_0 = arith.constant 0 : i32
    %c0_i32_1 = arith.constant 0 : i32
    return %c0_i32, %c0_i32_0 : i32, i32
  }
  func.func @transform_2(%arg0: i32) -> (i32, i32) {
    %c0_i32 = arith.constant 0 : i32
    %c0_i32_0 = arith.constant 0 : i32
    %c0_i32_1 = arith.constant 0 : i32
    return %c0_i32, %c0_i32_0 : i32, i32
  }
  func.func @transform_3(%arg0: i32) -> (i32, i32) {
    %c0_i32 = arith.constant 0 : i32
    %c0_i32_0 = arith.constant 0 : i32
    return %arg0, %c0_i32 : i32, i32
  }
}

module attributes {stable_mosaic.version = 11 : i64} {
  func.func @_matmul_bias_act_kernel(%arg0: i32, %arg1: memref<32x1024xbf16, #tpu.memory_space<vmem>>, %arg2: memref<1024x128xbf16, #tpu.memory_space<vmem>>, %arg3: memref<1x128xf32, #tpu.memory_space<vmem>>, %arg4: memref<32x128xf32, #tpu.memory_space<vmem>>) attributes {dimension_semantics = [#tpu.dimension_semantics<parallel>], iteration_bounds = array<i64: 1>, scalar_prefetch = 0 : i64, scratch_operands = 0 : i64, tpu.core_type = #tpu.core_type<tc>, window_params = [{transform_indices = @transform_0, window_bounds = array<i64: 32, 1024>}, {pipeline_mode = #tpu.pipeline_mode<synchronous>, transform_indices = @transform_1, window_bounds = array<i64: 1024, 128>}, {pipeline_mode = #tpu.pipeline_mode<synchronous>, transform_indices = @transform_2, window_bounds = array<i64: 1, 128>}, {transform_indices = @transform_3, window_bounds = array<i64: 32, 128>}]} {
    %c0 = arith.constant 0 : index
    %c0_0 = arith.constant 0 : index
    %0 = vector.load %arg1[%c0, %c0_0] : memref<32x1024xbf16, #tpu.memory_space<vmem>>, vector<32x1024xbf16>
    %c0_1 = arith.constant 0 : index
    %c0_2 = arith.constant 0 : index
    %1 = vector.load %arg2[%c0_1, %c0_2] : memref<1024x128xbf16, #tpu.memory_space<vmem>>, vector<1024x128xbf16>
    %cst = arith.constant dense<0.000000e+00> : vector<32x128xf32>
    %2 = tpu.matmul %0, %1, %cst {dimension_numbers = #tpu.dot_dimension_numbers<[1], [0], [0], [1], [0, 0, 1, 1], [], []>} : vector<32x1024xbf16>, vector<1024x128xbf16>, vector<32x128xf32> -> vector<32x128xf32>
    %c0_3 = arith.constant 0 : index
    %c0_4 = arith.constant 0 : index
    %3 = vector.load %arg3[%c0_3, %c0_4] : memref<1x128xf32, #tpu.memory_space<vmem>>, vector<1x128xf32>
    %4 = vector.broadcast %3 : vector<1x128xf32> to vector<32x128xf32>
    %5 = arith.addf %2, %4 : vector<32x128xf32>
    %cst_5 = arith.constant 0.000000e+00 : f32
    %6 = vector.broadcast %cst_5 : f32 to vector<32x128xf32>
    %7 = arith.maximumf %5, %6 : vector<32x128xf32>
    %c0_6 = arith.constant 0 : index
    %c0_7 = arith.constant 0 : index
    %8 = vector.load %arg4[%c0_6, %c0_7] : memref<32x128xf32, #tpu.memory_space<vmem>>, vector<32x128xf32>
    tpu.vector_store %arg4[%c0_6, %c0_7], %7 {strides = array<i32>} : memref<32x128xf32, #tpu.memory_space<vmem>>, vector<32x128xf32>,
    return
  }
  func.func @transform_0(%arg0: i32) -> (i32, i32) {
    %c0_i32 = arith.constant 0 : i32
    %c0_i32_0 = arith.constant 0 : i32
    return %arg0, %c0_i32 : i32, i32
  }
  func.func @transform_1(%arg0: i32) -> (i32, i32) {
    %c0_i32 = arith.constant 0 : i32
    %c0_i32_0 = arith.constant 0 : i32
    %c0_i32_1 = arith.constant 0 : i32
    return %c0_i32, %c0_i32_0 : i32, i32
  }
  func.func @transform_2(%arg0: i32) -> (i32, i32) {
    %c0_i32 = arith.constant 0 : i32
    %c0_i32_0 = arith.constant 0 : i32
    %c0_i32_1 = arith.constant 0 : i32
    return %c0_i32, %c0_i32_0 : i32, i32
  }
  func.func @transform_3(%arg0: i32) -> (i32, i32) {
    %c0_i32 = arith.constant 0 : i32
    %c0_i32_0 = arith.constant 0 : i32
    return %arg0, %c0_i32 : i32, i32
  }
}

module attributes {stable_mosaic.version = 11 : i64} {
  func.func @_matmul_bias_act_kernel(%arg0: i32, %arg1: memref<16x2048xbf16, #tpu.memory_space<vmem>>, %arg2: memref<2048x256xbf16, #tpu.memory_space<vmem>>, %arg3: memref<1x256xf32, #tpu.memory_space<vmem>>, %arg4: memref<16x256xf32, #tpu.memory_space<vmem>>) attributes {dimension_semantics = [#tpu.dimension_semantics<parallel>], iteration_bounds = array<i64: 1>, scalar_prefetch = 0 : i64, scratch_operands = 0 : i64, tpu.core_type = #tpu.core_type<tc>, window_params = [{transform_indices = @transform_0, window_bounds = array<i64: 16, 2048>}, {pipeline_mode = #tpu.pipeline_mode<synchronous>, transform_indices = @transform_1, window_bounds = array<i64: 2048, 256>}, {pipeline_mode = #tpu.pipeline_mode<synchronous>, transform_indices = @transform_2, window_bounds = array<i64: 1, 256>}, {transform_indices = @transform_3, window_bounds = array<i64: 16, 256>}]} {
    %c0 = arith.constant 0 : index
    %c0_0 = arith.constant 0 : index
    %0 = vector.load %arg1[%c0, %c0_0] : memref<16x2048xbf16, #tpu.memory_space<vmem>>, vector<16x2048xbf16>
    %c0_1 = arith.constant 0 : index
    %c0_2 = arith.constant 0 : index
    %1 = vector.load %arg2[%c0_1, %c0_2] : memref<2048x256xbf16, #tpu.memory_space<vmem>>, vector<2048x256xbf16>
    %cst = arith.constant dense<0.000000e+00> : vector<16x256xf32>
    %2 = tpu.matmul %0, %1, %cst {dimension_numbers = #tpu.dot_dimension_numbers<[1], [0], [0], [1], [0, 0, 1, 1], [], []>} : vector<16x2048xbf16>, vector<2048x256xbf16>, vector<16x256xf32> -> vector<16x256xf32>
    %c0_3 = arith.constant 0 : index
    %c0_4 = arith.constant 0 : index
    %3 = vector.load %arg3[%c0_3, %c0_4] : memref<1x256xf32, #tpu.memory_space<vmem>>, vector<1x256xf32>
    %4 = vector.broadcast %3 : vector<1x256xf32> to vector<16x256xf32>
    %5 = arith.addf %2, %4 : vector<16x256xf32>
    %cst_5 = arith.constant 0.000000e+00 : f32
    %6 = vector.broadcast %cst_5 : f32 to vector<16x256xf32>
    %7 = arith.maximumf %5, %6 : vector<16x256xf32>
    %c0_6 = arith.constant 0 : index
    %c0_7 = arith.constant 0 : index
    %8 = vector.load %arg4[%c0_6, %c0_7] : memref<16x256xf32, #tpu.memory_space<vmem>>, vector<16x256xf32>
    tpu.vector_store %arg4[%c0_6, %c0_7], %7 {strides = array<i32>} : memref<16x256xf32, #tpu.memory_space<vmem>>, vector<16x256xf32>,
    return
  }
  func.func @transform_0(%arg0: i32) -> (i32, i32) {
    %c0_i32 = arith.constant 0 : i32
    %c0_i32_0 = arith.constant 0 : i32
    return %arg0, %c0_i32 : i32, i32
  }
  func.func @transform_1(%arg0: i32) -> (i32, i32) {
    %c0_i32 = arith.constant 0 : i32
    %c0_i32_0 = arith.constant 0 : i32
    %c0_i32_1 = arith.constant 0 : i32
    return %c0_i32, %c0_i32_0 : i32, i32
  }
  func.func @transform_2(%arg0: i32) -> (i32, i32) {
    %c0_i32 = arith.constant 0 : i32
    %c0_i32_0 = arith.constant 0 : i32
    %c0_i32_1 = arith.constant 0 : i32
    return %c0_i32, %c0_i32_0 : i32, i32
  }
  func.func @transform_3(%arg0: i32) -> (i32, i32) {
    %c0_i32 = arith.constant 0 : i32
    %c0_i32_0 = arith.constant 0 : i32
    return %arg0, %c0_i32 : i32, i32
  }
}

module attributes {stable_mosaic.version = 11 : i64} {
  func.func @_latent_kernel(%arg0: i32, %arg1: memref<16x256xbf16, #tpu.memory_space<vmem>>, %arg2: memref<256x256xbf16, #tpu.memory_space<vmem>>, %arg3: memref<1x256xf32, #tpu.memory_space<vmem>>, %arg4: memref<16x128xf32, #tpu.memory_space<vmem>>, %arg5: memref<16x128xf32, #tpu.memory_space<vmem>>, %arg6: memref<16x128xf32, #tpu.memory_space<vmem>>, %arg7: memref<16x128xf32, #tpu.memory_space<vmem>>) attributes {dimension_semantics = [#tpu.dimension_semantics<arbitrary>], iteration_bounds = array<i64: 1>, scalar_prefetch = 0 : i64, scratch_operands = 0 : i64, tpu.core_type = #tpu.core_type<tc>, window_params = [{pipeline_mode = #tpu.pipeline_mode<synchronous>, transform_indices = @transform_0, window_bounds = array<i64: 16, 256>}, {pipeline_mode = #tpu.pipeline_mode<synchronous>, transform_indices = @transform_1, window_bounds = array<i64: 256, 256>}, {pipeline_mode = #tpu.pipeline_mode<synchronous>, transform_indices = @transform_2, window_bounds = array<i64: 1, 256>}, {pipeline_mode = #tpu.pipeline_mode<synchronous>, transform_indices = @transform_3, window_bounds = array<i64: 16, 128>}, {pipeline_mode = #tpu.pipeline_mode<synchronous>, transform_indices = @transform_4, window_bounds = array<i64: 16, 128>}, {pipeline_mode = #tpu.pipeline_mode<synchronous>, transform_indices = @transform_5, window_bounds = array<i64: 16, 128>}, {pipeline_mode = #tpu.pipeline_mode<synchronous>, transform_indices = @transform_6, window_bounds = array<i64: 16, 128>}]} {
    %c0 = arith.constant 0 : index
    %c0_0 = arith.constant 0 : index
    %0 = vector.load %arg1[%c0, %c0_0] : memref<16x256xbf16, #tpu.memory_space<vmem>>, vector<16x256xbf16>
    %c0_1 = arith.constant 0 : index
    %c0_2 = arith.constant 0 : index
    %1 = vector.load %arg2[%c0_1, %c0_2] : memref<256x256xbf16, #tpu.memory_space<vmem>>, vector<256x256xbf16>
    %cst = arith.constant dense<0.000000e+00> : vector<16x256xf32>
    %2 = tpu.matmul %0, %1, %cst {dimension_numbers = #tpu.dot_dimension_numbers<[1], [0], [0], [1], [0, 0, 1, 1], [], []>} : vector<16x256xbf16>, vector<256x256xbf16>, vector<16x256xf32> -> vector<16x256xf32>
    %c0_3 = arith.constant 0 : index
    %c0_4 = arith.constant 0 : index
    %3 = vector.load %arg3[%c0_3, %c0_4] : memref<1x256xf32, #tpu.memory_space<vmem>>, vector<1x256xf32>
    %4 = vector.broadcast %3 : vector<1x256xf32> to vector<16x256xf32>
    %5 = arith.addf %2, %4 : vector<16x256xf32>
    %6 = vector.extract_strided_slice %5 {offsets = [0, 0], sizes = [16, 128], strides = [1, 1]} : vector<16x256xf32> to vector<16x128xf32>
    %7 = vector.extract_strided_slice %5 {offsets = [0, 128], sizes = [16, 128], strides = [1, 1]} : vector<16x256xf32> to vector<16x128xf32>
    %c0_5 = arith.constant 0 : index
    %c0_6 = arith.constant 0 : index
    %8 = vector.load %arg5[%c0_5, %c0_6] : memref<16x128xf32, #tpu.memory_space<vmem>>, vector<16x128xf32>
    tpu.vector_store %arg5[%c0_5, %c0_6], %6 {strides = array<i32>} : memref<16x128xf32, #tpu.memory_space<vmem>>, vector<16x128xf32>,
    %c0_7 = arith.constant 0 : index
    %c0_8 = arith.constant 0 : index
    %9 = vector.load %arg6[%c0_7, %c0_8] : memref<16x128xf32, #tpu.memory_space<vmem>>, vector<16x128xf32>
    tpu.vector_store %arg6[%c0_7, %c0_8], %7 {strides = array<i32>} : memref<16x128xf32, #tpu.memory_space<vmem>>, vector<16x128xf32>,
    %c0_9 = arith.constant 0 : index
    %c0_10 = arith.constant 0 : index
    %10 = vector.load %arg4[%c0_9, %c0_10] : memref<16x128xf32, #tpu.memory_space<vmem>>, vector<16x128xf32>
    %cst_11 = arith.constant 5.000000e-01 : f32
    %11 = vector.broadcast %cst_11 : f32 to vector<16x128xf32>
    %12 = arith.mulf %11, %7 : vector<16x128xf32>
    %13 = math.exp %12 : vector<16x128xf32>
    %14 = arith.mulf %10, %13 : vector<16x128xf32>
    %15 = arith.addf %6, %14 : vector<16x128xf32>
    %c0_12 = arith.constant 0 : index
    %c0_13 = arith.constant 0 : index
    %16 = vector.load %arg7[%c0_12, %c0_13] : memref<16x128xf32, #tpu.memory_space<vmem>>, vector<16x128xf32>
    tpu.vector_store %arg7[%c0_12, %c0_13], %15 {strides = array<i32>} : memref<16x128xf32, #tpu.memory_space<vmem>>, vector<16x128xf32>,
    return
  }
  func.func @transform_0(%arg0: i32) -> (i32, i32) {
    %c0_i32 = arith.constant 0 : i32
    %c0_i32_0 = arith.constant 0 : i32
    %c0_i32_1 = arith.constant 0 : i32
    return %c0_i32, %c0_i32_0 : i32, i32
  }
  func.func @transform_1(%arg0: i32) -> (i32, i32) {
    %c0_i32 = arith.constant 0 : i32
    %c0_i32_0 = arith.constant 0 : i32
    %c0_i32_1 = arith.constant 0 : i32
    return %c0_i32, %c0_i32_0 : i32, i32
  }
  func.func @transform_2(%arg0: i32) -> (i32, i32) {
    %c0_i32 = arith.constant 0 : i32
    %c0_i32_0 = arith.constant 0 : i32
    %c0_i32_1 = arith.constant 0 : i32
    return %c0_i32, %c0_i32_0 : i32, i32
  }
  func.func @transform_3(%arg0: i32) -> (i32, i32) {
    %c0_i32 = arith.constant 0 : i32
    %c0_i32_0 = arith.constant 0 : i32
    %c0_i32_1 = arith.constant 0 : i32
    return %c0_i32, %c0_i32_0 : i32, i32
  }
  func.func @transform_4(%arg0: i32) -> (i32, i32) {
    %c0_i32 = arith.constant 0 : i32
    %c0_i32_0 = arith.constant 0 : i32
    %c0_i32_1 = arith.constant 0 : i32
    return %c0_i32, %c0_i32_0 : i32, i32
  }
  func.func @transform_5(%arg0: i32) -> (i32, i32) {
    %c0_i32 = arith.constant 0 : i32
    %c0_i32_0 = arith.constant 0 : i32
    %c0_i32_1 = arith.constant 0 : i32
    return %c0_i32, %c0_i32_0 : i32, i32
  }
  func.func @transform_6(%arg0: i32) -> (i32, i32) {
    %c0_i32 = arith.constant 0 : i32
    %c0_i32_0 = arith.constant 0 : i32
    %c0_i32_1 = arith.constant 0 : i32
    return %c0_i32, %c0_i32_0 : i32, i32
  }
}

module attributes {stable_mosaic.version = 11 : i64} {
  func.func @_decoder_head_kernel(%arg0: i32, %arg1: memref<16x16xbf16, #tpu.memory_space<vmem>>, %arg2: memref<16x256xbf16, #tpu.memory_space<vmem>>, %arg3: memref<1x256xf32, #tpu.memory_space<vmem>>, %arg4: memref<256x2048xbf16, #tpu.memory_space<vmem>>, %arg5: memref<1x2048xf32, #tpu.memory_space<vmem>>, %arg6: memref<16x2048xf32, #tpu.memory_space<vmem>>) attributes {dimension_semantics = [#tpu.dimension_semantics<arbitrary>], iteration_bounds = array<i64: 1>, scalar_prefetch = 0 : i64, scratch_operands = 0 : i64, tpu.core_type = #tpu.core_type<tc>, window_params = [{pipeline_mode = #tpu.pipeline_mode<synchronous>, transform_indices = @transform_0, window_bounds = array<i64: 16, 16>}, {pipeline_mode = #tpu.pipeline_mode<synchronous>, transform_indices = @transform_1, window_bounds = array<i64: 16, 256>}, {pipeline_mode = #tpu.pipeline_mode<synchronous>, transform_indices = @transform_2, window_bounds = array<i64: 1, 256>}, {pipeline_mode = #tpu.pipeline_mode<synchronous>, transform_indices = @transform_3, window_bounds = array<i64: 256, 2048>}, {pipeline_mode = #tpu.pipeline_mode<synchronous>, transform_indices = @transform_4, window_bounds = array<i64: 1, 2048>}, {pipeline_mode = #tpu.pipeline_mode<synchronous>, transform_indices = @transform_5, window_bounds = array<i64: 16, 2048>}]} {
    %c0 = arith.constant 0 : index
    %c0_0 = arith.constant 0 : index
    %0 = vector.load %arg1[%c0, %c0_0] : memref<16x16xbf16, #tpu.memory_space<vmem>>, vector<16x16xbf16>
    %c0_1 = arith.constant 0 : index
    %c0_2 = arith.constant 0 : index
    %1 = vector.load %arg2[%c0_1, %c0_2] : memref<16x256xbf16, #tpu.memory_space<vmem>>, vector<16x256xbf16>
    %cst = arith.constant dense<0.000000e+00> : vector<16x256xf32>
    %2 = tpu.matmul %0, %1, %cst {dimension_numbers = #tpu.dot_dimension_numbers<[1], [0], [0], [1], [0, 0, 1, 1], [], []>} : vector<16x16xbf16>, vector<16x256xbf16>, vector<16x256xf32> -> vector<16x256xf32>
    %c0_3 = arith.constant 0 : index
    %c0_4 = arith.constant 0 : index
    %3 = vector.load %arg3[%c0_3, %c0_4] : memref<1x256xf32, #tpu.memory_space<vmem>>, vector<1x256xf32>
    %4 = vector.broadcast %3 : vector<1x256xf32> to vector<16x256xf32>
    %5 = arith.addf %2, %4 : vector<16x256xf32>
    %6 = arith.truncf %5 : vector<16x256xf32> to vector<16x256xbf16>
    %c0_5 = arith.constant 0 : index
    %c0_6 = arith.constant 0 : index
    %7 = vector.load %arg4[%c0_5, %c0_6] : memref<256x2048xbf16, #tpu.memory_space<vmem>>, vector<256x2048xbf16>
    %cst_7 = arith.constant dense<0.000000e+00> : vector<16x2048xf32>
    %8 = tpu.matmul %6, %7, %cst_7 {dimension_numbers = #tpu.dot_dimension_numbers<[1], [0], [0], [1], [0, 0, 1, 1], [], []>} : vector<16x256xbf16>, vector<256x2048xbf16>, vector<16x2048xf32> -> vector<16x2048xf32>
    %c0_8 = arith.constant 0 : index
    %c0_9 = arith.constant 0 : index
    %9 = vector.load %arg5[%c0_8, %c0_9] : memref<1x2048xf32, #tpu.memory_space<vmem>>, vector<1x2048xf32>
    %10 = vector.broadcast %9 : vector<1x2048xf32> to vector<16x2048xf32>
    %11 = arith.addf %8, %10 : vector<16x2048xf32>
    %cst_10 = arith.constant 0.000000e+00 : f32
    %12 = vector.broadcast %cst_10 : f32 to vector<16x2048xf32>
    %13 = arith.maximumf %11, %12 : vector<16x2048xf32>
    %c0_11 = arith.constant 0 : index
    %c0_12 = arith.constant 0 : index
    %14 = vector.load %arg6[%c0_11, %c0_12] : memref<16x2048xf32, #tpu.memory_space<vmem>>, vector<16x2048xf32>
    tpu.vector_store %arg6[%c0_11, %c0_12], %13 {strides = array<i32>} : memref<16x2048xf32, #tpu.memory_space<vmem>>, vector<16x2048xf32>,
    return
  }
  func.func @transform_0(%arg0: i32) -> (i32, i32) {
    %c0_i32 = arith.constant 0 : i32
    %c0_i32_0 = arith.constant 0 : i32
    %c0_i32_1 = arith.constant 0 : i32
    return %c0_i32, %c0_i32_0 : i32, i32
  }
  func.func @transform_1(%arg0: i32) -> (i32, i32) {
    %c0_i32 = arith.constant 0 : i32
    %c0_i32_0 = arith.constant 0 : i32
    %c0_i32_1 = arith.constant 0 : i32
    return %c0_i32, %c0_i32_0 : i32, i32
  }
  func.func @transform_2(%arg0: i32) -> (i32, i32) {
    %c0_i32 = arith.constant 0 : i32
    %c0_i32_0 = arith.constant 0 : i32
    %c0_i32_1 = arith.constant 0 : i32
    return %c0_i32, %c0_i32_0 : i32, i32
  }
  func.func @transform_3(%arg0: i32) -> (i32, i32) {
    %c0_i32 = arith.constant 0 : i32
    %c0_i32_0 = arith.constant 0 : i32
    %c0_i32_1 = arith.constant 0 : i32
    return %c0_i32, %c0_i32_0 : i32, i32
  }
  func.func @transform_4(%arg0: i32) -> (i32, i32) {
    %c0_i32 = arith.constant 0 : i32
    %c0_i32_0 = arith.constant 0 : i32
    %c0_i32_1 = arith.constant 0 : i32
    return %c0_i32, %c0_i32_0 : i32, i32
  }
  func.func @transform_5(%arg0: i32) -> (i32, i32) {
    %c0_i32 = arith.constant 0 : i32
    %c0_i32_0 = arith.constant 0 : i32
    %c0_i32_1 = arith.constant 0 : i32
    return %c0_i32, %c0_i32_0 : i32, i32
  }
}

module attributes {stable_mosaic.version = 11 : i64} {
  func.func @_matmul_bias_act_kernel(%arg0: i32, %arg1: memref<32x1152xbf16, #tpu.memory_space<vmem>>, %arg2: memref<1152x256xbf16, #tpu.memory_space<vmem>>, %arg3: memref<1x256xf32, #tpu.memory_space<vmem>>, %arg4: memref<32x256xf32, #tpu.memory_space<vmem>>) attributes {dimension_semantics = [#tpu.dimension_semantics<parallel>], iteration_bounds = array<i64: 1>, scalar_prefetch = 0 : i64, scratch_operands = 0 : i64, tpu.core_type = #tpu.core_type<tc>, window_params = [{transform_indices = @transform_0, window_bounds = array<i64: 32, 1152>}, {pipeline_mode = #tpu.pipeline_mode<synchronous>, transform_indices = @transform_1, window_bounds = array<i64: 1152, 256>}, {pipeline_mode = #tpu.pipeline_mode<synchronous>, transform_indices = @transform_2, window_bounds = array<i64: 1, 256>}, {transform_indices = @transform_3, window_bounds = array<i64: 32, 256>}]} {
    %c0 = arith.constant 0 : index
    %c0_0 = arith.constant 0 : index
    %0 = vector.load %arg1[%c0, %c0_0] : memref<32x1152xbf16, #tpu.memory_space<vmem>>, vector<32x1152xbf16>
    %c0_1 = arith.constant 0 : index
    %c0_2 = arith.constant 0 : index
    %1 = vector.load %arg2[%c0_1, %c0_2] : memref<1152x256xbf16, #tpu.memory_space<vmem>>, vector<1152x256xbf16>
    %cst = arith.constant dense<0.000000e+00> : vector<32x256xf32>
    %2 = tpu.matmul %0, %1, %cst {dimension_numbers = #tpu.dot_dimension_numbers<[1], [0], [0], [1], [0, 0, 1, 1], [], []>} : vector<32x1152xbf16>, vector<1152x256xbf16>, vector<32x256xf32> -> vector<32x256xf32>
    %c0_3 = arith.constant 0 : index
    %c0_4 = arith.constant 0 : index
    %3 = vector.load %arg3[%c0_3, %c0_4] : memref<1x256xf32, #tpu.memory_space<vmem>>, vector<1x256xf32>
    %4 = vector.broadcast %3 : vector<1x256xf32> to vector<32x256xf32>
    %5 = arith.addf %2, %4 : vector<32x256xf32>
    %cst_5 = arith.constant 0.000000e+00 : f32
    %6 = vector.broadcast %cst_5 : f32 to vector<32x256xf32>
    %7 = arith.maximumf %5, %6 : vector<32x256xf32>
    %c0_6 = arith.constant 0 : index
    %c0_7 = arith.constant 0 : index
    %8 = vector.load %arg4[%c0_6, %c0_7] : memref<32x256xf32, #tpu.memory_space<vmem>>, vector<32x256xf32>
    tpu.vector_store %arg4[%c0_6, %c0_7], %7 {strides = array<i32>} : memref<32x256xf32, #tpu.memory_space<vmem>>, vector<32x256xf32>,
    return
  }
  func.func @transform_0(%arg0: i32) -> (i32, i32) {
    %c0_i32 = arith.constant 0 : i32
    %c0_i32_0 = arith.constant 0 : i32
    return %arg0, %c0_i32 : i32, i32
  }
  func.func @transform_1(%arg0: i32) -> (i32, i32) {
    %c0_i32 = arith.constant 0 : i32
    %c0_i32_0 = arith.constant 0 : i32
    %c0_i32_1 = arith.constant 0 : i32
    return %c0_i32, %c0_i32_0 : i32, i32
  }
  func.func @transform_2(%arg0: i32) -> (i32, i32) {
    %c0_i32 = arith.constant 0 : i32
    %c0_i32_0 = arith.constant 0 : i32
    %c0_i32_1 = arith.constant 0 : i32
    return %c0_i32, %c0_i32_0 : i32, i32
  }
  func.func @transform_3(%arg0: i32) -> (i32, i32) {
    %c0_i32 = arith.constant 0 : i32
    %c0_i32_0 = arith.constant 0 : i32
    return %arg0, %c0_i32 : i32, i32
  }
}

module attributes {stable_mosaic.version = 11 : i64} {
  func.func @_matmul_bias_act_kernel(%arg0: i32, %arg1: memref<128x576xbf16, #tpu.memory_space<vmem>>, %arg2: memref<576x128xbf16, #tpu.memory_space<vmem>>, %arg3: memref<1x128xf32, #tpu.memory_space<vmem>>, %arg4: memref<128x128xf32, #tpu.memory_space<vmem>>) attributes {dimension_semantics = [#tpu.dimension_semantics<parallel>], iteration_bounds = array<i64: 1>, scalar_prefetch = 0 : i64, scratch_operands = 0 : i64, tpu.core_type = #tpu.core_type<tc>, window_params = [{transform_indices = @transform_0, window_bounds = array<i64: 128, 576>}, {pipeline_mode = #tpu.pipeline_mode<synchronous>, transform_indices = @transform_1, window_bounds = array<i64: 576, 128>}, {pipeline_mode = #tpu.pipeline_mode<synchronous>, transform_indices = @transform_2, window_bounds = array<i64: 1, 128>}, {transform_indices = @transform_3, window_bounds = array<i64: 128, 128>}]} {
    %c0 = arith.constant 0 : index
    %c0_0 = arith.constant 0 : index
    %0 = vector.load %arg1[%c0, %c0_0] : memref<128x576xbf16, #tpu.memory_space<vmem>>, vector<128x576xbf16>
    %c0_1 = arith.constant 0 : index
    %c0_2 = arith.constant 0 : index
    %1 = vector.load %arg2[%c0_1, %c0_2] : memref<576x128xbf16, #tpu.memory_space<vmem>>, vector<576x128xbf16>
    %cst = arith.constant dense<0.000000e+00> : vector<128x128xf32>
    %2 = tpu.matmul %0, %1, %cst {dimension_numbers = #tpu.dot_dimension_numbers<[1], [0], [0], [1], [0, 0, 1, 1], [], []>} : vector<128x576xbf16>, vector<576x128xbf16>, vector<128x128xf32> -> vector<128x128xf32>
    %c0_3 = arith.constant 0 : index
    %c0_4 = arith.constant 0 : index
    %3 = vector.load %arg3[%c0_3, %c0_4] : memref<1x128xf32, #tpu.memory_space<vmem>>, vector<1x128xf32>
    %4 = vector.broadcast %3 : vector<1x128xf32> to vector<128x128xf32>
    %5 = arith.addf %2, %4 : vector<128x128xf32>
    %cst_5 = arith.constant 0.000000e+00 : f32
    %6 = vector.broadcast %cst_5 : f32 to vector<128x128xf32>
    %7 = arith.maximumf %5, %6 : vector<128x128xf32>
    %c0_6 = arith.constant 0 : index
    %c0_7 = arith.constant 0 : index
    %8 = vector.load %arg4[%c0_6, %c0_7] : memref<128x128xf32, #tpu.memory_space<vmem>>, vector<128x128xf32>
    tpu.vector_store %arg4[%c0_6, %c0_7], %7 {strides = array<i32>} : memref<128x128xf32, #tpu.memory_space<vmem>>, vector<128x128xf32>,
    return
  }
  func.func @transform_0(%arg0: i32) -> (i32, i32) {
    %c0_i32 = arith.constant 0 : i32
    %c0_i32_0 = arith.constant 0 : i32
    return %arg0, %c0_i32 : i32, i32
  }
  func.func @transform_1(%arg0: i32) -> (i32, i32) {
    %c0_i32 = arith.constant 0 : i32
    %c0_i32_0 = arith.constant 0 : i32
    %c0_i32_1 = arith.constant 0 : i32
    return %c0_i32, %c0_i32_0 : i32, i32
  }
  func.func @transform_2(%arg0: i32) -> (i32, i32) {
    %c0_i32 = arith.constant 0 : i32
    %c0_i32_0 = arith.constant 0 : i32
    %c0_i32_1 = arith.constant 0 : i32
    return %c0_i32, %c0_i32_0 : i32, i32
  }
  func.func @transform_3(%arg0: i32) -> (i32, i32) {
    %c0_i32 = arith.constant 0 : i32
    %c0_i32_0 = arith.constant 0 : i32
    return %arg0, %c0_i32 : i32, i32
  }
}

module attributes {stable_mosaic.version = 11 : i64} {
  func.func @_matmul_bias_act_kernel(%arg0: i32, %arg1: memref<256x288xbf16, #tpu.memory_space<vmem>>, %arg2: memref<288x128xbf16, #tpu.memory_space<vmem>>, %arg3: memref<1x128xf32, #tpu.memory_space<vmem>>, %arg4: memref<256x128xf32, #tpu.memory_space<vmem>>) attributes {dimension_semantics = [#tpu.dimension_semantics<parallel>], iteration_bounds = array<i64: 2>, scalar_prefetch = 0 : i64, scratch_operands = 0 : i64, tpu.core_type = #tpu.core_type<tc>, window_params = [{transform_indices = @transform_0, window_bounds = array<i64: 256, 288>}, {pipeline_mode = #tpu.pipeline_mode<synchronous>, transform_indices = @transform_1, window_bounds = array<i64: 288, 128>}, {pipeline_mode = #tpu.pipeline_mode<synchronous>, transform_indices = @transform_2, window_bounds = array<i64: 1, 128>}, {transform_indices = @transform_3, window_bounds = array<i64: 256, 128>}]} {
    %c0 = arith.constant 0 : index
    %c0_0 = arith.constant 0 : index
    %0 = vector.load %arg1[%c0, %c0_0] : memref<256x288xbf16, #tpu.memory_space<vmem>>, vector<256x288xbf16>
    %c0_1 = arith.constant 0 : index
    %c0_2 = arith.constant 0 : index
    %1 = vector.load %arg2[%c0_1, %c0_2] : memref<288x128xbf16, #tpu.memory_space<vmem>>, vector<288x128xbf16>
    %cst = arith.constant dense<0.000000e+00> : vector<256x128xf32>
    %2 = tpu.matmul %0, %1, %cst {dimension_numbers = #tpu.dot_dimension_numbers<[1], [0], [0], [1], [0, 0, 1, 1], [], []>} : vector<256x288xbf16>, vector<288x128xbf16>, vector<256x128xf32> -> vector<256x128xf32>
    %c0_3 = arith.constant 0 : index
    %c0_4 = arith.constant 0 : index
    %3 = vector.load %arg3[%c0_3, %c0_4] : memref<1x128xf32, #tpu.memory_space<vmem>>, vector<1x128xf32>
    %4 = vector.broadcast %3 : vector<1x128xf32> to vector<256x128xf32>
    %5 = arith.addf %2, %4 : vector<256x128xf32>
    %6 = arith.negf %5 : vector<256x128xf32>
    %7 = math.exp %6 : vector<256x128xf32>
    %cst_5 = arith.constant 1.000000e+00 : f32
    %8 = vector.broadcast %cst_5 : f32 to vector<256x128xf32>
    %9 = arith.addf %8, %7 : vector<256x128xf32>
    %10 = arith.divf %8, %9 : vector<256x128xf32>
    %c0_6 = arith.constant 0 : index
    %c0_7 = arith.constant 0 : index
    %11 = vector.load %arg4[%c0_6, %c0_7] : memref<256x128xf32, #tpu.memory_space<vmem>>, vector<256x128xf32>
    tpu.vector_store %arg4[%c0_6, %c0_7], %10 {strides = array<i32>} : memref<256x128xf32, #tpu.memory_space<vmem>>, vector<256x128xf32>,
    return
  }
  func.func @transform_0(%arg0: i32) -> (i32, i32) {
    %c0_i32 = arith.constant 0 : i32
    %c0_i32_0 = arith.constant 0 : i32
    return %arg0, %c0_i32 : i32, i32
  }
  func.func @transform_1(%arg0: i32) -> (i32, i32) {
    %c0_i32 = arith.constant 0 : i32
    %c0_i32_0 = arith.constant 0 : i32
    %c0_i32_1 = arith.constant 0 : i32
    return %c0_i32, %c0_i32_0 : i32, i32
  }
  func.func @transform_2(%arg0: i32) -> (i32, i32) {
    %c0_i32 = arith.constant 0 : i32
    %c0_i32_0 = arith.constant 0 : i32
    %c0_i32_1 = arith.constant 0 : i32
    return %c0_i32, %c0_i32_0 : i32, i32
  }
  func.func @transform_3(%arg0: i32) -> (i32, i32) {
    %c0_i32 = arith.constant 0 : i32
    %c0_i32_0 = arith.constant 0 : i32
    return %arg0, %c0_i32 : i32, i32
  }
}

</mosaic_0001>

<llo_original>
// kernel: beta_vae_forward.9
$region0: #{beta_vae_forward.9}
  #allocation0 [shape = 'u32[]', space=smem, size = 0x4, offset = 0x4, fixed_abs, tag = 'smem constant byte address 0x4 - core index']
  #allocation1 [shape = 'u32[144,128]{1,0:T(1,128)}', space=vmem, size = 0x12000, scoped, tag = 'internal scratch']
  %s0 = inlined_call_operand.vmem [shape: bf16[512,48], index: 0, kind: input, shape index: {}]
  %s1 = inlined_call_operand.vmem [shape: bf16[48,128], index: 1, kind: input, shape index: {}]
  %s2 = inlined_call_operand.vmem [shape: f32[1,128], index: 2, kind: input, shape index: {}]
  %s3 = inlined_call_operand.vmem [shape: f32[512,128], index: 3, kind: output, shape index: {}]
  %s4 = sld [smem:[#allocation0]]
  $region45: #{beta_vae_forward.9} parent=0
    _
  %s6 = ssub.s32 1, %s4
  %s7 = scalar_select 0, %s6, %s4
  loop: start=0, step=1, limit=4
  $region2: #{beta_vae_forward.9} parent=0 // loop_pre_header
    _
  $region3: #{beta_vae_forward.9} parent=0 // loop_header
    %s9 = sphi 0, %s13
    %p10 = scmp.ge.s32.totalorder %s9, 4
    %s19 = sphi 0, %s21
    %s22 = sphi 0, %s19
    %s23 = sphi 0, %s22
    %s39 = sphi 0, %s23
    %s43 = sphi 0, %s43
    %s45 = sphi 0, %s43
    %s46 = sphi 0, %s45
    %s60 = sphi 0, %s46
    %s64 = sphi 0, %s64
    %s66 = sphi 0, %s64
    %s67 = sphi 0, %s66
    %s81 = sphi 0, %s67
    %s87 = sphi 0, %s89
    %s90 = sphi 0, %s87
    %s91 = sphi 0, %s90
    %s107 = sphi 0, %s91
  $region4: #{beta_vae_forward.9} parent=0 // loop_header_branch
    %12 = sbr.rel (%p10) target = $region8
  $region5: #{beta_vae_forward.9} parent=0 // loop_body
    %s14 = ssub.s32 %s9, 1
    %s15 = ssub.s32 %s9, 2
    %s16 = sadd.s32 %s9, 1
    %s17 = ssub.s32 %s9, %s16
    %p18 = scmp.eq.s32.totalorder %s17, 0
    %s20 = sadd.s32 %s19, 1
    %s21 = scalar_select %p18, %s19, %s20
    %p24 = pneg %p18
    %p25 = scmp.eq.s32.totalorder %s9, 1
    %p26 = por %p24, %p25
    %p27 = scmp.ne.s32.totalorder %s19, %s22
    %p28 = scmp.eq.s32.totalorder %s9, 0
    %p29 = por %p27, %p28
    %p30 = scmp.ne.s32.totalorder %s19, %s22
    %p31 = scmp.eq.s32.totalorder %s14, 1
    %p32 = por %p30, %p31
    %p33 = scmp.ne.s32.totalorder %s22, %s23
    %p34 = scmp.eq.s32.totalorder %s14, 0
    %p35 = por %p33, %p34
    %p36 = scmp.ne.s32.totalorder %s22, %s23
    %p37 = scmp.eq.s32.totalorder %s15, 1
    %p38 = por %p36, %p37
    %p40 = scmp.ne.s32.totalorder %s23, %s39
    %p41 = scmp.eq.s32.totalorder %s15, 0
    %p42 = por %p40, %p41
    %s44 = sadd.s32 %s43, 1
    %p47 = scmp.eq.s32.totalorder %s9, 1
    %p48 = scmp.ne.s32.totalorder %s43, %s45
    %p49 = scmp.eq.s32.totalorder %s9, 0
    %p50 = por %p48, %p49
    %p51 = scmp.ne.s32.totalorder %s43, %s45
    %p52 = scmp.eq.s32.totalorder %s14, 1
    %p53 = por %p51, %p52
    %p54 = scmp.ne.s32.totalorder %s45, %s46
    %p55 = scmp.eq.s32.totalorder %s14, 0
    %p56 = por %p54, %p55
    %p57 = scmp.ne.s32.totalorder %s45, %s46
    %p58 = scmp.eq.s32.totalorder %s15, 1
    %p59 = por %p57, %p58
    %p61 = scmp.ne.s32.totalorder %s46, %s60
    %p62 = scmp.eq.s32.totalorder %s15, 0
    %p63 = por %p61, %p62
    %s65 = sadd.s32 %s64, 1
    %p68 = scmp.eq.s32.totalorder %s9, 1
    %p69 = scmp.ne.s32.totalorder %s64, %s66
    %p70 = scmp.eq.s32.totalorder %s9, 0
    %p71 = por %p69, %p70
    %p72 = scmp.ne.s32.totalorder %s64, %s66
    %p73 = scmp.eq.s32.totalorder %s14, 1
    %p74 = por %p72, %p73
    %p75 = scmp.ne.s32.totalorder %s66, %s67
    %p76 = scmp.eq.s32.totalorder %s14, 0
    %p77 = por %p75, %p76
    %p78 = scmp.ne.s32.totalorder %s66, %s67
    %p79 = scmp.eq.s32.totalorder %s15, 1
    %p80 = por %p78, %p79
    %p82 = scmp.ne.s32.totalorder %s67, %s81
    %p83 = scmp.eq.s32.totalorder %s15, 0
    %p84 = por %p82, %p83
    %s85 = ssub.s32 %s9, %s16
    %p86 = scmp.eq.s32.totalorder %s85, 0
    %s88 = sadd.s32 %s87, 1
    %s89 = scalar_select %p86, %s87, %s88
    %p92 = pneg %p86
    %p93 = scmp.eq.s32.totalorder %s9, 1
    %p94 = por %p92, %p93
    %p95 = scmp.ne.s32.totalorder %s87, %s90
    %p96 = scmp.eq.s32.totalorder %s9, 0
    %p97 = por %p95, %p96
    %p98 = scmp.ne.s32.totalorder %s87, %s90
    %p99 = scmp.eq.s32.totalorder %s14, 1
    %p100 = por %p98, %p99
    %p101 = scmp.ne.s32.totalorder %s90, %s91
    %p102 = scmp.eq.s32.totalorder %s14, 0
    %p103 = por %p101, %p102
    %p104 = scmp.ne.s32.totalorder %s90, %s91
    %p105 = scmp.eq.s32.totalorder %s15, 1
    %p106 = por %p104, %p105
    %p108 = scmp.ne.s32.totalorder %s91, %s107
    %p109 = scmp.eq.s32.totalorder %s15, 0
    %p110 = por %p108, %p109
    %p111 = scmp.le.s32.totalorder 1, %s9
    %p112 = scmp.lt.s32.totalorder %s9, 3
    %p113 = pnand %p111, %p112
    %p114 = pneg %p113
    // Predicated region
    $region9: #{beta_vae_forward.9} parent=5 // pred_check
      _
    $region10: #{beta_vae_forward.9} parent=5 // pred_check_branch
      %116 = sbr.rel (%p113) target = $region12
    $region11: #{beta_vae_forward.9} parent=5 // pred_region
      %s117 = ssub.s32 %s9, 1
      // Predicated region
      $region13: #{beta_vae_forward.9} parent=11 // pred_check
        %p118 = pneg %p56
      $region14: #{beta_vae_forward.9} parent=11 // pred_check_branch
        %120 = sbr.rel (%p118) target = $region16
      $region15: #{beta_vae_forward.9} parent=11 // pred_region
        _
      $region16: #{beta_vae_forward.9} parent=11 // pred_fallthru
        _
      // Predicated region
      $region17: #{beta_vae_forward.9} parent=11 // pred_check
        %p121 = pneg %p77
      $region18: #{beta_vae_forward.9} parent=11 // pred_check_branch
        %123 = sbr.rel (%p121) target = $region20
      $region19: #{beta_vae_forward.9} parent=11 // pred_region
        _
      $region20: #{beta_vae_forward.9} parent=11 // pred_fallthru
        _
    $region12: #{beta_vae_forward.9} parent=5 // pred_fallthru
      _
    %p124 = scmp.lt.s32.totalorder %s9, 2
    // Predicated region
    $region21: #{beta_vae_forward.9} parent=5 // pred_check
      %p125 = pneg %p124
    $region22: #{beta_vae_forward.9} parent=5 // pred_check_branch
      %127 = sbr.rel (%p125) target = $region24
    $region23: #{beta_vae_forward.9} parent=5 // pred_region
      // Predicated region
      $region25: #{beta_vae_forward.9} parent=23 // pred_check
        %p128 = pneg %p29
      $region26: #{beta_vae_forward.9} parent=23 // pred_check_branch
        %130 = sbr.rel (%p128) target = $region28
      $region27: #{beta_vae_forward.9} parent=23 // pred_region
        %s131 = smul.u32 32, %s9
        %p132 = scmp.lt.s32.totalorder %s131, 63
        %s133 = scalar_select %p132, %s131, 63
        %s134 = smul.addr %s133, 4
        %s135 = scalar_lea.vmem %s0, %s134
        %s136 = smul.u32 32, %s9
      $region28: #{beta_vae_forward.9} parent=23 // pred_fallthru
        _
    $region24: #{beta_vae_forward.9} parent=5 // pred_fallthru
      _
    %p137 = scmp.le.s32.totalorder 1, %s9
    %p138 = scmp.lt.s32.totalorder %s9, 3
    %p139 = pnand %p137, %p138
    %p140 = pneg %p139
    // Predicated region
    $region29: #{beta_vae_forward.9} parent=5 // pred_check
      _
    $region30: #{beta_vae_forward.9} parent=5 // pred_check_branch
      %142 = sbr.rel (%p139) target = $region32
    $region31: #{beta_vae_forward.9} parent=5 // pred_region
      %s143 = ssub.s32 %s9, 1
      %s144 = smul.u32 32, %s14
      %p145 = scmp.lt.s32.totalorder %s144, 63
      %s146 = scalar_select %p145, %s144, 63
      %s147 = smul.addr %s146, 4
      %s148 = scalar_lea.vmem %s0, %s147
      %p149 = pneg %p35
      %p150 = pneg %p32
      %p151 = pneg %p56
      %p152 = pneg %p53
      %p153 = pneg %p77
      %p154 = pneg %p74
      %p155 = pneg %p103
      %p156 = pneg %p100
      %s157 = smul.u32 32, %s14
      %p158 = scmp.lt.s32.totalorder %s157, 63
      %s159 = scalar_select %p158, %s157, 63
      %s160 = smul.addr %s159, 8
      %s161 = scalar_lea.vmem %s3, %s160
      %s162 = smul.u32 32, %s14
      %p163 = scmp.lt.s32.totalorder %s162, 63
      %s164 = scalar_select %p163, %s162, 63
      %s165 = smul.addr %s164, 4
      %s166 = scalar_lea.vmem %s0, %s165
      %s167 = smul.u32 32, %s14
      %s168 = smul.u32 32, %s14
      %p169 = scmp.lt.s32.totalorder %s168, 63
      %s170 = scalar_select %p169, %s168, 63
      %s171 = smul.addr %s170, 8
      %s172 = scalar_lea.vmem %s3, %s171
      %s173 = smul.u32 32, %s14
      %v175 = vld [vmem:[%s166] sm:$0xf]
      %v176 = vld [vmem:[%s166 + $0x4] sm:$0xf]
      %v177 = vld [vmem:[%s166 + $0x8] sm:$0xf]
      %v178 = vld [vmem:[%s166 + $0xc] sm:$0xf]
      %v179 = vld [vmem:[%s166 + $0x10] sm:$0xf]
      %v180 = vld [vmem:[%s166 + $0x14] sm:$0xf]
      %v181 = vld [vmem:[%s166 + $0x18] sm:$0xf]
      %v182 = vld [vmem:[%s166 + $0x1c] sm:$0xf]
      %v183 = vld [vmem:[%s166 + $0x20] sm:$0xf]
      %v184 = vld [vmem:[%s166 + $0x24] sm:$0xf]
      %v185 = vld [vmem:[%s166 + $0x28] sm:$0xf]
      %v186 = vld [vmem:[%s166 + $0x2c] sm:$0xf]
      %v187 = vld [vmem:[%s166 + $0x30] sm:$0xf]
      %v188 = vld [vmem:[%s166 + $0x34] sm:$0xf]
      %v189 = vld [vmem:[%s166 + $0x38] sm:$0xf]
      %v190 = vld [vmem:[%s166 + $0x3c] sm:$0xf]
      %v191 = vld [vmem:[%s166 + $0x40] sm:$0xf]
      %v192 = vld [vmem:[%s166 + $0x44] sm:$0xf]
      %v193 = vld [vmem:[%s166 + $0x48] sm:$0xf]
      %v194 = vld [vmem:[%s166 + $0x4c] sm:$0xf]
      %v195 = vld [vmem:[%s166 + $0x50] sm:$0xf]
      %v196 = vld [vmem:[%s166 + $0x54] sm:$0xf]
      %v197 = vld [vmem:[%s166 + $0x58] sm:$0xf]
      %v198 = vld [vmem:[%s166 + $0x5c] sm:$0xf]
      %v199 = vld [vmem:[%s166 + $0x60] sm:$0xf]
      %v200 = vld [vmem:[%s166 + $0x64] sm:$0xf]
      %v201 = vld [vmem:[%s166 + $0x68] sm:$0xf]
      %v202 = vld [vmem:[%s166 + $0x6c] sm:$0xf]
      %v203 = vld [vmem:[%s166 + $0x70] sm:$0xf]
      %v204 = vld [vmem:[%s166 + $0x74] sm:$0xf]
      %v205 = vld [vmem:[%s166 + $0x78] sm:$0xf]
      %v206 = vld [vmem:[%s166 + $0x7c] sm:$0xf]
      %v207 = vld [vmem:[%s1] sm:$0xf]
      %v208 = vld [vmem:[%s1 + $0x4] sm:$0xf]
      %v209 = vld [vmem:[%s1 + $0x8] sm:$0xf]
      %v210 = vld [vmem:[%s1 + $0xc] sm:$0xf]
      %v211 = vld [vmem:[%s1 + $0x10] sm:$0xf]
      %v212 = vld [vmem:[%s1 + $0x14] sm:$0xf]
      %v213 = vld [vmem:[%s2] sm:$0x1]
      %v215 = vlaneseq
      %v216 = vshrl.u32 %v215, 7
      %v217 = vsub.s32 0, %v216
      %v218 = vrot.slane %v213, %v217
      %v252 = vunpack.c.l.b16 %v175
      %v253 = vunpack.c.l.b16 %v176
      %v254 = vunpack.c.l.b16 %v177
      %v255 = vunpack.c.l.b16 %v178
      %v256 = vunpack.c.l.b16 %v179
      %v257 = vunpack.c.l.b16 %v180
      %v258 = vunpack.c.l.b16 %v181
      %v259 = vunpack.c.l.b16 %v182
      %v260 = vunpack.c.l.b16 %v183
      %v261 = vunpack.c.l.b16 %v184
      %v262 = vunpack.c.l.b16 %v185
      %v263 = vunpack.c.l.b16 %v186
      %v264 = vunpack.c.l.b16 %v187
      %v265 = vunpack.c.l.b16 %v188
      %v266 = vunpack.c.l.b16 %v189
      %v267 = vunpack.c.l.b16 %v190
      %v268 = vunpack.c.l.b16 %v191
      %v269 = vunpack.c.l.b16 %v192
      %v270 = vunpack.c.l.b16 %v193
      %v271 = vunpack.c.l.b16 %v194
      %v272 = vunpack.c.l.b16 %v195
      %v273 = vunpack.c.l.b16 %v196
      %v274 = vunpack.c.l.b16 %v197
      %v275 = vunpack.c.l.b16 %v198
      %v276 = vunpack.c.l.b16 %v199
      %v277 = vunpack.c.l.b16 %v200
      %v278 = vunpack.c.l.b16 %v201
      %v279 = vunpack.c.l.b16 %v202
      %v280 = vunpack.c.l.b16 %v203
      %v281 = vunpack.c.l.b16 %v204
      %v282 = vunpack.c.l.b16 %v205
      %v283 = vunpack.c.l.b16 %v206
      %v284 = vpack.c.b16 %v253, %v252
      %v285 = vpack.c.b16 %v255, %v254
      %v286 = vpack.c.b16 %v257, %v256
      %v287 = vpack.c.b16 %v259, %v258
      %v288 = vpack.c.b16 %v261, %v260
      %v289 = vpack.c.b16 %v263, %v262
      %v290 = vpack.c.b16 %v265, %v264
      %v291 = vpack.c.b16 %v267, %v266
      %v292 = vpack.c.b16 %v269, %v268
      %v293 = vpack.c.b16 %v271, %v270
      %v294 = vpack.c.b16 %v273, %v272
      %v295 = vpack.c.b16 %v275, %v274
      %v296 = vpack.c.b16 %v277, %v276
      %v297 = vpack.c.b16 %v279, %v278
      %v298 = vpack.c.b16 %v281, %v280
      %v299 = vpack.c.b16 %v283, %v282
      %v306 = vunpack.c.l.b16 %v207
      %v307 = vunpack.c.l.b16 %v208
      %v308 = vunpack.c.l.b16 %v209
      %v309 = vunpack.c.l.b16 %v210
      %v310 = vunpack.c.l.b16 %v211
      %v311 = vunpack.c.l.b16 %v212
      %v312 = vpack.c.b16 %v307, %v306
      %v313 = vpack.c.b16 %v309, %v308
      %v314 = vpack.c.b16 %v311, %v310
      %vm318 = vcmask 392192
      %v320 = vsel %vm318, %v284, 0
      %v323 = vsel %vm318, %v285, 0
      %v326 = vsel %vm318, %v286, 0
      %v329 = vsel %vm318, %v287, 0
      %v332 = vsel %vm318, %v288, 0
      %v335 = vsel %vm318, %v289, 0
      %v338 = vsel %vm318, %v290, 0
      %v341 = vsel %vm318, %v291, 0
      %v344 = vsel %vm318, %v292, 0
      %v347 = vsel %vm318, %v293, 0
      %v350 = vsel %vm318, %v294, 0
      %v353 = vsel %vm318, %v295, 0
      %v356 = vsel %vm318, %v296, 0
      %v359 = vsel %vm318, %v297, 0
      %v362 = vsel %vm318, %v298, 0
      %v365 = vsel %vm318, %v299, 0
      %367 = vmatprep.subr.bf16.mxu0 0
      %368 = vmatpush1.bf16.msra.mxu0 0
      %369 = vmatprep.subr.bf16.mxu0 0
      %370 = vmatpush1.bf16.msra.mxu0 0
      %371 = vmatprep.subr.bf16.mxu0 0
      %372 = vmatpush1.bf16.msra.mxu0 0
      %373 = vmatprep.subr.bf16.mxu0 0
      %374 = vmatpush1.bf16.msra.mxu0 0
      %375 = vmatprep.subr.bf16.mxu0 0
      %376 = vmatpush1.bf16.msra.mxu0 0
      %377 = vmatprep.subr.bf16.mxu0 0
      %378 = vmatpush1.bf16.msra.mxu0 %v314
      %379 = vmatprep.subr.bf16.mxu0 0
      %380 = vmatpush1.bf16.msra.mxu0 %v313
      %381 = vmatprep.subr.bf16.mxu0 0
      %382 = vmatpush1.bf16.msra.mxu0 %v312
      %383 = vmatprep.subr.bf16.mxu0 0
      %384 = vmatpush2.bf16.msra.mxu0 0
      %385 = vmatprep.subr.bf16.mxu0 0
      %386 = vmatpush2.bf16.msra.mxu0 0
      %387 = vmatprep.subr.bf16.mxu0 0
      %388 = vmatpush2.bf16.msra.mxu0 0
      %389 = vmatprep.subr.bf16.mxu0 0
      %390 = vmatpush2.bf16.msra.mxu0 0
      %391 = vmatprep.subr.bf16.mxu0 0
      %392 = vmatpush2.bf16.msra.mxu0 0
      %393 = vmatprep.subr.bf16.mxu0 0
      %394 = vmatpush2.bf16.msra.mxu0 0
      %395 = vmatprep.subr.bf16.mxu0 0
      %396 = vmatpush2.bf16.msra.mxu0 0
      %397 = vmatprep.subr.bf16.mxu0 0
      %398 = vmatpush2.bf16.msra.mxu0 0
      %399 = vmatprep.mubr.bf16.mxu0 0
      %400 = vmatmul.mubr.bf16.gmra.mxu0 %v320
      %v401 = vpop.f32.mrf.mxu0
      %v402 = vadd.f32 %v218, %v401
      %v403 = vpop.f32.mrf.mxu0
      %v404 = vpop.f32.mrf.mxu0
      %v405 = vadd.f32 %v218, %v404
      %v406 = vpop.f32.mrf.mxu0
      %407 = vmatprep.mubr.bf16.mxu0 0
      %408 = vmatmul.mubr.bf16.gmra.mxu0 %v323
      %v409 = vpop.f32.mrf.mxu0
      %v410 = vadd.f32 %v218, %v409
      %v411 = vpop.f32.mrf.mxu0
      %v412 = vpop.f32.mrf.mxu0
      %v413 = vadd.f32 %v218, %v412
      %v414 = vpop.f32.mrf.mxu0
      %415 = vmatprep.mubr.bf16.mxu0 0
      %416 = vmatmul.mubr.bf16.gmra.mxu0 %v326
      %v417 = vpop.f32.mrf.mxu0
      %v418 = vadd.f32 %v218, %v417
      %v419 = vpop.f32.mrf.mxu0
      %v420 = vpop.f32.mrf.mxu0
      %v421 = vadd.f32 %v218, %v420
      %v422 = vpop.f32.mrf.mxu0
      %423 = vmatprep.mubr.bf16.mxu0 0
      %424 = vmatmul.mubr.bf16.gmra.mxu0 %v329
      %v425 = vpop.f32.mrf.mxu0
      %v426 = vadd.f32 %v218, %v425
      %v427 = vpop.f32.mrf.mxu0
      %v428 = vpop.f32.mrf.mxu0
      %v429 = vadd.f32 %v218, %v428
      %v430 = vpop.f32.mrf.mxu0
      %431 = vmatprep.mubr.bf16.mxu0 0
      %432 = vmatmul.mubr.bf16.gmra.mxu0 %v332
      %v433 = vpop.f32.mrf.mxu0
      %v434 = vadd.f32 %v218, %v433
      %v435 = vpop.f32.mrf.mxu0
      %v436 = vpop.f32.mrf.mxu0
      %v437 = vadd.f32 %v218, %v436
      %v438 = vpop.f32.mrf.mxu0
      %439 = vmatprep.mubr.bf16.mxu0 0
      %440 = vmatmul.mubr.bf16.gmra.mxu0 %v335
      %v441 = vpop.f32.mrf.mxu0
      %v442 = vadd.f32 %v218, %v441
      %v443 = vpop.f32.mrf.mxu0
      %v444 = vpop.f32.mrf.mxu0
      %v445 = vadd.f32 %v218, %v444
      %v446 = vpop.f32.mrf.mxu0
      %447 = vmatprep.mubr.bf16.mxu0 0
      %448 = vmatmul.mubr.bf16.gmra.mxu0 %v338
      %v449 = vpop.f32.mrf.mxu0
      %v450 = vadd.f32 %v218, %v449
      %v451 = vpop.f32.mrf.mxu0
      %v452 = vpop.f32.mrf.mxu0
      %v453 = vadd.f32 %v218, %v452
      %v454 = vpop.f32.mrf.mxu0
      %455 = vmatprep.mubr.bf16.mxu0 0
      %456 = vmatmul.mubr.bf16.gmra.mxu0 %v341
      %v457 = vpop.f32.mrf.mxu0
      %v458 = vadd.f32 %v218, %v457
      %v459 = vpop.f32.mrf.mxu0
      %v460 = vpop.f32.mrf.mxu0
      %v461 = vadd.f32 %v218, %v460
      %v462 = vpop.f32.mrf.mxu0
      %463 = vmatprep.mubr.bf16.mxu0 0
      %464 = vmatmul.mubr.bf16.gmra.mxu0 %v344
      %v465 = vpop.f32.mrf.mxu0
      %v466 = vadd.f32 %v218, %v465
      %v467 = vpop.f32.mrf.mxu0
      %v468 = vpop.f32.mrf.mxu0
      %v469 = vadd.f32 %v218, %v468
      %v470 = vpop.f32.mrf.mxu0
      %471 = vmatprep.mubr.bf16.mxu0 0
      %472 = vmatmul.mubr.bf16.gmra.mxu0 %v347
      %v473 = vpop.f32.mrf.mxu0
      %v474 = vadd.f32 %v218, %v473
      %v475 = vpop.f32.mrf.mxu0
      %v476 = vpop.f32.mrf.mxu0
      %v477 = vadd.f32 %v218, %v476
      %v478 = vpop.f32.mrf.mxu0
      %479 = vmatprep.mubr.bf16.mxu0 0
      %480 = vmatmul.mubr.bf16.gmra.mxu0 %v350
      %v481 = vpop.f32.mrf.mxu0
      %v482 = vadd.f32 %v218, %v481
      %v483 = vpop.f32.mrf.mxu0
      %v484 = vpop.f32.mrf.mxu0
      %v485 = vadd.f32 %v218, %v484
      %v486 = vpop.f32.mrf.mxu0
      %487 = vmatprep.mubr.bf16.mxu0 0
      %488 = vmatmul.mubr.bf16.gmra.mxu0 %v353
      %v489 = vpop.f32.mrf.mxu0
      %v490 = vadd.f32 %v218, %v489
      %v491 = vpop.f32.mrf.mxu0
      %v492 = vpop.f32.mrf.mxu0
      %v493 = vadd.f32 %v218, %v492
      %v494 = vpop.f32.mrf.mxu0
      %495 = vmatprep.mubr.bf16.mxu0 0
      %496 = vmatmul.mubr.bf16.gmra.mxu0 %v356
      %v497 = vpop.f32.mrf.mxu0
      %v498 = vadd.f32 %v218, %v497
      %v499 = vpop.f32.mrf.mxu0
      %v500 = vpop.f32.mrf.mxu0
      %v501 = vadd.f32 %v218, %v500
      %v502 = vpop.f32.mrf.mxu0
      %503 = vmatprep.mubr.bf16.mxu0 0
      %504 = vmatmul.mubr.bf16.gmra.mxu0 %v359
      %v505 = vpop.f32.mrf.mxu0
      %v506 = vadd.f32 %v218, %v505
      %v507 = vpop.f32.mrf.mxu0
      %v508 = vpop.f32.mrf.mxu0
      %v509 = vadd.f32 %v218, %v508
      %v510 = vpop.f32.mrf.mxu0
      %511 = vmatprep.mubr.bf16.mxu0 0
      %512 = vmatmul.mubr.bf16.gmra.mxu0 %v362
      %v513 = vpop.f32.mrf.mxu0
      %v514 = vadd.f32 %v218, %v513
      %v515 = vpop.f32.mrf.mxu0
      %v516 = vpop.f32.mrf.mxu0
      %v517 = vadd.f32 %v218, %v516
      %v518 = vpop.f32.mrf.mxu0
      %519 = vmatprep.mubr.bf16.mxu0 0
      %520 = vmatmul.mubr.bf16.gmra.mxu0 %v365
      %v521 = vpop.f32.mrf.mxu0
      %v522 = vadd.f32 %v218, %v521
      %v523 = vpop.f32.mrf.mxu0
      %v524 = vpop.f32.mrf.mxu0
      %v525 = vadd.f32 %v218, %v524
      %v526 = vpop.f32.mrf.mxu0
      %527 = vdwg.mxu0
      %v528 = vmax.f32 %v402, 0.0
      %v529 = vmax.f32 %v405, 0.0
      %v530 = vmax.f32 %v410, 0.0
      %v531 = vmax.f32 %v413, 0.0
      %v532 = vmax.f32 %v418, 0.0
      %v533 = vmax.f32 %v421, 0.0
      %v534 = vmax.f32 %v426, 0.0
      %v535 = vmax.f32 %v429, 0.0
      %v536 = vmax.f32 %v434, 0.0
      %v537 = vmax.f32 %v437, 0.0
      %v538 = vmax.f32 %v442, 0.0
      %v539 = vmax.f32 %v445, 0.0
      %v540 = vmax.f32 %v450, 0.0
      %v541 = vmax.f32 %v453, 0.0
      %v542 = vmax.f32 %v458, 0.0
      %v543 = vmax.f32 %v461, 0.0
      %v544 = vmax.f32 %v466, 0.0
      %v545 = vmax.f32 %v469, 0.0
      %v546 = vmax.f32 %v474, 0.0
      %v547 = vmax.f32 %v477, 0.0
      %v548 = vmax.f32 %v482, 0.0
      %v549 = vmax.f32 %v485, 0.0
      %v550 = vmax.f32 %v490, 0.0
      %v551 = vmax.f32 %v493, 0.0
      %v552 = vmax.f32 %v498, 0.0
      %v553 = vmax.f32 %v501, 0.0
      %v554 = vmax.f32 %v506, 0.0
      %v555 = vmax.f32 %v509, 0.0
      %v556 = vmax.f32 %v514, 0.0
      %v557 = vmax.f32 %v517, 0.0
      %v558 = vmax.f32 %v522, 0.0
      %v559 = vmax.f32 %v525, 0.0
      %560 = vst [vmem:[%s172] sm:$0xff] %v528
      %561 = vst [vmem:[%s172 + $0x8] sm:$0xff] %v529
      %562 = vst [vmem:[%s172 + $0x10] sm:$0xff] %v530
      %563 = vst [vmem:[%s172 + $0x18] sm:$0xff] %v531
      %564 = vst [vmem:[%s172 + $0x20] sm:$0xff] %v532
      %565 = vst [vmem:[%s172 + $0x28] sm:$0xff] %v533
      %566 = vst [vmem:[%s172 + $0x30] sm:$0xff] %v534
      %567 = vst [vmem:[%s172 + $0x38] sm:$0xff] %v535
      %568 = vst [vmem:[%s172 + $0x40] sm:$0xff] %v536
      %569 = vst [vmem:[%s172 + $0x48] sm:$0xff] %v537
      %570 = vst [vmem:[%s172 + $0x50] sm:$0xff] %v538
      %571 = vst [vmem:[%s172 + $0x58] sm:$0xff] %v539
      %572 = vst [vmem:[%s172 + $0x60] sm:$0xff] %v540
      %573 = vst [vmem:[%s172 + $0x68] sm:$0xff] %v541
      %574 = vst [vmem:[%s172 + $0x70] sm:$0xff] %v542
      %575 = vst [vmem:[%s172 + $0x78] sm:$0xff] %v543
      %576 = vst [vmem:[%s172 + $0x80] sm:$0xff] %v544
      %577 = vst [vmem:[%s172 + $0x88] sm:$0xff] %v545
      %578 = vst [vmem:[%s172 + $0x90] sm:$0xff] %v546
      %579 = vst [vmem:[%s172 + $0x98] sm:$0xff] %v547
      %580 = vst [vmem:[%s172 + $0xa0] sm:$0xff] %v548
      %581 = vst [vmem:[%s172 + $0xa8] sm:$0xff] %v549
      %582 = vst [vmem:[%s172 + $0xb0] sm:$0xff] %v550
      %583 = vst [vmem:[%s172 + $0xb8] sm:$0xff] %v551
      %584 = vst [vmem:[%s172 + $0xc0] sm:$0xff] %v552
      %585 = vst [vmem:[%s172 + $0xc8] sm:$0xff] %v553
      %586 = vst [vmem:[%s172 + $0xd0] sm:$0xff] %v554
      %587 = vst [vmem:[%s172 + $0xd8] sm:$0xff] %v555
      %588 = vst [vmem:[%s172 + $0xe0] sm:$0xff] %v556
      %589 = vst [vmem:[%s172 + $0xe8] sm:$0xff] %v557
      %590 = vst [vmem:[%s172 + $0xf0] sm:$0xff] %v558
      %591 = vst [vmem:[%s172 + $0xf8] sm:$0xff] %v559
      %s592 = smul.u32 32, %s14
      %p593 = scmp.lt.s32.totalorder %s592, 63
      %s594 = scalar_select %p593, %s592, 63
      %s595 = smul.addr %s594, 8
      %s596 = scalar_lea.vmem %s3, %s595
      // Predicated region
      $region33: #{beta_vae_forward.9} parent=31 // pred_check
        %p597 = pneg %p100
      $region34: #{beta_vae_forward.9} parent=31 // pred_check_branch
        %599 = sbr.rel (%p597) target = $region36
      $region35: #{beta_vae_forward.9} parent=31 // pred_region
        %s600 = smul.u32 32, %s14
      $region36: #{beta_vae_forward.9} parent=31 // pred_fallthru
        _
    $region32: #{beta_vae_forward.9} parent=5 // pred_fallthru
      _
    %p601 = scmp.le.s32.totalorder 2, %s9
    // Predicated region
    $region37: #{beta_vae_forward.9} parent=5 // pred_check
      %p602 = pneg %p601
    $region38: #{beta_vae_forward.9} parent=5 // pred_check_branch
      %604 = sbr.rel (%p602) target = $region40
    $region39: #{beta_vae_forward.9} parent=5 // pred_region
      %s605 = ssub.s32 %s9, 2
      // Predicated region
      $region41: #{beta_vae_forward.9} parent=39 // pred_check
        %p606 = pneg %p106
      $region42: #{beta_vae_forward.9} parent=39 // pred_check_branch
        %608 = sbr.rel (%p606) target = $region44
      $region43: #{beta_vae_forward.9} parent=39 // pred_region
        %s609 = smul.u32 32, %s15
        %p610 = scmp.lt.s32.totalorder %s609, 63
        %s611 = scalar_select %p610, %s609, 63
        %s612 = smul.addr %s611, 8
        %s613 = scalar_lea.vmem %s3, %s612
      $region44: #{beta_vae_forward.9} parent=39 // pred_fallthru
        _
    $region40: #{beta_vae_forward.9} parent=5 // pred_fallthru
      _
  $region6: #{beta_vae_forward.9} parent=0 // loop_footer
    %s13 = sadd.s32 1, %s9
  $region7: #{beta_vae_forward.9} parent=0 // loop_footer_branch
    %8 = sbr.rel target = $region3
  $region8: #{beta_vae_forward.9} parent=0 // loop_exit
    _

// kernel: beta_vae_forward.10
$region0: #{beta_vae_forward.10}
  #allocation0 [shape = 'u32[]', space=smem, size = 0x4, offset = 0x4, fixed_abs, tag = 'smem constant byte address 0x4 - core index']
  #allocation1 [shape = 'u32[144,128]{1,0:T(1,128)}', space=vmem, size = 0x12000, scoped, tag = 'internal scratch']
  %s0 = inlined_call_operand.vmem [shape: bf16[128,512], index: 0, kind: input, shape index: {}]
  %s1 = inlined_call_operand.vmem [shape: bf16[512,128], index: 1, kind: input, shape index: {}]
  %s2 = inlined_call_operand.vmem [shape: f32[1,128], index: 2, kind: input, shape index: {}]
  %s3 = inlined_call_operand.vmem [shape: f32[128,128], index: 3, kind: output, shape index: {}]
  %s4 = sld [smem:[#allocation0]]
  $region22: #{beta_vae_forward.10} parent=0
    _
  %s6 = ssub.s32 1, %s4
  %s7 = scalar_select 0, %s6, %s4
  // Predicated region
  $region2: #{beta_vae_forward.10} parent=0 // pred_check
    _
  $region3: #{beta_vae_forward.10} parent=0 // pred_check_branch
    %9 = sbr.rel (0) target = $region5
  $region4: #{beta_vae_forward.10} parent=0 // pred_region
    _
  $region5: #{beta_vae_forward.10} parent=0 // pred_fallthru
    _
  // Predicated region
  $region6: #{beta_vae_forward.10} parent=0 // pred_check
    _
  $region7: #{beta_vae_forward.10} parent=0 // pred_check_branch
    %11 = sbr.rel (0) target = $region9
  $region8: #{beta_vae_forward.10} parent=0 // pred_region
    _
  $region9: #{beta_vae_forward.10} parent=0 // pred_fallthru
    _
  // Predicated region
  $region10: #{beta_vae_forward.10} parent=0 // pred_check
    _
  $region11: #{beta_vae_forward.10} parent=0 // pred_check_branch
    %13 = sbr.rel (0) target = $region13
  $region12: #{beta_vae_forward.10} parent=0 // pred_region
    _
  $region13: #{beta_vae_forward.10} parent=0 // pred_fallthru
    _
  %v15 = vld [vmem:[%s0] sm:$0xff]
  %v16 = vld [vmem:[%s0 + $0x8] sm:$0xff]
  %v17 = vld [vmem:[%s0 + $0x10] sm:$0xff]
  %v18 = vld [vmem:[%s0 + $0x18] sm:$0xff]
  %v19 = vld [vmem:[%s0 + $0x20] sm:$0xff]
  %v20 = vld [vmem:[%s0 + $0x28] sm:$0xff]
  %v21 = vld [vmem:[%s0 + $0x30] sm:$0xff]
  %v22 = vld [vmem:[%s0 + $0x38] sm:$0xff]
  %v23 = vld [vmem:[%s0 + $0x40] sm:$0xff]
  %v24 = vld [vmem:[%s0 + $0x48] sm:$0xff]
  %v25 = vld [vmem:[%s0 + $0x50] sm:$0xff]
  %v26 = vld [vmem:[%s0 + $0x58] sm:$0xff]
  %v27 = vld [vmem:[%s0 + $0x60] sm:$0xff]
  %v28 = vld [vmem:[%s0 + $0x68] sm:$0xff]
  %v29 = vld [vmem:[%s0 + $0x70] sm:$0xff]
  %v30 = vld [vmem:[%s0 + $0x78] sm:$0xff]
  %v31 = vld [vmem:[%s0 + $0x80] sm:$0xff]
  %v32 = vld [vmem:[%s0 + $0x88] sm:$0xff]
  %v33 = vld [vmem:[%s0 + $0x90] sm:$0xff]
  %v34 = vld [vmem:[%s0 + $0x98] sm:$0xff]
  %v35 = vld [vmem:[%s0 + $0xa0] sm:$0xff]
  %v36 = vld [vmem:[%s0 + $0xa8] sm:$0xff]
  %v37 = vld [vmem:[%s0 + $0xb0] sm:$0xff]
  %v38 = vld [vmem:[%s0 + $0xb8] sm:$0xff]
  %v39 = vld [vmem:[%s0 + $0xc0] sm:$0xff]
  %v40 = vld [vmem:[%s0 + $0xc8] sm:$0xff]
  %v41 = vld [vmem:[%s0 + $0xd0] sm:$0xff]
  %v42 = vld [vmem:[%s0 + $0xd8] sm:$0xff]
  %v43 = vld [vmem:[%s0 + $0xe0] sm:$0xff]
  %v44 = vld [vmem:[%s0 + $0xe8] sm:$0xff]
  %v45 = vld [vmem:[%s0 + $0xf0] sm:$0xff]
  %v46 = vld [vmem:[%s0 + $0xf8] sm:$0xff]
  %v47 = vld [vmem:[%s1] sm:$0xf]
  %v48 = vld [vmem:[%s1 + $0x4] sm:$0xf]
  %v49 = vld [vmem:[%s1 + $0x8] sm:$0xf]
  %v50 = vld [vmem:[%s1 + $0xc] sm:$0xf]
  %v51 = vld [vmem:[%s1 + $0x10] sm:$0xf]
  %v52 = vld [vmem:[%s1 + $0x14] sm:$0xf]
  %v53 = vld [vmem:[%s1 + $0x18] sm:$0xf]
  %v54 = vld [vmem:[%s1 + $0x1c] sm:$0xf]
  %v55 = vld [vmem:[%s1 + $0x20] sm:$0xf]
  %v56 = vld [vmem:[%s1 + $0x24] sm:$0xf]
  %v57 = vld [vmem:[%s1 + $0x28] sm:$0xf]
  %v58 = vld [vmem:[%s1 + $0x2c] sm:$0xf]
  %v59 = vld [vmem:[%s1 + $0x30] sm:$0xf]
  %v60 = vld [vmem:[%s1 + $0x34] sm:$0xf]
  %v61 = vld [vmem:[%s1 + $0x38] sm:$0xf]
  %v62 = vld [vmem:[%s1 + $0x3c] sm:$0xf]
  %v63 = vld [vmem:[%s1 + $0x40] sm:$0xf]
  %v64 = vld [vmem:[%s1 + $0x44] sm:$0xf]
  %v65 = vld [vmem:[%s1 + $0x48] sm:$0xf]
  %v66 = vld [vmem:[%s1 + $0x4c] sm:$0xf]
  %v67 = vld [vmem:[%s1 + $0x50] sm:$0xf]
  %v68 = vld [vmem:[%s1 + $0x54] sm:$0xf]
  %v69 = vld [vmem:[%s1 + $0x58] sm:$0xf]
  %v70 = vld [vmem:[%s1 + $0x5c] sm:$0xf]
  %v71 = vld [vmem:[%s1 + $0x60] sm:$0xf]
  %v72 = vld [vmem:[%s1 + $0x64] sm:$0xf]
  %v73 = vld [vmem:[%s1 + $0x68] sm:$0xf]
  %v74 = vld [vmem:[%s1 + $0x6c] sm:$0xf]
  %v75 = vld [vmem:[%s1 + $0x70] sm:$0xf]
  %v76 = vld [vmem:[%s1 + $0x74] sm:$0xf]
  %v77 = vld [vmem:[%s1 + $0x78] sm:$0xf]
  %v78 = vld [vmem:[%s1 + $0x7c] sm:$0xf]
  %v79 = vld [vmem:[%s1 + $0x80] sm:$0xf]
  %v80 = vld [vmem:[%s1 + $0x84] sm:$0xf]
  %v81 = vld [vmem:[%s1 + $0x88] sm:$0xf]
  %v82 = vld [vmem:[%s1 + $0x8c] sm:$0xf]
  %v83 = vld [vmem:[%s1 + $0x90] sm:$0xf]
  %v84 = vld [vmem:[%s1 + $0x94] sm:$0xf]
  %v85 = vld [vmem:[%s1 + $0x98] sm:$0xf]
  %v86 = vld [vmem:[%s1 + $0x9c] sm:$0xf]
  %v87 = vld [vmem:[%s1 + $0xa0] sm:$0xf]
  %v88 = vld [vmem:[%s1 + $0xa4] sm:$0xf]
  %v89 = vld [vmem:[%s1 + $0xa8] sm:$0xf]
  %v90 = vld [vmem:[%s1 + $0xac] sm:$0xf]
  %v91 = vld [vmem:[%s1 + $0xb0] sm:$0xf]
  %v92 = vld [vmem:[%s1 + $0xb4] sm:$0xf]
  %v93 = vld [vmem:[%s1 + $0xb8] sm:$0xf]
  %v94 = vld [vmem:[%s1 + $0xbc] sm:$0xf]
  %v95 = vld [vmem:[%s1 + $0xc0] sm:$0xf]
  %v96 = vld [vmem:[%s1 + $0xc4] sm:$0xf]
  %v97 = vld [vmem:[%s1 + $0xc8] sm:$0xf]
  %v98 = vld [vmem:[%s1 + $0xcc] sm:$0xf]
  %v99 = vld [vmem:[%s1 + $0xd0] sm:$0xf]
  %v100 = vld [vmem:[%s1 + $0xd4] sm:$0xf]
  %v101 = vld [vmem:[%s1 + $0xd8] sm:$0xf]
  %v102 = vld [vmem:[%s1 + $0xdc] sm:$0xf]
  %v103 = vld [vmem:[%s1 + $0xe0] sm:$0xf]
  %v104 = vld [vmem:[%s1 + $0xe4] sm:$0xf]
  %v105 = vld [vmem:[%s1 + $0xe8] sm:$0xf]
  %v106 = vld [vmem:[%s1 + $0xec] sm:$0xf]
  %v107 = vld [vmem:[%s1 + $0xf0] sm:$0xf]
  %v108 = vld [vmem:[%s1 + $0xf4] sm:$0xf]
  %v109 = vld [vmem:[%s1 + $0xf8] sm:$0xf]
  %v110 = vld [vmem:[%s1 + $0xfc] sm:$0xf]
  %v111 = vld [vmem:[%s2] sm:$0x1]
  %v113 = vlaneseq
  %v114 = vshrl.u32 %v113, 7
  %v115 = vsub.s32 0, %v114
  %v116 = vrot.slane %v111, %v115
  %v150 = vunpack.c.l.b16 %v15
  %v151 = vunpack.c.h.b16 %v15
  %v152 = vunpack.c.l.b16 %v16
  %v153 = vunpack.c.h.b16 %v16
  %v154 = vunpack.c.l.b16 %v17
  %v155 = vunpack.c.h.b16 %v17
  %v156 = vunpack.c.l.b16 %v18
  %v157 = vunpack.c.h.b16 %v18
  %v158 = vunpack.c.l.b16 %v19
  %v159 = vunpack.c.h.b16 %v19
  %v160 = vunpack.c.l.b16 %v20
  %v161 = vunpack.c.h.b16 %v20
  %v162 = vunpack.c.l.b16 %v21
  %v163 = vunpack.c.h.b16 %v21
  %v164 = vunpack.c.l.b16 %v22
  %v165 = vunpack.c.h.b16 %v22
  %v166 = vunpack.c.l.b16 %v23
  %v167 = vunpack.c.h.b16 %v23
  %v168 = vunpack.c.l.b16 %v24
  %v169 = vunpack.c.h.b16 %v24
  %v170 = vunpack.c.l.b16 %v25
  %v171 = vunpack.c.h.b16 %v25
  %v172 = vunpack.c.l.b16 %v26
  %v173 = vunpack.c.h.b16 %v26
  %v174 = vunpack.c.l.b16 %v27
  %v175 = vunpack.c.h.b16 %v27
  %v176 = vunpack.c.l.b16 %v28
  %v177 = vunpack.c.h.b16 %v28
  %v178 = vunpack.c.l.b16 %v29
  %v179 = vunpack.c.h.b16 %v29
  %v180 = vunpack.c.l.b16 %v30
  %v181 = vunpack.c.h.b16 %v30
  %v182 = vunpack.c.l.b16 %v31
  %v183 = vunpack.c.h.b16 %v31
  %v184 = vunpack.c.l.b16 %v32
  %v185 = vunpack.c.h.b16 %v32
  %v186 = vunpack.c.l.b16 %v33
  %v187 = vunpack.c.h.b16 %v33
  %v188 = vunpack.c.l.b16 %v34
  %v189 = vunpack.c.h.b16 %v34
  %v190 = vunpack.c.l.b16 %v35
  %v191 = vunpack.c.h.b16 %v35
  %v192 = vunpack.c.l.b16 %v36
  %v193 = vunpack.c.h.b16 %v36
  %v194 = vunpack.c.l.b16 %v37
  %v195 = vunpack.c.h.b16 %v37
  %v196 = vunpack.c.l.b16 %v38
  %v197 = vunpack.c.h.b16 %v38
  %v198 = vunpack.c.l.b16 %v39
  %v199 = vunpack.c.h.b16 %v39
  %v200 = vunpack.c.l.b16 %v40
  %v201 = vunpack.c.h.b16 %v40
  %v202 = vunpack.c.l.b16 %v41
  %v203 = vunpack.c.h.b16 %v41
  %v204 = vunpack.c.l.b16 %v42
  %v205 = vunpack.c.h.b16 %v42
  %v206 = vunpack.c.l.b16 %v43
  %v207 = vunpack.c.h.b16 %v43
  %v208 = vunpack.c.l.b16 %v44
  %v209 = vunpack.c.h.b16 %v44
  %v210 = vunpack.c.l.b16 %v45
  %v211 = vunpack.c.h.b16 %v45
  %v212 = vunpack.c.l.b16 %v46
  %v213 = vunpack.c.h.b16 %v46
  %v214 = vpack.c.b16 %v154, %v150
  %v215 = vpack.c.b16 %v155, %v151
  %v216 = vpack.c.b16 %v156, %v152
  %v217 = vpack.c.b16 %v157, %v153
  %v218 = vpack.c.b16 %v162, %v158
  %v219 = vpack.c.b16 %v163, %v159
  %v220 = vpack.c.b16 %v164, %v160
  %v221 = vpack.c.b16 %v165, %v161
  %v222 = vpack.c.b16 %v170, %v166
  %v223 = vpack.c.b16 %v171, %v167
  %v224 = vpack.c.b16 %v172, %v168
  %v225 = vpack.c.b16 %v173, %v169
  %v226 = vpack.c.b16 %v178, %v174
  %v227 = vpack.c.b16 %v179, %v175
  %v228 = vpack.c.b16 %v180, %v176
  %v229 = vpack.c.b16 %v181, %v177
  %v230 = vpack.c.b16 %v186, %v182
  %v231 = vpack.c.b16 %v187, %v183
  %v232 = vpack.c.b16 %v188, %v184
  %v233 = vpack.c.b16 %v189, %v185
  %v234 = vpack.c.b16 %v194, %v190
  %v235 = vpack.c.b16 %v195, %v191
  %v236 = vpack.c.b16 %v196, %v192
  %v237 = vpack.c.b16 %v197, %v193
  %v238 = vpack.c.b16 %v202, %v198
  %v239 = vpack.c.b16 %v203, %v199
  %v240 = vpack.c.b16 %v204, %v200
  %v241 = vpack.c.b16 %v205, %v201
  %v242 = vpack.c.b16 %v210, %v206
  %v243 = vpack.c.b16 %v211, %v207
  %v244 = vpack.c.b16 %v212, %v208
  %v245 = vpack.c.b16 %v213, %v209
  %v342 = vunpack.c.l.b16 %v47
  %v343 = vunpack.c.l.b16 %v48
  %v344 = vunpack.c.l.b16 %v49
  %v345 = vunpack.c.l.b16 %v50
  %v346 = vunpack.c.l.b16 %v51
  %v347 = vunpack.c.l.b16 %v52
  %v348 = vunpack.c.l.b16 %v53
  %v349 = vunpack.c.l.b16 %v54
  %v350 = vunpack.c.l.b16 %v55
  %v351 = vunpack.c.l.b16 %v56
  %v352 = vunpack.c.l.b16 %v57
  %v353 = vunpack.c.l.b16 %v58
  %v354 = vunpack.c.l.b16 %v59
  %v355 = vunpack.c.l.b16 %v60
  %v356 = vunpack.c.l.b16 %v61
  %v357 = vunpack.c.l.b16 %v62
  %v358 = vunpack.c.l.b16 %v63
  %v359 = vunpack.c.l.b16 %v64
  %v360 = vunpack.c.l.b16 %v65
  %v361 = vunpack.c.l.b16 %v66
  %v362 = vunpack.c.l.b16 %v67
  %v363 = vunpack.c.l.b16 %v68
  %v364 = vunpack.c.l.b16 %v69
  %v365 = vunpack.c.l.b16 %v70
  %v366 = vunpack.c.l.b16 %v71
  %v367 = vunpack.c.l.b16 %v72
  %v368 = vunpack.c.l.b16 %v73
  %v369 = vunpack.c.l.b16 %v74
  %v370 = vunpack.c.l.b16 %v75
  %v371 = vunpack.c.l.b16 %v76
  %v372 = vunpack.c.l.b16 %v77
  %v373 = vunpack.c.l.b16 %v78
  %v374 = vunpack.c.l.b16 %v79
  %v375 = vunpack.c.l.b16 %v80
  %v376 = vunpack.c.l.b16 %v81
  %v377 = vunpack.c.l.b16 %v82
  %v378 = vunpack.c.l.b16 %v83
  %v379 = vunpack.c.l.b16 %v84
  %v380 = vunpack.c.l.b16 %v85
  %v381 = vunpack.c.l.b16 %v86
  %v382 = vunpack.c.l.b16 %v87
  %v383 = vunpack.c.l.b16 %v88
  %v384 = vunpack.c.l.b16 %v89
  %v385 = vunpack.c.l.b16 %v90
  %v386 = vunpack.c.l.b16 %v91
  %v387 = vunpack.c.l.b16 %v92
  %v388 = vunpack.c.l.b16 %v93
  %v389 = vunpack.c.l.b16 %v94
  %v390 = vunpack.c.l.b16 %v95
  %v391 = vunpack.c.l.b16 %v96
  %v392 = vunpack.c.l.b16 %v97
  %v393 = vunpack.c.l.b16 %v98
  %v394 = vunpack.c.l.b16 %v99
  %v395 = vunpack.c.l.b16 %v100
  %v396 = vunpack.c.l.b16 %v101
  %v397 = vunpack.c.l.b16 %v102
  %v398 = vunpack.c.l.b16 %v103
  %v399 = vunpack.c.l.b16 %v104
  %v400 = vunpack.c.l.b16 %v105
  %v401 = vunpack.c.l.b16 %v106
  %v402 = vunpack.c.l.b16 %v107
  %v403 = vunpack.c.l.b16 %v108
  %v404 = vunpack.c.l.b16 %v109
  %v405 = vunpack.c.l.b16 %v110
  %v406 = vpack.c.b16 %v343, %v342
  %v407 = vpack.c.b16 %v345, %v344
  %v408 = vpack.c.b16 %v347, %v346
  %v409 = vpack.c.b16 %v349, %v348
  %v410 = vpack.c.b16 %v351, %v350
  %v411 = vpack.c.b16 %v353, %v352
  %v412 = vpack.c.b16 %v355, %v354
  %v413 = vpack.c.b16 %v357, %v356
  %v414 = vpack.c.b16 %v359, %v358
  %v415 = vpack.c.b16 %v361, %v360
  %v416 = vpack.c.b16 %v363, %v362
  %v417 = vpack.c.b16 %v365, %v364
  %v418 = vpack.c.b16 %v367, %v366
  %v419 = vpack.c.b16 %v369, %v368
  %v420 = vpack.c.b16 %v371, %v370
  %v421 = vpack.c.b16 %v373, %v372
  %v422 = vpack.c.b16 %v375, %v374
  %v423 = vpack.c.b16 %v377, %v376
  %v424 = vpack.c.b16 %v379, %v378
  %v425 = vpack.c.b16 %v381, %v380
  %v426 = vpack.c.b16 %v383, %v382
  %v427 = vpack.c.b16 %v385, %v384
  %v428 = vpack.c.b16 %v387, %v386
  %v429 = vpack.c.b16 %v389, %v388
  %v430 = vpack.c.b16 %v391, %v390
  %v431 = vpack.c.b16 %v393, %v392
  %v432 = vpack.c.b16 %v395, %v394
  %v433 = vpack.c.b16 %v397, %v396
  %v434 = vpack.c.b16 %v399, %v398
  %v435 = vpack.c.b16 %v401, %v400
  %v436 = vpack.c.b16 %v403, %v402
  %v437 = vpack.c.b16 %v405, %v404
  %470 = vmatprep.subr.bf16.mxu0 0
  %471 = vmatpush1.bf16.msra.mxu0 %v413
  %472 = vmatprep.subr.bf16.mxu0 0
  %473 = vmatpush1.bf16.msra.mxu0 %v412
  %474 = vmatprep.subr.bf16.mxu0 0
  %475 = vmatpush1.bf16.msra.mxu0 %v411
  %476 = vmatprep.subr.bf16.mxu0 0
  %477 = vmatpush1.bf16.msra.mxu0 %v410
  %478 = vmatprep.subr.bf16.mxu0 0
  %479 = vmatpush1.bf16.msra.mxu0 %v409
  %480 = vmatprep.subr.bf16.mxu0 0
  %481 = vmatpush1.bf16.msra.mxu0 %v408
  %482 = vmatprep.subr.bf16.mxu0 0
  %483 = vmatpush1.bf16.msra.mxu0 %v407
  %484 = vmatprep.subr.bf16.mxu0 0
  %485 = vmatpush1.bf16.msra.mxu0 %v406
  %486 = vmatprep.subr.bf16.mxu0 0
  %487 = vmatpush2.bf16.msra.mxu0 %v421
  %488 = vmatprep.subr.bf16.mxu0 0
  %489 = vmatpush2.bf16.msra.mxu0 %v420
  %490 = vmatprep.subr.bf16.mxu0 0
  %491 = vmatpush2.bf16.msra.mxu0 %v419
  %492 = vmatprep.subr.bf16.mxu0 0
  %493 = vmatpush2.bf16.msra.mxu0 %v418
  %494 = vmatprep.subr.bf16.mxu0 0
  %495 = vmatpush2.bf16.msra.mxu0 %v417
  %496 = vmatprep.subr.bf16.mxu0 0
  %497 = vmatpush2.bf16.msra.mxu0 %v416
  %498 = vmatprep.subr.bf16.mxu0 0
  %499 = vmatpush2.bf16.msra.mxu0 %v415
  %500 = vmatprep.subr.bf16.mxu0 0
  %501 = vmatpush2.bf16.msra.mxu0 %v414
  %502 = vmatprep.mubr.bf16.mxu0 %v215
  %503 = vmatmul.mubr.bf16.gmra.mxu0 %v214
  %v504 = vpop.f32.mrf.mxu0
  %v505 = vadd.f32 %v116, %v504
  %v506 = vpop.f32.mrf.mxu0
  %v507 = vpop.f32.mrf.mxu0
  %v508 = vadd.f32 %v116, %v507
  %v509 = vpop.f32.mrf.mxu0
  %510 = vmatprep.mubr.bf16.mxu0 %v219
  %511 = vmatmul.mubr.bf16.gmra.mxu0 %v218
  %v512 = vpop.f32.mrf.mxu0
  %v513 = vadd.f32 %v116, %v512
  %v514 = vpop.f32.mrf.mxu0
  %v515 = vpop.f32.mrf.mxu0
  %v516 = vadd.f32 %v116, %v515
  %v517 = vpop.f32.mrf.mxu0
  %518 = vmatprep.mubr.bf16.mxu0 %v223
  %519 = vmatmul.mubr.bf16.gmra.mxu0 %v222
  %v520 = vpop.f32.mrf.mxu0
  %v521 = vadd.f32 %v116, %v520
  %v522 = vpop.f32.mrf.mxu0
  %v523 = vpop.f32.mrf.mxu0
  %v524 = vadd.f32 %v116, %v523
  %v525 = vpop.f32.mrf.mxu0
  %526 = vmatprep.mubr.bf16.mxu0 %v227
  %527 = vmatmul.mubr.bf16.gmra.mxu0 %v226
  %v528 = vpop.f32.mrf.mxu0
  %v529 = vadd.f32 %v116, %v528
  %v530 = vpop.f32.mrf.mxu0
  %v531 = vpop.f32.mrf.mxu0
  %v532 = vadd.f32 %v116, %v531
  %v533 = vpop.f32.mrf.mxu0
  %534 = vmatprep.mubr.bf16.mxu0 %v231
  %535 = vmatmul.mubr.bf16.gmra.mxu0 %v230
  %v536 = vpop.f32.mrf.mxu0
  %v537 = vadd.f32 %v116, %v536
  %v538 = vpop.f32.mrf.mxu0
  %v539 = vpop.f32.mrf.mxu0
  %v540 = vadd.f32 %v116, %v539
  %v541 = vpop.f32.mrf.mxu0
  %542 = vmatprep.mubr.bf16.mxu0 %v235
  %543 = vmatmul.mubr.bf16.gmra.mxu0 %v234
  %v544 = vpop.f32.mrf.mxu0
  %v545 = vadd.f32 %v116, %v544
  %v546 = vpop.f32.mrf.mxu0
  %v547 = vpop.f32.mrf.mxu0
  %v548 = vadd.f32 %v116, %v547
  %v549 = vpop.f32.mrf.mxu0
  %550 = vmatprep.mubr.bf16.mxu0 %v239
  %551 = vmatmul.mubr.bf16.gmra.mxu0 %v238
  %v552 = vpop.f32.mrf.mxu0
  %v553 = vadd.f32 %v116, %v552
  %v554 = vpop.f32.mrf.mxu0
  %v555 = vpop.f32.mrf.mxu0
  %v556 = vadd.f32 %v116, %v555
  %v557 = vpop.f32.mrf.mxu0
  %558 = vmatprep.mubr.bf16.mxu0 %v243
  %559 = vmatmul.mubr.bf16.gmra.mxu0 %v242
  %v560 = vpop.f32.mrf.mxu0
  %v561 = vadd.f32 %v116, %v560
  %v562 = vpop.f32.mrf.mxu0
  %v563 = vpop.f32.mrf.mxu0
  %v564 = vadd.f32 %v116, %v563
  %v565 = vpop.f32.mrf.mxu0
  %566 = vdwg.mxu0
  %567 = vmatprep.subr.bf16.mxu0 0
  %568 = vmatpush1.bf16.msra.mxu0 %v429
  %569 = vmatprep.subr.bf16.mxu0 0
  %570 = vmatpush1.bf16.msra.mxu0 %v428
  %571 = vmatprep.subr.bf16.mxu0 0
  %572 = vmatpush1.bf16.msra.mxu0 %v427
  %573 = vmatprep.subr.bf16.mxu0 0
  %574 = vmatpush1.bf16.msra.mxu0 %v426
  %575 = vmatprep.subr.bf16.mxu0 0
  %576 = vmatpush1.bf16.msra.mxu0 %v425
  %577 = vmatprep.subr.bf16.mxu0 0
  %578 = vmatpush1.bf16.msra.mxu0 %v424
  %579 = vmatprep.subr.bf16.mxu0 0
  %580 = vmatpush1.bf16.msra.mxu0 %v423
  %581 = vmatprep.subr.bf16.mxu0 0
  %582 = vmatpush1.bf16.msra.mxu0 %v422
  %583 = vmatprep.subr.bf16.mxu0 0
  %584 = vmatpush2.bf16.msra.mxu0 %v437
  %585 = vmatprep.subr.bf16.mxu0 0
  %586 = vmatpush2.bf16.msra.mxu0 %v436
  %587 = vmatprep.subr.bf16.mxu0 0
  %588 = vmatpush2.bf16.msra.mxu0 %v435
  %589 = vmatprep.subr.bf16.mxu0 0
  %590 = vmatpush2.bf16.msra.mxu0 %v434
  %591 = vmatprep.subr.bf16.mxu0 0
  %592 = vmatpush2.bf16.msra.mxu0 %v433
  %593 = vmatprep.subr.bf16.mxu0 0
  %594 = vmatpush2.bf16.msra.mxu0 %v432
  %595 = vmatprep.subr.bf16.mxu0 0
  %596 = vmatpush2.bf16.msra.mxu0 %v431
  %597 = vmatprep.subr.bf16.mxu0 0
  %598 = vmatpush2.bf16.msra.mxu0 %v430
  %599 = vmatprep.mubr.bf16.mxu0 %v217
  %600 = vmatmul.mubr.bf16.gmra.mxu0 %v216
  %v601 = vpop.f32.mrf.mxu0
  %v602 = vadd.f32 %v505, %v601
  %v603 = vpop.f32.mrf.mxu0
  %v604 = vpop.f32.mrf.mxu0
  %v605 = vadd.f32 %v508, %v604
  %v606 = vpop.f32.mrf.mxu0
  %607 = vmatprep.mubr.bf16.mxu0 %v221
  %608 = vmatmul.mubr.bf16.gmra.mxu0 %v220
  %v609 = vpop.f32.mrf.mxu0
  %v610 = vadd.f32 %v513, %v609
  %v611 = vpop.f32.mrf.mxu0
  %v612 = vpop.f32.mrf.mxu0
  %v613 = vadd.f32 %v516, %v612
  %v614 = vpop.f32.mrf.mxu0
  %615 = vmatprep.mubr.bf16.mxu0 %v225
  %616 = vmatmul.mubr.bf16.gmra.mxu0 %v224
  %v617 = vpop.f32.mrf.mxu0
  %v618 = vadd.f32 %v521, %v617
  %v619 = vpop.f32.mrf.mxu0
  %v620 = vpop.f32.mrf.mxu0
  %v621 = vadd.f32 %v524, %v620
  %v622 = vpop.f32.mrf.mxu0
  %623 = vmatprep.mubr.bf16.mxu0 %v229
  %624 = vmatmul.mubr.bf16.gmra.mxu0 %v228
  %v625 = vpop.f32.mrf.mxu0
  %v626 = vadd.f32 %v529, %v625
  %v627 = vpop.f32.mrf.mxu0
  %v628 = vpop.f32.mrf.mxu0
  %v629 = vadd.f32 %v532, %v628
  %v630 = vpop.f32.mrf.mxu0
  %631 = vmatprep.mubr.bf16.mxu0 %v233
  %632 = vmatmul.mubr.bf16.gmra.mxu0 %v232
  %v633 = vpop.f32.mrf.mxu0
  %v634 = vadd.f32 %v537, %v633
  %v635 = vpop.f32.mrf.mxu0
  %v636 = vpop.f32.mrf.mxu0
  %v637 = vadd.f32 %v540, %v636
  %v638 = vpop.f32.mrf.mxu0
  %639 = vmatprep.mubr.bf16.mxu0 %v237
  %640 = vmatmul.mubr.bf16.gmra.mxu0 %v236
  %v641 = vpop.f32.mrf.mxu0
  %v642 = vadd.f32 %v545, %v641
  %v643 = vpop.f32.mrf.mxu0
  %v644 = vpop.f32.mrf.mxu0
  %v645 = vadd.f32 %v548, %v644
  %v646 = vpop.f32.mrf.mxu0
  %647 = vmatprep.mubr.bf16.mxu0 %v241
  %648 = vmatmul.mubr.bf16.gmra.mxu0 %v240
  %v649 = vpop.f32.mrf.mxu0
  %v650 = vadd.f32 %v553, %v649
  %v651 = vpop.f32.mrf.mxu0
  %v652 = vpop.f32.mrf.mxu0
  %v653 = vadd.f32 %v556, %v652
  %v654 = vpop.f32.mrf.mxu0
  %655 = vmatprep.mubr.bf16.mxu0 %v245
  %656 = vmatmul.mubr.bf16.gmra.mxu0 %v244
  %v657 = vpop.f32.mrf.mxu0
  %v658 = vadd.f32 %v561, %v657
  %v659 = vpop.f32.mrf.mxu0
  %v660 = vpop.f32.mrf.mxu0
  %v661 = vadd.f32 %v564, %v660
  %v662 = vpop.f32.mrf.mxu0
  %663 = vdwg.mxu0
  %v664 = vmax.f32 %v602, 0.0
  %v665 = vmax.f32 %v605, 0.0
  %v666 = vmax.f32 %v610, 0.0
  %v667 = vmax.f32 %v613, 0.0
  %v668 = vmax.f32 %v618, 0.0
  %v669 = vmax.f32 %v621, 0.0
  %v670 = vmax.f32 %v626, 0.0
  %v671 = vmax.f32 %v629, 0.0
  %v672 = vmax.f32 %v634, 0.0
  %v673 = vmax.f32 %v637, 0.0
  %v674 = vmax.f32 %v642, 0.0
  %v675 = vmax.f32 %v645, 0.0
  %v676 = vmax.f32 %v650, 0.0
  %v677 = vmax.f32 %v653, 0.0
  %v678 = vmax.f32 %v658, 0.0
  %v679 = vmax.f32 %v661, 0.0
  %680 = vst [vmem:[%s3] sm:$0xff] %v664
  %681 = vst [vmem:[%s3 + $0x8] sm:$0xff] %v665
  %682 = vst [vmem:[%s3 + $0x10] sm:$0xff] %v666
  %683 = vst [vmem:[%s3 + $0x18] sm:$0xff] %v667
  %684 = vst [vmem:[%s3 + $0x20] sm:$0xff] %v668
  %685 = vst [vmem:[%s3 + $0x28] sm:$0xff] %v669
  %686 = vst [vmem:[%s3 + $0x30] sm:$0xff] %v670
  %687 = vst [vmem:[%s3 + $0x38] sm:$0xff] %v671
  %688 = vst [vmem:[%s3 + $0x40] sm:$0xff] %v672
  %689 = vst [vmem:[%s3 + $0x48] sm:$0xff] %v673
  %690 = vst [vmem:[%s3 + $0x50] sm:$0xff] %v674
  %691 = vst [vmem:[%s3 + $0x58] sm:$0xff] %v675
  %692 = vst [vmem:[%s3 + $0x60] sm:$0xff] %v676
  %693 = vst [vmem:[%s3 + $0x68] sm:$0xff] %v677
  %694 = vst [vmem:[%s3 + $0x70] sm:$0xff] %v678
  %695 = vst [vmem:[%s3 + $0x78] sm:$0xff] %v679
  // Predicated region
  $region14: #{beta_vae_forward.10} parent=0 // pred_check
    _
  $region15: #{beta_vae_forward.10} parent=0 // pred_check_branch
    %697 = sbr.rel (0) target = $region17
  $region16: #{beta_vae_forward.10} parent=0 // pred_region
    _
  $region17: #{beta_vae_forward.10} parent=0 // pred_fallthru
    _
  // Predicated region
  $region18: #{beta_vae_forward.10} parent=0 // pred_check
    _
  $region19: #{beta_vae_forward.10} parent=0 // pred_check_branch
    %699 = sbr.rel (0) target = $region21
  $region20: #{beta_vae_forward.10} parent=0 // pred_region
    _
  $region21: #{beta_vae_forward.10} parent=0 // pred_fallthru
    _

// kernel: beta_vae_forward.11
$region0: #{beta_vae_forward.11}
  #allocation0 [shape = 'u32[]', space=smem, size = 0x4, offset = 0x4, fixed_abs, tag = 'smem constant byte address 0x4 - core index']
  #allocation1 [shape = 'u32[144,128]{1,0:T(1,128)}', space=vmem, size = 0x12000, scoped, tag = 'internal scratch']
  %s0 = inlined_call_operand.vmem [shape: bf16[32,1024], index: 0, kind: input, shape index: {}]
  %s1 = inlined_call_operand.vmem [shape: bf16[1024,128], index: 1, kind: input, shape index: {}]
  %s2 = inlined_call_operand.vmem [shape: f32[1,128], index: 2, kind: input, shape index: {}]
  %s3 = inlined_call_operand.vmem [shape: f32[32,128], index: 3, kind: output, shape index: {}]
  %s4 = sld [smem:[#allocation0]]
  $region22: #{beta_vae_forward.11} parent=0
    _
  %s6 = ssub.s32 1, %s4
  %s7 = scalar_select 0, %s6, %s4
  // Predicated region
  $region2: #{beta_vae_forward.11} parent=0 // pred_check
    _
  $region3: #{beta_vae_forward.11} parent=0 // pred_check_branch
    %9 = sbr.rel (0) target = $region5
  $region4: #{beta_vae_forward.11} parent=0 // pred_region
    _
  $region5: #{beta_vae_forward.11} parent=0 // pred_fallthru
    _
  // Predicated region
  $region6: #{beta_vae_forward.11} parent=0 // pred_check
    _
  $region7: #{beta_vae_forward.11} parent=0 // pred_check_branch
    %11 = sbr.rel (0) target = $region9
  $region8: #{beta_vae_forward.11} parent=0 // pred_region
    _
  $region9: #{beta_vae_forward.11} parent=0 // pred_fallthru
    _
  // Predicated region
  $region10: #{beta_vae_forward.11} parent=0 // pred_check
    _
  $region11: #{beta_vae_forward.11} parent=0 // pred_check_branch
    %13 = sbr.rel (0) target = $region13
  $region12: #{beta_vae_forward.11} parent=0 // pred_region
    _
  $region13: #{beta_vae_forward.11} parent=0 // pred_fallthru
    _
  %v15 = vld [vmem:[%s0] sm:$0xff]
  %v16 = vld [vmem:[%s0 + $0x8] sm:$0xff]
  %v17 = vld [vmem:[%s0 + $0x10] sm:$0xff]
  %v18 = vld [vmem:[%s0 + $0x18] sm:$0xff]
  %v19 = vld [vmem:[%s0 + $0x20] sm:$0xff]
  %v20 = vld [vmem:[%s0 + $0x28] sm:$0xff]
  %v21 = vld [vmem:[%s0 + $0x30] sm:$0xff]
  %v22 = vld [vmem:[%s0 + $0x38] sm:$0xff]
  %v23 = vld [vmem:[%s0 + $0x40] sm:$0xff]
  %v24 = vld [vmem:[%s0 + $0x48] sm:$0xff]
  %v25 = vld [vmem:[%s0 + $0x50] sm:$0xff]
  %v26 = vld [vmem:[%s0 + $0x58] sm:$0xff]
  %v27 = vld [vmem:[%s0 + $0x60] sm:$0xff]
  %v28 = vld [vmem:[%s0 + $0x68] sm:$0xff]
  %v29 = vld [vmem:[%s0 + $0x70] sm:$0xff]
  %v30 = vld [vmem:[%s0 + $0x78] sm:$0xff]
  %v31 = vld [vmem:[%s1] sm:$0xf]
  %v32 = vld [vmem:[%s1 + $0x4] sm:$0xf]
  %v33 = vld [vmem:[%s1 + $0x8] sm:$0xf]
  %v34 = vld [vmem:[%s1 + $0xc] sm:$0xf]
  %v35 = vld [vmem:[%s1 + $0x10] sm:$0xf]
  %v36 = vld [vmem:[%s1 + $0x14] sm:$0xf]
  %v37 = vld [vmem:[%s1 + $0x18] sm:$0xf]
  %v38 = vld [vmem:[%s1 + $0x1c] sm:$0xf]
  %v39 = vld [vmem:[%s1 + $0x20] sm:$0xf]
  %v40 = vld [vmem:[%s1 + $0x24] sm:$0xf]
  %v41 = vld [vmem:[%s1 + $0x28] sm:$0xf]
  %v42 = vld [vmem:[%s1 + $0x2c] sm:$0xf]
  %v43 = vld [vmem:[%s1 + $0x30] sm:$0xf]
  %v44 = vld [vmem:[%s1 + $0x34] sm:$0xf]
  %v45 = vld [vmem:[%s1 + $0x38] sm:$0xf]
  %v46 = vld [vmem:[%s1 + $0x3c] sm:$0xf]
  %v47 = vld [vmem:[%s1 + $0x40] sm:$0xf]
  %v48 = vld [vmem:[%s1 + $0x44] sm:$0xf]
  %v49 = vld [vmem:[%s1 + $0x48] sm:$0xf]
  %v50 = vld [vmem:[%s1 + $0x4c] sm:$0xf]
  %v51 = vld [vmem:[%s1 + $0x50] sm:$0xf]
  %v52 = vld [vmem:[%s1 + $0x54] sm:$0xf]
  %v53 = vld [vmem:[%s1 + $0x58] sm:$0xf]
  %v54 = vld [vmem:[%s1 + $0x5c] sm:$0xf]
  %v55 = vld [vmem:[%s1 + $0x60] sm:$0xf]
  %v56 = vld [vmem:[%s1 + $0x64] sm:$0xf]
  %v57 = vld [vmem:[%s1 + $0x68] sm:$0xf]
  %v58 = vld [vmem:[%s1 + $0x6c] sm:$0xf]
  %v59 = vld [vmem:[%s1 + $0x70] sm:$0xf]
  %v60 = vld [vmem:[%s1 + $0x74] sm:$0xf]
  %v61 = vld [vmem:[%s1 + $0x78] sm:$0xf]
  %v62 = vld [vmem:[%s1 + $0x7c] sm:$0xf]
  %v63 = vld [vmem:[%s1 + $0x80] sm:$0xf]
  %v64 = vld [vmem:[%s1 + $0x84] sm:$0xf]
  %v65 = vld [vmem:[%s1 + $0x88] sm:$0xf]
  %v66 = vld [vmem:[%s1 + $0x8c] sm:$0xf]
  %v67 = vld [vmem:[%s1 + $0x90] sm:$0xf]
  %v68 = vld [vmem:[%s1 + $0x94] sm:$0xf]
  %v69 = vld [vmem:[%s1 + $0x98] sm:$0xf]
  %v70 = vld [vmem:[%s1 + $0x9c] sm:$0xf]
  %v71 = vld [vmem:[%s1 + $0xa0] sm:$0xf]
  %v72 = vld [vmem:[%s1 + $0xa4] sm:$0xf]
  %v73 = vld [vmem:[%s1 + $0xa8] sm:$0xf]
  %v74 = vld [vmem:[%s1 + $0xac] sm:$0xf]
  %v75 = vld [vmem:[%s1 + $0xb0] sm:$0xf]
  %v76 = vld [vmem:[%s1 + $0xb4] sm:$0xf]
  %v77 = vld [vmem:[%s1 + $0xb8] sm:$0xf]
  %v78 = vld [vmem:[%s1 + $0xbc] sm:$0xf]
  %v79 = vld [vmem:[%s1 + $0xc0] sm:$0xf]
  %v80 = vld [vmem:[%s1 + $0xc4] sm:$0xf]
  %v81 = vld [vmem:[%s1 + $0xc8] sm:$0xf]
  %v82 = vld [vmem:[%s1 + $0xcc] sm:$0xf]
  %v83 = vld [vmem:[%s1 + $0xd0] sm:$0xf]
  %v84 = vld [vmem:[%s1 + $0xd4] sm:$0xf]
  %v85 = vld [vmem:[%s1 + $0xd8] sm:$0xf]
  %v86 = vld [vmem:[%s1 + $0xdc] sm:$0xf]
  %v87 = vld [vmem:[%s1 + $0xe0] sm:$0xf]
  %v88 = vld [vmem:[%s1 + $0xe4] sm:$0xf]
  %v89 = vld [vmem:[%s1 + $0xe8] sm:$0xf]
  %v90 = vld [vmem:[%s1 + $0xec] sm:$0xf]
  %v91 = vld [vmem:[%s1 + $0xf0] sm:$0xf]
  %v92 = vld [vmem:[%s1 + $0xf4] sm:$0xf]
  %v93 = vld [vmem:[%s1 + $0xf8] sm:$0xf]
  %v94 = vld [vmem:[%s1 + $0xfc] sm:$0xf]
  %v95 = vld [vmem:[%s1 + $0x100] sm:$0xf]
  %v96 = vld [vmem:[%s1 + $0x104] sm:$0xf]
  %v97 = vld [vmem:[%s1 + $0x108] sm:$0xf]
  %v98 = vld [vmem:[%s1 + $0x10c] sm:$0xf]
  %v99 = vld [vmem:[%s1 + $0x110] sm:$0xf]
  %v100 = vld [vmem:[%s1 + $0x114] sm:$0xf]
  %v101 = vld [vmem:[%s1 + $0x118] sm:$0xf]
  %v102 = vld [vmem:[%s1 + $0x11c] sm:$0xf]
  %v103 = vld [vmem:[%s1 + $0x120] sm:$0xf]
  %v104 = vld [vmem:[%s1 + $0x124] sm:$0xf]
  %v105 = vld [vmem:[%s1 + $0x128] sm:$0xf]
  %v106 = vld [vmem:[%s1 + $0x12c] sm:$0xf]
  %v107 = vld [vmem:[%s1 + $0x130] sm:$0xf]
  %v108 = vld [vmem:[%s1 + $0x134] sm:$0xf]
  %v109 = vld [vmem:[%s1 + $0x138] sm:$0xf]
  %v110 = vld [vmem:[%s1 + $0x13c] sm:$0xf]
  %v111 = vld [vmem:[%s1 + $0x140] sm:$0xf]
  %v112 = vld [vmem:[%s1 + $0x144] sm:$0xf]
  %v113 = vld [vmem:[%s1 + $0x148] sm:$0xf]
  %v114 = vld [vmem:[%s1 + $0x14c] sm:$0xf]
  %v115 = vld [vmem:[%s1 + $0x150] sm:$0xf]
  %v116 = vld [vmem:[%s1 + $0x154] sm:$0xf]
  %v117 = vld [vmem:[%s1 + $0x158] sm:$0xf]
  %v118 = vld [vmem:[%s1 + $0x15c] sm:$0xf]
  %v119 = vld [vmem:[%s1 + $0x160] sm:$0xf]
  %v120 = vld [vmem:[%s1 + $0x164] sm:$0xf]
  %v121 = vld [vmem:[%s1 + $0x168] sm:$0xf]
  %v122 = vld [vmem:[%s1 + $0x16c] sm:$0xf]
  %v123 = vld [vmem:[%s1 + $0x170] sm:$0xf]
  %v124 = vld [vmem:[%s1 + $0x174] sm:$0xf]
  %v125 = vld [vmem:[%s1 + $0x178] sm:$0xf]
  %v126 = vld [vmem:[%s1 + $0x17c] sm:$0xf]
  %v127 = vld [vmem:[%s1 + $0x180] sm:$0xf]
  %v128 = vld [vmem:[%s1 + $0x184] sm:$0xf]
  %v129 = vld [vmem:[%s1 + $0x188] sm:$0xf]
  %v130 = vld [vmem:[%s1 + $0x18c] sm:$0xf]
  %v131 = vld [vmem:[%s1 + $0x190] sm:$0xf]
  %v132 = vld [vmem:[%s1 + $0x194] sm:$0xf]
  %v133 = vld [vmem:[%s1 + $0x198] sm:$0xf]
  %v134 = vld [vmem:[%s1 + $0x19c] sm:$0xf]
  %v135 = vld [vmem:[%s1 + $0x1a0] sm:$0xf]
  %v136 = vld [vmem:[%s1 + $0x1a4] sm:$0xf]
  %v137 = vld [vmem:[%s1 + $0x1a8] sm:$0xf]
  %v138 = vld [vmem:[%s1 + $0x1ac] sm:$0xf]
  %v139 = vld [vmem:[%s1 + $0x1b0] sm:$0xf]
  %v140 = vld [vmem:[%s1 + $0x1b4] sm:$0xf]
  %v141 = vld [vmem:[%s1 + $0x1b8] sm:$0xf]
  %v142 = vld [vmem:[%s1 + $0x1bc] sm:$0xf]
  %v143 = vld [vmem:[%s1 + $0x1c0] sm:$0xf]
  %v144 = vld [vmem:[%s1 + $0x1c4] sm:$0xf]
  %v145 = vld [vmem:[%s1 + $0x1c8] sm:$0xf]
  %v146 = vld [vmem:[%s1 + $0x1cc] sm:$0xf]
  %v147 = vld [vmem:[%s1 + $0x1d0] sm:$0xf]
  %v148 = vld [vmem:[%s1 + $0x1d4] sm:$0xf]
  %v149 = vld [vmem:[%s1 + $0x1d8] sm:$0xf]
  %v150 = vld [vmem:[%s1 + $0x1dc] sm:$0xf]
  %v151 = vld [vmem:[%s1 + $0x1e0] sm:$0xf]
  %v152 = vld [vmem:[%s1 + $0x1e4] sm:$0xf]
  %v153 = vld [vmem:[%s1 + $0x1e8] sm:$0xf]
  %v154 = vld [vmem:[%s1 + $0x1ec] sm:$0xf]
  %v155 = vld [vmem:[%s1 + $0x1f0] sm:$0xf]
  %v156 = vld [vmem:[%s1 + $0x1f4] sm:$0xf]
  %v157 = vld [vmem:[%s1 + $0x1f8] sm:$0xf]
  %v158 = vld [vmem:[%s1 + $0x1fc] sm:$0xf]
  %v159 = vld [vmem:[%s2] sm:$0x1]
  %v161 = vlaneseq
  %v162 = vshrl.u32 %v161, 7
  %v163 = vsub.s32 0, %v162
  %v164 = vrot.slane %v159, %v163
  %v182 = vunpack.c.l.b16 %v15
  %v183 = vunpack.c.h.b16 %v15
  %v184 = vunpack.c.l.b16 %v16
  %v185 = vunpack.c.h.b16 %v16
  %v186 = vunpack.c.l.b16 %v17
  %v187 = vunpack.c.h.b16 %v17
  %v188 = vunpack.c.l.b16 %v18
  %v189 = vunpack.c.h.b16 %v18
  %v190 = vunpack.c.l.b16 %v19
  %v191 = vunpack.c.h.b16 %v19
  %v192 = vunpack.c.l.b16 %v20
  %v193 = vunpack.c.h.b16 %v20
  %v194 = vunpack.c.l.b16 %v21
  %v195 = vunpack.c.h.b16 %v21
  %v196 = vunpack.c.l.b16 %v22
  %v197 = vunpack.c.h.b16 %v22
  %v198 = vunpack.c.l.b16 %v23
  %v199 = vunpack.c.h.b16 %v23
  %v200 = vunpack.c.l.b16 %v24
  %v201 = vunpack.c.h.b16 %v24
  %v202 = vunpack.c.l.b16 %v25
  %v203 = vunpack.c.h.b16 %v25
  %v204 = vunpack.c.l.b16 %v26
  %v205 = vunpack.c.h.b16 %v26
  %v206 = vunpack.c.l.b16 %v27
  %v207 = vunpack.c.h.b16 %v27
  %v208 = vunpack.c.l.b16 %v28
  %v209 = vunpack.c.h.b16 %v28
  %v210 = vunpack.c.l.b16 %v29
  %v211 = vunpack.c.h.b16 %v29
  %v212 = vunpack.c.l.b16 %v30
  %v213 = vunpack.c.h.b16 %v30
  %v214 = vpack.c.b16 %v190, %v182
  %v215 = vpack.c.b16 %v191, %v183
  %v216 = vpack.c.b16 %v192, %v184
  %v217 = vpack.c.b16 %v193, %v185
  %v218 = vpack.c.b16 %v194, %v186
  %v219 = vpack.c.b16 %v195, %v187
  %v220 = vpack.c.b16 %v196, %v188
  %v221 = vpack.c.b16 %v197, %v189
  %v222 = vpack.c.b16 %v206, %v198
  %v223 = vpack.c.b16 %v207, %v199
  %v224 = vpack.c.b16 %v208, %v200
  %v225 = vpack.c.b16 %v209, %v201
  %v226 = vpack.c.b16 %v210, %v202
  %v227 = vpack.c.b16 %v211, %v203
  %v228 = vpack.c.b16 %v212, %v204
  %v229 = vpack.c.b16 %v213, %v205
  %v374 = vunpack.c.l.b16 %v31
  %v375 = vunpack.c.l.b16 %v32
  %v376 = vunpack.c.l.b16 %v33
  %v377 = vunpack.c.l.b16 %v34
  %v378 = vunpack.c.l.b16 %v35
  %v379 = vunpack.c.l.b16 %v36
  %v380 = vunpack.c.l.b16 %v37
  %v381 = vunpack.c.l.b16 %v38
  %v382 = vunpack.c.l.b16 %v39
  %v383 = vunpack.c.l.b16 %v40
  %v384 = vunpack.c.l.b16 %v41
  %v385 = vunpack.c.l.b16 %v42
  %v386 = vunpack.c.l.b16 %v43
  %v387 = vunpack.c.l.b16 %v44
  %v388 = vunpack.c.l.b16 %v45
  %v389 = vunpack.c.l.b16 %v46
  %v390 = vunpack.c.l.b16 %v47
  %v391 = vunpack.c.l.b16 %v48
  %v392 = vunpack.c.l.b16 %v49
  %v393 = vunpack.c.l.b16 %v50
  %v394 = vunpack.c.l.b16 %v51
  %v395 = vunpack.c.l.b16 %v52
  %v396 = vunpack.c.l.b16 %v53
  %v397 = vunpack.c.l.b16 %v54
  %v398 = vunpack.c.l.b16 %v55
  %v399 = vunpack.c.l.b16 %v56
  %v400 = vunpack.c.l.b16 %v57
  %v401 = vunpack.c.l.b16 %v58
  %v402 = vunpack.c.l.b16 %v59
  %v403 = vunpack.c.l.b16 %v60
  %v404 = vunpack.c.l.b16 %v61
  %v405 = vunpack.c.l.b16 %v62
  %v406 = vunpack.c.l.b16 %v63
  %v407 = vunpack.c.l.b16 %v64
  %v408 = vunpack.c.l.b16 %v65
  %v409 = vunpack.c.l.b16 %v66
  %v410 = vunpack.c.l.b16 %v67
  %v411 = vunpack.c.l.b16 %v68
  %v412 = vunpack.c.l.b16 %v69
  %v413 = vunpack.c.l.b16 %v70
  %v414 = vunpack.c.l.b16 %v71
  %v415 = vunpack.c.l.b16 %v72
  %v416 = vunpack.c.l.b16 %v73
  %v417 = vunpack.c.l.b16 %v74
  %v418 = vunpack.c.l.b16 %v75
  %v419 = vunpack.c.l.b16 %v76
  %v420 = vunpack.c.l.b16 %v77
  %v421 = vunpack.c.l.b16 %v78
  %v422 = vunpack.c.l.b16 %v79
  %v423 = vunpack.c.l.b16 %v80
  %v424 = vunpack.c.l.b16 %v81
  %v425 = vunpack.c.l.b16 %v82
  %v426 = vunpack.c.l.b16 %v83
  %v427 = vunpack.c.l.b16 %v84
  %v428 = vunpack.c.l.b16 %v85
  %v429 = vunpack.c.l.b16 %v86
  %v430 = vunpack.c.l.b16 %v87
  %v431 = vunpack.c.l.b16 %v88
  %v432 = vunpack.c.l.b16 %v89
  %v433 = vunpack.c.l.b16 %v90
  %v434 = vunpack.c.l.b16 %v91
  %v435 = vunpack.c.l.b16 %v92
  %v436 = vunpack.c.l.b16 %v93
  %v437 = vunpack.c.l.b16 %v94
  %v438 = vunpack.c.l.b16 %v95
  %v439 = vunpack.c.l.b16 %v96
  %v440 = vunpack.c.l.b16 %v97
  %v441 = vunpack.c.l.b16 %v98
  %v442 = vunpack.c.l.b16 %v99
  %v443 = vunpack.c.l.b16 %v100
  %v444 = vunpack.c.l.b16 %v101
  %v445 = vunpack.c.l.b16 %v102
  %v446 = vunpack.c.l.b16 %v103
  %v447 = vunpack.c.l.b16 %v104
  %v448 = vunpack.c.l.b16 %v105
  %v449 = vunpack.c.l.b16 %v106
  %v450 = vunpack.c.l.b16 %v107
  %v451 = vunpack.c.l.b16 %v108
  %v452 = vunpack.c.l.b16 %v109
  %v453 = vunpack.c.l.b16 %v110
  %v454 = vunpack.c.l.b16 %v111
  %v455 = vunpack.c.l.b16 %v112
  %v456 = vunpack.c.l.b16 %v113
  %v457 = vunpack.c.l.b16 %v114
  %v458 = vunpack.c.l.b16 %v115
  %v459 = vunpack.c.l.b16 %v116
  %v460 = vunpack.c.l.b16 %v117
  %v461 = vunpack.c.l.b16 %v118
  %v462 = vunpack.c.l.b16 %v119
  %v463 = vunpack.c.l.b16 %v120
  %v464 = vunpack.c.l.b16 %v121
  %v465 = vunpack.c.l.b16 %v122
  %v466 = vunpack.c.l.b16 %v123
  %v467 = vunpack.c.l.b16 %v124
  %v468 = vunpack.c.l.b16 %v125
  %v469 = vunpack.c.l.b16 %v126
  %v470 = vunpack.c.l.b16 %v127
  %v471 = vunpack.c.l.b16 %v128
  %v472 = vunpack.c.l.b16 %v129
  %v473 = vunpack.c.l.b16 %v130
  %v474 = vunpack.c.l.b16 %v131
  %v475 = vunpack.c.l.b16 %v132
  %v476 = vunpack.c.l.b16 %v133
  %v477 = vunpack.c.l.b16 %v134
  %v478 = vunpack.c.l.b16 %v135
  %v479 = vunpack.c.l.b16 %v136
  %v480 = vunpack.c.l.b16 %v137
  %v481 = vunpack.c.l.b16 %v138
  %v482 = vunpack.c.l.b16 %v139
  %v483 = vunpack.c.l.b16 %v140
  %v484 = vunpack.c.l.b16 %v141
  %v485 = vunpack.c.l.b16 %v142
  %v486 = vunpack.c.l.b16 %v143
  %v487 = vunpack.c.l.b16 %v144
  %v488 = vunpack.c.l.b16 %v145
  %v489 = vunpack.c.l.b16 %v146
  %v490 = vunpack.c.l.b16 %v147
  %v491 = vunpack.c.l.b16 %v148
  %v492 = vunpack.c.l.b16 %v149
  %v493 = vunpack.c.l.b16 %v150
  %v494 = vunpack.c.l.b16 %v151
  %v495 = vunpack.c.l.b16 %v152
  %v496 = vunpack.c.l.b16 %v153
  %v497 = vunpack.c.l.b16 %v154
  %v498 = vunpack.c.l.b16 %v155
  %v499 = vunpack.c.l.b16 %v156
  %v500 = vunpack.c.l.b16 %v157
  %v501 = vunpack.c.l.b16 %v158
  %v502 = vpack.c.b16 %v375, %v374
  %v503 = vpack.c.b16 %v377, %v376
  %v504 = vpack.c.b16 %v379, %v378
  %v505 = vpack.c.b16 %v381, %v380
  %v506 = vpack.c.b16 %v383, %v382
  %v507 = vpack.c.b16 %v385, %v384
  %v508 = vpack.c.b16 %v387, %v386
  %v509 = vpack.c.b16 %v389, %v388
  %v510 = vpack.c.b16 %v391, %v390
  %v511 = vpack.c.b16 %v393, %v392
  %v512 = vpack.c.b16 %v395, %v394
  %v513 = vpack.c.b16 %v397, %v396
  %v514 = vpack.c.b16 %v399, %v398
  %v515 = vpack.c.b16 %v401, %v400
  %v516 = vpack.c.b16 %v403, %v402
  %v517 = vpack.c.b16 %v405, %v404
  %v518 = vpack.c.b16 %v407, %v406
  %v519 = vpack.c.b16 %v409, %v408
  %v520 = vpack.c.b16 %v411, %v410
  %v521 = vpack.c.b16 %v413, %v412
  %v522 = vpack.c.b16 %v415, %v414
  %v523 = vpack.c.b16 %v417, %v416
  %v524 = vpack.c.b16 %v419, %v418
  %v525 = vpack.c.b16 %v421, %v420
  %v526 = vpack.c.b16 %v423, %v422
  %v527 = vpack.c.b16 %v425, %v424
  %v528 = vpack.c.b16 %v427, %v426
  %v529 = vpack.c.b16 %v429, %v428
  %v530 = vpack.c.b16 %v431, %v430
  %v531 = vpack.c.b16 %v433, %v432
  %v532 = vpack.c.b16 %v435, %v434
  %v533 = vpack.c.b16 %v437, %v436
  %v534 = vpack.c.b16 %v439, %v438
  %v535 = vpack.c.b16 %v441, %v440
  %v536 = vpack.c.b16 %v443, %v442
  %v537 = vpack.c.b16 %v445, %v444
  %v538 = vpack.c.b16 %v447, %v446
  %v539 = vpack.c.b16 %v449, %v448
  %v540 = vpack.c.b16 %v451, %v450
  %v541 = vpack.c.b16 %v453, %v452
  %v542 = vpack.c.b16 %v455, %v454
  %v543 = vpack.c.b16 %v457, %v456
  %v544 = vpack.c.b16 %v459, %v458
  %v545 = vpack.c.b16 %v461, %v460
  %v546 = vpack.c.b16 %v463, %v462
  %v547 = vpack.c.b16 %v465, %v464
  %v548 = vpack.c.b16 %v467, %v466
  %v549 = vpack.c.b16 %v469, %v468
  %v550 = vpack.c.b16 %v471, %v470
  %v551 = vpack.c.b16 %v473, %v472
  %v552 = vpack.c.b16 %v475, %v474
  %v553 = vpack.c.b16 %v477, %v476
  %v554 = vpack.c.b16 %v479, %v478
  %v555 = vpack.c.b16 %v481, %v480
  %v556 = vpack.c.b16 %v483, %v482
  %v557 = vpack.c.b16 %v485, %v484
  %v558 = vpack.c.b16 %v487, %v486
  %v559 = vpack.c.b16 %v489, %v488
  %v560 = vpack.c.b16 %v491, %v490
  %v561 = vpack.c.b16 %v493, %v492
  %v562 = vpack.c.b16 %v495, %v494
  %v563 = vpack.c.b16 %v497, %v496
  %v564 = vpack.c.b16 %v499, %v498
  %v565 = vpack.c.b16 %v501, %v500
  %630 = vmatprep.subr.bf16.mxu0 0
  %631 = vmatpush1.bf16.msra.mxu0 %v509
  %632 = vmatprep.subr.bf16.mxu0 0
  %633 = vmatpush1.bf16.msra.mxu0 %v508
  %634 = vmatprep.subr.bf16.mxu0 0
  %635 = vmatpush1.bf16.msra.mxu0 %v507
  %636 = vmatprep.subr.bf16.mxu0 0
  %637 = vmatpush1.bf16.msra.mxu0 %v506
  %638 = vmatprep.subr.bf16.mxu0 0
  %639 = vmatpush1.bf16.msra.mxu0 %v505
  %640 = vmatprep.subr.bf16.mxu0 0
  %641 = vmatpush1.bf16.msra.mxu0 %v504
  %642 = vmatprep.subr.bf16.mxu0 0
  %643 = vmatpush1.bf16.msra.mxu0 %v503
  %644 = vmatprep.subr.bf16.mxu0 0
  %645 = vmatpush1.bf16.msra.mxu0 %v502
  %646 = vmatprep.subr.bf16.mxu0 0
  %647 = vmatpush2.bf16.msra.mxu0 %v517
  %648 = vmatprep.subr.bf16.mxu0 0
  %649 = vmatpush2.bf16.msra.mxu0 %v516
  %650 = vmatprep.subr.bf16.mxu0 0
  %651 = vmatpush2.bf16.msra.mxu0 %v515
  %652 = vmatprep.subr.bf16.mxu0 0
  %653 = vmatpush2.bf16.msra.mxu0 %v514
  %654 = vmatprep.subr.bf16.mxu0 0
  %655 = vmatpush2.bf16.msra.mxu0 %v513
  %656 = vmatprep.subr.bf16.mxu0 0
  %657 = vmatpush2.bf16.msra.mxu0 %v512
  %658 = vmatprep.subr.bf16.mxu0 0
  %659 = vmatpush2.bf16.msra.mxu0 %v511
  %660 = vmatprep.subr.bf16.mxu0 0
  %661 = vmatpush2.bf16.msra.mxu0 %v510
  %662 = vmatprep.mubr.bf16.mxu0 %v215
  %663 = vmatmul.mubr.bf16.gmra.mxu0 %v214
  %v664 = vpop.f32.mrf.mxu0
  %v665 = vadd.f32 %v164, %v664
  %v666 = vpop.f32.mrf.mxu0
  %v667 = vpop.f32.mrf.mxu0
  %v668 = vadd.f32 %v164, %v667
  %v669 = vpop.f32.mrf.mxu0
  %670 = vmatprep.mubr.bf16.mxu0 %v223
  %671 = vmatmul.mubr.bf16.gmra.mxu0 %v222
  %v672 = vpop.f32.mrf.mxu0
  %v673 = vadd.f32 %v164, %v672
  %v674 = vpop.f32.mrf.mxu0
  %v675 = vpop.f32.mrf.mxu0
  %v676 = vadd.f32 %v164, %v675
  %v677 = vpop.f32.mrf.mxu0
  %678 = vdwg.mxu0
  %679 = vmatprep.subr.bf16.mxu0 0
  %680 = vmatpush1.bf16.msra.mxu0 %v525
  %681 = vmatprep.subr.bf16.mxu0 0
  %682 = vmatpush1.bf16.msra.mxu0 %v524
  %683 = vmatprep.subr.bf16.mxu0 0
  %684 = vmatpush1.bf16.msra.mxu0 %v523
  %685 = vmatprep.subr.bf16.mxu0 0
  %686 = vmatpush1.bf16.msra.mxu0 %v522
  %687 = vmatprep.subr.bf16.mxu0 0
  %688 = vmatpush1.bf16.msra.mxu0 %v521
  %689 = vmatprep.subr.bf16.mxu0 0
  %690 = vmatpush1.bf16.msra.mxu0 %v520
  %691 = vmatprep.subr.bf16.mxu0 0
  %692 = vmatpush1.bf16.msra.mxu0 %v519
  %693 = vmatprep.subr.bf16.mxu0 0
  %694 = vmatpush1.bf16.msra.mxu0 %v518
  %695 = vmatprep.subr.bf16.mxu0 0
  %696 = vmatpush2.bf16.msra.mxu0 %v533
  %697 = vmatprep.subr.bf16.mxu0 0
  %698 = vmatpush2.bf16.msra.mxu0 %v532
  %699 = vmatprep.subr.bf16.mxu0 0
  %700 = vmatpush2.bf16.msra.mxu0 %v531
  %701 = vmatprep.subr.bf16.mxu0 0
  %702 = vmatpush2.bf16.msra.mxu0 %v530
  %703 = vmatprep.subr.bf16.mxu0 0
  %704 = vmatpush2.bf16.msra.mxu0 %v529
  %705 = vmatprep.subr.bf16.mxu0 0
  %706 = vmatpush2.bf16.msra.mxu0 %v528
  %707 = vmatprep.subr.bf16.mxu0 0
  %708 = vmatpush2.bf16.msra.mxu0 %v527
  %709 = vmatprep.subr.bf16.mxu0 0
  %710 = vmatpush2.bf16.msra.mxu0 %v526
  %711 = vmatprep.mubr.bf16.mxu0 %v217
  %712 = vmatmul.mubr.bf16.gmra.mxu0 %v216
  %v713 = vpop.f32.mrf.mxu0
  %v714 = vadd.f32 %v665, %v713
  %v715 = vpop.f32.mrf.mxu0
  %v716 = vpop.f32.mrf.mxu0
  %v717 = vadd.f32 %v668, %v716
  %v718 = vpop.f32.mrf.mxu0
  %719 = vmatprep.mubr.bf16.mxu0 %v225
  %720 = vmatmul.mubr.bf16.gmra.mxu0 %v224
  %v721 = vpop.f32.mrf.mxu0
  %v722 = vadd.f32 %v673, %v721
  %v723 = vpop.f32.mrf.mxu0
  %v724 = vpop.f32.mrf.mxu0
  %v725 = vadd.f32 %v676, %v724
  %v726 = vpop.f32.mrf.mxu0
  %727 = vdwg.mxu0
  %728 = vmatprep.subr.bf16.mxu0 0
  %729 = vmatpush1.bf16.msra.mxu0 %v541
  %730 = vmatprep.subr.bf16.mxu0 0
  %731 = vmatpush1.bf16.msra.mxu0 %v540
  %732 = vmatprep.subr.bf16.mxu0 0
  %733 = vmatpush1.bf16.msra.mxu0 %v539
  %734 = vmatprep.subr.bf16.mxu0 0
  %735 = vmatpush1.bf16.msra.mxu0 %v538
  %736 = vmatprep.subr.bf16.mxu0 0
  %737 = vmatpush1.bf16.msra.mxu0 %v537
  %738 = vmatprep.subr.bf16.mxu0 0
  %739 = vmatpush1.bf16.msra.mxu0 %v536
  %740 = vmatprep.subr.bf16.mxu0 0
  %741 = vmatpush1.bf16.msra.mxu0 %v535
  %742 = vmatprep.subr.bf16.mxu0 0
  %743 = vmatpush1.bf16.msra.mxu0 %v534
  %744 = vmatprep.subr.bf16.mxu0 0
  %745 = vmatpush2.bf16.msra.mxu0 %v549
  %746 = vmatprep.subr.bf16.mxu0 0
  %747 = vmatpush2.bf16.msra.mxu0 %v548
  %748 = vmatprep.subr.bf16.mxu0 0
  %749 = vmatpush2.bf16.msra.mxu0 %v547
  %750 = vmatprep.subr.bf16.mxu0 0
  %751 = vmatpush2.bf16.msra.mxu0 %v546
  %752 = vmatprep.subr.bf16.mxu0 0
  %753 = vmatpush2.bf16.msra.mxu0 %v545
  %754 = vmatprep.subr.bf16.mxu0 0
  %755 = vmatpush2.bf16.msra.mxu0 %v544
  %756 = vmatprep.subr.bf16.mxu0 0
  %757 = vmatpush2.bf16.msra.mxu0 %v543
  %758 = vmatprep.subr.bf16.mxu0 0
  %759 = vmatpush2.bf16.msra.mxu0 %v542
  %760 = vmatprep.mubr.bf16.mxu0 %v219
  %761 = vmatmul.mubr.bf16.gmra.mxu0 %v218
  %v762 = vpop.f32.mrf.mxu0
  %v763 = vadd.f32 %v714, %v762
  %v764 = vpop.f32.mrf.mxu0
  %v765 = vpop.f32.mrf.mxu0
  %v766 = vadd.f32 %v717, %v765
  %v767 = vpop.f32.mrf.mxu0
  %768 = vmatprep.mubr.bf16.mxu0 %v227
  %769 = vmatmul.mubr.bf16.gmra.mxu0 %v226
  %v770 = vpop.f32.mrf.mxu0
  %v771 = vadd.f32 %v722, %v770
  %v772 = vpop.f32.mrf.mxu0
  %v773 = vpop.f32.mrf.mxu0
  %v774 = vadd.f32 %v725, %v773
  %v775 = vpop.f32.mrf.mxu0
  %776 = vdwg.mxu0
  %777 = vmatprep.subr.bf16.mxu0 0
  %778 = vmatpush1.bf16.msra.mxu0 %v557
  %779 = vmatprep.subr.bf16.mxu0 0
  %780 = vmatpush1.bf16.msra.mxu0 %v556
  %781 = vmatprep.subr.bf16.mxu0 0
  %782 = vmatpush1.bf16.msra.mxu0 %v555
  %783 = vmatprep.subr.bf16.mxu0 0
  %784 = vmatpush1.bf16.msra.mxu0 %v554
  %785 = vmatprep.subr.bf16.mxu0 0
  %786 = vmatpush1.bf16.msra.mxu0 %v553
  %787 = vmatprep.subr.bf16.mxu0 0
  %788 = vmatpush1.bf16.msra.mxu0 %v552
  %789 = vmatprep.subr.bf16.mxu0 0
  %790 = vmatpush1.bf16.msra.mxu0 %v551
  %791 = vmatprep.subr.bf16.mxu0 0
  %792 = vmatpush1.bf16.msra.mxu0 %v550
  %793 = vmatprep.subr.bf16.mxu0 0
  %794 = vmatpush2.bf16.msra.mxu0 %v565
  %795 = vmatprep.subr.bf16.mxu0 0
  %796 = vmatpush2.bf16.msra.mxu0 %v564
  %797 = vmatprep.subr.bf16.mxu0 0
  %798 = vmatpush2.bf16.msra.mxu0 %v563
  %799 = vmatprep.subr.bf16.mxu0 0
  %800 = vmatpush2.bf16.msra.mxu0 %v562
  %801 = vmatprep.subr.bf16.mxu0 0
  %802 = vmatpush2.bf16.msra.mxu0 %v561
  %803 = vmatprep.subr.bf16.mxu0 0
  %804 = vmatpush2.bf16.msra.mxu0 %v560
  %805 = vmatprep.subr.bf16.mxu0 0
  %806 = vmatpush2.bf16.msra.mxu0 %v559
  %807 = vmatprep.subr.bf16.mxu0 0
  %808 = vmatpush2.bf16.msra.mxu0 %v558
  %809 = vmatprep.mubr.bf16.mxu0 %v221
  %810 = vmatmul.mubr.bf16.gmra.mxu0 %v220
  %v811 = vpop.f32.mrf.mxu0
  %v812 = vadd.f32 %v763, %v811
  %v813 = vpop.f32.mrf.mxu0
  %v814 = vpop.f32.mrf.mxu0
  %v815 = vadd.f32 %v766, %v814
  %v816 = vpop.f32.mrf.mxu0
  %817 = vmatprep.mubr.bf16.mxu0 %v229
  %818 = vmatmul.mubr.bf16.gmra.mxu0 %v228
  %v819 = vpop.f32.mrf.mxu0
  %v820 = vadd.f32 %v771, %v819
  %v821 = vpop.f32.mrf.mxu0
  %v822 = vpop.f32.mrf.mxu0
  %v823 = vadd.f32 %v774, %v822
  %v824 = vpop.f32.mrf.mxu0
  %825 = vdwg.mxu0
  %v826 = vmax.f32 %v812, 0.0
  %v827 = vmax.f32 %v815, 0.0
  %v828 = vmax.f32 %v820, 0.0
  %v829 = vmax.f32 %v823, 0.0
  %830 = vst [vmem:[%s3] sm:$0xff] %v826
  %831 = vst [vmem:[%s3 + $0x8] sm:$0xff] %v827
  %832 = vst [vmem:[%s3 + $0x10] sm:$0xff] %v828
  %833 = vst [vmem:[%s3 + $0x18] sm:$0xff] %v829
  // Predicated region
  $region14: #{beta_vae_forward.11} parent=0 // pred_check
    _
  $region15: #{beta_vae_forward.11} parent=0 // pred_check_branch
    %835 = sbr.rel (0) target = $region17
  $region16: #{beta_vae_forward.11} parent=0 // pred_region
    _
  $region17: #{beta_vae_forward.11} parent=0 // pred_fallthru
    _
  // Predicated region
  $region18: #{beta_vae_forward.11} parent=0 // pred_check
    _
  $region19: #{beta_vae_forward.11} parent=0 // pred_check_branch
    %837 = sbr.rel (0) target = $region21
  $region20: #{beta_vae_forward.11} parent=0 // pred_region
    _
  $region21: #{beta_vae_forward.11} parent=0 // pred_fallthru
    _

// kernel: beta_vae_forward.12
$region0: #{beta_vae_forward.12}
  #allocation0 [shape = 'u32[]', space=smem, size = 0x4, offset = 0x4, fixed_abs, tag = 'smem constant byte address 0x4 - core index']
  #allocation1 [shape = 'u32[144,128]{1,0:T(1,128)}', space=vmem, size = 0x12000, scoped, tag = 'internal scratch']
  %s0 = inlined_call_operand.vmem [shape: bf16[16,2048], index: 0, kind: input, shape index: {}]
  %s1 = inlined_call_operand.vmem [shape: bf16[2048,256], index: 1, kind: input, shape index: {}]
  %s2 = inlined_call_operand.vmem [shape: f32[1,256], index: 2, kind: input, shape index: {}]
  %s3 = inlined_call_operand.vmem [shape: f32[16,256], index: 3, kind: output, shape index: {}]
  %s4 = sld [smem:[#allocation0]]
  $region22: #{beta_vae_forward.12} parent=0
    _
  %s6 = ssub.s32 1, %s4
  %s7 = scalar_select 0, %s6, %s4
  // Predicated region
  $region2: #{beta_vae_forward.12} parent=0 // pred_check
    _
  $region3: #{beta_vae_forward.12} parent=0 // pred_check_branch
    %9 = sbr.rel (0) target = $region5
  $region4: #{beta_vae_forward.12} parent=0 // pred_region
    _
  $region5: #{beta_vae_forward.12} parent=0 // pred_fallthru
    _
  // Predicated region
  $region6: #{beta_vae_forward.12} parent=0 // pred_check
    _
  $region7: #{beta_vae_forward.12} parent=0 // pred_check_branch
    %11 = sbr.rel (0) target = $region9
  $region8: #{beta_vae_forward.12} parent=0 // pred_region
    _
  $region9: #{beta_vae_forward.12} parent=0 // pred_fallthru
    _
  // Predicated region
  $region10: #{beta_vae_forward.12} parent=0 // pred_check
    _
  $region11: #{beta_vae_forward.12} parent=0 // pred_check_branch
    %13 = sbr.rel (0) target = $region13
  $region12: #{beta_vae_forward.12} parent=0 // pred_region
    _
  $region13: #{beta_vae_forward.12} parent=0 // pred_fallthru
    _
  %v14 = vld [vmem:[%s0] sm:$0xff]
  %v15 = vld [vmem:[%s0 + $0x8] sm:$0xff]
  %v16 = vld [vmem:[%s0 + $0x10] sm:$0xff]
  %v17 = vld [vmem:[%s0 + $0x18] sm:$0xff]
  %v18 = vld [vmem:[%s0 + $0x20] sm:$0xff]
  %v19 = vld [vmem:[%s0 + $0x28] sm:$0xff]
  %v20 = vld [vmem:[%s0 + $0x30] sm:$0xff]
  %v21 = vld [vmem:[%s0 + $0x38] sm:$0xff]
  %v22 = vld [vmem:[%s0 + $0x40] sm:$0xff]
  %v23 = vld [vmem:[%s0 + $0x48] sm:$0xff]
  %v24 = vld [vmem:[%s0 + $0x50] sm:$0xff]
  %v25 = vld [vmem:[%s0 + $0x58] sm:$0xff]
  %v26 = vld [vmem:[%s0 + $0x60] sm:$0xff]
  %v27 = vld [vmem:[%s0 + $0x68] sm:$0xff]
  %v28 = vld [vmem:[%s0 + $0x70] sm:$0xff]
  %v29 = vld [vmem:[%s0 + $0x78] sm:$0xff]
  %v30 = vld [vmem:[%s1] sm:$0xff]
  %v31 = vld [vmem:[%s1 + $0x8] sm:$0xff]
  %v32 = vld [vmem:[%s1 + $0x10] sm:$0xff]
  %v33 = vld [vmem:[%s1 + $0x18] sm:$0xff]
  %v34 = vld [vmem:[%s1 + $0x20] sm:$0xff]
  %v35 = vld [vmem:[%s1 + $0x28] sm:$0xff]
  %v36 = vld [vmem:[%s1 + $0x30] sm:$0xff]
  %v37 = vld [vmem:[%s1 + $0x38] sm:$0xff]
  %v38 = vld [vmem:[%s1 + $0x40] sm:$0xff]
  %v39 = vld [vmem:[%s1 + $0x48] sm:$0xff]
  %v40 = vld [vmem:[%s1 + $0x50] sm:$0xff]
  %v41 = vld [vmem:[%s1 + $0x58] sm:$0xff]
  %v42 = vld [vmem:[%s1 + $0x60] sm:$0xff]
  %v43 = vld [vmem:[%s1 + $0x68] sm:$0xff]
  %v44 = vld [vmem:[%s1 + $0x70] sm:$0xff]
  %v45 = vld [vmem:[%s1 + $0x78] sm:$0xff]
  %v46 = vld [vmem:[%s1 + $0x80] sm:$0xff]
  %v47 = vld [vmem:[%s1 + $0x88] sm:$0xff]
  %v48 = vld [vmem:[%s1 + $0x90] sm:$0xff]
  %v49 = vld [vmem:[%s1 + $0x98] sm:$0xff]
  %v50 = vld [vmem:[%s1 + $0xa0] sm:$0xff]
  %v51 = vld [vmem:[%s1 + $0xa8] sm:$0xff]
  %v52 = vld [vmem:[%s1 + $0xb0] sm:$0xff]
  %v53 = vld [vmem:[%s1 + $0xb8] sm:$0xff]
  %v54 = vld [vmem:[%s1 + $0xc0] sm:$0xff]
  %v55 = vld [vmem:[%s1 + $0xc8] sm:$0xff]
  %v56 = vld [vmem:[%s1 + $0xd0] sm:$0xff]
  %v57 = vld [vmem:[%s1 + $0xd8] sm:$0xff]
  %v58 = vld [vmem:[%s1 + $0xe0] sm:$0xff]
  %v59 = vld [vmem:[%s1 + $0xe8] sm:$0xff]
  %v60 = vld [vmem:[%s1 + $0xf0] sm:$0xff]
  %v61 = vld [vmem:[%s1 + $0xf8] sm:$0xff]
  %v62 = vld [vmem:[%s1 + $0x100] sm:$0xff]
  %v63 = vld [vmem:[%s1 + $0x108] sm:$0xff]
  %v64 = vld [vmem:[%s1 + $0x110] sm:$0xff]
  %v65 = vld [vmem:[%s1 + $0x118] sm:$0xff]
  %v66 = vld [vmem:[%s1 + $0x120] sm:$0xff]
  %v67 = vld [vmem:[%s1 + $0x128] sm:$0xff]
  %v68 = vld [vmem:[%s1 + $0x130] sm:$0xff]
  %v69 = vld [vmem:[%s1 + $0x138] sm:$0xff]
  %v70 = vld [vmem:[%s1 + $0x140] sm:$0xff]
  %v71 = vld [vmem:[%s1 + $0x148] sm:$0xff]
  %v72 = vld [vmem:[%s1 + $0x150] sm:$0xff]
  %v73 = vld [vmem:[%s1 + $0x158] sm:$0xff]
  %v74 = vld [vmem:[%s1 + $0x160] sm:$0xff]
  %v75 = vld [vmem:[%s1 + $0x168] sm:$0xff]
  %v76 = vld [vmem:[%s1 + $0x170] sm:$0xff]
  %v77 = vld [vmem:[%s1 + $0x178] sm:$0xff]
  %v78 = vld [vmem:[%s1 + $0x180] sm:$0xff]
  %v79 = vld [vmem:[%s1 + $0x188] sm:$0xff]
  %v80 = vld [vmem:[%s1 + $0x190] sm:$0xff]
  %v81 = vld [vmem:[%s1 + $0x198] sm:$0xff]
  %v82 = vld [vmem:[%s1 + $0x1a0] sm:$0xff]
  %v83 = vld [vmem:[%s1 + $0x1a8] sm:$0xff]
  %v84 = vld [vmem:[%s1 + $0x1b0] sm:$0xff]
  %v85 = vld [vmem:[%s1 + $0x1b8] sm:$0xff]
  %v86 = vld [vmem:[%s1 + $0x1c0] sm:$0xff]
  %v87 = vld [vmem:[%s1 + $0x1c8] sm:$0xff]
  %v88 = vld [vmem:[%s1 + $0x1d0] sm:$0xff]
  %v89 = vld [vmem:[%s1 + $0x1d8] sm:$0xff]
  %v90 = vld [vmem:[%s1 + $0x1e0] sm:$0xff]
  %v91 = vld [vmem:[%s1 + $0x1e8] sm:$0xff]
  %v92 = vld [vmem:[%s1 + $0x1f0] sm:$0xff]
  %v93 = vld [vmem:[%s1 + $0x1f8] sm:$0xff]
  %v94 = vld [vmem:[%s1 + $0x200] sm:$0xff]
  %v95 = vld [vmem:[%s1 + $0x208] sm:$0xff]
  %v96 = vld [vmem:[%s1 + $0x210] sm:$0xff]
  %v97 = vld [vmem:[%s1 + $0x218] sm:$0xff]
  %v98 = vld [vmem:[%s1 + $0x220] sm:$0xff]
  %v99 = vld [vmem:[%s1 + $0x228] sm:$0xff]
  %v100 = vld [vmem:[%s1 + $0x230] sm:$0xff]
  %v101 = vld [vmem:[%s1 + $0x238] sm:$0xff]
  %v102 = vld [vmem:[%s1 + $0x240] sm:$0xff]
  %v103 = vld [vmem:[%s1 + $0x248] sm:$0xff]
  %v104 = vld [vmem:[%s1 + $0x250] sm:$0xff]
  %v105 = vld [vmem:[%s1 + $0x258] sm:$0xff]
  %v106 = vld [vmem:[%s1 + $0x260] sm:$0xff]
  %v107 = vld [vmem:[%s1 + $0x268] sm:$0xff]
  %v108 = vld [vmem:[%s1 + $0x270] sm:$0xff]
  %v109 = vld [vmem:[%s1 + $0x278] sm:$0xff]
  %v110 = vld [vmem:[%s1 + $0x280] sm:$0xff]
  %v111 = vld [vmem:[%s1 + $0x288] sm:$0xff]
  %v112 = vld [vmem:[%s1 + $0x290] sm:$0xff]
  %v113 = vld [vmem:[%s1 + $0x298] sm:$0xff]
  %v114 = vld [vmem:[%s1 + $0x2a0] sm:$0xff]
  %v115 = vld [vmem:[%s1 + $0x2a8] sm:$0xff]
  %v116 = vld [vmem:[%s1 + $0x2b0] sm:$0xff]
  %v117 = vld [vmem:[%s1 + $0x2b8] sm:$0xff]
  %v118 = vld [vmem:[%s1 + $0x2c0] sm:$0xff]
  %v119 = vld [vmem:[%s1 + $0x2c8] sm:$0xff]
  %v120 = vld [vmem:[%s1 + $0x2d0] sm:$0xff]
  %v121 = vld [vmem:[%s1 + $0x2d8] sm:$0xff]
  %v122 = vld [vmem:[%s1 + $0x2e0] sm:$0xff]
  %v123 = vld [vmem:[%s1 + $0x2e8] sm:$0xff]
  %v124 = vld [vmem:[%s1 + $0x2f0] sm:$0xff]
  %v125 = vld [vmem:[%s1 + $0x2f8] sm:$0xff]
  %v126 = vld [vmem:[%s1 + $0x300] sm:$0xff]
  %v127 = vld [vmem:[%s1 + $0x308] sm:$0xff]
  %v128 = vld [vmem:[%s1 + $0x310] sm:$0xff]
  %v129 = vld [vmem:[%s1 + $0x318] sm:$0xff]
  %v130 = vld [vmem:[%s1 + $0x320] sm:$0xff]
  %v131 = vld [vmem:[%s1 + $0x328] sm:$0xff]
  %v132 = vld [vmem:[%s1 + $0x330] sm:$0xff]
  %v133 = vld [vmem:[%s1 + $0x338] sm:$0xff]
  %v134 = vld [vmem:[%s1 + $0x340] sm:$0xff]
  %v135 = vld [vmem:[%s1 + $0x348] sm:$0xff]
  %v136 = vld [vmem:[%s1 + $0x350] sm:$0xff]
  %v137 = vld [vmem:[%s1 + $0x358] sm:$0xff]
  %v138 = vld [vmem:[%s1 + $0x360] sm:$0xff]
  %v139 = vld [vmem:[%s1 + $0x368] sm:$0xff]
  %v140 = vld [vmem:[%s1 + $0x370] sm:$0xff]
  %v141 = vld [vmem:[%s1 + $0x378] sm:$0xff]
  %v142 = vld [vmem:[%s1 + $0x380] sm:$0xff]
  %v143 = vld [vmem:[%s1 + $0x388] sm:$0xff]
  %v144 = vld [vmem:[%s1 + $0x390] sm:$0xff]
  %v145 = vld [vmem:[%s1 + $0x398] sm:$0xff]
  %v146 = vld [vmem:[%s1 + $0x3a0] sm:$0xff]
  %v147 = vld [vmem:[%s1 + $0x3a8] sm:$0xff]
  %v148 = vld [vmem:[%s1 + $0x3b0] sm:$0xff]
  %v149 = vld [vmem:[%s1 + $0x3b8] sm:$0xff]
  %v150 = vld [vmem:[%s1 + $0x3c0] sm:$0xff]
  %v151 = vld [vmem:[%s1 + $0x3c8] sm:$0xff]
  %v152 = vld [vmem:[%s1 + $0x3d0] sm:$0xff]
  %v153 = vld [vmem:[%s1 + $0x3d8] sm:$0xff]
  %v154 = vld [vmem:[%s1 + $0x3e0] sm:$0xff]
  %v155 = vld [vmem:[%s1 + $0x3e8] sm:$0xff]
  %v156 = vld [vmem:[%s1 + $0x3f0] sm:$0xff]
  %v157 = vld [vmem:[%s1 + $0x3f8] sm:$0xff]
  %v158 = vld [vmem:[%s1 + $0x400] sm:$0xff]
  %v159 = vld [vmem:[%s1 + $0x408] sm:$0xff]
  %v160 = vld [vmem:[%s1 + $0x410] sm:$0xff]
  %v161 = vld [vmem:[%s1 + $0x418] sm:$0xff]
  %v162 = vld [vmem:[%s1 + $0x420] sm:$0xff]
  %v163 = vld [vmem:[%s1 + $0x428] sm:$0xff]
  %v164 = vld [vmem:[%s1 + $0x430] sm:$0xff]
  %v165 = vld [vmem:[%s1 + $0x438] sm:$0xff]
  %v166 = vld [vmem:[%s1 + $0x440] sm:$0xff]
  %v167 = vld [vmem:[%s1 + $0x448] sm:$0xff]
  %v168 = vld [vmem:[%s1 + $0x450] sm:$0xff]
  %v169 = vld [vmem:[%s1 + $0x458] sm:$0xff]
  %v170 = vld [vmem:[%s1 + $0x460] sm:$0xff]
  %v171 = vld [vmem:[%s1 + $0x468] sm:$0xff]
  %v172 = vld [vmem:[%s1 + $0x470] sm:$0xff]
  %v173 = vld [vmem:[%s1 + $0x478] sm:$0xff]
  %v174 = vld [vmem:[%s1 + $0x480] sm:$0xff]
  %v175 = vld [vmem:[%s1 + $0x488] sm:$0xff]
  %v176 = vld [vmem:[%s1 + $0x490] sm:$0xff]
  %v177 = vld [vmem:[%s1 + $0x498] sm:$0xff]
  %v178 = vld [vmem:[%s1 + $0x4a0] sm:$0xff]
  %v179 = vld [vmem:[%s1 + $0x4a8] sm:$0xff]
  %v180 = vld [vmem:[%s1 + $0x4b0] sm:$0xff]
  %v181 = vld [vmem:[%s1 + $0x4b8] sm:$0xff]
  %v182 = vld [vmem:[%s1 + $0x4c0] sm:$0xff]
  %v183 = vld [vmem:[%s1 + $0x4c8] sm:$0xff]
  %v184 = vld [vmem:[%s1 + $0x4d0] sm:$0xff]
  %v185 = vld [vmem:[%s1 + $0x4d8] sm:$0xff]
  %v186 = vld [vmem:[%s1 + $0x4e0] sm:$0xff]
  %v187 = vld [vmem:[%s1 + $0x4e8] sm:$0xff]
  %v188 = vld [vmem:[%s1 + $0x4f0] sm:$0xff]
  %v189 = vld [vmem:[%s1 + $0x4f8] sm:$0xff]
  %v190 = vld [vmem:[%s1 + $0x500] sm:$0xff]
  %v191 = vld [vmem:[%s1 + $0x508] sm:$0xff]
  %v192 = vld [vmem:[%s1 + $0x510] sm:$0xff]
  %v193 = vld [vmem:[%s1 + $0x518] sm:$0xff]
  %v194 = vld [vmem:[%s1 + $0x520] sm:$0xff]
  %v195 = vld [vmem:[%s1 + $0x528] sm:$0xff]
  %v196 = vld [vmem:[%s1 + $0x530] sm:$0xff]
  %v197 = vld [vmem:[%s1 + $0x538] sm:$0xff]
  %v198 = vld [vmem:[%s1 + $0x540] sm:$0xff]
  %v199 = vld [vmem:[%s1 + $0x548] sm:$0xff]
  %v200 = vld [vmem:[%s1 + $0x550] sm:$0xff]
  %v201 = vld [vmem:[%s1 + $0x558] sm:$0xff]
  %v202 = vld [vmem:[%s1 + $0x560] sm:$0xff]
  %v203 = vld [vmem:[%s1 + $0x568] sm:$0xff]
  %v204 = vld [vmem:[%s1 + $0x570] sm:$0xff]
  %v205 = vld [vmem:[%s1 + $0x578] sm:$0xff]
  %v206 = vld [vmem:[%s1 + $0x580] sm:$0xff]
  %v207 = vld [vmem:[%s1 + $0x588] sm:$0xff]
  %v208 = vld [vmem:[%s1 + $0x590] sm:$0xff]
  %v209 = vld [vmem:[%s1 + $0x598] sm:$0xff]
  %v210 = vld [vmem:[%s1 + $0x5a0] sm:$0xff]
  %v211 = vld [vmem:[%s1 + $0x5a8] sm:$0xff]
  %v212 = vld [vmem:[%s1 + $0x5b0] sm:$0xff]
  %v213 = vld [vmem:[%s1 + $0x5b8] sm:$0xff]
  %v214 = vld [vmem:[%s1 + $0x5c0] sm:$0xff]
  %v215 = vld [vmem:[%s1 + $0x5c8] sm:$0xff]
  %v216 = vld [vmem:[%s1 + $0x5d0] sm:$0xff]
  %v217 = vld [vmem:[%s1 + $0x5d8] sm:$0xff]
  %v218 = vld [vmem:[%s1 + $0x5e0] sm:$0xff]
  %v219 = vld [vmem:[%s1 + $0x5e8] sm:$0xff]
  %v220 = vld [vmem:[%s1 + $0x5f0] sm:$0xff]
  %v221 = vld [vmem:[%s1 + $0x5f8] sm:$0xff]
  %v222 = vld [vmem:[%s1 + $0x600] sm:$0xff]
  %v223 = vld [vmem:[%s1 + $0x608] sm:$0xff]
  %v224 = vld [vmem:[%s1 + $0x610] sm:$0xff]
  %v225 = vld [vmem:[%s1 + $0x618] sm:$0xff]
  %v226 = vld [vmem:[%s1 + $0x620] sm:$0xff]
  %v227 = vld [vmem:[%s1 + $0x628] sm:$0xff]
  %v228 = vld [vmem:[%s1 + $0x630] sm:$0xff]
  %v229 = vld [vmem:[%s1 + $0x638] sm:$0xff]
  %v230 = vld [vmem:[%s1 + $0x640] sm:$0xff]
  %v231 = vld [vmem:[%s1 + $0x648] sm:$0xff]
  %v232 = vld [vmem:[%s1 + $0x650] sm:$0xff]
  %v233 = vld [vmem:[%s1 + $0x658] sm:$0xff]
  %v234 = vld [vmem:[%s1 + $0x660] sm:$0xff]
  %v235 = vld [vmem:[%s1 + $0x668] sm:$0xff]
  %v236 = vld [vmem:[%s1 + $0x670] sm:$0xff]
  %v237 = vld [vmem:[%s1 + $0x678] sm:$0xff]
  %v238 = vld [vmem:[%s1 + $0x680] sm:$0xff]
  %v239 = vld [vmem:[%s1 + $0x688] sm:$0xff]
  %v240 = vld [vmem:[%s1 + $0x690] sm:$0xff]
  %v241 = vld [vmem:[%s1 + $0x698] sm:$0xff]
  %v242 = vld [vmem:[%s1 + $0x6a0] sm:$0xff]
  %v243 = vld [vmem:[%s1 + $0x6a8] sm:$0xff]
  %v244 = vld [vmem:[%s1 + $0x6b0] sm:$0xff]
  %v245 = vld [vmem:[%s1 + $0x6b8] sm:$0xff]
  %v246 = vld [vmem:[%s1 + $0x6c0] sm:$0xff]
  %v247 = vld [vmem:[%s1 + $0x6c8] sm:$0xff]
  %v248 = vld [vmem:[%s1 + $0x6d0] sm:$0xff]
  %v249 = vld [vmem:[%s1 + $0x6d8] sm:$0xff]
  %v250 = vld [vmem:[%s1 + $0x6e0] sm:$0xff]
  %v251 = vld [vmem:[%s1 + $0x6e8] sm:$0xff]
  %v252 = vld [vmem:[%s1 + $0x6f0] sm:$0xff]
  %v253 = vld [vmem:[%s1 + $0x6f8] sm:$0xff]
  %v254 = vld [vmem:[%s1 + $0x700] sm:$0xff]
  %v255 = vld [vmem:[%s1 + $0x708] sm:$0xff]
  %v256 = vld [vmem:[%s1 + $0x710] sm:$0xff]
  %v257 = vld [vmem:[%s1 + $0x718] sm:$0xff]
  %v258 = vld [vmem:[%s1 + $0x720] sm:$0xff]
  %v259 = vld [vmem:[%s1 + $0x728] sm:$0xff]
  %v260 = vld [vmem:[%s1 + $0x730] sm:$0xff]
  %v261 = vld [vmem:[%s1 + $0x738] sm:$0xff]
  %v262 = vld [vmem:[%s1 + $0x740] sm:$0xff]
  %v263 = vld [vmem:[%s1 + $0x748] sm:$0xff]
  %v264 = vld [vmem:[%s1 + $0x750] sm:$0xff]
  %v265 = vld [vmem:[%s1 + $0x758] sm:$0xff]
  %v266 = vld [vmem:[%s1 + $0x760] sm:$0xff]
  %v267 = vld [vmem:[%s1 + $0x768] sm:$0xff]
  %v268 = vld [vmem:[%s1 + $0x770] sm:$0xff]
  %v269 = vld [vmem:[%s1 + $0x778] sm:$0xff]
  %v270 = vld [vmem:[%s1 + $0x780] sm:$0xff]
  %v271 = vld [vmem:[%s1 + $0x788] sm:$0xff]
  %v272 = vld [vmem:[%s1 + $0x790] sm:$0xff]
  %v273 = vld [vmem:[%s1 + $0x798] sm:$0xff]
  %v274 = vld [vmem:[%s1 + $0x7a0] sm:$0xff]
  %v275 = vld [vmem:[%s1 + $0x7a8] sm:$0xff]
  %v276 = vld [vmem:[%s1 + $0x7b0] sm:$0xff]
  %v277 = vld [vmem:[%s1 + $0x7b8] sm:$0xff]
  %v278 = vld [vmem:[%s1 + $0x7c0] sm:$0xff]
  %v279 = vld [vmem:[%s1 + $0x7c8] sm:$0xff]
  %v280 = vld [vmem:[%s1 + $0x7d0] sm:$0xff]
  %v281 = vld [vmem:[%s1 + $0x7d8] sm:$0xff]
  %v282 = vld [vmem:[%s1 + $0x7e0] sm:$0xff]
  %v283 = vld [vmem:[%s1 + $0x7e8] sm:$0xff]
  %v284 = vld [vmem:[%s1 + $0x7f0] sm:$0xff]
  %v285 = vld [vmem:[%s1 + $0x7f8] sm:$0xff]
  %v286 = vld [vmem:[%s2] sm:$0x3]
  %v288 = vlaneseq
  %v289 = vshrl.u32 %v288, 7
  %v290 = vsub.s32 0, %v289
  %v291 = vrot.slane %v286, %v290
  %v292 = vlaneseq
  %v293 = vshrl.u32 %v292, 7
  %v294 = vsub.s32 1, %v293
  %v295 = vrot.slane %v286, %v294
  %v314 = vunpack.c.l.b16 %v14
  %v315 = vunpack.c.h.b16 %v14
  %v316 = vunpack.c.l.b16 %v15
  %v317 = vunpack.c.h.b16 %v15
  %v318 = vunpack.c.l.b16 %v16
  %v319 = vunpack.c.h.b16 %v16
  %v320 = vunpack.c.l.b16 %v17
  %v321 = vunpack.c.h.b16 %v17
  %v322 = vunpack.c.l.b16 %v18
  %v323 = vunpack.c.h.b16 %v18
  %v324 = vunpack.c.l.b16 %v19
  %v325 = vunpack.c.h.b16 %v19
  %v326 = vunpack.c.l.b16 %v20
  %v327 = vunpack.c.h.b16 %v20
  %v328 = vunpack.c.l.b16 %v21
  %v329 = vunpack.c.h.b16 %v21
  %v330 = vunpack.c.l.b16 %v22
  %v331 = vunpack.c.h.b16 %v22
  %v332 = vunpack.c.l.b16 %v23
  %v333 = vunpack.c.h.b16 %v23
  %v334 = vunpack.c.l.b16 %v24
  %v335 = vunpack.c.h.b16 %v24
  %v336 = vunpack.c.l.b16 %v25
  %v337 = vunpack.c.h.b16 %v25
  %v338 = vunpack.c.l.b16 %v26
  %v339 = vunpack.c.h.b16 %v26
  %v340 = vunpack.c.l.b16 %v27
  %v341 = vunpack.c.h.b16 %v27
  %v342 = vunpack.c.l.b16 %v28
  %v343 = vunpack.c.h.b16 %v28
  %v344 = vunpack.c.l.b16 %v29
  %v345 = vunpack.c.h.b16 %v29
  %v346 = vpack.c.b16 %v330, %v314
  %v347 = vpack.c.b16 %v331, %v315
  %v348 = vpack.c.b16 %v332, %v316
  %v349 = vpack.c.b16 %v333, %v317
  %v350 = vpack.c.b16 %v334, %v318
  %v351 = vpack.c.b16 %v335, %v319
  %v352 = vpack.c.b16 %v336, %v320
  %v353 = vpack.c.b16 %v337, %v321
  %v354 = vpack.c.b16 %v338, %v322
  %v355 = vpack.c.b16 %v339, %v323
  %v356 = vpack.c.b16 %v340, %v324
  %v357 = vpack.c.b16 %v341, %v325
  %v358 = vpack.c.b16 %v342, %v326
  %v359 = vpack.c.b16 %v343, %v327
  %v360 = vpack.c.b16 %v344, %v328
  %v361 = vpack.c.b16 %v345, %v329
  %v634 = vunpack.c.l.b16 %v30
  %v635 = vunpack.c.h.b16 %v30
  %v636 = vunpack.c.l.b16 %v31
  %v637 = vunpack.c.h.b16 %v31
  %v638 = vunpack.c.l.b16 %v32
  %v639 = vunpack.c.h.b16 %v32
  %v640 = vunpack.c.l.b16 %v33
  %v641 = vunpack.c.h.b16 %v33
  %v642 = vunpack.c.l.b16 %v34
  %v643 = vunpack.c.h.b16 %v34
  %v644 = vunpack.c.l.b16 %v35
  %v645 = vunpack.c.h.b16 %v35
  %v646 = vunpack.c.l.b16 %v36
  %v647 = vunpack.c.h.b16 %v36
  %v648 = vunpack.c.l.b16 %v37
  %v649 = vunpack.c.h.b16 %v37
  %v650 = vunpack.c.l.b16 %v38
  %v651 = vunpack.c.h.b16 %v38
  %v652 = vunpack.c.l.b16 %v39
  %v653 = vunpack.c.h.b16 %v39
  %v654 = vunpack.c.l.b16 %v40
  %v655 = vunpack.c.h.b16 %v40
  %v656 = vunpack.c.l.b16 %v41
  %v657 = vunpack.c.h.b16 %v41
  %v658 = vunpack.c.l.b16 %v42
  %v659 = vunpack.c.h.b16 %v42
  %v660 = vunpack.c.l.b16 %v43
  %v661 = vunpack.c.h.b16 %v43
  %v662 = vunpack.c.l.b16 %v44
  %v663 = vunpack.c.h.b16 %v44
  %v664 = vunpack.c.l.b16 %v45
  %v665 = vunpack.c.h.b16 %v45
  %v666 = vunpack.c.l.b16 %v46
  %v667 = vunpack.c.h.b16 %v46
  %v668 = vunpack.c.l.b16 %v47
  %v669 = vunpack.c.h.b16 %v47
  %v670 = vunpack.c.l.b16 %v48
  %v671 = vunpack.c.h.b16 %v48
  %v672 = vunpack.c.l.b16 %v49
  %v673 = vunpack.c.h.b16 %v49
  %v674 = vunpack.c.l.b16 %v50
  %v675 = vunpack.c.h.b16 %v50
  %v676 = vunpack.c.l.b16 %v51
  %v677 = vunpack.c.h.b16 %v51
  %v678 = vunpack.c.l.b16 %v52
  %v679 = vunpack.c.h.b16 %v52
  %v680 = vunpack.c.l.b16 %v53
  %v681 = vunpack.c.h.b16 %v53
  %v682 = vunpack.c.l.b16 %v54
  %v683 = vunpack.c.h.b16 %v54
  %v684 = vunpack.c.l.b16 %v55
  %v685 = vunpack.c.h.b16 %v55
  %v686 = vunpack.c.l.b16 %v56
  %v687 = vunpack.c.h.b16 %v56
  %v688 = vunpack.c.l.b16 %v57
  %v689 = vunpack.c.h.b16 %v57
  %v690 = vunpack.c.l.b16 %v58
  %v691 = vunpack.c.h.b16 %v58
  %v692 = vunpack.c.l.b16 %v59
  %v693 = vunpack.c.h.b16 %v59
  %v694 = vunpack.c.l.b16 %v60
  %v695 = vunpack.c.h.b16 %v60
  %v696 = vunpack.c.l.b16 %v61
  %v697 = vunpack.c.h.b16 %v61
  %v698 = vunpack.c.l.b16 %v62
  %v699 = vunpack.c.h.b16 %v62
  %v700 = vunpack.c.l.b16 %v63
  %v701 = vunpack.c.h.b16 %v63
  %v702 = vunpack.c.l.b16 %v64
  %v703 = vunpack.c.h.b16 %v64
  %v704 = vunpack.c.l.b16 %v65
  %v705 = vunpack.c.h.b16 %v65
  %v706 = vunpack.c.l.b16 %v66
  %v707 = vunpack.c.h.b16 %v66
  %v708 = vunpack.c.l.b16 %v67
  %v709 = vunpack.c.h.b16 %v67
  %v710 = vunpack.c.l.b16 %v68
  %v711 = vunpack.c.h.b16 %v68
  %v712 = vunpack.c.l.b16 %v69
  %v713 = vunpack.c.h.b16 %v69
  %v714 = vunpack.c.l.b16 %v70
  %v715 = vunpack.c.h.b16 %v70
  %v716 = vunpack.c.l.b16 %v71
  %v717 = vunpack.c.h.b16 %v71
  %v718 = vunpack.c.l.b16 %v72
  %v719 = vunpack.c.h.b16 %v72
  %v720 = vunpack.c.l.b16 %v73
  %v721 = vunpack.c.h.b16 %v73
  %v722 = vunpack.c.l.b16 %v74
  %v723 = vunpack.c.h.b16 %v74
  %v724 = vunpack.c.l.b16 %v75
  %v725 = vunpack.c.h.b16 %v75
  %v726 = vunpack.c.l.b16 %v76
  %v727 = vunpack.c.h.b16 %v76
  %v728 = vunpack.c.l.b16 %v77
  %v729 = vunpack.c.h.b16 %v77
  %v730 = vunpack.c.l.b16 %v78
  %v731 = vunpack.c.h.b16 %v78
  %v732 = vunpack.c.l.b16 %v79
  %v733 = vunpack.c.h.b16 %v79
  %v734 = vunpack.c.l.b16 %v80
  %v735 = vunpack.c.h.b16 %v80
  %v736 = vunpack.c.l.b16 %v81
  %v737 = vunpack.c.h.b16 %v81
  %v738 = vunpack.c.l.b16 %v82
  %v739 = vunpack.c.h.b16 %v82
  %v740 = vunpack.c.l.b16 %v83
  %v741 = vunpack.c.h.b16 %v83
  %v742 = vunpack.c.l.b16 %v84
  %v743 = vunpack.c.h.b16 %v84
  %v744 = vunpack.c.l.b16 %v85
  %v745 = vunpack.c.h.b16 %v85
  %v746 = vunpack.c.l.b16 %v86
  %v747 = vunpack.c.h.b16 %v86
  %v748 = vunpack.c.l.b16 %v87
  %v749 = vunpack.c.h.b16 %v87
  %v750 = vunpack.c.l.b16 %v88
  %v751 = vunpack.c.h.b16 %v88
  %v752 = vunpack.c.l.b16 %v89
  %v753 = vunpack.c.h.b16 %v89
  %v754 = vunpack.c.l.b16 %v90
  %v755 = vunpack.c.h.b16 %v90
  %v756 = vunpack.c.l.b16 %v91
  %v757 = vunpack.c.h.b16 %v91
  %v758 = vunpack.c.l.b16 %v92
  %v759 = vunpack.c.h.b16 %v92
  %v760 = vunpack.c.l.b16 %v93
  %v761 = vunpack.c.h.b16 %v93
  %v762 = vunpack.c.l.b16 %v94
  %v763 = vunpack.c.h.b16 %v94
  %v764 = vunpack.c.l.b16 %v95
  %v765 = vunpack.c.h.b16 %v95
  %v766 = vunpack.c.l.b16 %v96
  %v767 = vunpack.c.h.b16 %v96
  %v768 = vunpack.c.l.b16 %v97
  %v769 = vunpack.c.h.b16 %v97
  %v770 = vunpack.c.l.b16 %v98
  %v771 = vunpack.c.h.b16 %v98
  %v772 = vunpack.c.l.b16 %v99
  %v773 = vunpack.c.h.b16 %v99
  %v774 = vunpack.c.l.b16 %v100
  %v775 = vunpack.c.h.b16 %v100
  %v776 = vunpack.c.l.b16 %v101
  %v777 = vunpack.c.h.b16 %v101
  %v778 = vunpack.c.l.b16 %v102
  %v779 = vunpack.c.h.b16 %v102
  %v780 = vunpack.c.l.b16 %v103
  %v781 = vunpack.c.h.b16 %v103
  %v782 = vunpack.c.l.b16 %v104
  %v783 = vunpack.c.h.b16 %v104
  %v784 = vunpack.c.l.b16 %v105
  %v785 = vunpack.c.h.b16 %v105
  %v786 = vunpack.c.l.b16 %v106
  %v787 = vunpack.c.h.b16 %v106
  %v788 = vunpack.c.l.b16 %v107
  %v789 = vunpack.c.h.b16 %v107
  %v790 = vunpack.c.l.b16 %v108
  %v791 = vunpack.c.h.b16 %v108
  %v792 = vunpack.c.l.b16 %v109
  %v793 = vunpack.c.h.b16 %v109
  %v794 = vunpack.c.l.b16 %v110
  %v795 = vunpack.c.h.b16 %v110
  %v796 = vunpack.c.l.b16 %v111
  %v797 = vunpack.c.h.b16 %v111
  %v798 = vunpack.c.l.b16 %v112
  %v799 = vunpack.c.h.b16 %v112
  %v800 = vunpack.c.l.b16 %v113
  %v801 = vunpack.c.h.b16 %v113
  %v802 = vunpack.c.l.b16 %v114
  %v803 = vunpack.c.h.b16 %v114
  %v804 = vunpack.c.l.b16 %v115
  %v805 = vunpack.c.h.b16 %v115
  %v806 = vunpack.c.l.b16 %v116
  %v807 = vunpack.c.h.b16 %v116
  %v808 = vunpack.c.l.b16 %v117
  %v809 = vunpack.c.h.b16 %v117
  %v810 = vunpack.c.l.b16 %v118
  %v811 = vunpack.c.h.b16 %v118
  %v812 = vunpack.c.l.b16 %v119
  %v813 = vunpack.c.h.b16 %v119
  %v814 = vunpack.c.l.b16 %v120
  %v815 = vunpack.c.h.b16 %v120
  %v816 = vunpack.c.l.b16 %v121
  %v817 = vunpack.c.h.b16 %v121
  %v818 = vunpack.c.l.b16 %v122
  %v819 = vunpack.c.h.b16 %v122
  %v820 = vunpack.c.l.b16 %v123
  %v821 = vunpack.c.h.b16 %v123
  %v822 = vunpack.c.l.b16 %v124
  %v823 = vunpack.c.h.b16 %v124
  %v824 = vunpack.c.l.b16 %v125
  %v825 = vunpack.c.h.b16 %v125
  %v826 = vunpack.c.l.b16 %v126
  %v827 = vunpack.c.h.b16 %v126
  %v828 = vunpack.c.l.b16 %v127
  %v829 = vunpack.c.h.b16 %v127
  %v830 = vunpack.c.l.b16 %v128
  %v831 = vunpack.c.h.b16 %v128
  %v832 = vunpack.c.l.b16 %v129
  %v833 = vunpack.c.h.b16 %v129
  %v834 = vunpack.c.l.b16 %v130
  %v835 = vunpack.c.h.b16 %v130
  %v836 = vunpack.c.l.b16 %v131
  %v837 = vunpack.c.h.b16 %v131
  %v838 = vunpack.c.l.b16 %v132
  %v839 = vunpack.c.h.b16 %v132
  %v840 = vunpack.c.l.b16 %v133
  %v841 = vunpack.c.h.b16 %v133
  %v842 = vunpack.c.l.b16 %v134
  %v843 = vunpack.c.h.b16 %v134
  %v844 = vunpack.c.l.b16 %v135
  %v845 = vunpack.c.h.b16 %v135
  %v846 = vunpack.c.l.b16 %v136
  %v847 = vunpack.c.h.b16 %v136
  %v848 = vunpack.c.l.b16 %v137
  %v849 = vunpack.c.h.b16 %v137
  %v850 = vunpack.c.l.b16 %v138
  %v851 = vunpack.c.h.b16 %v138
  %v852 = vunpack.c.l.b16 %v139
  %v853 = vunpack.c.h.b16 %v139
  %v854 = vunpack.c.l.b16 %v140
  %v855 = vunpack.c.h.b16 %v140
  %v856 = vunpack.c.l.b16 %v141
  %v857 = vunpack.c.h.b16 %v141
  %v858 = vunpack.c.l.b16 %v142
  %v859 = vunpack.c.h.b16 %v142
  %v860 = vunpack.c.l.b16 %v143
  %v861 = vunpack.c.h.b16 %v143
  %v862 = vunpack.c.l.b16 %v144
  %v863 = vunpack.c.h.b16 %v144
  %v864 = vunpack.c.l.b16 %v145
  %v865 = vunpack.c.h.b16 %v145
  %v866 = vunpack.c.l.b16 %v146
  %v867 = vunpack.c.h.b16 %v146
  %v868 = vunpack.c.l.b16 %v147
  %v869 = vunpack.c.h.b16 %v147
  %v870 = vunpack.c.l.b16 %v148
  %v871 = vunpack.c.h.b16 %v148
  %v872 = vunpack.c.l.b16 %v149
  %v873 = vunpack.c.h.b16 %v149
  %v874 = vunpack.c.l.b16 %v150
  %v875 = vunpack.c.h.b16 %v150
  %v876 = vunpack.c.l.b16 %v151
  %v877 = vunpack.c.h.b16 %v151
  %v878 = vunpack.c.l.b16 %v152
  %v879 = vunpack.c.h.b16 %v152
  %v880 = vunpack.c.l.b16 %v153
  %v881 = vunpack.c.h.b16 %v153
  %v882 = vunpack.c.l.b16 %v154
  %v883 = vunpack.c.h.b16 %v154
  %v884 = vunpack.c.l.b16 %v155
  %v885 = vunpack.c.h.b16 %v155
  %v886 = vunpack.c.l.b16 %v156
  %v887 = vunpack.c.h.b16 %v156
  %v888 = vunpack.c.l.b16 %v157
  %v889 = vunpack.c.h.b16 %v157
  %v890 = vunpack.c.l.b16 %v158
  %v891 = vunpack.c.h.b16 %v158
  %v892 = vunpack.c.l.b16 %v159
  %v893 = vunpack.c.h.b16 %v159
  %v894 = vunpack.c.l.b16 %v160
  %v895 = vunpack.c.h.b16 %v160
  %v896 = vunpack.c.l.b16 %v161
  %v897 = vunpack.c.h.b16 %v161
  %v898 = vunpack.c.l.b16 %v162
  %v899 = vunpack.c.h.b16 %v162
  %v900 = vunpack.c.l.b16 %v163
  %v901 = vunpack.c.h.b16 %v163
  %v902 = vunpack.c.l.b16 %v164
  %v903 = vunpack.c.h.b16 %v164
  %v904 = vunpack.c.l.b16 %v165
  %v905 = vunpack.c.h.b16 %v165
  %v906 = vunpack.c.l.b16 %v166
  %v907 = vunpack.c.h.b16 %v166
  %v908 = vunpack.c.l.b16 %v167
  %v909 = vunpack.c.h.b16 %v167
  %v910 = vunpack.c.l.b16 %v168
  %v911 = vunpack.c.h.b16 %v168
  %v912 = vunpack.c.l.b16 %v169
  %v913 = vunpack.c.h.b16 %v169
  %v914 = vunpack.c.l.b16 %v170
  %v915 = vunpack.c.h.b16 %v170
  %v916 = vunpack.c.l.b16 %v171
  %v917 = vunpack.c.h.b16 %v171
  %v918 = vunpack.c.l.b16 %v172
  %v919 = vunpack.c.h.b16 %v172
  %v920 = vunpack.c.l.b16 %v173
  %v921 = vunpack.c.h.b16 %v173
  %v922 = vunpack.c.l.b16 %v174
  %v923 = vunpack.c.h.b16 %v174
  %v924 = vunpack.c.l.b16 %v175
  %v925 = vunpack.c.h.b16 %v175
  %v926 = vunpack.c.l.b16 %v176
  %v927 = vunpack.c.h.b16 %v176
  %v928 = vunpack.c.l.b16 %v177
  %v929 = vunpack.c.h.b16 %v177
  %v930 = vunpack.c.l.b16 %v178
  %v931 = vunpack.c.h.b16 %v178
  %v932 = vunpack.c.l.b16 %v179
  %v933 = vunpack.c.h.b16 %v179
  %v934 = vunpack.c.l.b16 %v180
  %v935 = vunpack.c.h.b16 %v180
  %v936 = vunpack.c.l.b16 %v181
  %v937 = vunpack.c.h.b16 %v181
  %v938 = vunpack.c.l.b16 %v182
  %v939 = vunpack.c.h.b16 %v182
  %v940 = vunpack.c.l.b16 %v183
  %v941 = vunpack.c.h.b16 %v183
  %v942 = vunpack.c.l.b16 %v184
  %v943 = vunpack.c.h.b16 %v184
  %v944 = vunpack.c.l.b16 %v185
  %v945 = vunpack.c.h.b16 %v185
  %v946 = vunpack.c.l.b16 %v186
  %v947 = vunpack.c.h.b16 %v186
  %v948 = vunpack.c.l.b16 %v187
  %v949 = vunpack.c.h.b16 %v187
  %v950 = vunpack.c.l.b16 %v188
  %v951 = vunpack.c.h.b16 %v188
  %v952 = vunpack.c.l.b16 %v189
  %v953 = vunpack.c.h.b16 %v189
  %v954 = vunpack.c.l.b16 %v190
  %v955 = vunpack.c.h.b16 %v190
  %v956 = vunpack.c.l.b16 %v191
  %v957 = vunpack.c.h.b16 %v191
  %v958 = vunpack.c.l.b16 %v192
  %v959 = vunpack.c.h.b16 %v192
  %v960 = vunpack.c.l.b16 %v193
  %v961 = vunpack.c.h.b16 %v193
  %v962 = vunpack.c.l.b16 %v194
  %v963 = vunpack.c.h.b16 %v194
  %v964 = vunpack.c.l.b16 %v195
  %v965 = vunpack.c.h.b16 %v195
  %v966 = vunpack.c.l.b16 %v196
  %v967 = vunpack.c.h.b16 %v196
  %v968 = vunpack.c.l.b16 %v197
  %v969 = vunpack.c.h.b16 %v197
  %v970 = vunpack.c.l.b16 %v198
  %v971 = vunpack.c.h.b16 %v198
  %v972 = vunpack.c.l.b16 %v199
  %v973 = vunpack.c.h.b16 %v199
  %v974 = vunpack.c.l.b16 %v200
  %v975 = vunpack.c.h.b16 %v200
  %v976 = vunpack.c.l.b16 %v201
  %v977 = vunpack.c.h.b16 %v201
  %v978 = vunpack.c.l.b16 %v202
  %v979 = vunpack.c.h.b16 %v202
  %v980 = vunpack.c.l.b16 %v203
  %v981 = vunpack.c.h.b16 %v203
  %v982 = vunpack.c.l.b16 %v204
  %v983 = vunpack.c.h.b16 %v204
  %v984 = vunpack.c.l.b16 %v205
  %v985 = vunpack.c.h.b16 %v205
  %v986 = vunpack.c.l.b16 %v206
  %v987 = vunpack.c.h.b16 %v206
  %v988 = vunpack.c.l.b16 %v207
  %v989 = vunpack.c.h.b16 %v207
  %v990 = vunpack.c.l.b16 %v208
  %v991 = vunpack.c.h.b16 %v208
  %v992 = vunpack.c.l.b16 %v209
  %v993 = vunpack.c.h.b16 %v209
  %v994 = vunpack.c.l.b16 %v210
  %v995 = vunpack.c.h.b16 %v210
  %v996 = vunpack.c.l.b16 %v211
  %v997 = vunpack.c.h.b16 %v211
  %v998 = vunpack.c.l.b16 %v212
  %v999 = vunpack.c.h.b16 %v212
  %v1000 = vunpack.c.l.b16 %v213
  %v1001 = vunpack.c.h.b16 %v213
  %v1002 = vunpack.c.l.b16 %v214
  %v1003 = vunpack.c.h.b16 %v214
  %v1004 = vunpack.c.l.b16 %v215
  %v1005 = vunpack.c.h.b16 %v215
  %v1006 = vunpack.c.l.b16 %v216
  %v1007 = vunpack.c.h.b16 %v216
  %v1008 = vunpack.c.l.b16 %v217
  %v1009 = vunpack.c.h.b16 %v217
  %v1010 = vunpack.c.l.b16 %v218
  %v1011 = vunpack.c.h.b16 %v218
  %v1012 = vunpack.c.l.b16 %v219
  %v1013 = vunpack.c.h.b16 %v219
  %v1014 = vunpack.c.l.b16 %v220
  %v1015 = vunpack.c.h.b16 %v220
  %v1016 = vunpack.c.l.b16 %v221
  %v1017 = vunpack.c.h.b16 %v221
  %v1018 = vunpack.c.l.b16 %v222
  %v1019 = vunpack.c.h.b16 %v222
  %v1020 = vunpack.c.l.b16 %v223
  %v1021 = vunpack.c.h.b16 %v223
  %v1022 = vunpack.c.l.b16 %v224
  %v1023 = vunpack.c.h.b16 %v224
  %v1024 = vunpack.c.l.b16 %v225
  %v1025 = vunpack.c.h.b16 %v225
  %v1026 = vunpack.c.l.b16 %v226
  %v1027 = vunpack.c.h.b16 %v226
  %v1028 = vunpack.c.l.b16 %v227
  %v1029 = vunpack.c.h.b16 %v227
  %v1030 = vunpack.c.l.b16 %v228
  %v1031 = vunpack.c.h.b16 %v228
  %v1032 = vunpack.c.l.b16 %v229
  %v1033 = vunpack.c.h.b16 %v229
  %v1034 = vunpack.c.l.b16 %v230
  %v1035 = vunpack.c.h.b16 %v230
  %v1036 = vunpack.c.l.b16 %v231
  %v1037 = vunpack.c.h.b16 %v231
  %v1038 = vunpack.c.l.b16 %v232
  %v1039 = vunpack.c.h.b16 %v232
  %v1040 = vunpack.c.l.b16 %v233
  %v1041 = vunpack.c.h.b16 %v233
  %v1042 = vunpack.c.l.b16 %v234
  %v1043 = vunpack.c.h.b16 %v234
  %v1044 = vunpack.c.l.b16 %v235
  %v1045 = vunpack.c.h.b16 %v235
  %v1046 = vunpack.c.l.b16 %v236
  %v1047 = vunpack.c.h.b16 %v236
  %v1048 = vunpack.c.l.b16 %v237
  %v1049 = vunpack.c.h.b16 %v237
  %v1050 = vunpack.c.l.b16 %v238
  %v1051 = vunpack.c.h.b16 %v238
  %v1052 = vunpack.c.l.b16 %v239
  %v1053 = vunpack.c.h.b16 %v239
  %v1054 = vunpack.c.l.b16 %v240
  %v1055 = vunpack.c.h.b16 %v240
  %v1056 = vunpack.c.l.b16 %v241
  %v1057 = vunpack.c.h.b16 %v241
  %v1058 = vunpack.c.l.b16 %v242
  %v1059 = vunpack.c.h.b16 %v242
  %v1060 = vunpack.c.l.b16 %v243
  %v1061 = vunpack.c.h.b16 %v243
  %v1062 = vunpack.c.l.b16 %v244
  %v1063 = vunpack.c.h.b16 %v244
  %v1064 = vunpack.c.l.b16 %v245
  %v1065 = vunpack.c.h.b16 %v245
  %v1066 = vunpack.c.l.b16 %v246
  %v1067 = vunpack.c.h.b16 %v246
  %v1068 = vunpack.c.l.b16 %v247
  %v1069 = vunpack.c.h.b16 %v247
  %v1070 = vunpack.c.l.b16 %v248
  %v1071 = vunpack.c.h.b16 %v248
  %v1072 = vunpack.c.l.b16 %v249
  %v1073 = vunpack.c.h.b16 %v249
  %v1074 = vunpack.c.l.b16 %v250
  %v1075 = vunpack.c.h.b16 %v250
  %v1076 = vunpack.c.l.b16 %v251
  %v1077 = vunpack.c.h.b16 %v251
  %v1078 = vunpack.c.l.b16 %v252
  %v1079 = vunpack.c.h.b16 %v252
  %v1080 = vunpack.c.l.b16 %v253
  %v1081 = vunpack.c.h.b16 %v253
  %v1082 = vunpack.c.l.b16 %v254
  %v1083 = vunpack.c.h.b16 %v254
  %v1084 = vunpack.c.l.b16 %v255
  %v1085 = vunpack.c.h.b16 %v255
  %v1086 = vunpack.c.l.b16 %v256
  %v1087 = vunpack.c.h.b16 %v256
  %v1088 = vunpack.c.l.b16 %v257
  %v1089 = vunpack.c.h.b16 %v257
  %v1090 = vunpack.c.l.b16 %v258
  %v1091 = vunpack.c.h.b16 %v258
  %v1092 = vunpack.c.l.b16 %v259
  %v1093 = vunpack.c.h.b16 %v259
  %v1094 = vunpack.c.l.b16 %v260
  %v1095 = vunpack.c.h.b16 %v260
  %v1096 = vunpack.c.l.b16 %v261
  %v1097 = vunpack.c.h.b16 %v261
  %v1098 = vunpack.c.l.b16 %v262
  %v1099 = vunpack.c.h.b16 %v262
  %v1100 = vunpack.c.l.b16 %v263
  %v1101 = vunpack.c.h.b16 %v263
  %v1102 = vunpack.c.l.b16 %v264
  %v1103 = vunpack.c.h.b16 %v264
  %v1104 = vunpack.c.l.b16 %v265
  %v1105 = vunpack.c.h.b16 %v265
  %v1106 = vunpack.c.l.b16 %v266
  %v1107 = vunpack.c.h.b16 %v266
  %v1108 = vunpack.c.l.b16 %v267
  %v1109 = vunpack.c.h.b16 %v267
  %v1110 = vunpack.c.l.b16 %v268
  %v1111 = vunpack.c.h.b16 %v268
  %v1112 = vunpack.c.l.b16 %v269
  %v1113 = vunpack.c.h.b16 %v269
  %v1114 = vunpack.c.l.b16 %v270
  %v1115 = vunpack.c.h.b16 %v270
  %v1116 = vunpack.c.l.b16 %v271
  %v1117 = vunpack.c.h.b16 %v271
  %v1118 = vunpack.c.l.b16 %v272
  %v1119 = vunpack.c.h.b16 %v272
  %v1120 = vunpack.c.l.b16 %v273
  %v1121 = vunpack.c.h.b16 %v273
  %v1122 = vunpack.c.l.b16 %v274
  %v1123 = vunpack.c.h.b16 %v274
  %v1124 = vunpack.c.l.b16 %v275
  %v1125 = vunpack.c.h.b16 %v275
  %v1126 = vunpack.c.l.b16 %v276
  %v1127 = vunpack.c.h.b16 %v276
  %v1128 = vunpack.c.l.b16 %v277
  %v1129 = vunpack.c.h.b16 %v277
  %v1130 = vunpack.c.l.b16 %v278
  %v1131 = vunpack.c.h.b16 %v278
  %v1132 = vunpack.c.l.b16 %v279
  %v1133 = vunpack.c.h.b16 %v279
  %v1134 = vunpack.c.l.b16 %v280
  %v1135 = vunpack.c.h.b16 %v280
  %v1136 = vunpack.c.l.b16 %v281
  %v1137 = vunpack.c.h.b16 %v281
  %v1138 = vunpack.c.l.b16 %v282
  %v1139 = vunpack.c.h.b16 %v282
  %v1140 = vunpack.c.l.b16 %v283
  %v1141 = vunpack.c.h.b16 %v283
  %v1142 = vunpack.c.l.b16 %v284
  %v1143 = vunpack.c.h.b16 %v284
  %v1144 = vunpack.c.l.b16 %v285
  %v1145 = vunpack.c.h.b16 %v285
  %v1146 = vpack.c.b16 %v636, %v634
  %v1147 = vpack.c.b16 %v637, %v635
  %v1148 = vpack.c.b16 %v640, %v638
  %v1149 = vpack.c.b16 %v641, %v639
  %v1150 = vpack.c.b16 %v644, %v642
  %v1151 = vpack.c.b16 %v645, %v643
  %v1152 = vpack.c.b16 %v648, %v646
  %v1153 = vpack.c.b16 %v649, %v647
  %v1154 = vpack.c.b16 %v652, %v650
  %v1155 = vpack.c.b16 %v653, %v651
  %v1156 = vpack.c.b16 %v656, %v654
  %v1157 = vpack.c.b16 %v657, %v655
  %v1158 = vpack.c.b16 %v660, %v658
  %v1159 = vpack.c.b16 %v661, %v659
  %v1160 = vpack.c.b16 %v664, %v662
  %v1161 = vpack.c.b16 %v665, %v663
  %v1162 = vpack.c.b16 %v668, %v666
  %v1163 = vpack.c.b16 %v669, %v667
  %v1164 = vpack.c.b16 %v672, %v670
  %v1165 = vpack.c.b16 %v673, %v671
  %v1166 = vpack.c.b16 %v676, %v674
  %v1167 = vpack.c.b16 %v677, %v675
  %v1168 = vpack.c.b16 %v680, %v678
  %v1169 = vpack.c.b16 %v681, %v679
  %v1170 = vpack.c.b16 %v684, %v682
  %v1171 = vpack.c.b16 %v685, %v683
  %v1172 = vpack.c.b16 %v688, %v686
  %v1173 = vpack.c.b16 %v689, %v687
  %v1174 = vpack.c.b16 %v692, %v690
  %v1175 = vpack.c.b16 %v693, %v691
  %v1176 = vpack.c.b16 %v696, %v694
  %v1177 = vpack.c.b16 %v697, %v695
  %v1178 = vpack.c.b16 %v700, %v698
  %v1179 = vpack.c.b16 %v701, %v699
  %v1180 = vpack.c.b16 %v704, %v702
  %v1181 = vpack.c.b16 %v705, %v703
  %v1182 = vpack.c.b16 %v708, %v706
  %v1183 = vpack.c.b16 %v709, %v707
  %v1184 = vpack.c.b16 %v712, %v710
  %v1185 = vpack.c.b16 %v713, %v711
  %v1186 = vpack.c.b16 %v716, %v714
  %v1187 = vpack.c.b16 %v717, %v715
  %v1188 = vpack.c.b16 %v720, %v718
  %v1189 = vpack.c.b16 %v721, %v719
  %v1190 = vpack.c.b16 %v724, %v722
  %v1191 = vpack.c.b16 %v725, %v723
  %v1192 = vpack.c.b16 %v728, %v726
  %v1193 = vpack.c.b16 %v729, %v727
  %v1194 = vpack.c.b16 %v732, %v730
  %v1195 = vpack.c.b16 %v733, %v731
  %v1196 = vpack.c.b16 %v736, %v734
  %v1197 = vpack.c.b16 %v737, %v735
  %v1198 = vpack.c.b16 %v740, %v738
  %v1199 = vpack.c.b16 %v741, %v739
  %v1200 = vpack.c.b16 %v744, %v742
  %v1201 = vpack.c.b16 %v745, %v743
  %v1202 = vpack.c.b16 %v748, %v746
  %v1203 = vpack.c.b16 %v749, %v747
  %v1204 = vpack.c.b16 %v752, %v750
  %v1205 = vpack.c.b16 %v753, %v751
  %v1206 = vpack.c.b16 %v756, %v754
  %v1207 = vpack.c.b16 %v757, %v755
  %v1208 = vpack.c.b16 %v760, %v758
  %v1209 = vpack.c.b16 %v761, %v759
  %v1210 = vpack.c.b16 %v764, %v762
  %v1211 = vpack.c.b16 %v765, %v763
  %v1212 = vpack.c.b16 %v768, %v766
  %v1213 = vpack.c.b16 %v769, %v767
  %v1214 = vpack.c.b16 %v772, %v770
  %v1215 = vpack.c.b16 %v773, %v771
  %v1216 = vpack.c.b16 %v776, %v774
  %v1217 = vpack.c.b16 %v777, %v775
  %v1218 = vpack.c.b16 %v780, %v778
  %v1219 = vpack.c.b16 %v781, %v779
  %v1220 = vpack.c.b16 %v784, %v782
  %v1221 = vpack.c.b16 %v785, %v783
  %v1222 = vpack.c.b16 %v788, %v786
  %v1223 = vpack.c.b16 %v789, %v787
  %v1224 = vpack.c.b16 %v792, %v790
  %v1225 = vpack.c.b16 %v793, %v791
  %v1226 = vpack.c.b16 %v796, %v794
  %v1227 = vpack.c.b16 %v797, %v795
  %v1228 = vpack.c.b16 %v800, %v798
  %v1229 = vpack.c.b16 %v801, %v799
  %v1230 = vpack.c.b16 %v804, %v802
  %v1231 = vpack.c.b16 %v805, %v803
  %v1232 = vpack.c.b16 %v808, %v806
  %v1233 = vpack.c.b16 %v809, %v807
  %v1234 = vpack.c.b16 %v812, %v810
  %v1235 = vpack.c.b16 %v813, %v811
  %v1236 = vpack.c.b16 %v816, %v814
  %v1237 = vpack.c.b16 %v817, %v815
  %v1238 = vpack.c.b16 %v820, %v818
  %v1239 = vpack.c.b16 %v821, %v819
  %v1240 = vpack.c.b16 %v824, %v822
  %v1241 = vpack.c.b16 %v825, %v823
  %v1242 = vpack.c.b16 %v828, %v826
  %v1243 = vpack.c.b16 %v829, %v827
  %v1244 = vpack.c.b16 %v832, %v830
  %v1245 = vpack.c.b16 %v833, %v831
  %v1246 = vpack.c.b16 %v836, %v834
  %v1247 = vpack.c.b16 %v837, %v835
  %v1248 = vpack.c.b16 %v840, %v838
  %v1249 = vpack.c.b16 %v841, %v839
  %v1250 = vpack.c.b16 %v844, %v842
  %v1251 = vpack.c.b16 %v845, %v843
  %v1252 = vpack.c.b16 %v848, %v846
  %v1253 = vpack.c.b16 %v849, %v847
  %v1254 = vpack.c.b16 %v852, %v850
  %v1255 = vpack.c.b16 %v853, %v851
  %v1256 = vpack.c.b16 %v856, %v854
  %v1257 = vpack.c.b16 %v857, %v855
  %v1258 = vpack.c.b16 %v860, %v858
  %v1259 = vpack.c.b16 %v861, %v859
  %v1260 = vpack.c.b16 %v864, %v862
  %v1261 = vpack.c.b16 %v865, %v863
  %v1262 = vpack.c.b16 %v868, %v866
  %v1263 = vpack.c.b16 %v869, %v867
  %v1264 = vpack.c.b16 %v872, %v870
  %v1265 = vpack.c.b16 %v873, %v871
  %v1266 = vpack.c.b16 %v876, %v874
  %v1267 = vpack.c.b16 %v877, %v875
  %v1268 = vpack.c.b16 %v880, %v878
  %v1269 = vpack.c.b16 %v881, %v879
  %v1270 = vpack.c.b16 %v884, %v882
  %v1271 = vpack.c.b16 %v885, %v883
  %v1272 = vpack.c.b16 %v888, %v886
  %v1273 = vpack.c.b16 %v889, %v887
  %v1274 = vpack.c.b16 %v892, %v890
  %v1275 = vpack.c.b16 %v893, %v891
  %v1276 = vpack.c.b16 %v896, %v894
  %v1277 = vpack.c.b16 %v897, %v895
  %v1278 = vpack.c.b16 %v900, %v898
  %v1279 = vpack.c.b16 %v901, %v899
  %v1280 = vpack.c.b16 %v904, %v902
  %v1281 = vpack.c.b16 %v905, %v903
  %v1282 = vpack.c.b16 %v908, %v906
  %v1283 = vpack.c.b16 %v909, %v907
  %v1284 = vpack.c.b16 %v912, %v910
  %v1285 = vpack.c.b16 %v913, %v911
  %v1286 = vpack.c.b16 %v916, %v914
  %v1287 = vpack.c.b16 %v917, %v915
  %v1288 = vpack.c.b16 %v920, %v918
  %v1289 = vpack.c.b16 %v921, %v919
  %v1290 = vpack.c.b16 %v924, %v922
  %v1291 = vpack.c.b16 %v925, %v923
  %v1292 = vpack.c.b16 %v928, %v926
  %v1293 = vpack.c.b16 %v929, %v927
  %v1294 = vpack.c.b16 %v932, %v930
  %v1295 = vpack.c.b16 %v933, %v931
  %v1296 = vpack.c.b16 %v936, %v934
  %v1297 = vpack.c.b16 %v937, %v935
  %v1298 = vpack.c.b16 %v940, %v938
  %v1299 = vpack.c.b16 %v941, %v939
  %v1300 = vpack.c.b16 %v944, %v942
  %v1301 = vpack.c.b16 %v945, %v943
  %v1302 = vpack.c.b16 %v948, %v946
  %v1303 = vpack.c.b16 %v949, %v947
  %v1304 = vpack.c.b16 %v952, %v950
  %v1305 = vpack.c.b16 %v953, %v951
  %v1306 = vpack.c.b16 %v956, %v954
  %v1307 = vpack.c.b16 %v957, %v955
  %v1308 = vpack.c.b16 %v960, %v958
  %v1309 = vpack.c.b16 %v961, %v959
  %v1310 = vpack.c.b16 %v964, %v962
  %v1311 = vpack.c.b16 %v965, %v963
  %v1312 = vpack.c.b16 %v968, %v966
  %v1313 = vpack.c.b16 %v969, %v967
  %v1314 = vpack.c.b16 %v972, %v970
  %v1315 = vpack.c.b16 %v973, %v971
  %v1316 = vpack.c.b16 %v976, %v974
  %v1317 = vpack.c.b16 %v977, %v975
  %v1318 = vpack.c.b16 %v980, %v978
  %v1319 = vpack.c.b16 %v981, %v979
  %v1320 = vpack.c.b16 %v984, %v982
  %v1321 = vpack.c.b16 %v985, %v983
  %v1322 = vpack.c.b16 %v988, %v986
  %v1323 = vpack.c.b16 %v989, %v987
  %v1324 = vpack.c.b16 %v992, %v990
  %v1325 = vpack.c.b16 %v993, %v991
  %v1326 = vpack.c.b16 %v996, %v994
  %v1327 = vpack.c.b16 %v997, %v995
  %v1328 = vpack.c.b16 %v1000, %v998
  %v1329 = vpack.c.b16 %v1001, %v999
  %v1330 = vpack.c.b16 %v1004, %v1002
  %v1331 = vpack.c.b16 %v1005, %v1003
  %v1332 = vpack.c.b16 %v1008, %v1006
  %v1333 = vpack.c.b16 %v1009, %v1007
  %v1334 = vpack.c.b16 %v1012, %v1010
  %v1335 = vpack.c.b16 %v1013, %v1011
  %v1336 = vpack.c.b16 %v1016, %v1014
  %v1337 = vpack.c.b16 %v1017, %v1015
  %v1338 = vpack.c.b16 %v1020, %v1018
  %v1339 = vpack.c.b16 %v1021, %v1019
  %v1340 = vpack.c.b16 %v1024, %v1022
  %v1341 = vpack.c.b16 %v1025, %v1023
  %v1342 = vpack.c.b16 %v1028, %v1026
  %v1343 = vpack.c.b16 %v1029, %v1027
  %v1344 = vpack.c.b16 %v1032, %v1030
  %v1345 = vpack.c.b16 %v1033, %v1031
  %v1346 = vpack.c.b16 %v1036, %v1034
  %v1347 = vpack.c.b16 %v1037, %v1035
  %v1348 = vpack.c.b16 %v1040, %v1038
  %v1349 = vpack.c.b16 %v1041, %v1039
  %v1350 = vpack.c.b16 %v1044, %v1042
  %v1351 = vpack.c.b16 %v1045, %v1043
  %v1352 = vpack.c.b16 %v1048, %v1046
  %v1353 = vpack.c.b16 %v1049, %v1047
  %v1354 = vpack.c.b16 %v1052, %v1050
  %v1355 = vpack.c.b16 %v1053, %v1051
  %v1356 = vpack.c.b16 %v1056, %v1054
  %v1357 = vpack.c.b16 %v1057, %v1055
  %v1358 = vpack.c.b16 %v1060, %v1058
  %v1359 = vpack.c.b16 %v1061, %v1059
  %v1360 = vpack.c.b16 %v1064, %v1062
  %v1361 = vpack.c.b16 %v1065, %v1063
  %v1362 = vpack.c.b16 %v1068, %v1066
  %v1363 = vpack.c.b16 %v1069, %v1067
  %v1364 = vpack.c.b16 %v1072, %v1070
  %v1365 = vpack.c.b16 %v1073, %v1071
  %v1366 = vpack.c.b16 %v1076, %v1074
  %v1367 = vpack.c.b16 %v1077, %v1075
  %v1368 = vpack.c.b16 %v1080, %v1078
  %v1369 = vpack.c.b16 %v1081, %v1079
  %v1370 = vpack.c.b16 %v1084, %v1082
  %v1371 = vpack.c.b16 %v1085, %v1083
  %v1372 = vpack.c.b16 %v1088, %v1086
  %v1373 = vpack.c.b16 %v1089, %v1087
  %v1374 = vpack.c.b16 %v1092, %v1090
  %v1375 = vpack.c.b16 %v1093, %v1091
  %v1376 = vpack.c.b16 %v1096, %v1094
  %v1377 = vpack.c.b16 %v1097, %v1095
  %v1378 = vpack.c.b16 %v1100, %v1098
  %v1379 = vpack.c.b16 %v1101, %v1099
  %v1380 = vpack.c.b16 %v1104, %v1102
  %v1381 = vpack.c.b16 %v1105, %v1103
  %v1382 = vpack.c.b16 %v1108, %v1106
  %v1383 = vpack.c.b16 %v1109, %v1107
  %v1384 = vpack.c.b16 %v1112, %v1110
  %v1385 = vpack.c.b16 %v1113, %v1111
  %v1386 = vpack.c.b16 %v1116, %v1114
  %v1387 = vpack.c.b16 %v1117, %v1115
  %v1388 = vpack.c.b16 %v1120, %v1118
  %v1389 = vpack.c.b16 %v1121, %v1119
  %v1390 = vpack.c.b16 %v1124, %v1122
  %v1391 = vpack.c.b16 %v1125, %v1123
  %v1392 = vpack.c.b16 %v1128, %v1126
  %v1393 = vpack.c.b16 %v1129, %v1127
  %v1394 = vpack.c.b16 %v1132, %v1130
  %v1395 = vpack.c.b16 %v1133, %v1131
  %v1396 = vpack.c.b16 %v1136, %v1134
  %v1397 = vpack.c.b16 %v1137, %v1135
  %v1398 = vpack.c.b16 %v1140, %v1138
  %v1399 = vpack.c.b16 %v1141, %v1139
  %v1400 = vpack.c.b16 %v1144, %v1142
  %v1401 = vpack.c.b16 %v1145, %v1143
  %1658 = vmatprep.subr.bf16.mxu0 %v1161
  %1659 = vmatpush1.bf16.msra.mxu0 %v1160
  %1660 = vmatprep.subr.bf16.mxu0 %v1159
  %1661 = vmatpush1.bf16.msra.mxu0 %v1158
  %1662 = vmatprep.subr.bf16.mxu0 %v1157
  %1663 = vmatpush1.bf16.msra.mxu0 %v1156
  %1664 = vmatprep.subr.bf16.mxu0 %v1155
  %1665 = vmatpush1.bf16.msra.mxu0 %v1154
  %1666 = vmatprep.subr.bf16.mxu0 %v1153
  %1667 = vmatpush1.bf16.msra.mxu0 %v1152
  %1668 = vmatprep.subr.bf16.mxu0 %v1151
  %1669 = vmatpush1.bf16.msra.mxu0 %v1150
  %1670 = vmatprep.subr.bf16.mxu0 %v1149
  %1671 = vmatpush1.bf16.msra.mxu0 %v1148
  %1672 = vmatprep.subr.bf16.mxu0 %v1147
  %1673 = vmatpush1.bf16.msra.mxu0 %v1146
  %1674 = vmatprep.subr.bf16.mxu0 %v1177
  %1675 = vmatpush2.bf16.msra.mxu0 %v1176
  %1676 = vmatprep.subr.bf16.mxu0 %v1175
  %1677 = vmatpush2.bf16.msra.mxu0 %v1174
  %1678 = vmatprep.subr.bf16.mxu0 %v1173
  %1679 = vmatpush2.bf16.msra.mxu0 %v1172
  %1680 = vmatprep.subr.bf16.mxu0 %v1171
  %1681 = vmatpush2.bf16.msra.mxu0 %v1170
  %1682 = vmatprep.subr.bf16.mxu0 %v1169
  %1683 = vmatpush2.bf16.msra.mxu0 %v1168
  %1684 = vmatprep.subr.bf16.mxu0 %v1167
  %1685 = vmatpush2.bf16.msra.mxu0 %v1166
  %1686 = vmatprep.subr.bf16.mxu0 %v1165
  %1687 = vmatpush2.bf16.msra.mxu0 %v1164
  %1688 = vmatprep.subr.bf16.mxu0 %v1163
  %1689 = vmatpush2.bf16.msra.mxu0 %v1162
  %1690 = vmatprep.mubr.bf16.mxu0 %v347
  %1691 = vmatmul.mubr.bf16.gmra.mxu0 %v346
  %v1692 = vpop.f32.mrf.mxu0
  %v1693 = vadd.f32 %v291, %v1692
  %v1694 = vpop.f32.mrf.mxu0
  %v1695 = vadd.f32 %v295, %v1694
  %v1696 = vpop.f32.mrf.mxu0
  %v1697 = vadd.f32 %v291, %v1696
  %v1698 = vpop.f32.mrf.mxu0
  %v1699 = vadd.f32 %v295, %v1698
  %1700 = vdwg.mxu0
  %1701 = vmatprep.subr.bf16.mxu0 %v1193
  %1702 = vmatpush1.bf16.msra.mxu0 %v1192
  %1703 = vmatprep.subr.bf16.mxu0 %v1191
  %1704 = vmatpush1.bf16.msra.mxu0 %v1190
  %1705 = vmatprep.subr.bf16.mxu0 %v1189
  %1706 = vmatpush1.bf16.msra.mxu0 %v1188
  %1707 = vmatprep.subr.bf16.mxu0 %v1187
  %1708 = vmatpush1.bf16.msra.mxu0 %v1186
  %1709 = vmatprep.subr.bf16.mxu0 %v1185
  %1710 = vmatpush1.bf16.msra.mxu0 %v1184
  %1711 = vmatprep.subr.bf16.mxu0 %v1183
  %1712 = vmatpush1.bf16.msra.mxu0 %v1182
  %1713 = vmatprep.subr.bf16.mxu0 %v1181
  %1714 = vmatpush1.bf16.msra.mxu0 %v1180
  %1715 = vmatprep.subr.bf16.mxu0 %v1179
  %1716 = vmatpush1.bf16.msra.mxu0 %v1178
  %1717 = vmatprep.subr.bf16.mxu0 %v1209
  %1718 = vmatpush2.bf16.msra.mxu0 %v1208
  %1719 = vmatprep.subr.bf16.mxu0 %v1207
  %1720 = vmatpush2.bf16.msra.mxu0 %v1206
  %1721 = vmatprep.subr.bf16.mxu0 %v1205
  %1722 = vmatpush2.bf16.msra.mxu0 %v1204
  %1723 = vmatprep.subr.bf16.mxu0 %v1203
  %1724 = vmatpush2.bf16.msra.mxu0 %v1202
  %1725 = vmatprep.subr.bf16.mxu0 %v1201
  %1726 = vmatpush2.bf16.msra.mxu0 %v1200
  %1727 = vmatprep.subr.bf16.mxu0 %v1199
  %1728 = vmatpush2.bf16.msra.mxu0 %v1198
  %1729 = vmatprep.subr.bf16.mxu0 %v1197
  %1730 = vmatpush2.bf16.msra.mxu0 %v1196
  %1731 = vmatprep.subr.bf16.mxu0 %v1195
  %1732 = vmatpush2.bf16.msra.mxu0 %v1194
  %1733 = vmatprep.mubr.bf16.mxu0 %v349
  %1734 = vmatmul.mubr.bf16.gmra.mxu0 %v348
  %v1735 = vpop.f32.mrf.mxu0
  %v1736 = vadd.f32 %v1693, %v1735
  %v1737 = vpop.f32.mrf.mxu0
  %v1738 = vadd.f32 %v1695, %v1737
  %v1739 = vpop.f32.mrf.mxu0
  %v1740 = vadd.f32 %v1697, %v1739
  %v1741 = vpop.f32.mrf.mxu0
  %v1742 = vadd.f32 %v1699, %v1741
  %1743 = vdwg.mxu0
  %1744 = vmatprep.subr.bf16.mxu0 %v1225
  %1745 = vmatpush1.bf16.msra.mxu0 %v1224
  %1746 = vmatprep.subr.bf16.mxu0 %v1223
  %1747 = vmatpush1.bf16.msra.mxu0 %v1222
  %1748 = vmatprep.subr.bf16.mxu0 %v1221
  %1749 = vmatpush1.bf16.msra.mxu0 %v1220
  %1750 = vmatprep.subr.bf16.mxu0 %v1219
  %1751 = vmatpush1.bf16.msra.mxu0 %v1218
  %1752 = vmatprep.subr.bf16.mxu0 %v1217
  %1753 = vmatpush1.bf16.msra.mxu0 %v1216
  %1754 = vmatprep.subr.bf16.mxu0 %v1215
  %1755 = vmatpush1.bf16.msra.mxu0 %v1214
  %1756 = vmatprep.subr.bf16.mxu0 %v1213
  %1757 = vmatpush1.bf16.msra.mxu0 %v1212
  %1758 = vmatprep.subr.bf16.mxu0 %v1211
  %1759 = vmatpush1.bf16.msra.mxu0 %v1210
  %1760 = vmatprep.subr.bf16.mxu0 %v1241
  %1761 = vmatpush2.bf16.msra.mxu0 %v1240
  %1762 = vmatprep.subr.bf16.mxu0 %v1239
  %1763 = vmatpush2.bf16.msra.mxu0 %v1238
  %1764 = vmatprep.subr.bf16.mxu0 %v1237
  %1765 = vmatpush2.bf16.msra.mxu0 %v1236
  %1766 = vmatprep.subr.bf16.mxu0 %v1235
  %1767 = vmatpush2.bf16.msra.mxu0 %v1234
  %1768 = vmatprep.subr.bf16.mxu0 %v1233
  %1769 = vmatpush2.bf16.msra.mxu0 %v1232
  %1770 = vmatprep.subr.bf16.mxu0 %v1231
  %1771 = vmatpush2.bf16.msra.mxu0 %v1230
  %1772 = vmatprep.subr.bf16.mxu0 %v1229
  %1773 = vmatpush2.bf16.msra.mxu0 %v1228
  %1774 = vmatprep.subr.bf16.mxu0 %v1227
  %1775 = vmatpush2.bf16.msra.mxu0 %v1226
  %1776 = vmatprep.mubr.bf16.mxu0 %v351
  %1777 = vmatmul.mubr.bf16.gmra.mxu0 %v350
  %v1778 = vpop.f32.mrf.mxu0
  %v1779 = vadd.f32 %v1736, %v1778
  %v1780 = vpop.f32.mrf.mxu0
  %v1781 = vadd.f32 %v1738, %v1780
  %v1782 = vpop.f32.mrf.mxu0
  %v1783 = vadd.f32 %v1740, %v1782
  %v1784 = vpop.f32.mrf.mxu0
  %v1785 = vadd.f32 %v1742, %v1784
  %1786 = vdwg.mxu0
  %1787 = vmatprep.subr.bf16.mxu0 %v1257
  %1788 = vmatpush1.bf16.msra.mxu0 %v1256
  %1789 = vmatprep.subr.bf16.mxu0 %v1255
  %1790 = vmatpush1.bf16.msra.mxu0 %v1254
  %1791 = vmatprep.subr.bf16.mxu0 %v1253
  %1792 = vmatpush1.bf16.msra.mxu0 %v1252
  %1793 = vmatprep.subr.bf16.mxu0 %v1251
  %1794 = vmatpush1.bf16.msra.mxu0 %v1250
  %1795 = vmatprep.subr.bf16.mxu0 %v1249
  %1796 = vmatpush1.bf16.msra.mxu0 %v1248
  %1797 = vmatprep.subr.bf16.mxu0 %v1247
  %1798 = vmatpush1.bf16.msra.mxu0 %v1246
  %1799 = vmatprep.subr.bf16.mxu0 %v1245
  %1800 = vmatpush1.bf16.msra.mxu0 %v1244
  %1801 = vmatprep.subr.bf16.mxu0 %v1243
  %1802 = vmatpush1.bf16.msra.mxu0 %v1242
  %1803 = vmatprep.subr.bf16.mxu0 %v1273
  %1804 = vmatpush2.bf16.msra.mxu0 %v1272
  %1805 = vmatprep.subr.bf16.mxu0 %v1271
  %1806 = vmatpush2.bf16.msra.mxu0 %v1270
  %1807 = vmatprep.subr.bf16.mxu0 %v1269
  %1808 = vmatpush2.bf16.msra.mxu0 %v1268
  %1809 = vmatprep.subr.bf16.mxu0 %v1267
  %1810 = vmatpush2.bf16.msra.mxu0 %v1266
  %1811 = vmatprep.subr.bf16.mxu0 %v1265
  %1812 = vmatpush2.bf16.msra.mxu0 %v1264
  %1813 = vmatprep.subr.bf16.mxu0 %v1263
  %1814 = vmatpush2.bf16.msra.mxu0 %v1262
  %1815 = vmatprep.subr.bf16.mxu0 %v1261
  %1816 = vmatpush2.bf16.msra.mxu0 %v1260
  %1817 = vmatprep.subr.bf16.mxu0 %v1259
  %1818 = vmatpush2.bf16.msra.mxu0 %v1258
  %1819 = vmatprep.mubr.bf16.mxu0 %v353
  %1820 = vmatmul.mubr.bf16.gmra.mxu0 %v352
  %v1821 = vpop.f32.mrf.mxu0
  %v1822 = vadd.f32 %v1779, %v1821
  %v1823 = vpop.f32.mrf.mxu0
  %v1824 = vadd.f32 %v1781, %v1823
  %v1825 = vpop.f32.mrf.mxu0
  %v1826 = vadd.f32 %v1783, %v1825
  %v1827 = vpop.f32.mrf.mxu0
  %v1828 = vadd.f32 %v1785, %v1827
  %1829 = vdwg.mxu0
  %1830 = vmatprep.subr.bf16.mxu0 %v1289
  %1831 = vmatpush1.bf16.msra.mxu0 %v1288
  %1832 = vmatprep.subr.bf16.mxu0 %v1287
  %1833 = vmatpush1.bf16.msra.mxu0 %v1286
  %1834 = vmatprep.subr.bf16.mxu0 %v1285
  %1835 = vmatpush1.bf16.msra.mxu0 %v1284
  %1836 = vmatprep.subr.bf16.mxu0 %v1283
  %1837 = vmatpush1.bf16.msra.mxu0 %v1282
  %1838 = vmatprep.subr.bf16.mxu0 %v1281
  %1839 = vmatpush1.bf16.msra.mxu0 %v1280
  %1840 = vmatprep.subr.bf16.mxu0 %v1279
  %1841 = vmatpush1.bf16.msra.mxu0 %v1278
  %1842 = vmatprep.subr.bf16.mxu0 %v1277
  %1843 = vmatpush1.bf16.msra.mxu0 %v1276
  %1844 = vmatprep.subr.bf16.mxu0 %v1275
  %1845 = vmatpush1.bf16.msra.mxu0 %v1274
  %1846 = vmatprep.subr.bf16.mxu0 %v1305
  %1847 = vmatpush2.bf16.msra.mxu0 %v1304
  %1848 = vmatprep.subr.bf16.mxu0 %v1303
  %1849 = vmatpush2.bf16.msra.mxu0 %v1302
  %1850 = vmatprep.subr.bf16.mxu0 %v1301
  %1851 = vmatpush2.bf16.msra.mxu0 %v1300
  %1852 = vmatprep.subr.bf16.mxu0 %v1299
  %1853 = vmatpush2.bf16.msra.mxu0 %v1298
  %1854 = vmatprep.subr.bf16.mxu0 %v1297
  %1855 = vmatpush2.bf16.msra.mxu0 %v1296
  %1856 = vmatprep.subr.bf16.mxu0 %v1295
  %1857 = vmatpush2.bf16.msra.mxu0 %v1294
  %1858 = vmatprep.subr.bf16.mxu0 %v1293
  %1859 = vmatpush2.bf16.msra.mxu0 %v1292
  %1860 = vmatprep.subr.bf16.mxu0 %v1291
  %1861 = vmatpush2.bf16.msra.mxu0 %v1290
  %1862 = vmatprep.mubr.bf16.mxu0 %v355
  %1863 = vmatmul.mubr.bf16.gmra.mxu0 %v354
  %v1864 = vpop.f32.mrf.mxu0
  %v1865 = vadd.f32 %v1822, %v1864
  %v1866 = vpop.f32.mrf.mxu0
  %v1867 = vadd.f32 %v1824, %v1866
  %v1868 = vpop.f32.mrf.mxu0
  %v1869 = vadd.f32 %v1826, %v1868
  %v1870 = vpop.f32.mrf.mxu0
  %v1871 = vadd.f32 %v1828, %v1870
  %1872 = vdwg.mxu0
  %1873 = vmatprep.subr.bf16.mxu0 %v1321
  %1874 = vmatpush1.bf16.msra.mxu0 %v1320
  %1875 = vmatprep.subr.bf16.mxu0 %v1319
  %1876 = vmatpush1.bf16.msra.mxu0 %v1318
  %1877 = vmatprep.subr.bf16.mxu0 %v1317
  %1878 = vmatpush1.bf16.msra.mxu0 %v1316
  %1879 = vmatprep.subr.bf16.mxu0 %v1315
  %1880 = vmatpush1.bf16.msra.mxu0 %v1314
  %1881 = vmatprep.subr.bf16.mxu0 %v1313
  %1882 = vmatpush1.bf16.msra.mxu0 %v1312
  %1883 = vmatprep.subr.bf16.mxu0 %v1311
  %1884 = vmatpush1.bf16.msra.mxu0 %v1310
  %1885 = vmatprep.subr.bf16.mxu0 %v1309
  %1886 = vmatpush1.bf16.msra.mxu0 %v1308
  %1887 = vmatprep.subr.bf16.mxu0 %v1307
  %1888 = vmatpush1.bf16.msra.mxu0 %v1306
  %1889 = vmatprep.subr.bf16.mxu0 %v1337
  %1890 = vmatpush2.bf16.msra.mxu0 %v1336
  %1891 = vmatprep.subr.bf16.mxu0 %v1335
  %1892 = vmatpush2.bf16.msra.mxu0 %v1334
  %1893 = vmatprep.subr.bf16.mxu0 %v1333
  %1894 = vmatpush2.bf16.msra.mxu0 %v1332
  %1895 = vmatprep.subr.bf16.mxu0 %v1331
  %1896 = vmatpush2.bf16.msra.mxu0 %v1330
  %1897 = vmatprep.subr.bf16.mxu0 %v1329
  %1898 = vmatpush2.bf16.msra.mxu0 %v1328
  %1899 = vmatprep.subr.bf16.mxu0 %v1327
  %1900 = vmatpush2.bf16.msra.mxu0 %v1326
  %1901 = vmatprep.subr.bf16.mxu0 %v1325
  %1902 = vmatpush2.bf16.msra.mxu0 %v1324
  %1903 = vmatprep.subr.bf16.mxu0 %v1323
  %1904 = vmatpush2.bf16.msra.mxu0 %v1322
  %1905 = vmatprep.mubr.bf16.mxu0 %v357
  %1906 = vmatmul.mubr.bf16.gmra.mxu0 %v356
  %v1907 = vpop.f32.mrf.mxu0
  %v1908 = vadd.f32 %v1865, %v1907
  %v1909 = vpop.f32.mrf.mxu0
  %v1910 = vadd.f32 %v1867, %v1909
  %v1911 = vpop.f32.mrf.mxu0
  %v1912 = vadd.f32 %v1869, %v1911
  %v1913 = vpop.f32.mrf.mxu0
  %v1914 = vadd.f32 %v1871, %v1913
  %1915 = vdwg.mxu0
  %1916 = vmatprep.subr.bf16.mxu0 %v1353
  %1917 = vmatpush1.bf16.msra.mxu0 %v1352
  %1918 = vmatprep.subr.bf16.mxu0 %v1351
  %1919 = vmatpush1.bf16.msra.mxu0 %v1350
  %1920 = vmatprep.subr.bf16.mxu0 %v1349
  %1921 = vmatpush1.bf16.msra.mxu0 %v1348
  %1922 = vmatprep.subr.bf16.mxu0 %v1347
  %1923 = vmatpush1.bf16.msra.mxu0 %v1346
  %1924 = vmatprep.subr.bf16.mxu0 %v1345
  %1925 = vmatpush1.bf16.msra.mxu0 %v1344
  %1926 = vmatprep.subr.bf16.mxu0 %v1343
  %1927 = vmatpush1.bf16.msra.mxu0 %v1342
  %1928 = vmatprep.subr.bf16.mxu0 %v1341
  %1929 = vmatpush1.bf16.msra.mxu0 %v1340
  %1930 = vmatprep.subr.bf16.mxu0 %v1339
  %1931 = vmatpush1.bf16.msra.mxu0 %v1338
  %1932 = vmatprep.subr.bf16.mxu0 %v1369
  %1933 = vmatpush2.bf16.msra.mxu0 %v1368
  %1934 = vmatprep.subr.bf16.mxu0 %v1367
  %1935 = vmatpush2.bf16.msra.mxu0 %v1366
  %1936 = vmatprep.subr.bf16.mxu0 %v1365
  %1937 = vmatpush2.bf16.msra.mxu0 %v1364
  %1938 = vmatprep.subr.bf16.mxu0 %v1363
  %1939 = vmatpush2.bf16.msra.mxu0 %v1362
  %1940 = vmatprep.subr.bf16.mxu0 %v1361
  %1941 = vmatpush2.bf16.msra.mxu0 %v1360
  %1942 = vmatprep.subr.bf16.mxu0 %v1359
  %1943 = vmatpush2.bf16.msra.mxu0 %v1358
  %1944 = vmatprep.subr.bf16.mxu0 %v1357
  %1945 = vmatpush2.bf16.msra.mxu0 %v1356
  %1946 = vmatprep.subr.bf16.mxu0 %v1355
  %1947 = vmatpush2.bf16.msra.mxu0 %v1354
  %1948 = vmatprep.mubr.bf16.mxu0 %v359
  %1949 = vmatmul.mubr.bf16.gmra.mxu0 %v358
  %v1950 = vpop.f32.mrf.mxu0
  %v1951 = vadd.f32 %v1908, %v1950
  %v1952 = vpop.f32.mrf.mxu0
  %v1953 = vadd.f32 %v1910, %v1952
  %v1954 = vpop.f32.mrf.mxu0
  %v1955 = vadd.f32 %v1912, %v1954
  %v1956 = vpop.f32.mrf.mxu0
  %v1957 = vadd.f32 %v1914, %v1956
  %1958 = vdwg.mxu0
  %1959 = vmatprep.subr.bf16.mxu0 %v1385
  %1960 = vmatpush1.bf16.msra.mxu0 %v1384
  %1961 = vmatprep.subr.bf16.mxu0 %v1383
  %1962 = vmatpush1.bf16.msra.mxu0 %v1382
  %1963 = vmatprep.subr.bf16.mxu0 %v1381
  %1964 = vmatpush1.bf16.msra.mxu0 %v1380
  %1965 = vmatprep.subr.bf16.mxu0 %v1379
  %1966 = vmatpush1.bf16.msra.mxu0 %v1378
  %1967 = vmatprep.subr.bf16.mxu0 %v1377
  %1968 = vmatpush1.bf16.msra.mxu0 %v1376
  %1969 = vmatprep.subr.bf16.mxu0 %v1375
  %1970 = vmatpush1.bf16.msra.mxu0 %v1374
  %1971 = vmatprep.subr.bf16.mxu0 %v1373
  %1972 = vmatpush1.bf16.msra.mxu0 %v1372
  %1973 = vmatprep.subr.bf16.mxu0 %v1371
  %1974 = vmatpush1.bf16.msra.mxu0 %v1370
  %1975 = vmatprep.subr.bf16.mxu0 %v1401
  %1976 = vmatpush2.bf16.msra.mxu0 %v1400
  %1977 = vmatprep.subr.bf16.mxu0 %v1399
  %1978 = vmatpush2.bf16.msra.mxu0 %v1398
  %1979 = vmatprep.subr.bf16.mxu0 %v1397
  %1980 = vmatpush2.bf16.msra.mxu0 %v1396
  %1981 = vmatprep.subr.bf16.mxu0 %v1395
  %1982 = vmatpush2.bf16.msra.mxu0 %v1394
  %1983 = vmatprep.subr.bf16.mxu0 %v1393
  %1984 = vmatpush2.bf16.msra.mxu0 %v1392
  %1985 = vmatprep.subr.bf16.mxu0 %v1391
  %1986 = vmatpush2.bf16.msra.mxu0 %v1390
  %1987 = vmatprep.subr.bf16.mxu0 %v1389
  %1988 = vmatpush2.bf16.msra.mxu0 %v1388
  %1989 = vmatprep.subr.bf16.mxu0 %v1387
  %1990 = vmatpush2.bf16.msra.mxu0 %v1386
  %1991 = vmatprep.mubr.bf16.mxu0 %v361
  %1992 = vmatmul.mubr.bf16.gmra.mxu0 %v360
  %v1993 = vpop.f32.mrf.mxu0
  %v1994 = vadd.f32 %v1951, %v1993
  %v1995 = vpop.f32.mrf.mxu0
  %v1996 = vadd.f32 %v1953, %v1995
  %v1997 = vpop.f32.mrf.mxu0
  %v1998 = vadd.f32 %v1955, %v1997
  %v1999 = vpop.f32.mrf.mxu0
  %v2000 = vadd.f32 %v1957, %v1999
  %2001 = vdwg.mxu0
  %v2002 = vmax.f32 %v1994, 0.0
  %v2003 = vmax.f32 %v1996, 0.0
  %v2004 = vmax.f32 %v1998, 0.0
  %v2005 = vmax.f32 %v2000, 0.0
  %2006 = vst [vmem:[%s3] sm:$0xff] %v2002
  %2007 = vst [vmem:[%s3 + $0x8] sm:$0xff] %v2003
  %2008 = vst [vmem:[%s3 + $0x10] sm:$0xff] %v2004
  %2009 = vst [vmem:[%s3 + $0x18] sm:$0xff] %v2005
  // Predicated region
  $region14: #{beta_vae_forward.12} parent=0 // pred_check
    _
  $region15: #{beta_vae_forward.12} parent=0 // pred_check_branch
    %2011 = sbr.rel (0) target = $region17
  $region16: #{beta_vae_forward.12} parent=0 // pred_region
    _
  $region17: #{beta_vae_forward.12} parent=0 // pred_fallthru
    _
  // Predicated region
  $region18: #{beta_vae_forward.12} parent=0 // pred_check
    _
  $region19: #{beta_vae_forward.12} parent=0 // pred_check_branch
    %2013 = sbr.rel (0) target = $region21
  $region20: #{beta_vae_forward.12} parent=0 // pred_region
    _
  $region21: #{beta_vae_forward.12} parent=0 // pred_fallthru
    _

// kernel: beta_vae_forward.13
$region0: #{beta_vae_forward.13}
  #allocation0 [shape = 'u32[]', space=smem, size = 0x4, offset = 0x4, fixed_abs, tag = 'smem constant byte address 0x4 - core index']
  #allocation1 [shape = 'u32[144,128]{1,0:T(1,128)}', space=vmem, size = 0x12000, scoped, tag = 'internal scratch']
  %s0 = inlined_call_operand.vmem [shape: bf16[16,256], index: 0, kind: input, shape index: {}]
  %s1 = inlined_call_operand.vmem [shape: bf16[256,256], index: 1, kind: input, shape index: {}]
  %s2 = inlined_call_operand.vmem [shape: f32[1,256], index: 2, kind: input, shape index: {}]
  %s3 = inlined_call_operand.vmem [shape: f32[16,128], index: 3, kind: input, shape index: {}]
  %s4 = inlined_call_operand.vmem [shape: f32[16,128], index: 4, kind: output, shape index: {0}]
  %s5 = inlined_call_operand.vmem [shape: f32[16,128], index: 5, kind: output, shape index: {1}]
  %s6 = inlined_call_operand.vmem [shape: f32[16,128], index: 6, kind: output, shape index: {2}]
  %7 = xla_tuple %s4, %s5, %s6
  %s8 = sld [smem:[#allocation0]]
  $region42: #{beta_vae_forward.13} parent=0
    _
  %s10 = ssub.s32 1, %s8
  %s11 = scalar_select 0, %s10, %s8
  // Predicated region
  $region2: #{beta_vae_forward.13} parent=0 // pred_check
    _
  $region3: #{beta_vae_forward.13} parent=0 // pred_check_branch
    %13 = sbr.rel (0) target = $region5
  $region4: #{beta_vae_forward.13} parent=0 // pred_region
    _
  $region5: #{beta_vae_forward.13} parent=0 // pred_fallthru
    _
  // Predicated region
  $region6: #{beta_vae_forward.13} parent=0 // pred_check
    _
  $region7: #{beta_vae_forward.13} parent=0 // pred_check_branch
    %15 = sbr.rel (0) target = $region9
  $region8: #{beta_vae_forward.13} parent=0 // pred_region
    _
  $region9: #{beta_vae_forward.13} parent=0 // pred_fallthru
    _
  // Predicated region
  $region10: #{beta_vae_forward.13} parent=0 // pred_check
    _
  $region11: #{beta_vae_forward.13} parent=0 // pred_check_branch
    %17 = sbr.rel (0) target = $region13
  $region12: #{beta_vae_forward.13} parent=0 // pred_region
    _
  $region13: #{beta_vae_forward.13} parent=0 // pred_fallthru
    _
  // Predicated region
  $region14: #{beta_vae_forward.13} parent=0 // pred_check
    _
  $region15: #{beta_vae_forward.13} parent=0 // pred_check_branch
    %19 = sbr.rel (0) target = $region17
  $region16: #{beta_vae_forward.13} parent=0 // pred_region
    _
  $region17: #{beta_vae_forward.13} parent=0 // pred_fallthru
    _
  %v20 = vld [vmem:[%s0] sm:$0xff]
  %v21 = vld [vmem:[%s0 + $0x8] sm:$0xff]
  %v22 = vld [vmem:[%s1] sm:$0xff]
  %v23 = vld [vmem:[%s1 + $0x8] sm:$0xff]
  %v24 = vld [vmem:[%s1 + $0x10] sm:$0xff]
  %v25 = vld [vmem:[%s1 + $0x18] sm:$0xff]
  %v26 = vld [vmem:[%s1 + $0x20] sm:$0xff]
  %v27 = vld [vmem:[%s1 + $0x28] sm:$0xff]
  %v28 = vld [vmem:[%s1 + $0x30] sm:$0xff]
  %v29 = vld [vmem:[%s1 + $0x38] sm:$0xff]
  %v30 = vld [vmem:[%s1 + $0x40] sm:$0xff]
  %v31 = vld [vmem:[%s1 + $0x48] sm:$0xff]
  %v32 = vld [vmem:[%s1 + $0x50] sm:$0xff]
  %v33 = vld [vmem:[%s1 + $0x58] sm:$0xff]
  %v34 = vld [vmem:[%s1 + $0x60] sm:$0xff]
  %v35 = vld [vmem:[%s1 + $0x68] sm:$0xff]
  %v36 = vld [vmem:[%s1 + $0x70] sm:$0xff]
  %v37 = vld [vmem:[%s1 + $0x78] sm:$0xff]
  %v38 = vld [vmem:[%s1 + $0x80] sm:$0xff]
  %v39 = vld [vmem:[%s1 + $0x88] sm:$0xff]
  %v40 = vld [vmem:[%s1 + $0x90] sm:$0xff]
  %v41 = vld [vmem:[%s1 + $0x98] sm:$0xff]
  %v42 = vld [vmem:[%s1 + $0xa0] sm:$0xff]
  %v43 = vld [vmem:[%s1 + $0xa8] sm:$0xff]
  %v44 = vld [vmem:[%s1 + $0xb0] sm:$0xff]
  %v45 = vld [vmem:[%s1 + $0xb8] sm:$0xff]
  %v46 = vld [vmem:[%s1 + $0xc0] sm:$0xff]
  %v47 = vld [vmem:[%s1 + $0xc8] sm:$0xff]
  %v48 = vld [vmem:[%s1 + $0xd0] sm:$0xff]
  %v49 = vld [vmem:[%s1 + $0xd8] sm:$0xff]
  %v50 = vld [vmem:[%s1 + $0xe0] sm:$0xff]
  %v51 = vld [vmem:[%s1 + $0xe8] sm:$0xff]
  %v52 = vld [vmem:[%s1 + $0xf0] sm:$0xff]
  %v53 = vld [vmem:[%s1 + $0xf8] sm:$0xff]
  %v54 = vld [vmem:[%s2] sm:$0x3]
  %v56 = vlaneseq
  %v57 = vshrl.u32 %v56, 7
  %v58 = vsub.s32 0, %v57
  %v59 = vrot.slane %v54, %v58
  %v60 = vlaneseq
  %v61 = vshrl.u32 %v60, 7
  %v62 = vsub.s32 1, %v61
  %v63 = vrot.slane %v54, %v62
  %v68 = vunpack.c.l.b16 %v20
  %v69 = vunpack.c.h.b16 %v20
  %v70 = vunpack.c.l.b16 %v21
  %v71 = vunpack.c.h.b16 %v21
  %v72 = vpack.c.b16 %v70, %v68
  %v73 = vpack.c.b16 %v71, %v69
  %v108 = vunpack.c.l.b16 %v22
  %v109 = vunpack.c.h.b16 %v22
  %v110 = vunpack.c.l.b16 %v23
  %v111 = vunpack.c.h.b16 %v23
  %v112 = vunpack.c.l.b16 %v24
  %v113 = vunpack.c.h.b16 %v24
  %v114 = vunpack.c.l.b16 %v25
  %v115 = vunpack.c.h.b16 %v25
  %v116 = vunpack.c.l.b16 %v26
  %v117 = vunpack.c.h.b16 %v26
  %v118 = vunpack.c.l.b16 %v27
  %v119 = vunpack.c.h.b16 %v27
  %v120 = vunpack.c.l.b16 %v28
  %v121 = vunpack.c.h.b16 %v28
  %v122 = vunpack.c.l.b16 %v29
  %v123 = vunpack.c.h.b16 %v29
  %v124 = vunpack.c.l.b16 %v30
  %v125 = vunpack.c.h.b16 %v30
  %v126 = vunpack.c.l.b16 %v31
  %v127 = vunpack.c.h.b16 %v31
  %v128 = vunpack.c.l.b16 %v32
  %v129 = vunpack.c.h.b16 %v32
  %v130 = vunpack.c.l.b16 %v33
  %v131 = vunpack.c.h.b16 %v33
  %v132 = vunpack.c.l.b16 %v34
  %v133 = vunpack.c.h.b16 %v34
  %v134 = vunpack.c.l.b16 %v35
  %v135 = vunpack.c.h.b16 %v35
  %v136 = vunpack.c.l.b16 %v36
  %v137 = vunpack.c.h.b16 %v36
  %v138 = vunpack.c.l.b16 %v37
  %v139 = vunpack.c.h.b16 %v37
  %v140 = vunpack.c.l.b16 %v38
  %v141 = vunpack.c.h.b16 %v38
  %v142 = vunpack.c.l.b16 %v39
  %v143 = vunpack.c.h.b16 %v39
  %v144 = vunpack.c.l.b16 %v40
  %v145 = vunpack.c.h.b16 %v40
  %v146 = vunpack.c.l.b16 %v41
  %v147 = vunpack.c.h.b16 %v41
  %v148 = vunpack.c.l.b16 %v42
  %v149 = vunpack.c.h.b16 %v42
  %v150 = vunpack.c.l.b16 %v43
  %v151 = vunpack.c.h.b16 %v43
  %v152 = vunpack.c.l.b16 %v44
  %v153 = vunpack.c.h.b16 %v44
  %v154 = vunpack.c.l.b16 %v45
  %v155 = vunpack.c.h.b16 %v45
  %v156 = vunpack.c.l.b16 %v46
  %v157 = vunpack.c.h.b16 %v46
  %v158 = vunpack.c.l.b16 %v47
  %v159 = vunpack.c.h.b16 %v47
  %v160 = vunpack.c.l.b16 %v48
  %v161 = vunpack.c.h.b16 %v48
  %v162 = vunpack.c.l.b16 %v49
  %v163 = vunpack.c.h.b16 %v49
  %v164 = vunpack.c.l.b16 %v50
  %v165 = vunpack.c.h.b16 %v50
  %v166 = vunpack.c.l.b16 %v51
  %v167 = vunpack.c.h.b16 %v51
  %v168 = vunpack.c.l.b16 %v52
  %v169 = vunpack.c.h.b16 %v52
  %v170 = vunpack.c.l.b16 %v53
  %v171 = vunpack.c.h.b16 %v53
  %v172 = vpack.c.b16 %v110, %v108
  %v173 = vpack.c.b16 %v111, %v109
  %v174 = vpack.c.b16 %v114, %v112
  %v175 = vpack.c.b16 %v115, %v113
  %v176 = vpack.c.b16 %v118, %v116
  %v177 = vpack.c.b16 %v119, %v117
  %v178 = vpack.c.b16 %v122, %v120
  %v179 = vpack.c.b16 %v123, %v121
  %v180 = vpack.c.b16 %v126, %v124
  %v181 = vpack.c.b16 %v127, %v125
  %v182 = vpack.c.b16 %v130, %v128
  %v183 = vpack.c.b16 %v131, %v129
  %v184 = vpack.c.b16 %v134, %v132
  %v185 = vpack.c.b16 %v135, %v133
  %v186 = vpack.c.b16 %v138, %v136
  %v187 = vpack.c.b16 %v139, %v137
  %v188 = vpack.c.b16 %v142, %v140
  %v189 = vpack.c.b16 %v143, %v141
  %v190 = vpack.c.b16 %v146, %v144
  %v191 = vpack.c.b16 %v147, %v145
  %v192 = vpack.c.b16 %v150, %v148
  %v193 = vpack.c.b16 %v151, %v149
  %v194 = vpack.c.b16 %v154, %v152
  %v195 = vpack.c.b16 %v155, %v153
  %v196 = vpack.c.b16 %v158, %v156
  %v197 = vpack.c.b16 %v159, %v157
  %v198 = vpack.c.b16 %v162, %v160
  %v199 = vpack.c.b16 %v163, %v161
  %v200 = vpack.c.b16 %v166, %v164
  %v201 = vpack.c.b16 %v167, %v165
  %v202 = vpack.c.b16 %v170, %v168
  %v203 = vpack.c.b16 %v171, %v169
  %236 = vmatprep.subr.bf16.mxu0 %v187
  %237 = vmatpush1.bf16.msra.mxu0 %v186
  %238 = vmatprep.subr.bf16.mxu0 %v185
  %239 = vmatpush1.bf16.msra.mxu0 %v184
  %240 = vmatprep.subr.bf16.mxu0 %v183
  %241 = vmatpush1.bf16.msra.mxu0 %v182
  %242 = vmatprep.subr.bf16.mxu0 %v181
  %243 = vmatpush1.bf16.msra.mxu0 %v180
  %244 = vmatprep.subr.bf16.mxu0 %v179
  %245 = vmatpush1.bf16.msra.mxu0 %v178
  %246 = vmatprep.subr.bf16.mxu0 %v177
  %247 = vmatpush1.bf16.msra.mxu0 %v176
  %248 = vmatprep.subr.bf16.mxu0 %v175
  %249 = vmatpush1.bf16.msra.mxu0 %v174
  %250 = vmatprep.subr.bf16.mxu0 %v173
  %251 = vmatpush1.bf16.msra.mxu0 %v172
  %252 = vmatprep.subr.bf16.mxu0 %v203
  %253 = vmatpush2.bf16.msra.mxu0 %v202
  %254 = vmatprep.subr.bf16.mxu0 %v201
  %255 = vmatpush2.bf16.msra.mxu0 %v200
  %256 = vmatprep.subr.bf16.mxu0 %v199
  %257 = vmatpush2.bf16.msra.mxu0 %v198
  %258 = vmatprep.subr.bf16.mxu0 %v197
  %259 = vmatpush2.bf16.msra.mxu0 %v196
  %260 = vmatprep.subr.bf16.mxu0 %v195
  %261 = vmatpush2.bf16.msra.mxu0 %v194
  %262 = vmatprep.subr.bf16.mxu0 %v193
  %263 = vmatpush2.bf16.msra.mxu0 %v192
  %264 = vmatprep.subr.bf16.mxu0 %v191
  %265 = vmatpush2.bf16.msra.mxu0 %v190
  %266 = vmatprep.subr.bf16.mxu0 %v189
  %267 = vmatpush2.bf16.msra.mxu0 %v188
  %268 = vmatprep.mubr.bf16.mxu0 %v73
  %269 = vmatmul.mubr.bf16.gmra.mxu0 %v72
  %v270 = vpop.f32.mrf.mxu0
  %v271 = vadd.f32 %v59, %v270
  %v272 = vpop.f32.mrf.mxu0
  %v273 = vadd.f32 %v63, %v272
  %v274 = vpop.f32.mrf.mxu0
  %v275 = vadd.f32 %v59, %v274
  %v276 = vpop.f32.mrf.mxu0
  %v277 = vadd.f32 %v63, %v276
  %278 = vdwg.mxu0
  %279 = vst [vmem:[%s4] sm:$0xff] %v271
  %280 = vst [vmem:[%s4 + $0x8] sm:$0xff] %v275
  %281 = vst [vmem:[%s5] sm:$0xff] %v273
  %282 = vst [vmem:[%s5 + $0x8] sm:$0xff] %v277
  %v283 = vld [vmem:[%s3] sm:$0xff]
  %v284 = vld [vmem:[%s3 + $0x8] sm:$0xff]
  %v285 = vmul.f32 %v273, 0.5
  %v286 = vmul.f32 %v277, 0.5
  %v287 = vmul.f32 %v285, 1.442695
  %v288 = vpow.pop %v287
  %v289 = vmul.f32 %v286, 1.442695
  %v290 = vpow.pop %v289
  %v291 = vmul.f32 %v283, %v288
  %v292 = vmul.f32 %v284, %v290
  %v293 = vadd.f32 %v271, %v291
  %v294 = vadd.f32 %v275, %v292
  %295 = vst [vmem:[%s6] sm:$0xff] %v293
  %296 = vst [vmem:[%s6 + $0x8] sm:$0xff] %v294
  // Predicated region
  $region18: #{beta_vae_forward.13} parent=0 // pred_check
    _
  $region19: #{beta_vae_forward.13} parent=0 // pred_check_branch
    %298 = sbr.rel (0) target = $region21
  $region20: #{beta_vae_forward.13} parent=0 // pred_region
    _
  $region21: #{beta_vae_forward.13} parent=0 // pred_fallthru
    _
  // Predicated region
  $region22: #{beta_vae_forward.13} parent=0 // pred_check
    _
  $region23: #{beta_vae_forward.13} parent=0 // pred_check_branch
    %300 = sbr.rel (0) target = $region25
  $region24: #{beta_vae_forward.13} parent=0 // pred_region
    _
  $region25: #{beta_vae_forward.13} parent=0 // pred_fallthru
    _
  // Predicated region
  $region26: #{beta_vae_forward.13} parent=0 // pred_check
    _
  $region27: #{beta_vae_forward.13} parent=0 // pred_check_branch
    %302 = sbr.rel (0) target = $region29
  $region28: #{beta_vae_forward.13} parent=0 // pred_region
    _
  $region29: #{beta_vae_forward.13} parent=0 // pred_fallthru
    _
  // Predicated region
  $region30: #{beta_vae_forward.13} parent=0 // pred_check
    _
  $region31: #{beta_vae_forward.13} parent=0 // pred_check_branch
    %304 = sbr.rel (0) target = $region33
  $region32: #{beta_vae_forward.13} parent=0 // pred_region
    _
  $region33: #{beta_vae_forward.13} parent=0 // pred_fallthru
    _
  // Predicated region
  $region34: #{beta_vae_forward.13} parent=0 // pred_check
    _
  $region35: #{beta_vae_forward.13} parent=0 // pred_check_branch
    %306 = sbr.rel (0) target = $region37
  $region36: #{beta_vae_forward.13} parent=0 // pred_region
    _
  $region37: #{beta_vae_forward.13} parent=0 // pred_fallthru
    _
  // Predicated region
  $region38: #{beta_vae_forward.13} parent=0 // pred_check
    _
  $region39: #{beta_vae_forward.13} parent=0 // pred_check_branch
    %308 = sbr.rel (0) target = $region41
  $region40: #{beta_vae_forward.13} parent=0 // pred_region
    _
  $region41: #{beta_vae_forward.13} parent=0 // pred_fallthru
    _

// kernel: beta_vae_forward.14
$region0: #{beta_vae_forward.14}
  #allocation0 [shape = 'u32[]', space=smem, size = 0x4, offset = 0x4, fixed_abs, tag = 'smem constant byte address 0x4 - core index']
  #allocation1 [shape = 'u32[144,128]{1,0:T(1,128)}', space=vmem, size = 0x12000, scoped, tag = 'internal scratch']
  %s0 = inlined_call_operand.vmem [shape: bf16[16,16], index: 0, kind: input, shape index: {}]
  %s1 = inlined_call_operand.vmem [shape: bf16[16,256], index: 1, kind: input, shape index: {}]
  %s2 = inlined_call_operand.vmem [shape: f32[1,256], index: 2, kind: input, shape index: {}]
  %s3 = inlined_call_operand.vmem [shape: bf16[256,2048], index: 3, kind: input, shape index: {}]
  %s4 = inlined_call_operand.vmem [shape: f32[1,2048], index: 4, kind: input, shape index: {}]
  %s5 = inlined_call_operand.vmem [shape: f32[16,2048], index: 5, kind: output, shape index: {}]
  %s6 = sld [smem:[#allocation0]]
  $region30: #{beta_vae_forward.14} parent=0
    _
  %s8 = ssub.s32 1, %s6
  %s9 = scalar_select 0, %s8, %s6
  // Predicated region
  $region2: #{beta_vae_forward.14} parent=0 // pred_check
    _
  $region3: #{beta_vae_forward.14} parent=0 // pred_check_branch
    %11 = sbr.rel (0) target = $region5
  $region4: #{beta_vae_forward.14} parent=0 // pred_region
    _
  $region5: #{beta_vae_forward.14} parent=0 // pred_fallthru
    _
  // Predicated region
  $region6: #{beta_vae_forward.14} parent=0 // pred_check
    _
  $region7: #{beta_vae_forward.14} parent=0 // pred_check_branch
    %13 = sbr.rel (0) target = $region9
  $region8: #{beta_vae_forward.14} parent=0 // pred_region
    _
  $region9: #{beta_vae_forward.14} parent=0 // pred_fallthru
    _
  // Predicated region
  $region10: #{beta_vae_forward.14} parent=0 // pred_check
    _
  $region11: #{beta_vae_forward.14} parent=0 // pred_check_branch
    %15 = sbr.rel (0) target = $region13
  $region12: #{beta_vae_forward.14} parent=0 // pred_region
    _
  $region13: #{beta_vae_forward.14} parent=0 // pred_fallthru
    _
  // Predicated region
  $region14: #{beta_vae_forward.14} parent=0 // pred_check
    _
  $region15: #{beta_vae_forward.14} parent=0 // pred_check_branch
    %17 = sbr.rel (0) target = $region17
  $region16: #{beta_vae_forward.14} parent=0 // pred_region
    _
  $region17: #{beta_vae_forward.14} parent=0 // pred_fallthru
    _
  // Predicated region
  $region18: #{beta_vae_forward.14} parent=0 // pred_check
    _
  $region19: #{beta_vae_forward.14} parent=0 // pred_check_branch
    %19 = sbr.rel (0) target = $region21
  $region20: #{beta_vae_forward.14} parent=0 // pred_region
    _
  $region21: #{beta_vae_forward.14} parent=0 // pred_fallthru
    _
  %v21 = vld [vmem:[%s0] sm:$0xf]
  %v22 = vld [vmem:[%s0 + $0x4] sm:$0xf]
  %v23 = vld [vmem:[%s1] sm:$0xff]
  %v24 = vld [vmem:[%s1 + $0x8] sm:$0xff]
  %v25 = vld [vmem:[%s2] sm:$0x3]
  %v27 = vlaneseq
  %v28 = vshrl.u32 %v27, 7
  %v29 = vsub.s32 0, %v28
  %v30 = vrot.slane %v25, %v29
  %v31 = vlaneseq
  %v32 = vshrl.u32 %v31, 7
  %v33 = vsub.s32 1, %v32
  %v34 = vrot.slane %v25, %v33
  %v39 = vunpack.c.l.b16 %v21
  %v40 = vunpack.c.l.b16 %v22
  %v41 = vpack.c.b16 %v40, %v39
  %v44 = vunpack.c.l.b16 %v23
  %v45 = vunpack.c.h.b16 %v23
  %v46 = vunpack.c.l.b16 %v24
  %v47 = vunpack.c.h.b16 %v24
  %v48 = vpack.c.b16 %v46, %v44
  %v49 = vpack.c.b16 %v47, %v45
  %vm52 = vcmask 130048
  %v54 = vsel %vm52, %v41, 0
  %56 = vmatprep.subr.bf16.mxu0 0
  %57 = vmatpush1.bf16.msra.mxu0 0
  %58 = vmatprep.subr.bf16.mxu0 0
  %59 = vmatpush1.bf16.msra.mxu0 0
  %60 = vmatprep.subr.bf16.mxu0 0
  %61 = vmatpush1.bf16.msra.mxu0 0
  %62 = vmatprep.subr.bf16.mxu0 0
  %63 = vmatpush1.bf16.msra.mxu0 0
  %64 = vmatprep.subr.bf16.mxu0 0
  %65 = vmatpush1.bf16.msra.mxu0 0
  %66 = vmatprep.subr.bf16.mxu0 0
  %67 = vmatpush1.bf16.msra.mxu0 0
  %68 = vmatprep.subr.bf16.mxu0 0
  %69 = vmatpush1.bf16.msra.mxu0 0
  %70 = vmatprep.subr.bf16.mxu0 %v49
  %71 = vmatpush1.bf16.msra.mxu0 %v48
  %72 = vmatprep.subr.bf16.mxu0 0
  %73 = vmatpush2.bf16.msra.mxu0 0
  %74 = vmatprep.subr.bf16.mxu0 0
  %75 = vmatpush2.bf16.msra.mxu0 0
  %76 = vmatprep.subr.bf16.mxu0 0
  %77 = vmatpush2.bf16.msra.mxu0 0
  %78 = vmatprep.subr.bf16.mxu0 0
  %79 = vmatpush2.bf16.msra.mxu0 0
  %80 = vmatprep.subr.bf16.mxu0 0
  %81 = vmatpush2.bf16.msra.mxu0 0
  %82 = vmatprep.subr.bf16.mxu0 0
  %83 = vmatpush2.bf16.msra.mxu0 0
  %84 = vmatprep.subr.bf16.mxu0 0
  %85 = vmatpush2.bf16.msra.mxu0 0
  %86 = vmatprep.subr.bf16.mxu0 0
  %87 = vmatpush2.bf16.msra.mxu0 0
  %88 = vmatprep.mubr.bf16.mxu0 0
  %89 = vmatmul.mubr.bf16.gmra.mxu0 %v54
  %v90 = vpop.f32.mrf.mxu0
  %v91 = vadd.f32 %v30, %v90
  %v92 = vpop.f32.mrf.mxu0
  %v93 = vadd.f32 %v34, %v92
  %v94 = vpop.f32.mrf.mxu0
  %v95 = vadd.f32 %v30, %v94
  %v96 = vpop.f32.mrf.mxu0
  %v97 = vadd.f32 %v34, %v96
  %98 = vdwg.mxu0
  %v99 = vpack.c.bf16 %v95, %v91
  %v100 = vpack.c.bf16 %v97, %v93
  %v101 = vld [vmem:[%s3] sm:$0xff]
  %v102 = vld [vmem:[%s3 + $0x8] sm:$0xff]
  %v103 = vld [vmem:[%s3 + $0x10] sm:$0xff]
  %v104 = vld [vmem:[%s3 + $0x18] sm:$0xff]
  %v105 = vld [vmem:[%s3 + $0x20] sm:$0xff]
  %v106 = vld [vmem:[%s3 + $0x28] sm:$0xff]
  %v107 = vld [vmem:[%s3 + $0x30] sm:$0xff]
  %v108 = vld [vmem:[%s3 + $0x38] sm:$0xff]
  %v109 = vld [vmem:[%s3 + $0x40] sm:$0xff]
  %v110 = vld [vmem:[%s3 + $0x48] sm:$0xff]
  %v111 = vld [vmem:[%s3 + $0x50] sm:$0xff]
  %v112 = vld [vmem:[%s3 + $0x58] sm:$0xff]
  %v113 = vld [vmem:[%s3 + $0x60] sm:$0xff]
  %v114 = vld [vmem:[%s3 + $0x68] sm:$0xff]
  %v115 = vld [vmem:[%s3 + $0x70] sm:$0xff]
  %v116 = vld [vmem:[%s3 + $0x78] sm:$0xff]
  %v117 = vld [vmem:[%s3 + $0x80] sm:$0xff]
  %v118 = vld [vmem:[%s3 + $0x88] sm:$0xff]
  %v119 = vld [vmem:[%s3 + $0x90] sm:$0xff]
  %v120 = vld [vmem:[%s3 + $0x98] sm:$0xff]
  %v121 = vld [vmem:[%s3 + $0xa0] sm:$0xff]
  %v122 = vld [vmem:[%s3 + $0xa8] sm:$0xff]
  %v123 = vld [vmem:[%s3 + $0xb0] sm:$0xff]
  %v124 = vld [vmem:[%s3 + $0xb8] sm:$0xff]
  %v125 = vld [vmem:[%s3 + $0xc0] sm:$0xff]
  %v126 = vld [vmem:[%s3 + $0xc8] sm:$0xff]
  %v127 = vld [vmem:[%s3 + $0xd0] sm:$0xff]
  %v128 = vld [vmem:[%s3 + $0xd8] sm:$0xff]
  %v129 = vld [vmem:[%s3 + $0xe0] sm:$0xff]
  %v130 = vld [vmem:[%s3 + $0xe8] sm:$0xff]
  %v131 = vld [vmem:[%s3 + $0xf0] sm:$0xff]
  %v132 = vld [vmem:[%s3 + $0xf8] sm:$0xff]
  %v133 = vld [vmem:[%s3 + $0x100] sm:$0xff]
  %v134 = vld [vmem:[%s3 + $0x108] sm:$0xff]
  %v135 = vld [vmem:[%s3 + $0x110] sm:$0xff]
  %v136 = vld [vmem:[%s3 + $0x118] sm:$0xff]
  %v137 = vld [vmem:[%s3 + $0x120] sm:$0xff]
  %v138 = vld [vmem:[%s3 + $0x128] sm:$0xff]
  %v139 = vld [vmem:[%s3 + $0x130] sm:$0xff]
  %v140 = vld [vmem:[%s3 + $0x138] sm:$0xff]
  %v141 = vld [vmem:[%s3 + $0x140] sm:$0xff]
  %v142 = vld [vmem:[%s3 + $0x148] sm:$0xff]
  %v143 = vld [vmem:[%s3 + $0x150] sm:$0xff]
  %v144 = vld [vmem:[%s3 + $0x158] sm:$0xff]
  %v145 = vld [vmem:[%s3 + $0x160] sm:$0xff]
  %v146 = vld [vmem:[%s3 + $0x168] sm:$0xff]
  %v147 = vld [vmem:[%s3 + $0x170] sm:$0xff]
  %v148 = vld [vmem:[%s3 + $0x178] sm:$0xff]
  %v149 = vld [vmem:[%s3 + $0x180] sm:$0xff]
  %v150 = vld [vmem:[%s3 + $0x188] sm:$0xff]
  %v151 = vld [vmem:[%s3 + $0x190] sm:$0xff]
  %v152 = vld [vmem:[%s3 + $0x198] sm:$0xff]
  %v153 = vld [vmem:[%s3 + $0x1a0] sm:$0xff]
  %v154 = vld [vmem:[%s3 + $0x1a8] sm:$0xff]
  %v155 = vld [vmem:[%s3 + $0x1b0] sm:$0xff]
  %v156 = vld [vmem:[%s3 + $0x1b8] sm:$0xff]
  %v157 = vld [vmem:[%s3 + $0x1c0] sm:$0xff]
  %v158 = vld [vmem:[%s3 + $0x1c8] sm:$0xff]
  %v159 = vld [vmem:[%s3 + $0x1d0] sm:$0xff]
  %v160 = vld [vmem:[%s3 + $0x1d8] sm:$0xff]
  %v161 = vld [vmem:[%s3 + $0x1e0] sm:$0xff]
  %v162 = vld [vmem:[%s3 + $0x1e8] sm:$0xff]
  %v163 = vld [vmem:[%s3 + $0x1f0] sm:$0xff]
  %v164 = vld [vmem:[%s3 + $0x1f8] sm:$0xff]
  %v165 = vld [vmem:[%s3 + $0x200] sm:$0xff]
  %v166 = vld [vmem:[%s3 + $0x208] sm:$0xff]
  %v167 = vld [vmem:[%s3 + $0x210] sm:$0xff]
  %v168 = vld [vmem:[%s3 + $0x218] sm:$0xff]
  %v169 = vld [vmem:[%s3 + $0x220] sm:$0xff]
  %v170 = vld [vmem:[%s3 + $0x228] sm:$0xff]
  %v171 = vld [vmem:[%s3 + $0x230] sm:$0xff]
  %v172 = vld [vmem:[%s3 + $0x238] sm:$0xff]
  %v173 = vld [vmem:[%s3 + $0x240] sm:$0xff]
  %v174 = vld [vmem:[%s3 + $0x248] sm:$0xff]
  %v175 = vld [vmem:[%s3 + $0x250] sm:$0xff]
  %v176 = vld [vmem:[%s3 + $0x258] sm:$0xff]
  %v177 = vld [vmem:[%s3 + $0x260] sm:$0xff]
  %v178 = vld [vmem:[%s3 + $0x268] sm:$0xff]
  %v179 = vld [vmem:[%s3 + $0x270] sm:$0xff]
  %v180 = vld [vmem:[%s3 + $0x278] sm:$0xff]
  %v181 = vld [vmem:[%s3 + $0x280] sm:$0xff]
  %v182 = vld [vmem:[%s3 + $0x288] sm:$0xff]
  %v183 = vld [vmem:[%s3 + $0x290] sm:$0xff]
  %v184 = vld [vmem:[%s3 + $0x298] sm:$0xff]
  %v185 = vld [vmem:[%s3 + $0x2a0] sm:$0xff]
  %v186 = vld [vmem:[%s3 + $0x2a8] sm:$0xff]
  %v187 = vld [vmem:[%s3 + $0x2b0] sm:$0xff]
  %v188 = vld [vmem:[%s3 + $0x2b8] sm:$0xff]
  %v189 = vld [vmem:[%s3 + $0x2c0] sm:$0xff]
  %v190 = vld [vmem:[%s3 + $0x2c8] sm:$0xff]
  %v191 = vld [vmem:[%s3 + $0x2d0] sm:$0xff]
  %v192 = vld [vmem:[%s3 + $0x2d8] sm:$0xff]
  %v193 = vld [vmem:[%s3 + $0x2e0] sm:$0xff]
  %v194 = vld [vmem:[%s3 + $0x2e8] sm:$0xff]
  %v195 = vld [vmem:[%s3 + $0x2f0] sm:$0xff]
  %v196 = vld [vmem:[%s3 + $0x2f8] sm:$0xff]
  %v197 = vld [vmem:[%s3 + $0x300] sm:$0xff]
  %v198 = vld [vmem:[%s3 + $0x308] sm:$0xff]
  %v199 = vld [vmem:[%s3 + $0x310] sm:$0xff]
  %v200 = vld [vmem:[%s3 + $0x318] sm:$0xff]
  %v201 = vld [vmem:[%s3 + $0x320] sm:$0xff]
  %v202 = vld [vmem:[%s3 + $0x328] sm:$0xff]
  %v203 = vld [vmem:[%s3 + $0x330] sm:$0xff]
  %v204 = vld [vmem:[%s3 + $0x338] sm:$0xff]
  %v205 = vld [vmem:[%s3 + $0x340] sm:$0xff]
  %v206 = vld [vmem:[%s3 + $0x348] sm:$0xff]
  %v207 = vld [vmem:[%s3 + $0x350] sm:$0xff]
  %v208 = vld [vmem:[%s3 + $0x358] sm:$0xff]
  %v209 = vld [vmem:[%s3 + $0x360] sm:$0xff]
  %v210 = vld [vmem:[%s3 + $0x368] sm:$0xff]
  %v211 = vld [vmem:[%s3 + $0x370] sm:$0xff]
  %v212 = vld [vmem:[%s3 + $0x378] sm:$0xff]
  %v213 = vld [vmem:[%s3 + $0x380] sm:$0xff]
  %v214 = vld [vmem:[%s3 + $0x388] sm:$0xff]
  %v215 = vld [vmem:[%s3 + $0x390] sm:$0xff]
  %v216 = vld [vmem:[%s3 + $0x398] sm:$0xff]
  %v217 = vld [vmem:[%s3 + $0x3a0] sm:$0xff]
  %v218 = vld [vmem:[%s3 + $0x3a8] sm:$0xff]
  %v219 = vld [vmem:[%s3 + $0x3b0] sm:$0xff]
  %v220 = vld [vmem:[%s3 + $0x3b8] sm:$0xff]
  %v221 = vld [vmem:[%s3 + $0x3c0] sm:$0xff]
  %v222 = vld [vmem:[%s3 + $0x3c8] sm:$0xff]
  %v223 = vld [vmem:[%s3 + $0x3d0] sm:$0xff]
  %v224 = vld [vmem:[%s3 + $0x3d8] sm:$0xff]
  %v225 = vld [vmem:[%s3 + $0x3e0] sm:$0xff]
  %v226 = vld [vmem:[%s3 + $0x3e8] sm:$0xff]
  %v227 = vld [vmem:[%s3 + $0x3f0] sm:$0xff]
  %v228 = vld [vmem:[%s3 + $0x3f8] sm:$0xff]
  %v229 = vld [vmem:[%s3 + $0x400] sm:$0xff]
  %v230 = vld [vmem:[%s3 + $0x408] sm:$0xff]
  %v231 = vld [vmem:[%s3 + $0x410] sm:$0xff]
  %v232 = vld [vmem:[%s3 + $0x418] sm:$0xff]
  %v233 = vld [vmem:[%s3 + $0x420] sm:$0xff]
  %v234 = vld [vmem:[%s3 + $0x428] sm:$0xff]
  %v235 = vld [vmem:[%s3 + $0x430] sm:$0xff]
  %v236 = vld [vmem:[%s3 + $0x438] sm:$0xff]
  %v237 = vld [vmem:[%s3 + $0x440] sm:$0xff]
  %v238 = vld [vmem:[%s3 + $0x448] sm:$0xff]
  %v239 = vld [vmem:[%s3 + $0x450] sm:$0xff]
  %v240 = vld [vmem:[%s3 + $0x458] sm:$0xff]
  %v241 = vld [vmem:[%s3 + $0x460] sm:$0xff]
  %v242 = vld [vmem:[%s3 + $0x468] sm:$0xff]
  %v243 = vld [vmem:[%s3 + $0x470] sm:$0xff]
  %v244 = vld [vmem:[%s3 + $0x478] sm:$0xff]
  %v245 = vld [vmem:[%s3 + $0x480] sm:$0xff]
  %v246 = vld [vmem:[%s3 + $0x488] sm:$0xff]
  %v247 = vld [vmem:[%s3 + $0x490] sm:$0xff]
  %v248 = vld [vmem:[%s3 + $0x498] sm:$0xff]
  %v249 = vld [vmem:[%s3 + $0x4a0] sm:$0xff]
  %v250 = vld [vmem:[%s3 + $0x4a8] sm:$0xff]
  %v251 = vld [vmem:[%s3 + $0x4b0] sm:$0xff]
  %v252 = vld [vmem:[%s3 + $0x4b8] sm:$0xff]
  %v253 = vld [vmem:[%s3 + $0x4c0] sm:$0xff]
  %v254 = vld [vmem:[%s3 + $0x4c8] sm:$0xff]
  %v255 = vld [vmem:[%s3 + $0x4d0] sm:$0xff]
  %v256 = vld [vmem:[%s3 + $0x4d8] sm:$0xff]
  %v257 = vld [vmem:[%s3 + $0x4e0] sm:$0xff]
  %v258 = vld [vmem:[%s3 + $0x4e8] sm:$0xff]
  %v259 = vld [vmem:[%s3 + $0x4f0] sm:$0xff]
  %v260 = vld [vmem:[%s3 + $0x4f8] sm:$0xff]
  %v261 = vld [vmem:[%s3 + $0x500] sm:$0xff]
  %v262 = vld [vmem:[%s3 + $0x508] sm:$0xff]
  %v263 = vld [vmem:[%s3 + $0x510] sm:$0xff]
  %v264 = vld [vmem:[%s3 + $0x518] sm:$0xff]
  %v265 = vld [vmem:[%s3 + $0x520] sm:$0xff]
  %v266 = vld [vmem:[%s3 + $0x528] sm:$0xff]
  %v267 = vld [vmem:[%s3 + $0x530] sm:$0xff]
  %v268 = vld [vmem:[%s3 + $0x538] sm:$0xff]
  %v269 = vld [vmem:[%s3 + $0x540] sm:$0xff]
  %v270 = vld [vmem:[%s3 + $0x548] sm:$0xff]
  %v271 = vld [vmem:[%s3 + $0x550] sm:$0xff]
  %v272 = vld [vmem:[%s3 + $0x558] sm:$0xff]
  %v273 = vld [vmem:[%s3 + $0x560] sm:$0xff]
  %v274 = vld [vmem:[%s3 + $0x568] sm:$0xff]
  %v275 = vld [vmem:[%s3 + $0x570] sm:$0xff]
  %v276 = vld [vmem:[%s3 + $0x578] sm:$0xff]
  %v277 = vld [vmem:[%s3 + $0x580] sm:$0xff]
  %v278 = vld [vmem:[%s3 + $0x588] sm:$0xff]
  %v279 = vld [vmem:[%s3 + $0x590] sm:$0xff]
  %v280 = vld [vmem:[%s3 + $0x598] sm:$0xff]
  %v281 = vld [vmem:[%s3 + $0x5a0] sm:$0xff]
  %v282 = vld [vmem:[%s3 + $0x5a8] sm:$0xff]
  %v283 = vld [vmem:[%s3 + $0x5b0] sm:$0xff]
  %v284 = vld [vmem:[%s3 + $0x5b8] sm:$0xff]
  %v285 = vld [vmem:[%s3 + $0x5c0] sm:$0xff]
  %v286 = vld [vmem:[%s3 + $0x5c8] sm:$0xff]
  %v287 = vld [vmem:[%s3 + $0x5d0] sm:$0xff]
  %v288 = vld [vmem:[%s3 + $0x5d8] sm:$0xff]
  %v289 = vld [vmem:[%s3 + $0x5e0] sm:$0xff]
  %v290 = vld [vmem:[%s3 + $0x5e8] sm:$0xff]
  %v291 = vld [vmem:[%s3 + $0x5f0] sm:$0xff]
  %v292 = vld [vmem:[%s3 + $0x5f8] sm:$0xff]
  %v293 = vld [vmem:[%s3 + $0x600] sm:$0xff]
  %v294 = vld [vmem:[%s3 + $0x608] sm:$0xff]
  %v295 = vld [vmem:[%s3 + $0x610] sm:$0xff]
  %v296 = vld [vmem:[%s3 + $0x618] sm:$0xff]
  %v297 = vld [vmem:[%s3 + $0x620] sm:$0xff]
  %v298 = vld [vmem:[%s3 + $0x628] sm:$0xff]
  %v299 = vld [vmem:[%s3 + $0x630] sm:$0xff]
  %v300 = vld [vmem:[%s3 + $0x638] sm:$0xff]
  %v301 = vld [vmem:[%s3 + $0x640] sm:$0xff]
  %v302 = vld [vmem:[%s3 + $0x648] sm:$0xff]
  %v303 = vld [vmem:[%s3 + $0x650] sm:$0xff]
  %v304 = vld [vmem:[%s3 + $0x658] sm:$0xff]
  %v305 = vld [vmem:[%s3 + $0x660] sm:$0xff]
  %v306 = vld [vmem:[%s3 + $0x668] sm:$0xff]
  %v307 = vld [vmem:[%s3 + $0x670] sm:$0xff]
  %v308 = vld [vmem:[%s3 + $0x678] sm:$0xff]
  %v309 = vld [vmem:[%s3 + $0x680] sm:$0xff]
  %v310 = vld [vmem:[%s3 + $0x688] sm:$0xff]
  %v311 = vld [vmem:[%s3 + $0x690] sm:$0xff]
  %v312 = vld [vmem:[%s3 + $0x698] sm:$0xff]
  %v313 = vld [vmem:[%s3 + $0x6a0] sm:$0xff]
  %v314 = vld [vmem:[%s3 + $0x6a8] sm:$0xff]
  %v315 = vld [vmem:[%s3 + $0x6b0] sm:$0xff]
  %v316 = vld [vmem:[%s3 + $0x6b8] sm:$0xff]
  %v317 = vld [vmem:[%s3 + $0x6c0] sm:$0xff]
  %v318 = vld [vmem:[%s3 + $0x6c8] sm:$0xff]
  %v319 = vld [vmem:[%s3 + $0x6d0] sm:$0xff]
  %v320 = vld [vmem:[%s3 + $0x6d8] sm:$0xff]
  %v321 = vld [vmem:[%s3 + $0x6e0] sm:$0xff]
  %v322 = vld [vmem:[%s3 + $0x6e8] sm:$0xff]
  %v323 = vld [vmem:[%s3 + $0x6f0] sm:$0xff]
  %v324 = vld [vmem:[%s3 + $0x6f8] sm:$0xff]
  %v325 = vld [vmem:[%s3 + $0x700] sm:$0xff]
  %v326 = vld [vmem:[%s3 + $0x708] sm:$0xff]
  %v327 = vld [vmem:[%s3 + $0x710] sm:$0xff]
  %v328 = vld [vmem:[%s3 + $0x718] sm:$0xff]
  %v329 = vld [vmem:[%s3 + $0x720] sm:$0xff]
  %v330 = vld [vmem:[%s3 + $0x728] sm:$0xff]
  %v331 = vld [vmem:[%s3 + $0x730] sm:$0xff]
  %v332 = vld [vmem:[%s3 + $0x738] sm:$0xff]
  %v333 = vld [vmem:[%s3 + $0x740] sm:$0xff]
  %v334 = vld [vmem:[%s3 + $0x748] sm:$0xff]
  %v335 = vld [vmem:[%s3 + $0x750] sm:$0xff]
  %v336 = vld [vmem:[%s3 + $0x758] sm:$0xff]
  %v337 = vld [vmem:[%s3 + $0x760] sm:$0xff]
  %v338 = vld [vmem:[%s3 + $0x768] sm:$0xff]
  %v339 = vld [vmem:[%s3 + $0x770] sm:$0xff]
  %v340 = vld [vmem:[%s3 + $0x778] sm:$0xff]
  %v341 = vld [vmem:[%s3 + $0x780] sm:$0xff]
  %v342 = vld [vmem:[%s3 + $0x788] sm:$0xff]
  %v343 = vld [vmem:[%s3 + $0x790] sm:$0xff]
  %v344 = vld [vmem:[%s3 + $0x798] sm:$0xff]
  %v345 = vld [vmem:[%s3 + $0x7a0] sm:$0xff]
  %v346 = vld [vmem:[%s3 + $0x7a8] sm:$0xff]
  %v347 = vld [vmem:[%s3 + $0x7b0] sm:$0xff]
  %v348 = vld [vmem:[%s3 + $0x7b8] sm:$0xff]
  %v349 = vld [vmem:[%s3 + $0x7c0] sm:$0xff]
  %v350 = vld [vmem:[%s3 + $0x7c8] sm:$0xff]
  %v351 = vld [vmem:[%s3 + $0x7d0] sm:$0xff]
  %v352 = vld [vmem:[%s3 + $0x7d8] sm:$0xff]
  %v353 = vld [vmem:[%s3 + $0x7e0] sm:$0xff]
  %v354 = vld [vmem:[%s3 + $0x7e8] sm:$0xff]
  %v355 = vld [vmem:[%s3 + $0x7f0] sm:$0xff]
  %v356 = vld [vmem:[%s3 + $0x7f8] sm:$0xff]
  %v357 = vld [vmem:[%s4] sm:$0xff]
  %v358 = vld [vmem:[%s4 + $0x8] sm:$0xff]
  %v361 = vlaneseq
  %v362 = vshrl.u32 %v361, 7
  %v363 = vsub.s32 0, %v362
  %v364 = vrot.slane %v357, %v363
  %v365 = vlaneseq
  %v366 = vshrl.u32 %v365, 7
  %v367 = vsub.s32 1, %v366
  %v368 = vrot.slane %v357, %v367
  %v369 = vlaneseq
  %v370 = vshrl.u32 %v369, 7
  %v371 = vsub.s32 2, %v370
  %v372 = vrot.slane %v357, %v371
  %v373 = vlaneseq
  %v374 = vshrl.u32 %v373, 7
  %v375 = vsub.s32 3, %v374
  %v376 = vrot.slane %v357, %v375
  %v377 = vlaneseq
  %v378 = vshrl.u32 %v377, 7
  %v379 = vsub.s32 4, %v378
  %v380 = vrot.slane %v357, %v379
  %v381 = vlaneseq
  %v382 = vshrl.u32 %v381, 7
  %v383 = vsub.s32 5, %v382
  %v384 = vrot.slane %v357, %v383
  %v385 = vlaneseq
  %v386 = vshrl.u32 %v385, 7
  %v387 = vsub.s32 6, %v386
  %v388 = vrot.slane %v357, %v387
  %v389 = vlaneseq
  %v390 = vshrl.u32 %v389, 7
  %v391 = vsub.s32 7, %v390
  %v392 = vrot.slane %v357, %v391
  %v393 = vlaneseq
  %v394 = vshrl.u32 %v393, 7
  %v395 = vsub.s32 0, %v394
  %v396 = vrot.slane %v358, %v395
  %v397 = vlaneseq
  %v398 = vshrl.u32 %v397, 7
  %v399 = vsub.s32 1, %v398
  %v400 = vrot.slane %v358, %v399
  %v401 = vlaneseq
  %v402 = vshrl.u32 %v401, 7
  %v403 = vsub.s32 2, %v402
  %v404 = vrot.slane %v358, %v403
  %v405 = vlaneseq
  %v406 = vshrl.u32 %v405, 7
  %v407 = vsub.s32 3, %v406
  %v408 = vrot.slane %v358, %v407
  %v409 = vlaneseq
  %v410 = vshrl.u32 %v409, 7
  %v411 = vsub.s32 4, %v410
  %v412 = vrot.slane %v358, %v411
  %v413 = vlaneseq
  %v414 = vshrl.u32 %v413, 7
  %v415 = vsub.s32 5, %v414
  %v416 = vrot.slane %v358, %v415
  %v417 = vlaneseq
  %v418 = vshrl.u32 %v417, 7
  %v419 = vsub.s32 6, %v418
  %v420 = vrot.slane %v358, %v419
  %v421 = vlaneseq
  %v422 = vshrl.u32 %v421, 7
  %v423 = vsub.s32 7, %v422
  %v424 = vrot.slane %v358, %v423
  %v697 = vunpack.c.l.b16 %v101
  %v698 = vunpack.c.h.b16 %v101
  %v699 = vunpack.c.l.b16 %v102
  %v700 = vunpack.c.h.b16 %v102
  %v701 = vunpack.c.l.b16 %v103
  %v702 = vunpack.c.h.b16 %v103
  %v703 = vunpack.c.l.b16 %v104
  %v704 = vunpack.c.h.b16 %v104
  %v705 = vunpack.c.l.b16 %v105
  %v706 = vunpack.c.h.b16 %v105
  %v707 = vunpack.c.l.b16 %v106
  %v708 = vunpack.c.h.b16 %v106
  %v709 = vunpack.c.l.b16 %v107
  %v710 = vunpack.c.h.b16 %v107
  %v711 = vunpack.c.l.b16 %v108
  %v712 = vunpack.c.h.b16 %v108
  %v713 = vunpack.c.l.b16 %v109
  %v714 = vunpack.c.h.b16 %v109
  %v715 = vunpack.c.l.b16 %v110
  %v716 = vunpack.c.h.b16 %v110
  %v717 = vunpack.c.l.b16 %v111
  %v718 = vunpack.c.h.b16 %v111
  %v719 = vunpack.c.l.b16 %v112
  %v720 = vunpack.c.h.b16 %v112
  %v721 = vunpack.c.l.b16 %v113
  %v722 = vunpack.c.h.b16 %v113
  %v723 = vunpack.c.l.b16 %v114
  %v724 = vunpack.c.h.b16 %v114
  %v725 = vunpack.c.l.b16 %v115
  %v726 = vunpack.c.h.b16 %v115
  %v727 = vunpack.c.l.b16 %v116
  %v728 = vunpack.c.h.b16 %v116
  %v729 = vunpack.c.l.b16 %v117
  %v730 = vunpack.c.h.b16 %v117
  %v731 = vunpack.c.l.b16 %v118
  %v732 = vunpack.c.h.b16 %v118
  %v733 = vunpack.c.l.b16 %v119
  %v734 = vunpack.c.h.b16 %v119
  %v735 = vunpack.c.l.b16 %v120
  %v736 = vunpack.c.h.b16 %v120
  %v737 = vunpack.c.l.b16 %v121
  %v738 = vunpack.c.h.b16 %v121
  %v739 = vunpack.c.l.b16 %v122
  %v740 = vunpack.c.h.b16 %v122
  %v741 = vunpack.c.l.b16 %v123
  %v742 = vunpack.c.h.b16 %v123
  %v743 = vunpack.c.l.b16 %v124
  %v744 = vunpack.c.h.b16 %v124
  %v745 = vunpack.c.l.b16 %v125
  %v746 = vunpack.c.h.b16 %v125
  %v747 = vunpack.c.l.b16 %v126
  %v748 = vunpack.c.h.b16 %v126
  %v749 = vunpack.c.l.b16 %v127
  %v750 = vunpack.c.h.b16 %v127
  %v751 = vunpack.c.l.b16 %v128
  %v752 = vunpack.c.h.b16 %v128
  %v753 = vunpack.c.l.b16 %v129
  %v754 = vunpack.c.h.b16 %v129
  %v755 = vunpack.c.l.b16 %v130
  %v756 = vunpack.c.h.b16 %v130
  %v757 = vunpack.c.l.b16 %v131
  %v758 = vunpack.c.h.b16 %v131
  %v759 = vunpack.c.l.b16 %v132
  %v760 = vunpack.c.h.b16 %v132
  %v761 = vunpack.c.l.b16 %v133
  %v762 = vunpack.c.h.b16 %v133
  %v763 = vunpack.c.l.b16 %v134
  %v764 = vunpack.c.h.b16 %v134
  %v765 = vunpack.c.l.b16 %v135
  %v766 = vunpack.c.h.b16 %v135
  %v767 = vunpack.c.l.b16 %v136
  %v768 = vunpack.c.h.b16 %v136
  %v769 = vunpack.c.l.b16 %v137
  %v770 = vunpack.c.h.b16 %v137
  %v771 = vunpack.c.l.b16 %v138
  %v772 = vunpack.c.h.b16 %v138
  %v773 = vunpack.c.l.b16 %v139
  %v774 = vunpack.c.h.b16 %v139
  %v775 = vunpack.c.l.b16 %v140
  %v776 = vunpack.c.h.b16 %v140
  %v777 = vunpack.c.l.b16 %v141
  %v778 = vunpack.c.h.b16 %v141
  %v779 = vunpack.c.l.b16 %v142
  %v780 = vunpack.c.h.b16 %v142
  %v781 = vunpack.c.l.b16 %v143
  %v782 = vunpack.c.h.b16 %v143
  %v783 = vunpack.c.l.b16 %v144
  %v784 = vunpack.c.h.b16 %v144
  %v785 = vunpack.c.l.b16 %v145
  %v786 = vunpack.c.h.b16 %v145
  %v787 = vunpack.c.l.b16 %v146
  %v788 = vunpack.c.h.b16 %v146
  %v789 = vunpack.c.l.b16 %v147
  %v790 = vunpack.c.h.b16 %v147
  %v791 = vunpack.c.l.b16 %v148
  %v792 = vunpack.c.h.b16 %v148
  %v793 = vunpack.c.l.b16 %v149
  %v794 = vunpack.c.h.b16 %v149
  %v795 = vunpack.c.l.b16 %v150
  %v796 = vunpack.c.h.b16 %v150
  %v797 = vunpack.c.l.b16 %v151
  %v798 = vunpack.c.h.b16 %v151
  %v799 = vunpack.c.l.b16 %v152
  %v800 = vunpack.c.h.b16 %v152
  %v801 = vunpack.c.l.b16 %v153
  %v802 = vunpack.c.h.b16 %v153
  %v803 = vunpack.c.l.b16 %v154
  %v804 = vunpack.c.h.b16 %v154
  %v805 = vunpack.c.l.b16 %v155
  %v806 = vunpack.c.h.b16 %v155
  %v807 = vunpack.c.l.b16 %v156
  %v808 = vunpack.c.h.b16 %v156
  %v809 = vunpack.c.l.b16 %v157
  %v810 = vunpack.c.h.b16 %v157
  %v811 = vunpack.c.l.b16 %v158
  %v812 = vunpack.c.h.b16 %v158
  %v813 = vunpack.c.l.b16 %v159
  %v814 = vunpack.c.h.b16 %v159
  %v815 = vunpack.c.l.b16 %v160
  %v816 = vunpack.c.h.b16 %v160
  %v817 = vunpack.c.l.b16 %v161
  %v818 = vunpack.c.h.b16 %v161
  %v819 = vunpack.c.l.b16 %v162
  %v820 = vunpack.c.h.b16 %v162
  %v821 = vunpack.c.l.b16 %v163
  %v822 = vunpack.c.h.b16 %v163
  %v823 = vunpack.c.l.b16 %v164
  %v824 = vunpack.c.h.b16 %v164
  %v825 = vunpack.c.l.b16 %v165
  %v826 = vunpack.c.h.b16 %v165
  %v827 = vunpack.c.l.b16 %v166
  %v828 = vunpack.c.h.b16 %v166
  %v829 = vunpack.c.l.b16 %v167
  %v830 = vunpack.c.h.b16 %v167
  %v831 = vunpack.c.l.b16 %v168
  %v832 = vunpack.c.h.b16 %v168
  %v833 = vunpack.c.l.b16 %v169
  %v834 = vunpack.c.h.b16 %v169
  %v835 = vunpack.c.l.b16 %v170
  %v836 = vunpack.c.h.b16 %v170
  %v837 = vunpack.c.l.b16 %v171
  %v838 = vunpack.c.h.b16 %v171
  %v839 = vunpack.c.l.b16 %v172
  %v840 = vunpack.c.h.b16 %v172
  %v841 = vunpack.c.l.b16 %v173
  %v842 = vunpack.c.h.b16 %v173
  %v843 = vunpack.c.l.b16 %v174
  %v844 = vunpack.c.h.b16 %v174
  %v845 = vunpack.c.l.b16 %v175
  %v846 = vunpack.c.h.b16 %v175
  %v847 = vunpack.c.l.b16 %v176
  %v848 = vunpack.c.h.b16 %v176
  %v849 = vunpack.c.l.b16 %v177
  %v850 = vunpack.c.h.b16 %v177
  %v851 = vunpack.c.l.b16 %v178
  %v852 = vunpack.c.h.b16 %v178
  %v853 = vunpack.c.l.b16 %v179
  %v854 = vunpack.c.h.b16 %v179
  %v855 = vunpack.c.l.b16 %v180
  %v856 = vunpack.c.h.b16 %v180
  %v857 = vunpack.c.l.b16 %v181
  %v858 = vunpack.c.h.b16 %v181
  %v859 = vunpack.c.l.b16 %v182
  %v860 = vunpack.c.h.b16 %v182
  %v861 = vunpack.c.l.b16 %v183
  %v862 = vunpack.c.h.b16 %v183
  %v863 = vunpack.c.l.b16 %v184
  %v864 = vunpack.c.h.b16 %v184
  %v865 = vunpack.c.l.b16 %v185
  %v866 = vunpack.c.h.b16 %v185
  %v867 = vunpack.c.l.b16 %v186
  %v868 = vunpack.c.h.b16 %v186
  %v869 = vunpack.c.l.b16 %v187
  %v870 = vunpack.c.h.b16 %v187
  %v871 = vunpack.c.l.b16 %v188
  %v872 = vunpack.c.h.b16 %v188
  %v873 = vunpack.c.l.b16 %v189
  %v874 = vunpack.c.h.b16 %v189
  %v875 = vunpack.c.l.b16 %v190
  %v876 = vunpack.c.h.b16 %v190
  %v877 = vunpack.c.l.b16 %v191
  %v878 = vunpack.c.h.b16 %v191
  %v879 = vunpack.c.l.b16 %v192
  %v880 = vunpack.c.h.b16 %v192
  %v881 = vunpack.c.l.b16 %v193
  %v882 = vunpack.c.h.b16 %v193
  %v883 = vunpack.c.l.b16 %v194
  %v884 = vunpack.c.h.b16 %v194
  %v885 = vunpack.c.l.b16 %v195
  %v886 = vunpack.c.h.b16 %v195
  %v887 = vunpack.c.l.b16 %v196
  %v888 = vunpack.c.h.b16 %v196
  %v889 = vunpack.c.l.b16 %v197
  %v890 = vunpack.c.h.b16 %v197
  %v891 = vunpack.c.l.b16 %v198
  %v892 = vunpack.c.h.b16 %v198
  %v893 = vunpack.c.l.b16 %v199
  %v894 = vunpack.c.h.b16 %v199
  %v895 = vunpack.c.l.b16 %v200
  %v896 = vunpack.c.h.b16 %v200
  %v897 = vunpack.c.l.b16 %v201
  %v898 = vunpack.c.h.b16 %v201
  %v899 = vunpack.c.l.b16 %v202
  %v900 = vunpack.c.h.b16 %v202
  %v901 = vunpack.c.l.b16 %v203
  %v902 = vunpack.c.h.b16 %v203
  %v903 = vunpack.c.l.b16 %v204
  %v904 = vunpack.c.h.b16 %v204
  %v905 = vunpack.c.l.b16 %v205
  %v906 = vunpack.c.h.b16 %v205
  %v907 = vunpack.c.l.b16 %v206
  %v908 = vunpack.c.h.b16 %v206
  %v909 = vunpack.c.l.b16 %v207
  %v910 = vunpack.c.h.b16 %v207
  %v911 = vunpack.c.l.b16 %v208
  %v912 = vunpack.c.h.b16 %v208
  %v913 = vunpack.c.l.b16 %v209
  %v914 = vunpack.c.h.b16 %v209
  %v915 = vunpack.c.l.b16 %v210
  %v916 = vunpack.c.h.b16 %v210
  %v917 = vunpack.c.l.b16 %v211
  %v918 = vunpack.c.h.b16 %v211
  %v919 = vunpack.c.l.b16 %v212
  %v920 = vunpack.c.h.b16 %v212
  %v921 = vunpack.c.l.b16 %v213
  %v922 = vunpack.c.h.b16 %v213
  %v923 = vunpack.c.l.b16 %v214
  %v924 = vunpack.c.h.b16 %v214
  %v925 = vunpack.c.l.b16 %v215
  %v926 = vunpack.c.h.b16 %v215
  %v927 = vunpack.c.l.b16 %v216
  %v928 = vunpack.c.h.b16 %v216
  %v929 = vunpack.c.l.b16 %v217
  %v930 = vunpack.c.h.b16 %v217
  %v931 = vunpack.c.l.b16 %v218
  %v932 = vunpack.c.h.b16 %v218
  %v933 = vunpack.c.l.b16 %v219
  %v934 = vunpack.c.h.b16 %v219
  %v935 = vunpack.c.l.b16 %v220
  %v936 = vunpack.c.h.b16 %v220
  %v937 = vunpack.c.l.b16 %v221
  %v938 = vunpack.c.h.b16 %v221
  %v939 = vunpack.c.l.b16 %v222
  %v940 = vunpack.c.h.b16 %v222
  %v941 = vunpack.c.l.b16 %v223
  %v942 = vunpack.c.h.b16 %v223
  %v943 = vunpack.c.l.b16 %v224
  %v944 = vunpack.c.h.b16 %v224
  %v945 = vunpack.c.l.b16 %v225
  %v946 = vunpack.c.h.b16 %v225
  %v947 = vunpack.c.l.b16 %v226
  %v948 = vunpack.c.h.b16 %v226
  %v949 = vunpack.c.l.b16 %v227
  %v950 = vunpack.c.h.b16 %v227
  %v951 = vunpack.c.l.b16 %v228
  %v952 = vunpack.c.h.b16 %v228
  %v953 = vunpack.c.l.b16 %v229
  %v954 = vunpack.c.h.b16 %v229
  %v955 = vunpack.c.l.b16 %v230
  %v956 = vunpack.c.h.b16 %v230
  %v957 = vunpack.c.l.b16 %v231
  %v958 = vunpack.c.h.b16 %v231
  %v959 = vunpack.c.l.b16 %v232
  %v960 = vunpack.c.h.b16 %v232
  %v961 = vunpack.c.l.b16 %v233
  %v962 = vunpack.c.h.b16 %v233
  %v963 = vunpack.c.l.b16 %v234
  %v964 = vunpack.c.h.b16 %v234
  %v965 = vunpack.c.l.b16 %v235
  %v966 = vunpack.c.h.b16 %v235
  %v967 = vunpack.c.l.b16 %v236
  %v968 = vunpack.c.h.b16 %v236
  %v969 = vunpack.c.l.b16 %v237
  %v970 = vunpack.c.h.b16 %v237
  %v971 = vunpack.c.l.b16 %v238
  %v972 = vunpack.c.h.b16 %v238
  %v973 = vunpack.c.l.b16 %v239
  %v974 = vunpack.c.h.b16 %v239
  %v975 = vunpack.c.l.b16 %v240
  %v976 = vunpack.c.h.b16 %v240
  %v977 = vunpack.c.l.b16 %v241
  %v978 = vunpack.c.h.b16 %v241
  %v979 = vunpack.c.l.b16 %v242
  %v980 = vunpack.c.h.b16 %v242
  %v981 = vunpack.c.l.b16 %v243
  %v982 = vunpack.c.h.b16 %v243
  %v983 = vunpack.c.l.b16 %v244
  %v984 = vunpack.c.h.b16 %v244
  %v985 = vunpack.c.l.b16 %v245
  %v986 = vunpack.c.h.b16 %v245
  %v987 = vunpack.c.l.b16 %v246
  %v988 = vunpack.c.h.b16 %v246
  %v989 = vunpack.c.l.b16 %v247
  %v990 = vunpack.c.h.b16 %v247
  %v991 = vunpack.c.l.b16 %v248
  %v992 = vunpack.c.h.b16 %v248
  %v993 = vunpack.c.l.b16 %v249
  %v994 = vunpack.c.h.b16 %v249
  %v995 = vunpack.c.l.b16 %v250
  %v996 = vunpack.c.h.b16 %v250
  %v997 = vunpack.c.l.b16 %v251
  %v998 = vunpack.c.h.b16 %v251
  %v999 = vunpack.c.l.b16 %v252
  %v1000 = vunpack.c.h.b16 %v252
  %v1001 = vunpack.c.l.b16 %v253
  %v1002 = vunpack.c.h.b16 %v253
  %v1003 = vunpack.c.l.b16 %v254
  %v1004 = vunpack.c.h.b16 %v254
  %v1005 = vunpack.c.l.b16 %v255
  %v1006 = vunpack.c.h.b16 %v255
  %v1007 = vunpack.c.l.b16 %v256
  %v1008 = vunpack.c.h.b16 %v256
  %v1009 = vunpack.c.l.b16 %v257
  %v1010 = vunpack.c.h.b16 %v257
  %v1011 = vunpack.c.l.b16 %v258
  %v1012 = vunpack.c.h.b16 %v258
  %v1013 = vunpack.c.l.b16 %v259
  %v1014 = vunpack.c.h.b16 %v259
  %v1015 = vunpack.c.l.b16 %v260
  %v1016 = vunpack.c.h.b16 %v260
  %v1017 = vunpack.c.l.b16 %v261
  %v1018 = vunpack.c.h.b16 %v261
  %v1019 = vunpack.c.l.b16 %v262
  %v1020 = vunpack.c.h.b16 %v262
  %v1021 = vunpack.c.l.b16 %v263
  %v1022 = vunpack.c.h.b16 %v263
  %v1023 = vunpack.c.l.b16 %v264
  %v1024 = vunpack.c.h.b16 %v264
  %v1025 = vunpack.c.l.b16 %v265
  %v1026 = vunpack.c.h.b16 %v265
  %v1027 = vunpack.c.l.b16 %v266
  %v1028 = vunpack.c.h.b16 %v266
  %v1029 = vunpack.c.l.b16 %v267
  %v1030 = vunpack.c.h.b16 %v267
  %v1031 = vunpack.c.l.b16 %v268
  %v1032 = vunpack.c.h.b16 %v268
  %v1033 = vunpack.c.l.b16 %v269
  %v1034 = vunpack.c.h.b16 %v269
  %v1035 = vunpack.c.l.b16 %v270
  %v1036 = vunpack.c.h.b16 %v270
  %v1037 = vunpack.c.l.b16 %v271
  %v1038 = vunpack.c.h.b16 %v271
  %v1039 = vunpack.c.l.b16 %v272
  %v1040 = vunpack.c.h.b16 %v272
  %v1041 = vunpack.c.l.b16 %v273
  %v1042 = vunpack.c.h.b16 %v273
  %v1043 = vunpack.c.l.b16 %v274
  %v1044 = vunpack.c.h.b16 %v274
  %v1045 = vunpack.c.l.b16 %v275
  %v1046 = vunpack.c.h.b16 %v275
  %v1047 = vunpack.c.l.b16 %v276
  %v1048 = vunpack.c.h.b16 %v276
  %v1049 = vunpack.c.l.b16 %v277
  %v1050 = vunpack.c.h.b16 %v277
  %v1051 = vunpack.c.l.b16 %v278
  %v1052 = vunpack.c.h.b16 %v278
  %v1053 = vunpack.c.l.b16 %v279
  %v1054 = vunpack.c.h.b16 %v279
  %v1055 = vunpack.c.l.b16 %v280
  %v1056 = vunpack.c.h.b16 %v280
  %v1057 = vunpack.c.l.b16 %v281
  %v1058 = vunpack.c.h.b16 %v281
  %v1059 = vunpack.c.l.b16 %v282
  %v1060 = vunpack.c.h.b16 %v282
  %v1061 = vunpack.c.l.b16 %v283
  %v1062 = vunpack.c.h.b16 %v283
  %v1063 = vunpack.c.l.b16 %v284
  %v1064 = vunpack.c.h.b16 %v284
  %v1065 = vunpack.c.l.b16 %v285
  %v1066 = vunpack.c.h.b16 %v285
  %v1067 = vunpack.c.l.b16 %v286
  %v1068 = vunpack.c.h.b16 %v286
  %v1069 = vunpack.c.l.b16 %v287
  %v1070 = vunpack.c.h.b16 %v287
  %v1071 = vunpack.c.l.b16 %v288
  %v1072 = vunpack.c.h.b16 %v288
  %v1073 = vunpack.c.l.b16 %v289
  %v1074 = vunpack.c.h.b16 %v289
  %v1075 = vunpack.c.l.b16 %v290
  %v1076 = vunpack.c.h.b16 %v290
  %v1077 = vunpack.c.l.b16 %v291
  %v1078 = vunpack.c.h.b16 %v291
  %v1079 = vunpack.c.l.b16 %v292
  %v1080 = vunpack.c.h.b16 %v292
  %v1081 = vunpack.c.l.b16 %v293
  %v1082 = vunpack.c.h.b16 %v293
  %v1083 = vunpack.c.l.b16 %v294
  %v1084 = vunpack.c.h.b16 %v294
  %v1085 = vunpack.c.l.b16 %v295
  %v1086 = vunpack.c.h.b16 %v295
  %v1087 = vunpack.c.l.b16 %v296
  %v1088 = vunpack.c.h.b16 %v296
  %v1089 = vunpack.c.l.b16 %v297
  %v1090 = vunpack.c.h.b16 %v297
  %v1091 = vunpack.c.l.b16 %v298
  %v1092 = vunpack.c.h.b16 %v298
  %v1093 = vunpack.c.l.b16 %v299
  %v1094 = vunpack.c.h.b16 %v299
  %v1095 = vunpack.c.l.b16 %v300
  %v1096 = vunpack.c.h.b16 %v300
  %v1097 = vunpack.c.l.b16 %v301
  %v1098 = vunpack.c.h.b16 %v301
  %v1099 = vunpack.c.l.b16 %v302
  %v1100 = vunpack.c.h.b16 %v302
  %v1101 = vunpack.c.l.b16 %v303
  %v1102 = vunpack.c.h.b16 %v303
  %v1103 = vunpack.c.l.b16 %v304
  %v1104 = vunpack.c.h.b16 %v304
  %v1105 = vunpack.c.l.b16 %v305
  %v1106 = vunpack.c.h.b16 %v305
  %v1107 = vunpack.c.l.b16 %v306
  %v1108 = vunpack.c.h.b16 %v306
  %v1109 = vunpack.c.l.b16 %v307
  %v1110 = vunpack.c.h.b16 %v307
  %v1111 = vunpack.c.l.b16 %v308
  %v1112 = vunpack.c.h.b16 %v308
  %v1113 = vunpack.c.l.b16 %v309
  %v1114 = vunpack.c.h.b16 %v309
  %v1115 = vunpack.c.l.b16 %v310
  %v1116 = vunpack.c.h.b16 %v310
  %v1117 = vunpack.c.l.b16 %v311
  %v1118 = vunpack.c.h.b16 %v311
  %v1119 = vunpack.c.l.b16 %v312
  %v1120 = vunpack.c.h.b16 %v312
  %v1121 = vunpack.c.l.b16 %v313
  %v1122 = vunpack.c.h.b16 %v313
  %v1123 = vunpack.c.l.b16 %v314
  %v1124 = vunpack.c.h.b16 %v314
  %v1125 = vunpack.c.l.b16 %v315
  %v1126 = vunpack.c.h.b16 %v315
  %v1127 = vunpack.c.l.b16 %v316
  %v1128 = vunpack.c.h.b16 %v316
  %v1129 = vunpack.c.l.b16 %v317
  %v1130 = vunpack.c.h.b16 %v317
  %v1131 = vunpack.c.l.b16 %v318
  %v1132 = vunpack.c.h.b16 %v318
  %v1133 = vunpack.c.l.b16 %v319
  %v1134 = vunpack.c.h.b16 %v319
  %v1135 = vunpack.c.l.b16 %v320
  %v1136 = vunpack.c.h.b16 %v320
  %v1137 = vunpack.c.l.b16 %v321
  %v1138 = vunpack.c.h.b16 %v321
  %v1139 = vunpack.c.l.b16 %v322
  %v1140 = vunpack.c.h.b16 %v322
  %v1141 = vunpack.c.l.b16 %v323
  %v1142 = vunpack.c.h.b16 %v323
  %v1143 = vunpack.c.l.b16 %v324
  %v1144 = vunpack.c.h.b16 %v324
  %v1145 = vunpack.c.l.b16 %v325
  %v1146 = vunpack.c.h.b16 %v325
  %v1147 = vunpack.c.l.b16 %v326
  %v1148 = vunpack.c.h.b16 %v326
  %v1149 = vunpack.c.l.b16 %v327
  %v1150 = vunpack.c.h.b16 %v327
  %v1151 = vunpack.c.l.b16 %v328
  %v1152 = vunpack.c.h.b16 %v328
  %v1153 = vunpack.c.l.b16 %v329
  %v1154 = vunpack.c.h.b16 %v329
  %v1155 = vunpack.c.l.b16 %v330
  %v1156 = vunpack.c.h.b16 %v330
  %v1157 = vunpack.c.l.b16 %v331
  %v1158 = vunpack.c.h.b16 %v331
  %v1159 = vunpack.c.l.b16 %v332
  %v1160 = vunpack.c.h.b16 %v332
  %v1161 = vunpack.c.l.b16 %v333
  %v1162 = vunpack.c.h.b16 %v333
  %v1163 = vunpack.c.l.b16 %v334
  %v1164 = vunpack.c.h.b16 %v334
  %v1165 = vunpack.c.l.b16 %v335
  %v1166 = vunpack.c.h.b16 %v335
  %v1167 = vunpack.c.l.b16 %v336
  %v1168 = vunpack.c.h.b16 %v336
  %v1169 = vunpack.c.l.b16 %v337
  %v1170 = vunpack.c.h.b16 %v337
  %v1171 = vunpack.c.l.b16 %v338
  %v1172 = vunpack.c.h.b16 %v338
  %v1173 = vunpack.c.l.b16 %v339
  %v1174 = vunpack.c.h.b16 %v339
  %v1175 = vunpack.c.l.b16 %v340
  %v1176 = vunpack.c.h.b16 %v340
  %v1177 = vunpack.c.l.b16 %v341
  %v1178 = vunpack.c.h.b16 %v341
  %v1179 = vunpack.c.l.b16 %v342
  %v1180 = vunpack.c.h.b16 %v342
  %v1181 = vunpack.c.l.b16 %v343
  %v1182 = vunpack.c.h.b16 %v343
  %v1183 = vunpack.c.l.b16 %v344
  %v1184 = vunpack.c.h.b16 %v344
  %v1185 = vunpack.c.l.b16 %v345
  %v1186 = vunpack.c.h.b16 %v345
  %v1187 = vunpack.c.l.b16 %v346
  %v1188 = vunpack.c.h.b16 %v346
  %v1189 = vunpack.c.l.b16 %v347
  %v1190 = vunpack.c.h.b16 %v347
  %v1191 = vunpack.c.l.b16 %v348
  %v1192 = vunpack.c.h.b16 %v348
  %v1193 = vunpack.c.l.b16 %v349
  %v1194 = vunpack.c.h.b16 %v349
  %v1195 = vunpack.c.l.b16 %v350
  %v1196 = vunpack.c.h.b16 %v350
  %v1197 = vunpack.c.l.b16 %v351
  %v1198 = vunpack.c.h.b16 %v351
  %v1199 = vunpack.c.l.b16 %v352
  %v1200 = vunpack.c.h.b16 %v352
  %v1201 = vunpack.c.l.b16 %v353
  %v1202 = vunpack.c.h.b16 %v353
  %v1203 = vunpack.c.l.b16 %v354
  %v1204 = vunpack.c.h.b16 %v354
  %v1205 = vunpack.c.l.b16 %v355
  %v1206 = vunpack.c.h.b16 %v355
  %v1207 = vunpack.c.l.b16 %v356
  %v1208 = vunpack.c.h.b16 %v356
  %v1209 = vpack.c.b16 %v713, %v697
  %v1210 = vpack.c.b16 %v714, %v698
  %v1211 = vpack.c.b16 %v715, %v699
  %v1212 = vpack.c.b16 %v716, %v700
  %v1213 = vpack.c.b16 %v717, %v701
  %v1214 = vpack.c.b16 %v718, %v702
  %v1215 = vpack.c.b16 %v719, %v703
  %v1216 = vpack.c.b16 %v720, %v704
  %v1217 = vpack.c.b16 %v721, %v705
  %v1218 = vpack.c.b16 %v722, %v706
  %v1219 = vpack.c.b16 %v723, %v707
  %v1220 = vpack.c.b16 %v724, %v708
  %v1221 = vpack.c.b16 %v725, %v709
  %v1222 = vpack.c.b16 %v726, %v710
  %v1223 = vpack.c.b16 %v727, %v711
  %v1224 = vpack.c.b16 %v728, %v712
  %v1225 = vpack.c.b16 %v745, %v729
  %v1226 = vpack.c.b16 %v746, %v730
  %v1227 = vpack.c.b16 %v747, %v731
  %v1228 = vpack.c.b16 %v748, %v732
  %v1229 = vpack.c.b16 %v749, %v733
  %v1230 = vpack.c.b16 %v750, %v734
  %v1231 = vpack.c.b16 %v751, %v735
  %v1232 = vpack.c.b16 %v752, %v736
  %v1233 = vpack.c.b16 %v753, %v737
  %v1234 = vpack.c.b16 %v754, %v738
  %v1235 = vpack.c.b16 %v755, %v739
  %v1236 = vpack.c.b16 %v756, %v740
  %v1237 = vpack.c.b16 %v757, %v741
  %v1238 = vpack.c.b16 %v758, %v742
  %v1239 = vpack.c.b16 %v759, %v743
  %v1240 = vpack.c.b16 %v760, %v744
  %v1241 = vpack.c.b16 %v777, %v761
  %v1242 = vpack.c.b16 %v778, %v762
  %v1243 = vpack.c.b16 %v779, %v763
  %v1244 = vpack.c.b16 %v780, %v764
  %v1245 = vpack.c.b16 %v781, %v765
  %v1246 = vpack.c.b16 %v782, %v766
  %v1247 = vpack.c.b16 %v783, %v767
  %v1248 = vpack.c.b16 %v784, %v768
  %v1249 = vpack.c.b16 %v785, %v769
  %v1250 = vpack.c.b16 %v786, %v770
  %v1251 = vpack.c.b16 %v787, %v771
  %v1252 = vpack.c.b16 %v788, %v772
  %v1253 = vpack.c.b16 %v789, %v773
  %v1254 = vpack.c.b16 %v790, %v774
  %v1255 = vpack.c.b16 %v791, %v775
  %v1256 = vpack.c.b16 %v792, %v776
  %v1257 = vpack.c.b16 %v809, %v793
  %v1258 = vpack.c.b16 %v810, %v794
  %v1259 = vpack.c.b16 %v811, %v795
  %v1260 = vpack.c.b16 %v812, %v796
  %v1261 = vpack.c.b16 %v813, %v797
  %v1262 = vpack.c.b16 %v814, %v798
  %v1263 = vpack.c.b16 %v815, %v799
  %v1264 = vpack.c.b16 %v816, %v800
  %v1265 = vpack.c.b16 %v817, %v801
  %v1266 = vpack.c.b16 %v818, %v802
  %v1267 = vpack.c.b16 %v819, %v803
  %v1268 = vpack.c.b16 %v820, %v804
  %v1269 = vpack.c.b16 %v821, %v805
  %v1270 = vpack.c.b16 %v822, %v806
  %v1271 = vpack.c.b16 %v823, %v807
  %v1272 = vpack.c.b16 %v824, %v808
  %v1273 = vpack.c.b16 %v841, %v825
  %v1274 = vpack.c.b16 %v842, %v826
  %v1275 = vpack.c.b16 %v843, %v827
  %v1276 = vpack.c.b16 %v844, %v828
  %v1277 = vpack.c.b16 %v845, %v829
  %v1278 = vpack.c.b16 %v846, %v830
  %v1279 = vpack.c.b16 %v847, %v831
  %v1280 = vpack.c.b16 %v848, %v832
  %v1281 = vpack.c.b16 %v849, %v833
  %v1282 = vpack.c.b16 %v850, %v834
  %v1283 = vpack.c.b16 %v851, %v835
  %v1284 = vpack.c.b16 %v852, %v836
  %v1285 = vpack.c.b16 %v853, %v837
  %v1286 = vpack.c.b16 %v854, %v838
  %v1287 = vpack.c.b16 %v855, %v839
  %v1288 = vpack.c.b16 %v856, %v840
  %v1289 = vpack.c.b16 %v873, %v857
  %v1290 = vpack.c.b16 %v874, %v858
  %v1291 = vpack.c.b16 %v875, %v859
  %v1292 = vpack.c.b16 %v876, %v860
  %v1293 = vpack.c.b16 %v877, %v861
  %v1294 = vpack.c.b16 %v878, %v862
  %v1295 = vpack.c.b16 %v879, %v863
  %v1296 = vpack.c.b16 %v880, %v864
  %v1297 = vpack.c.b16 %v881, %v865
  %v1298 = vpack.c.b16 %v882, %v866
  %v1299 = vpack.c.b16 %v883, %v867
  %v1300 = vpack.c.b16 %v884, %v868
  %v1301 = vpack.c.b16 %v885, %v869
  %v1302 = vpack.c.b16 %v886, %v870
  %v1303 = vpack.c.b16 %v887, %v871
  %v1304 = vpack.c.b16 %v888, %v872
  %v1305 = vpack.c.b16 %v905, %v889
  %v1306 = vpack.c.b16 %v906, %v890
  %v1307 = vpack.c.b16 %v907, %v891
  %v1308 = vpack.c.b16 %v908, %v892
  %v1309 = vpack.c.b16 %v909, %v893
  %v1310 = vpack.c.b16 %v910, %v894
  %v1311 = vpack.c.b16 %v911, %v895
  %v1312 = vpack.c.b16 %v912, %v896
  %v1313 = vpack.c.b16 %v913, %v897
  %v1314 = vpack.c.b16 %v914, %v898
  %v1315 = vpack.c.b16 %v915, %v899
  %v1316 = vpack.c.b16 %v916, %v900
  %v1317 = vpack.c.b16 %v917, %v901
  %v1318 = vpack.c.b16 %v918, %v902
  %v1319 = vpack.c.b16 %v919, %v903
  %v1320 = vpack.c.b16 %v920, %v904
  %v1321 = vpack.c.b16 %v937, %v921
  %v1322 = vpack.c.b16 %v938, %v922
  %v1323 = vpack.c.b16 %v939, %v923
  %v1324 = vpack.c.b16 %v940, %v924
  %v1325 = vpack.c.b16 %v941, %v925
  %v1326 = vpack.c.b16 %v942, %v926
  %v1327 = vpack.c.b16 %v943, %v927
  %v1328 = vpack.c.b16 %v944, %v928
  %v1329 = vpack.c.b16 %v945, %v929
  %v1330 = vpack.c.b16 %v946, %v930
  %v1331 = vpack.c.b16 %v947, %v931
  %v1332 = vpack.c.b16 %v948, %v932
  %v1333 = vpack.c.b16 %v949, %v933
  %v1334 = vpack.c.b16 %v950, %v934
  %v1335 = vpack.c.b16 %v951, %v935
  %v1336 = vpack.c.b16 %v952, %v936
  %v1337 = vpack.c.b16 %v969, %v953
  %v1338 = vpack.c.b16 %v970, %v954
  %v1339 = vpack.c.b16 %v971, %v955
  %v1340 = vpack.c.b16 %v972, %v956
  %v1341 = vpack.c.b16 %v973, %v957
  %v1342 = vpack.c.b16 %v974, %v958
  %v1343 = vpack.c.b16 %v975, %v959
  %v1344 = vpack.c.b16 %v976, %v960
  %v1345 = vpack.c.b16 %v977, %v961
  %v1346 = vpack.c.b16 %v978, %v962
  %v1347 = vpack.c.b16 %v979, %v963
  %v1348 = vpack.c.b16 %v980, %v964
  %v1349 = vpack.c.b16 %v981, %v965
  %v1350 = vpack.c.b16 %v982, %v966
  %v1351 = vpack.c.b16 %v983, %v967
  %v1352 = vpack.c.b16 %v984, %v968
  %v1353 = vpack.c.b16 %v1001, %v985
  %v1354 = vpack.c.b16 %v1002, %v986
  %v1355 = vpack.c.b16 %v1003, %v987
  %v1356 = vpack.c.b16 %v1004, %v988
  %v1357 = vpack.c.b16 %v1005, %v989
  %v1358 = vpack.c.b16 %v1006, %v990
  %v1359 = vpack.c.b16 %v1007, %v991
  %v1360 = vpack.c.b16 %v1008, %v992
  %v1361 = vpack.c.b16 %v1009, %v993
  %v1362 = vpack.c.b16 %v1010, %v994
  %v1363 = vpack.c.b16 %v1011, %v995
  %v1364 = vpack.c.b16 %v1012, %v996
  %v1365 = vpack.c.b16 %v1013, %v997
  %v1366 = vpack.c.b16 %v1014, %v998
  %v1367 = vpack.c.b16 %v1015, %v999
  %v1368 = vpack.c.b16 %v1016, %v1000
  %v1369 = vpack.c.b16 %v1033, %v1017
  %v1370 = vpack.c.b16 %v1034, %v1018
  %v1371 = vpack.c.b16 %v1035, %v1019
  %v1372 = vpack.c.b16 %v1036, %v1020
  %v1373 = vpack.c.b16 %v1037, %v1021
  %v1374 = vpack.c.b16 %v1038, %v1022
  %v1375 = vpack.c.b16 %v1039, %v1023
  %v1376 = vpack.c.b16 %v1040, %v1024
  %v1377 = vpack.c.b16 %v1041, %v1025
  %v1378 = vpack.c.b16 %v1042, %v1026
  %v1379 = vpack.c.b16 %v1043, %v1027
  %v1380 = vpack.c.b16 %v1044, %v1028
  %v1381 = vpack.c.b16 %v1045, %v1029
  %v1382 = vpack.c.b16 %v1046, %v1030
  %v1383 = vpack.c.b16 %v1047, %v1031
  %v1384 = vpack.c.b16 %v1048, %v1032
  %v1385 = vpack.c.b16 %v1065, %v1049
  %v1386 = vpack.c.b16 %v1066, %v1050
  %v1387 = vpack.c.b16 %v1067, %v1051
  %v1388 = vpack.c.b16 %v1068, %v1052
  %v1389 = vpack.c.b16 %v1069, %v1053
  %v1390 = vpack.c.b16 %v1070, %v1054
  %v1391 = vpack.c.b16 %v1071, %v1055
  %v1392 = vpack.c.b16 %v1072, %v1056
  %v1393 = vpack.c.b16 %v1073, %v1057
  %v1394 = vpack.c.b16 %v1074, %v1058
  %v1395 = vpack.c.b16 %v1075, %v1059
  %v1396 = vpack.c.b16 %v1076, %v1060
  %v1397 = vpack.c.b16 %v1077, %v1061
  %v1398 = vpack.c.b16 %v1078, %v1062
  %v1399 = vpack.c.b16 %v1079, %v1063
  %v1400 = vpack.c.b16 %v1080, %v1064
  %v1401 = vpack.c.b16 %v1097, %v1081
  %v1402 = vpack.c.b16 %v1098, %v1082
  %v1403 = vpack.c.b16 %v1099, %v1083
  %v1404 = vpack.c.b16 %v1100, %v1084
  %v1405 = vpack.c.b16 %v1101, %v1085
  %v1406 = vpack.c.b16 %v1102, %v1086
  %v1407 = vpack.c.b16 %v1103, %v1087
  %v1408 = vpack.c.b16 %v1104, %v1088
  %v1409 = vpack.c.b16 %v1105, %v1089
  %v1410 = vpack.c.b16 %v1106, %v1090
  %v1411 = vpack.c.b16 %v1107, %v1091
  %v1412 = vpack.c.b16 %v1108, %v1092
  %v1413 = vpack.c.b16 %v1109, %v1093
  %v1414 = vpack.c.b16 %v1110, %v1094
  %v1415 = vpack.c.b16 %v1111, %v1095
  %v1416 = vpack.c.b16 %v1112, %v1096
  %v1417 = vpack.c.b16 %v1129, %v1113
  %v1418 = vpack.c.b16 %v1130, %v1114
  %v1419 = vpack.c.b16 %v1131, %v1115
  %v1420 = vpack.c.b16 %v1132, %v1116
  %v1421 = vpack.c.b16 %v1133, %v1117
  %v1422 = vpack.c.b16 %v1134, %v1118
  %v1423 = vpack.c.b16 %v1135, %v1119
  %v1424 = vpack.c.b16 %v1136, %v1120
  %v1425 = vpack.c.b16 %v1137, %v1121
  %v1426 = vpack.c.b16 %v1138, %v1122
  %v1427 = vpack.c.b16 %v1139, %v1123
  %v1428 = vpack.c.b16 %v1140, %v1124
  %v1429 = vpack.c.b16 %v1141, %v1125
  %v1430 = vpack.c.b16 %v1142, %v1126
  %v1431 = vpack.c.b16 %v1143, %v1127
  %v1432 = vpack.c.b16 %v1144, %v1128
  %v1433 = vpack.c.b16 %v1161, %v1145
  %v1434 = vpack.c.b16 %v1162, %v1146
  %v1435 = vpack.c.b16 %v1163, %v1147
  %v1436 = vpack.c.b16 %v1164, %v1148
  %v1437 = vpack.c.b16 %v1165, %v1149
  %v1438 = vpack.c.b16 %v1166, %v1150
  %v1439 = vpack.c.b16 %v1167, %v1151
  %v1440 = vpack.c.b16 %v1168, %v1152
  %v1441 = vpack.c.b16 %v1169, %v1153
  %v1442 = vpack.c.b16 %v1170, %v1154
  %v1443 = vpack.c.b16 %v1171, %v1155
  %v1444 = vpack.c.b16 %v1172, %v1156
  %v1445 = vpack.c.b16 %v1173, %v1157
  %v1446 = vpack.c.b16 %v1174, %v1158
  %v1447 = vpack.c.b16 %v1175, %v1159
  %v1448 = vpack.c.b16 %v1176, %v1160
  %v1449 = vpack.c.b16 %v1193, %v1177
  %v1450 = vpack.c.b16 %v1194, %v1178
  %v1451 = vpack.c.b16 %v1195, %v1179
  %v1452 = vpack.c.b16 %v1196, %v1180
  %v1453 = vpack.c.b16 %v1197, %v1181
  %v1454 = vpack.c.b16 %v1198, %v1182
  %v1455 = vpack.c.b16 %v1199, %v1183
  %v1456 = vpack.c.b16 %v1200, %v1184
  %v1457 = vpack.c.b16 %v1201, %v1185
  %v1458 = vpack.c.b16 %v1202, %v1186
  %v1459 = vpack.c.b16 %v1203, %v1187
  %v1460 = vpack.c.b16 %v1204, %v1188
  %v1461 = vpack.c.b16 %v1205, %v1189
  %v1462 = vpack.c.b16 %v1206, %v1190
  %v1463 = vpack.c.b16 %v1207, %v1191
  %v1464 = vpack.c.b16 %v1208, %v1192
  %1721 = vmatprep.subr.bf16.mxu0 %v1322
  %1722 = vmatpush1.bf16.msra.mxu0 %v1321
  %1723 = vmatprep.subr.bf16.mxu0 %v1306
  %1724 = vmatpush1.bf16.msra.mxu0 %v1305
  %1725 = vmatprep.subr.bf16.mxu0 %v1290
  %1726 = vmatpush1.bf16.msra.mxu0 %v1289
  %1727 = vmatprep.subr.bf16.mxu0 %v1274
  %1728 = vmatpush1.bf16.msra.mxu0 %v1273
  %1729 = vmatprep.subr.bf16.mxu0 %v1258
  %1730 = vmatpush1.bf16.msra.mxu0 %v1257
  %1731 = vmatprep.subr.bf16.mxu0 %v1242
  %1732 = vmatpush1.bf16.msra.mxu0 %v1241
  %1733 = vmatprep.subr.bf16.mxu0 %v1226
  %1734 = vmatpush1.bf16.msra.mxu0 %v1225
  %1735 = vmatprep.subr.bf16.mxu0 %v1210
  %1736 = vmatpush1.bf16.msra.mxu0 %v1209
  %1737 = vmatprep.subr.bf16.mxu0 %v1450
  %1738 = vmatpush2.bf16.msra.mxu0 %v1449
  %1739 = vmatprep.subr.bf16.mxu0 %v1434
  %1740 = vmatpush2.bf16.msra.mxu0 %v1433
  %1741 = vmatprep.subr.bf16.mxu0 %v1418
  %1742 = vmatpush2.bf16.msra.mxu0 %v1417
  %1743 = vmatprep.subr.bf16.mxu0 %v1402
  %1744 = vmatpush2.bf16.msra.mxu0 %v1401
  %1745 = vmatprep.subr.bf16.mxu0 %v1386
  %1746 = vmatpush2.bf16.msra.mxu0 %v1385
  %1747 = vmatprep.subr.bf16.mxu0 %v1370
  %1748 = vmatpush2.bf16.msra.mxu0 %v1369
  %1749 = vmatprep.subr.bf16.mxu0 %v1354
  %1750 = vmatpush2.bf16.msra.mxu0 %v1353
  %1751 = vmatprep.subr.bf16.mxu0 %v1338
  %1752 = vmatpush2.bf16.msra.mxu0 %v1337
  %1753 = vmatprep.mubr.bf16.mxu0 %v100
  %1754 = vmatmul.mubr.bf16.gmra.mxu0 %v99
  %v1755 = vpop.f32.mrf.mxu0
  %v1756 = vadd.f32 %v364, %v1755
  %v1757 = vpop.f32.mrf.mxu0
  %v1758 = vadd.f32 %v368, %v1757
  %v1759 = vpop.f32.mrf.mxu0
  %v1760 = vadd.f32 %v364, %v1759
  %v1761 = vpop.f32.mrf.mxu0
  %v1762 = vadd.f32 %v368, %v1761
  %1763 = vdwg.mxu0
  %1764 = vmatprep.subr.bf16.mxu0 %v1324
  %1765 = vmatpush1.bf16.msra.mxu0 %v1323
  %1766 = vmatprep.subr.bf16.mxu0 %v1308
  %1767 = vmatpush1.bf16.msra.mxu0 %v1307
  %1768 = vmatprep.subr.bf16.mxu0 %v1292
  %1769 = vmatpush1.bf16.msra.mxu0 %v1291
  %1770 = vmatprep.subr.bf16.mxu0 %v1276
  %1771 = vmatpush1.bf16.msra.mxu0 %v1275
  %1772 = vmatprep.subr.bf16.mxu0 %v1260
  %1773 = vmatpush1.bf16.msra.mxu0 %v1259
  %1774 = vmatprep.subr.bf16.mxu0 %v1244
  %1775 = vmatpush1.bf16.msra.mxu0 %v1243
  %1776 = vmatprep.subr.bf16.mxu0 %v1228
  %1777 = vmatpush1.bf16.msra.mxu0 %v1227
  %1778 = vmatprep.subr.bf16.mxu0 %v1212
  %1779 = vmatpush1.bf16.msra.mxu0 %v1211
  %1780 = vmatprep.subr.bf16.mxu0 %v1452
  %1781 = vmatpush2.bf16.msra.mxu0 %v1451
  %1782 = vmatprep.subr.bf16.mxu0 %v1436
  %1783 = vmatpush2.bf16.msra.mxu0 %v1435
  %1784 = vmatprep.subr.bf16.mxu0 %v1420
  %1785 = vmatpush2.bf16.msra.mxu0 %v1419
  %1786 = vmatprep.subr.bf16.mxu0 %v1404
  %1787 = vmatpush2.bf16.msra.mxu0 %v1403
  %1788 = vmatprep.subr.bf16.mxu0 %v1388
  %1789 = vmatpush2.bf16.msra.mxu0 %v1387
  %1790 = vmatprep.subr.bf16.mxu0 %v1372
  %1791 = vmatpush2.bf16.msra.mxu0 %v1371
  %1792 = vmatprep.subr.bf16.mxu0 %v1356
  %1793 = vmatpush2.bf16.msra.mxu0 %v1355
  %1794 = vmatprep.subr.bf16.mxu0 %v1340
  %1795 = vmatpush2.bf16.msra.mxu0 %v1339
  %1796 = vmatprep.mubr.bf16.mxu0 %v100
  %1797 = vmatmul.mubr.bf16.gmra.mxu0 %v99
  %v1798 = vpop.f32.mrf.mxu0
  %v1799 = vadd.f32 %v372, %v1798
  %v1800 = vpop.f32.mrf.mxu0
  %v1801 = vadd.f32 %v376, %v1800
  %v1802 = vpop.f32.mrf.mxu0
  %v1803 = vadd.f32 %v372, %v1802
  %v1804 = vpop.f32.mrf.mxu0
  %v1805 = vadd.f32 %v376, %v1804
  %1806 = vdwg.mxu0
  %1807 = vmatprep.subr.bf16.mxu0 %v1326
  %1808 = vmatpush1.bf16.msra.mxu0 %v1325
  %1809 = vmatprep.subr.bf16.mxu0 %v1310
  %1810 = vmatpush1.bf16.msra.mxu0 %v1309
  %1811 = vmatprep.subr.bf16.mxu0 %v1294
  %1812 = vmatpush1.bf16.msra.mxu0 %v1293
  %1813 = vmatprep.subr.bf16.mxu0 %v1278
  %1814 = vmatpush1.bf16.msra.mxu0 %v1277
  %1815 = vmatprep.subr.bf16.mxu0 %v1262
  %1816 = vmatpush1.bf16.msra.mxu0 %v1261
  %1817 = vmatprep.subr.bf16.mxu0 %v1246
  %1818 = vmatpush1.bf16.msra.mxu0 %v1245
  %1819 = vmatprep.subr.bf16.mxu0 %v1230
  %1820 = vmatpush1.bf16.msra.mxu0 %v1229
  %1821 = vmatprep.subr.bf16.mxu0 %v1214
  %1822 = vmatpush1.bf16.msra.mxu0 %v1213
  %1823 = vmatprep.subr.bf16.mxu0 %v1454
  %1824 = vmatpush2.bf16.msra.mxu0 %v1453
  %1825 = vmatprep.subr.bf16.mxu0 %v1438
  %1826 = vmatpush2.bf16.msra.mxu0 %v1437
  %1827 = vmatprep.subr.bf16.mxu0 %v1422
  %1828 = vmatpush2.bf16.msra.mxu0 %v1421
  %1829 = vmatprep.subr.bf16.mxu0 %v1406
  %1830 = vmatpush2.bf16.msra.mxu0 %v1405
  %1831 = vmatprep.subr.bf16.mxu0 %v1390
  %1832 = vmatpush2.bf16.msra.mxu0 %v1389
  %1833 = vmatprep.subr.bf16.mxu0 %v1374
  %1834 = vmatpush2.bf16.msra.mxu0 %v1373
  %1835 = vmatprep.subr.bf16.mxu0 %v1358
  %1836 = vmatpush2.bf16.msra.mxu0 %v1357
  %1837 = vmatprep.subr.bf16.mxu0 %v1342
  %1838 = vmatpush2.bf16.msra.mxu0 %v1341
  %1839 = vmatprep.mubr.bf16.mxu0 %v100
  %1840 = vmatmul.mubr.bf16.gmra.mxu0 %v99
  %v1841 = vpop.f32.mrf.mxu0
  %v1842 = vadd.f32 %v380, %v1841
  %v1843 = vpop.f32.mrf.mxu0
  %v1844 = vadd.f32 %v384, %v1843
  %v1845 = vpop.f32.mrf.mxu0
  %v1846 = vadd.f32 %v380, %v1845
  %v1847 = vpop.f32.mrf.mxu0
  %v1848 = vadd.f32 %v384, %v1847
  %1849 = vdwg.mxu0
  %1850 = vmatprep.subr.bf16.mxu0 %v1328
  %1851 = vmatpush1.bf16.msra.mxu0 %v1327
  %1852 = vmatprep.subr.bf16.mxu0 %v1312
  %1853 = vmatpush1.bf16.msra.mxu0 %v1311
  %1854 = vmatprep.subr.bf16.mxu0 %v1296
  %1855 = vmatpush1.bf16.msra.mxu0 %v1295
  %1856 = vmatprep.subr.bf16.mxu0 %v1280
  %1857 = vmatpush1.bf16.msra.mxu0 %v1279
  %1858 = vmatprep.subr.bf16.mxu0 %v1264
  %1859 = vmatpush1.bf16.msra.mxu0 %v1263
  %1860 = vmatprep.subr.bf16.mxu0 %v1248
  %1861 = vmatpush1.bf16.msra.mxu0 %v1247
  %1862 = vmatprep.subr.bf16.mxu0 %v1232
  %1863 = vmatpush1.bf16.msra.mxu0 %v1231
  %1864 = vmatprep.subr.bf16.mxu0 %v1216
  %1865 = vmatpush1.bf16.msra.mxu0 %v1215
  %1866 = vmatprep.subr.bf16.mxu0 %v1456
  %1867 = vmatpush2.bf16.msra.mxu0 %v1455
  %1868 = vmatprep.subr.bf16.mxu0 %v1440
  %1869 = vmatpush2.bf16.msra.mxu0 %v1439
  %1870 = vmatprep.subr.bf16.mxu0 %v1424
  %1871 = vmatpush2.bf16.msra.mxu0 %v1423
  %1872 = vmatprep.subr.bf16.mxu0 %v1408
  %1873 = vmatpush2.bf16.msra.mxu0 %v1407
  %1874 = vmatprep.subr.bf16.mxu0 %v1392
  %1875 = vmatpush2.bf16.msra.mxu0 %v1391
  %1876 = vmatprep.subr.bf16.mxu0 %v1376
  %1877 = vmatpush2.bf16.msra.mxu0 %v1375
  %1878 = vmatprep.subr.bf16.mxu0 %v1360
  %1879 = vmatpush2.bf16.msra.mxu0 %v1359
  %1880 = vmatprep.subr.bf16.mxu0 %v1344
  %1881 = vmatpush2.bf16.msra.mxu0 %v1343
  %1882 = vmatprep.mubr.bf16.mxu0 %v100
  %1883 = vmatmul.mubr.bf16.gmra.mxu0 %v99
  %v1884 = vpop.f32.mrf.mxu0
  %v1885 = vadd.f32 %v388, %v1884
  %v1886 = vpop.f32.mrf.mxu0
  %v1887 = vadd.f32 %v392, %v1886
  %v1888 = vpop.f32.mrf.mxu0
  %v1889 = vadd.f32 %v388, %v1888
  %v1890 = vpop.f32.mrf.mxu0
  %v1891 = vadd.f32 %v392, %v1890
  %1892 = vdwg.mxu0
  %1893 = vmatprep.subr.bf16.mxu0 %v1330
  %1894 = vmatpush1.bf16.msra.mxu0 %v1329
  %1895 = vmatprep.subr.bf16.mxu0 %v1314
  %1896 = vmatpush1.bf16.msra.mxu0 %v1313
  %1897 = vmatprep.subr.bf16.mxu0 %v1298
  %1898 = vmatpush1.bf16.msra.mxu0 %v1297
  %1899 = vmatprep.subr.bf16.mxu0 %v1282
  %1900 = vmatpush1.bf16.msra.mxu0 %v1281
  %1901 = vmatprep.subr.bf16.mxu0 %v1266
  %1902 = vmatpush1.bf16.msra.mxu0 %v1265
  %1903 = vmatprep.subr.bf16.mxu0 %v1250
  %1904 = vmatpush1.bf16.msra.mxu0 %v1249
  %1905 = vmatprep.subr.bf16.mxu0 %v1234
  %1906 = vmatpush1.bf16.msra.mxu0 %v1233
  %1907 = vmatprep.subr.bf16.mxu0 %v1218
  %1908 = vmatpush1.bf16.msra.mxu0 %v1217
  %1909 = vmatprep.subr.bf16.mxu0 %v1458
  %1910 = vmatpush2.bf16.msra.mxu0 %v1457
  %1911 = vmatprep.subr.bf16.mxu0 %v1442
  %1912 = vmatpush2.bf16.msra.mxu0 %v1441
  %1913 = vmatprep.subr.bf16.mxu0 %v1426
  %1914 = vmatpush2.bf16.msra.mxu0 %v1425
  %1915 = vmatprep.subr.bf16.mxu0 %v1410
  %1916 = vmatpush2.bf16.msra.mxu0 %v1409
  %1917 = vmatprep.subr.bf16.mxu0 %v1394
  %1918 = vmatpush2.bf16.msra.mxu0 %v1393
  %1919 = vmatprep.subr.bf16.mxu0 %v1378
  %1920 = vmatpush2.bf16.msra.mxu0 %v1377
  %1921 = vmatprep.subr.bf16.mxu0 %v1362
  %1922 = vmatpush2.bf16.msra.mxu0 %v1361
  %1923 = vmatprep.subr.bf16.mxu0 %v1346
  %1924 = vmatpush2.bf16.msra.mxu0 %v1345
  %1925 = vmatprep.mubr.bf16.mxu0 %v100
  %1926 = vmatmul.mubr.bf16.gmra.mxu0 %v99
  %v1927 = vpop.f32.mrf.mxu0
  %v1928 = vadd.f32 %v396, %v1927
  %v1929 = vpop.f32.mrf.mxu0
  %v1930 = vadd.f32 %v400, %v1929
  %v1931 = vpop.f32.mrf.mxu0
  %v1932 = vadd.f32 %v396, %v1931
  %v1933 = vpop.f32.mrf.mxu0
  %v1934 = vadd.f32 %v400, %v1933
  %1935 = vdwg.mxu0
  %1936 = vmatprep.subr.bf16.mxu0 %v1332
  %1937 = vmatpush1.bf16.msra.mxu0 %v1331
  %1938 = vmatprep.subr.bf16.mxu0 %v1316
  %1939 = vmatpush1.bf16.msra.mxu0 %v1315
  %1940 = vmatprep.subr.bf16.mxu0 %v1300
  %1941 = vmatpush1.bf16.msra.mxu0 %v1299
  %1942 = vmatprep.subr.bf16.mxu0 %v1284
  %1943 = vmatpush1.bf16.msra.mxu0 %v1283
  %1944 = vmatprep.subr.bf16.mxu0 %v1268
  %1945 = vmatpush1.bf16.msra.mxu0 %v1267
  %1946 = vmatprep.subr.bf16.mxu0 %v1252
  %1947 = vmatpush1.bf16.msra.mxu0 %v1251
  %1948 = vmatprep.subr.bf16.mxu0 %v1236
  %1949 = vmatpush1.bf16.msra.mxu0 %v1235
  %1950 = vmatprep.subr.bf16.mxu0 %v1220
  %1951 = vmatpush1.bf16.msra.mxu0 %v1219
  %1952 = vmatprep.subr.bf16.mxu0 %v1460
  %1953 = vmatpush2.bf16.msra.mxu0 %v1459
  %1954 = vmatprep.subr.bf16.mxu0 %v1444
  %1955 = vmatpush2.bf16.msra.mxu0 %v1443
  %1956 = vmatprep.subr.bf16.mxu0 %v1428
  %1957 = vmatpush2.bf16.msra.mxu0 %v1427
  %1958 = vmatprep.subr.bf16.mxu0 %v1412
  %1959 = vmatpush2.bf16.msra.mxu0 %v1411
  %1960 = vmatprep.subr.bf16.mxu0 %v1396
  %1961 = vmatpush2.bf16.msra.mxu0 %v1395
  %1962 = vmatprep.subr.bf16.mxu0 %v1380
  %1963 = vmatpush2.bf16.msra.mxu0 %v1379
  %1964 = vmatprep.subr.bf16.mxu0 %v1364
  %1965 = vmatpush2.bf16.msra.mxu0 %v1363
  %1966 = vmatprep.subr.bf16.mxu0 %v1348
  %1967 = vmatpush2.bf16.msra.mxu0 %v1347
  %1968 = vmatprep.mubr.bf16.mxu0 %v100
  %1969 = vmatmul.mubr.bf16.gmra.mxu0 %v99
  %v1970 = vpop.f32.mrf.mxu0
  %v1971 = vadd.f32 %v404, %v1970
  %v1972 = vpop.f32.mrf.mxu0
  %v1973 = vadd.f32 %v408, %v1972
  %v1974 = vpop.f32.mrf.mxu0
  %v1975 = vadd.f32 %v404, %v1974
  %v1976 = vpop.f32.mrf.mxu0
  %v1977 = vadd.f32 %v408, %v1976
  %1978 = vdwg.mxu0
  %1979 = vmatprep.subr.bf16.mxu0 %v1334
  %1980 = vmatpush1.bf16.msra.mxu0 %v1333
  %1981 = vmatprep.subr.bf16.mxu0 %v1318
  %1982 = vmatpush1.bf16.msra.mxu0 %v1317
  %1983 = vmatprep.subr.bf16.mxu0 %v1302
  %1984 = vmatpush1.bf16.msra.mxu0 %v1301
  %1985 = vmatprep.subr.bf16.mxu0 %v1286
  %1986 = vmatpush1.bf16.msra.mxu0 %v1285
  %1987 = vmatprep.subr.bf16.mxu0 %v1270
  %1988 = vmatpush1.bf16.msra.mxu0 %v1269
  %1989 = vmatprep.subr.bf16.mxu0 %v1254
  %1990 = vmatpush1.bf16.msra.mxu0 %v1253
  %1991 = vmatprep.subr.bf16.mxu0 %v1238
  %1992 = vmatpush1.bf16.msra.mxu0 %v1237
  %1993 = vmatprep.subr.bf16.mxu0 %v1222
  %1994 = vmatpush1.bf16.msra.mxu0 %v1221
  %1995 = vmatprep.subr.bf16.mxu0 %v1462
  %1996 = vmatpush2.bf16.msra.mxu0 %v1461
  %1997 = vmatprep.subr.bf16.mxu0 %v1446
  %1998 = vmatpush2.bf16.msra.mxu0 %v1445
  %1999 = vmatprep.subr.bf16.mxu0 %v1430
  %2000 = vmatpush2.bf16.msra.mxu0 %v1429
  %2001 = vmatprep.subr.bf16.mxu0 %v1414
  %2002 = vmatpush2.bf16.msra.mxu0 %v1413
  %2003 = vmatprep.subr.bf16.mxu0 %v1398
  %2004 = vmatpush2.bf16.msra.mxu0 %v1397
  %2005 = vmatprep.subr.bf16.mxu0 %v1382
  %2006 = vmatpush2.bf16.msra.mxu0 %v1381
  %2007 = vmatprep.subr.bf16.mxu0 %v1366
  %2008 = vmatpush2.bf16.msra.mxu0 %v1365
  %2009 = vmatprep.subr.bf16.mxu0 %v1350
  %2010 = vmatpush2.bf16.msra.mxu0 %v1349
  %2011 = vmatprep.mubr.bf16.mxu0 %v100
  %2012 = vmatmul.mubr.bf16.gmra.mxu0 %v99
  %v2013 = vpop.f32.mrf.mxu0
  %v2014 = vadd.f32 %v412, %v2013
  %v2015 = vpop.f32.mrf.mxu0
  %v2016 = vadd.f32 %v416, %v2015
  %v2017 = vpop.f32.mrf.mxu0
  %v2018 = vadd.f32 %v412, %v2017
  %v2019 = vpop.f32.mrf.mxu0
  %v2020 = vadd.f32 %v416, %v2019
  %2021 = vdwg.mxu0
  %2022 = vmatprep.subr.bf16.mxu0 %v1336
  %2023 = vmatpush1.bf16.msra.mxu0 %v1335
  %2024 = vmatprep.subr.bf16.mxu0 %v1320
  %2025 = vmatpush1.bf16.msra.mxu0 %v1319
  %2026 = vmatprep.subr.bf16.mxu0 %v1304
  %2027 = vmatpush1.bf16.msra.mxu0 %v1303
  %2028 = vmatprep.subr.bf16.mxu0 %v1288
  %2029 = vmatpush1.bf16.msra.mxu0 %v1287
  %2030 = vmatprep.subr.bf16.mxu0 %v1272
  %2031 = vmatpush1.bf16.msra.mxu0 %v1271
  %2032 = vmatprep.subr.bf16.mxu0 %v1256
  %2033 = vmatpush1.bf16.msra.mxu0 %v1255
  %2034 = vmatprep.subr.bf16.mxu0 %v1240
  %2035 = vmatpush1.bf16.msra.mxu0 %v1239
  %2036 = vmatprep.subr.bf16.mxu0 %v1224
  %2037 = vmatpush1.bf16.msra.mxu0 %v1223
  %2038 = vmatprep.subr.bf16.mxu0 %v1464
  %2039 = vmatpush2.bf16.msra.mxu0 %v1463
  %2040 = vmatprep.subr.bf16.mxu0 %v1448
  %2041 = vmatpush2.bf16.msra.mxu0 %v1447
  %2042 = vmatprep.subr.bf16.mxu0 %v1432
  %2043 = vmatpush2.bf16.msra.mxu0 %v1431
  %2044 = vmatprep.subr.bf16.mxu0 %v1416
  %2045 = vmatpush2.bf16.msra.mxu0 %v1415
  %2046 = vmatprep.subr.bf16.mxu0 %v1400
  %2047 = vmatpush2.bf16.msra.mxu0 %v1399
  %2048 = vmatprep.subr.bf16.mxu0 %v1384
  %2049 = vmatpush2.bf16.msra.mxu0 %v1383
  %2050 = vmatprep.subr.bf16.mxu0 %v1368
  %2051 = vmatpush2.bf16.msra.mxu0 %v1367
  %2052 = vmatprep.subr.bf16.mxu0 %v1352
  %2053 = vmatpush2.bf16.msra.mxu0 %v1351
  %2054 = vmatprep.mubr.bf16.mxu0 %v100
  %2055 = vmatmul.mubr.bf16.gmra.mxu0 %v99
  %v2056 = vpop.f32.mrf.mxu0
  %v2057 = vadd.f32 %v420, %v2056
  %v2058 = vpop.f32.mrf.mxu0
  %v2059 = vadd.f32 %v424, %v2058
  %v2060 = vpop.f32.mrf.mxu0
  %v2061 = vadd.f32 %v420, %v2060
  %v2062 = vpop.f32.mrf.mxu0
  %v2063 = vadd.f32 %v424, %v2062
  %2064 = vdwg.mxu0
  %v2065 = vmax.f32 %v1756, 0.0
  %v2066 = vmax.f32 %v1758, 0.0
  %v2067 = vmax.f32 %v1799, 0.0
  %v2068 = vmax.f32 %v1801, 0.0
  %v2069 = vmax.f32 %v1842, 0.0
  %v2070 = vmax.f32 %v1844, 0.0
  %v2071 = vmax.f32 %v1885, 0.0
  %v2072 = vmax.f32 %v1887, 0.0
  %v2073 = vmax.f32 %v1928, 0.0
  %v2074 = vmax.f32 %v1930, 0.0
  %v2075 = vmax.f32 %v1971, 0.0
  %v2076 = vmax.f32 %v1973, 0.0
  %v2077 = vmax.f32 %v2014, 0.0
  %v2078 = vmax.f32 %v2016, 0.0
  %v2079 = vmax.f32 %v2057, 0.0
  %v2080 = vmax.f32 %v2059, 0.0
  %v2081 = vmax.f32 %v1760, 0.0
  %v2082 = vmax.f32 %v1762, 0.0
  %v2083 = vmax.f32 %v1803, 0.0
  %v2084 = vmax.f32 %v1805, 0.0
  %v2085 = vmax.f32 %v1846, 0.0
  %v2086 = vmax.f32 %v1848, 0.0
  %v2087 = vmax.f32 %v1889, 0.0
  %v2088 = vmax.f32 %v1891, 0.0
  %v2089 = vmax.f32 %v1932, 0.0
  %v2090 = vmax.f32 %v1934, 0.0
  %v2091 = vmax.f32 %v1975, 0.0
  %v2092 = vmax.f32 %v1977, 0.0
  %v2093 = vmax.f32 %v2018, 0.0
  %v2094 = vmax.f32 %v2020, 0.0
  %v2095 = vmax.f32 %v2061, 0.0
  %v2096 = vmax.f32 %v2063, 0.0
  %2097 = vst [vmem:[%s5] sm:$0xff] %v2065
  %2098 = vst [vmem:[%s5 + $0x8] sm:$0xff] %v2066
  %2099 = vst [vmem:[%s5 + $0x10] sm:$0xff] %v2067
  %2100 = vst [vmem:[%s5 + $0x18] sm:$0xff] %v2068
  %2101 = vst [vmem:[%s5 + $0x20] sm:$0xff] %v2069
  %2102 = vst [vmem:[%s5 + $0x28] sm:$0xff] %v2070
  %2103 = vst [vmem:[%s5 + $0x30] sm:$0xff] %v2071
  %2104 = vst [vmem:[%s5 + $0x38] sm:$0xff] %v2072
  %2105 = vst [vmem:[%s5 + $0x40] sm:$0xff] %v2073
  %2106 = vst [vmem:[%s5 + $0x48] sm:$0xff] %v2074
  %2107 = vst [vmem:[%s5 + $0x50] sm:$0xff] %v2075
  %2108 = vst [vmem:[%s5 + $0x58] sm:$0xff] %v2076
  %2109 = vst [vmem:[%s5 + $0x60] sm:$0xff] %v2077
  %2110 = vst [vmem:[%s5 + $0x68] sm:$0xff] %v2078
  %2111 = vst [vmem:[%s5 + $0x70] sm:$0xff] %v2079
  %2112 = vst [vmem:[%s5 + $0x78] sm:$0xff] %v2080
  %2113 = vst [vmem:[%s5 + $0x80] sm:$0xff] %v2081
  %2114 = vst [vmem:[%s5 + $0x88] sm:$0xff] %v2082
  %2115 = vst [vmem:[%s5 + $0x90] sm:$0xff] %v2083
  %2116 = vst [vmem:[%s5 + $0x98] sm:$0xff] %v2084
  %2117 = vst [vmem:[%s5 + $0xa0] sm:$0xff] %v2085
  %2118 = vst [vmem:[%s5 + $0xa8] sm:$0xff] %v2086
  %2119 = vst [vmem:[%s5 + $0xb0] sm:$0xff] %v2087
  %2120 = vst [vmem:[%s5 + $0xb8] sm:$0xff] %v2088
  %2121 = vst [vmem:[%s5 + $0xc0] sm:$0xff] %v2089
  %2122 = vst [vmem:[%s5 + $0xc8] sm:$0xff] %v2090
  %2123 = vst [vmem:[%s5 + $0xd0] sm:$0xff] %v2091
  %2124 = vst [vmem:[%s5 + $0xd8] sm:$0xff] %v2092
  %2125 = vst [vmem:[%s5 + $0xe0] sm:$0xff] %v2093
  %2126 = vst [vmem:[%s5 + $0xe8] sm:$0xff] %v2094
  %2127 = vst [vmem:[%s5 + $0xf0] sm:$0xff] %v2095
  %2128 = vst [vmem:[%s5 + $0xf8] sm:$0xff] %v2096
  // Predicated region
  $region22: #{beta_vae_forward.14} parent=0 // pred_check
    _
  $region23: #{beta_vae_forward.14} parent=0 // pred_check_branch
    %2130 = sbr.rel (0) target = $region25
  $region24: #{beta_vae_forward.14} parent=0 // pred_region
    _
  $region25: #{beta_vae_forward.14} parent=0 // pred_fallthru
    _
  // Predicated region
  $region26: #{beta_vae_forward.14} parent=0 // pred_check
    _
  $region27: #{beta_vae_forward.14} parent=0 // pred_check_branch
    %2132 = sbr.rel (0) target = $region29
  $region28: #{beta_vae_forward.14} parent=0 // pred_region
    _
  $region29: #{beta_vae_forward.14} parent=0 // pred_fallthru
    _

// kernel: tile.18
$region0: #{tile.18}
  #allocation0 [shape = 's32[1]{0}', space=sflag, size = 0x4, scoped, tag = 'scoped memory for tile.18']
  %s0 = inlined_call_operand.vmem [shape: f32[64], index: 0, kind: input, shape index: {}]
  %s1 = inlined_call_operand.vmem [shape: f32[4,64], index: 1, kind: output, shape index: {}]
  // Predicated region
  $region2: #{tile.18} parent=0 // pred_check
    _
  $region3: #{tile.18} parent=0 // pred_check_branch
    %3 = sbr.rel (0) target = $region5
  $region4: #{tile.18} parent=0 // pred_region
    _
  $region5: #{tile.18} parent=0 // pred_fallthru
    _
  %v4 = vld [vmem:[%s0] ss:$0 sm:$0xff]
  %5 = vst [vmem:[%s1] sm:$0xf] %v4

// kernel: beta_vae_forward.15
$region0: #{beta_vae_forward.15}
  #allocation0 [shape = 'u32[]', space=smem, size = 0x4, offset = 0x4, fixed_abs, tag = 'smem constant byte address 0x4 - core index']
  #allocation1 [shape = 'u32[144,128]{1,0:T(1,128)}', space=vmem, size = 0x12000, scoped, tag = 'internal scratch']
  %s0 = inlined_call_operand.vmem [shape: bf16[32,1152], index: 0, kind: input, shape index: {}]
  %s1 = inlined_call_operand.vmem [shape: bf16[1152,256], index: 1, kind: input, shape index: {}]
  %s2 = inlined_call_operand.vmem [shape: f32[1,256], index: 2, kind: input, shape index: {}]
  %s3 = inlined_call_operand.vmem [shape: f32[32,256], index: 3, kind: output, shape index: {}]
  %s4 = sld [smem:[#allocation0]]
  $region22: #{beta_vae_forward.15} parent=0
    _
  %s6 = ssub.s32 1, %s4
  %s7 = scalar_select 0, %s6, %s4
  // Predicated region
  $region2: #{beta_vae_forward.15} parent=0 // pred_check
    _
  $region3: #{beta_vae_forward.15} parent=0 // pred_check_branch
    %9 = sbr.rel (0) target = $region5
  $region4: #{beta_vae_forward.15} parent=0 // pred_region
    _
  $region5: #{beta_vae_forward.15} parent=0 // pred_fallthru
    _
  // Predicated region
  $region6: #{beta_vae_forward.15} parent=0 // pred_check
    _
  $region7: #{beta_vae_forward.15} parent=0 // pred_check_branch
    %11 = sbr.rel (0) target = $region9
  $region8: #{beta_vae_forward.15} parent=0 // pred_region
    _
  $region9: #{beta_vae_forward.15} parent=0 // pred_fallthru
    _
  // Predicated region
  $region10: #{beta_vae_forward.15} parent=0 // pred_check
    _
  $region11: #{beta_vae_forward.15} parent=0 // pred_check_branch
    %13 = sbr.rel (0) target = $region13
  $region12: #{beta_vae_forward.15} parent=0 // pred_region
    _
  $region13: #{beta_vae_forward.15} parent=0 // pred_fallthru
    _
  %v15 = vld [vmem:[%s0] sm:$0xff]
  %v16 = vld [vmem:[%s0 + $0x8] sm:$0xff]
  %v17 = vld [vmem:[%s0 + $0x10] sm:$0xff]
  %v18 = vld [vmem:[%s0 + $0x18] sm:$0xff]
  %v19 = vld [vmem:[%s0 + $0x20] sm:$0xf]
  %v20 = vld [vmem:[%s0 + $0x24] sm:$0xff]
  %v21 = vld [vmem:[%s0 + $0x2c] sm:$0xff]
  %v22 = vld [vmem:[%s0 + $0x34] sm:$0xff]
  %v23 = vld [vmem:[%s0 + $0x3c] sm:$0xff]
  %v24 = vld [vmem:[%s0 + $0x44] sm:$0xf]
  %v25 = vld [vmem:[%s0 + $0x48] sm:$0xff]
  %v26 = vld [vmem:[%s0 + $0x50] sm:$0xff]
  %v27 = vld [vmem:[%s0 + $0x58] sm:$0xff]
  %v28 = vld [vmem:[%s0 + $0x60] sm:$0xff]
  %v29 = vld [vmem:[%s0 + $0x68] sm:$0xf]
  %v30 = vld [vmem:[%s0 + $0x6c] sm:$0xff]
  %v31 = vld [vmem:[%s0 + $0x74] sm:$0xff]
  %v32 = vld [vmem:[%s0 + $0x7c] sm:$0xff]
  %v33 = vld [vmem:[%s0 + $0x84] sm:$0xff]
  %v34 = vld [vmem:[%s0 + $0x8c] sm:$0xf]
  %v35 = vld [vmem:[%s1] sm:$0xff]
  %v36 = vld [vmem:[%s1 + $0x8] sm:$0xff]
  %v37 = vld [vmem:[%s1 + $0x10] sm:$0xff]
  %v38 = vld [vmem:[%s1 + $0x18] sm:$0xff]
  %v39 = vld [vmem:[%s1 + $0x20] sm:$0xff]
  %v40 = vld [vmem:[%s1 + $0x28] sm:$0xff]
  %v41 = vld [vmem:[%s1 + $0x30] sm:$0xff]
  %v42 = vld [vmem:[%s1 + $0x38] sm:$0xff]
  %v43 = vld [vmem:[%s1 + $0x40] sm:$0xff]
  %v44 = vld [vmem:[%s1 + $0x48] sm:$0xff]
  %v45 = vld [vmem:[%s1 + $0x50] sm:$0xff]
  %v46 = vld [vmem:[%s1 + $0x58] sm:$0xff]
  %v47 = vld [vmem:[%s1 + $0x60] sm:$0xff]
  %v48 = vld [vmem:[%s1 + $0x68] sm:$0xff]
  %v49 = vld [vmem:[%s1 + $0x70] sm:$0xff]
  %v50 = vld [vmem:[%s1 + $0x78] sm:$0xff]
  %v51 = vld [vmem:[%s1 + $0x80] sm:$0xff]
  %v52 = vld [vmem:[%s1 + $0x88] sm:$0xff]
  %v53 = vld [vmem:[%s1 + $0x90] sm:$0xff]
  %v54 = vld [vmem:[%s1 + $0x98] sm:$0xff]
  %v55 = vld [vmem:[%s1 + $0xa0] sm:$0xff]
  %v56 = vld [vmem:[%s1 + $0xa8] sm:$0xff]
  %v57 = vld [vmem:[%s1 + $0xb0] sm:$0xff]
  %v58 = vld [vmem:[%s1 + $0xb8] sm:$0xff]
  %v59 = vld [vmem:[%s1 + $0xc0] sm:$0xff]
  %v60 = vld [vmem:[%s1 + $0xc8] sm:$0xff]
  %v61 = vld [vmem:[%s1 + $0xd0] sm:$0xff]
  %v62 = vld [vmem:[%s1 + $0xd8] sm:$0xff]
  %v63 = vld [vmem:[%s1 + $0xe0] sm:$0xff]
  %v64 = vld [vmem:[%s1 + $0xe8] sm:$0xff]
  %v65 = vld [vmem:[%s1 + $0xf0] sm:$0xff]
  %v66 = vld [vmem:[%s1 + $0xf8] sm:$0xff]
  %v67 = vld [vmem:[%s1 + $0x100] sm:$0xff]
  %v68 = vld [vmem:[%s1 + $0x108] sm:$0xff]
  %v69 = vld [vmem:[%s1 + $0x110] sm:$0xff]
  %v70 = vld [vmem:[%s1 + $0x118] sm:$0xff]
  %v71 = vld [vmem:[%s1 + $0x120] sm:$0xff]
  %v72 = vld [vmem:[%s1 + $0x128] sm:$0xff]
  %v73 = vld [vmem:[%s1 + $0x130] sm:$0xff]
  %v74 = vld [vmem:[%s1 + $0x138] sm:$0xff]
  %v75 = vld [vmem:[%s1 + $0x140] sm:$0xff]
  %v76 = vld [vmem:[%s1 + $0x148] sm:$0xff]
  %v77 = vld [vmem:[%s1 + $0x150] sm:$0xff]
  %v78 = vld [vmem:[%s1 + $0x158] sm:$0xff]
  %v79 = vld [vmem:[%s1 + $0x160] sm:$0xff]
  %v80 = vld [vmem:[%s1 + $0x168] sm:$0xff]
  %v81 = vld [vmem:[%s1 + $0x170] sm:$0xff]
  %v82 = vld [vmem:[%s1 + $0x178] sm:$0xff]
  %v83 = vld [vmem:[%s1 + $0x180] sm:$0xff]
  %v84 = vld [vmem:[%s1 + $0x188] sm:$0xff]
  %v85 = vld [vmem:[%s1 + $0x190] sm:$0xff]
  %v86 = vld [vmem:[%s1 + $0x198] sm:$0xff]
  %v87 = vld [vmem:[%s1 + $0x1a0] sm:$0xff]
  %v88 = vld [vmem:[%s1 + $0x1a8] sm:$0xff]
  %v89 = vld [vmem:[%s1 + $0x1b0] sm:$0xff]
  %v90 = vld [vmem:[%s1 + $0x1b8] sm:$0xff]
  %v91 = vld [vmem:[%s1 + $0x1c0] sm:$0xff]
  %v92 = vld [vmem:[%s1 + $0x1c8] sm:$0xff]
  %v93 = vld [vmem:[%s1 + $0x1d0] sm:$0xff]
  %v94 = vld [vmem:[%s1 + $0x1d8] sm:$0xff]
  %v95 = vld [vmem:[%s1 + $0x1e0] sm:$0xff]
  %v96 = vld [vmem:[%s1 + $0x1e8] sm:$0xff]
  %v97 = vld [vmem:[%s1 + $0x1f0] sm:$0xff]
  %v98 = vld [vmem:[%s1 + $0x1f8] sm:$0xff]
  %v99 = vld [vmem:[%s1 + $0x200] sm:$0xff]
  %v100 = vld [vmem:[%s1 + $0x208] sm:$0xff]
  %v101 = vld [vmem:[%s1 + $0x210] sm:$0xff]
  %v102 = vld [vmem:[%s1 + $0x218] sm:$0xff]
  %v103 = vld [vmem:[%s1 + $0x220] sm:$0xff]
  %v104 = vld [vmem:[%s1 + $0x228] sm:$0xff]
  %v105 = vld [vmem:[%s1 + $0x230] sm:$0xff]
  %v106 = vld [vmem:[%s1 + $0x238] sm:$0xff]
  %v107 = vld [vmem:[%s1 + $0x240] sm:$0xff]
  %v108 = vld [vmem:[%s1 + $0x248] sm:$0xff]
  %v109 = vld [vmem:[%s1 + $0x250] sm:$0xff]
  %v110 = vld [vmem:[%s1 + $0x258] sm:$0xff]
  %v111 = vld [vmem:[%s1 + $0x260] sm:$0xff]
  %v112 = vld [vmem:[%s1 + $0x268] sm:$0xff]
  %v113 = vld [vmem:[%s1 + $0x270] sm:$0xff]
  %v114 = vld [vmem:[%s1 + $0x278] sm:$0xff]
  %v115 = vld [vmem:[%s1 + $0x280] sm:$0xff]
  %v116 = vld [vmem:[%s1 + $0x288] sm:$0xff]
  %v117 = vld [vmem:[%s1 + $0x290] sm:$0xff]
  %v118 = vld [vmem:[%s1 + $0x298] sm:$0xff]
  %v119 = vld [vmem:[%s1 + $0x2a0] sm:$0xff]
  %v120 = vld [vmem:[%s1 + $0x2a8] sm:$0xff]
  %v121 = vld [vmem:[%s1 + $0x2b0] sm:$0xff]
  %v122 = vld [vmem:[%s1 + $0x2b8] sm:$0xff]
  %v123 = vld [vmem:[%s1 + $0x2c0] sm:$0xff]
  %v124 = vld [vmem:[%s1 + $0x2c8] sm:$0xff]
  %v125 = vld [vmem:[%s1 + $0x2d0] sm:$0xff]
  %v126 = vld [vmem:[%s1 + $0x2d8] sm:$0xff]
  %v127 = vld [vmem:[%s1 + $0x2e0] sm:$0xff]
  %v128 = vld [vmem:[%s1 + $0x2e8] sm:$0xff]
  %v129 = vld [vmem:[%s1 + $0x2f0] sm:$0xff]
  %v130 = vld [vmem:[%s1 + $0x2f8] sm:$0xff]
  %v131 = vld [vmem:[%s1 + $0x300] sm:$0xff]
  %v132 = vld [vmem:[%s1 + $0x308] sm:$0xff]
  %v133 = vld [vmem:[%s1 + $0x310] sm:$0xff]
  %v134 = vld [vmem:[%s1 + $0x318] sm:$0xff]
  %v135 = vld [vmem:[%s1 + $0x320] sm:$0xff]
  %v136 = vld [vmem:[%s1 + $0x328] sm:$0xff]
  %v137 = vld [vmem:[%s1 + $0x330] sm:$0xff]
  %v138 = vld [vmem:[%s1 + $0x338] sm:$0xff]
  %v139 = vld [vmem:[%s1 + $0x340] sm:$0xff]
  %v140 = vld [vmem:[%s1 + $0x348] sm:$0xff]
  %v141 = vld [vmem:[%s1 + $0x350] sm:$0xff]
  %v142 = vld [vmem:[%s1 + $0x358] sm:$0xff]
  %v143 = vld [vmem:[%s1 + $0x360] sm:$0xff]
  %v144 = vld [vmem:[%s1 + $0x368] sm:$0xff]
  %v145 = vld [vmem:[%s1 + $0x370] sm:$0xff]
  %v146 = vld [vmem:[%s1 + $0x378] sm:$0xff]
  %v147 = vld [vmem:[%s1 + $0x380] sm:$0xff]
  %v148 = vld [vmem:[%s1 + $0x388] sm:$0xff]
  %v149 = vld [vmem:[%s1 + $0x390] sm:$0xff]
  %v150 = vld [vmem:[%s1 + $0x398] sm:$0xff]
  %v151 = vld [vmem:[%s1 + $0x3a0] sm:$0xff]
  %v152 = vld [vmem:[%s1 + $0x3a8] sm:$0xff]
  %v153 = vld [vmem:[%s1 + $0x3b0] sm:$0xff]
  %v154 = vld [vmem:[%s1 + $0x3b8] sm:$0xff]
  %v155 = vld [vmem:[%s1 + $0x3c0] sm:$0xff]
  %v156 = vld [vmem:[%s1 + $0x3c8] sm:$0xff]
  %v157 = vld [vmem:[%s1 + $0x3d0] sm:$0xff]
  %v158 = vld [vmem:[%s1 + $0x3d8] sm:$0xff]
  %v159 = vld [vmem:[%s1 + $0x3e0] sm:$0xff]
  %v160 = vld [vmem:[%s1 + $0x3e8] sm:$0xff]
  %v161 = vld [vmem:[%s1 + $0x3f0] sm:$0xff]
  %v162 = vld [vmem:[%s1 + $0x3f8] sm:$0xff]
  %v163 = vld [vmem:[%s1 + $0x400] sm:$0xff]
  %v164 = vld [vmem:[%s1 + $0x408] sm:$0xff]
  %v165 = vld [vmem:[%s1 + $0x410] sm:$0xff]
  %v166 = vld [vmem:[%s1 + $0x418] sm:$0xff]
  %v167 = vld [vmem:[%s1 + $0x420] sm:$0xff]
  %v168 = vld [vmem:[%s1 + $0x428] sm:$0xff]
  %v169 = vld [vmem:[%s1 + $0x430] sm:$0xff]
  %v170 = vld [vmem:[%s1 + $0x438] sm:$0xff]
  %v171 = vld [vmem:[%s1 + $0x440] sm:$0xff]
  %v172 = vld [vmem:[%s1 + $0x448] sm:$0xff]
  %v173 = vld [vmem:[%s1 + $0x450] sm:$0xff]
  %v174 = vld [vmem:[%s1 + $0x458] sm:$0xff]
  %v175 = vld [vmem:[%s1 + $0x460] sm:$0xff]
  %v176 = vld [vmem:[%s1 + $0x468] sm:$0xff]
  %v177 = vld [vmem:[%s1 + $0x470] sm:$0xff]
  %v178 = vld [vmem:[%s1 + $0x478] sm:$0xff]
  %v179 = vld [vmem:[%s2] sm:$0x3]
  %v181 = vlaneseq
  %v182 = vshrl.u32 %v181, 7
  %v183 = vsub.s32 0, %v182
  %v184 = vrot.slane %v179, %v183
  %v185 = vlaneseq
  %v186 = vshrl.u32 %v185, 7
  %v187 = vsub.s32 1, %v186
  %v188 = vrot.slane %v179, %v187
  %v211 = vunpack.c.l.b16 %v15
  %v212 = vunpack.c.h.b16 %v15
  %v213 = vunpack.c.l.b16 %v16
  %v214 = vunpack.c.h.b16 %v16
  %v215 = vunpack.c.l.b16 %v17
  %v216 = vunpack.c.h.b16 %v17
  %v217 = vunpack.c.l.b16 %v18
  %v218 = vunpack.c.h.b16 %v18
  %v219 = vunpack.c.l.b16 %v19
  %v220 = vunpack.c.l.b16 %v20
  %v221 = vunpack.c.h.b16 %v20
  %v222 = vunpack.c.l.b16 %v21
  %v223 = vunpack.c.h.b16 %v21
  %v224 = vunpack.c.l.b16 %v22
  %v225 = vunpack.c.h.b16 %v22
  %v226 = vunpack.c.l.b16 %v23
  %v227 = vunpack.c.h.b16 %v23
  %v228 = vunpack.c.l.b16 %v24
  %v229 = vunpack.c.l.b16 %v25
  %v230 = vunpack.c.h.b16 %v25
  %v231 = vunpack.c.l.b16 %v26
  %v232 = vunpack.c.h.b16 %v26
  %v233 = vunpack.c.l.b16 %v27
  %v234 = vunpack.c.h.b16 %v27
  %v235 = vunpack.c.l.b16 %v28
  %v236 = vunpack.c.h.b16 %v28
  %v237 = vunpack.c.l.b16 %v29
  %v238 = vunpack.c.l.b16 %v30
  %v239 = vunpack.c.h.b16 %v30
  %v240 = vunpack.c.l.b16 %v31
  %v241 = vunpack.c.h.b16 %v31
  %v242 = vunpack.c.l.b16 %v32
  %v243 = vunpack.c.h.b16 %v32
  %v244 = vunpack.c.l.b16 %v33
  %v245 = vunpack.c.h.b16 %v33
  %v246 = vunpack.c.l.b16 %v34
  %v247 = vpack.c.b16 %v220, %v211
  %v248 = vpack.c.b16 %v221, %v212
  %v249 = vpack.c.b16 %v222, %v213
  %v250 = vpack.c.b16 %v223, %v214
  %v251 = vpack.c.b16 %v224, %v215
  %v252 = vpack.c.b16 %v225, %v216
  %v253 = vpack.c.b16 %v226, %v217
  %v254 = vpack.c.b16 %v227, %v218
  %v255 = vpack.c.b16 %v228, %v219
  %v256 = vpack.c.b16 %v238, %v229
  %v257 = vpack.c.b16 %v239, %v230
  %v258 = vpack.c.b16 %v240, %v231
  %v259 = vpack.c.b16 %v241, %v232
  %v260 = vpack.c.b16 %v242, %v233
  %v261 = vpack.c.b16 %v243, %v234
  %v262 = vpack.c.b16 %v244, %v235
  %v263 = vpack.c.b16 %v245, %v236
  %v264 = vpack.c.b16 %v246, %v237
  %v427 = vunpack.c.l.b16 %v35
  %v428 = vunpack.c.h.b16 %v35
  %v429 = vunpack.c.l.b16 %v36
  %v430 = vunpack.c.h.b16 %v36
  %v431 = vunpack.c.l.b16 %v37
  %v432 = vunpack.c.h.b16 %v37
  %v433 = vunpack.c.l.b16 %v38
  %v434 = vunpack.c.h.b16 %v38
  %v435 = vunpack.c.l.b16 %v39
  %v436 = vunpack.c.h.b16 %v39
  %v437 = vunpack.c.l.b16 %v40
  %v438 = vunpack.c.h.b16 %v40
  %v439 = vunpack.c.l.b16 %v41
  %v440 = vunpack.c.h.b16 %v41
  %v441 = vunpack.c.l.b16 %v42
  %v442 = vunpack.c.h.b16 %v42
  %v443 = vunpack.c.l.b16 %v43
  %v444 = vunpack.c.h.b16 %v43
  %v445 = vunpack.c.l.b16 %v44
  %v446 = vunpack.c.h.b16 %v44
  %v447 = vunpack.c.l.b16 %v45
  %v448 = vunpack.c.h.b16 %v45
  %v449 = vunpack.c.l.b16 %v46
  %v450 = vunpack.c.h.b16 %v46
  %v451 = vunpack.c.l.b16 %v47
  %v452 = vunpack.c.h.b16 %v47
  %v453 = vunpack.c.l.b16 %v48
  %v454 = vunpack.c.h.b16 %v48
  %v455 = vunpack.c.l.b16 %v49
  %v456 = vunpack.c.h.b16 %v49
  %v457 = vunpack.c.l.b16 %v50
  %v458 = vunpack.c.h.b16 %v50
  %v459 = vunpack.c.l.b16 %v51
  %v460 = vunpack.c.h.b16 %v51
  %v461 = vunpack.c.l.b16 %v52
  %v462 = vunpack.c.h.b16 %v52
  %v463 = vunpack.c.l.b16 %v53
  %v464 = vunpack.c.h.b16 %v53
  %v465 = vunpack.c.l.b16 %v54
  %v466 = vunpack.c.h.b16 %v54
  %v467 = vunpack.c.l.b16 %v55
  %v468 = vunpack.c.h.b16 %v55
  %v469 = vunpack.c.l.b16 %v56
  %v470 = vunpack.c.h.b16 %v56
  %v471 = vunpack.c.l.b16 %v57
  %v472 = vunpack.c.h.b16 %v57
  %v473 = vunpack.c.l.b16 %v58
  %v474 = vunpack.c.h.b16 %v58
  %v475 = vunpack.c.l.b16 %v59
  %v476 = vunpack.c.h.b16 %v59
  %v477 = vunpack.c.l.b16 %v60
  %v478 = vunpack.c.h.b16 %v60
  %v479 = vunpack.c.l.b16 %v61
  %v480 = vunpack.c.h.b16 %v61
  %v481 = vunpack.c.l.b16 %v62
  %v482 = vunpack.c.h.b16 %v62
  %v483 = vunpack.c.l.b16 %v63
  %v484 = vunpack.c.h.b16 %v63
  %v485 = vunpack.c.l.b16 %v64
  %v486 = vunpack.c.h.b16 %v64
  %v487 = vunpack.c.l.b16 %v65
  %v488 = vunpack.c.h.b16 %v65
  %v489 = vunpack.c.l.b16 %v66
  %v490 = vunpack.c.h.b16 %v66
  %v491 = vunpack.c.l.b16 %v67
  %v492 = vunpack.c.h.b16 %v67
  %v493 = vunpack.c.l.b16 %v68
  %v494 = vunpack.c.h.b16 %v68
  %v495 = vunpack.c.l.b16 %v69
  %v496 = vunpack.c.h.b16 %v69
  %v497 = vunpack.c.l.b16 %v70
  %v498 = vunpack.c.h.b16 %v70
  %v499 = vunpack.c.l.b16 %v71
  %v500 = vunpack.c.h.b16 %v71
  %v501 = vunpack.c.l.b16 %v72
  %v502 = vunpack.c.h.b16 %v72
  %v503 = vunpack.c.l.b16 %v73
  %v504 = vunpack.c.h.b16 %v73
  %v505 = vunpack.c.l.b16 %v74
  %v506 = vunpack.c.h.b16 %v74
  %v507 = vunpack.c.l.b16 %v75
  %v508 = vunpack.c.h.b16 %v75
  %v509 = vunpack.c.l.b16 %v76
  %v510 = vunpack.c.h.b16 %v76
  %v511 = vunpack.c.l.b16 %v77
  %v512 = vunpack.c.h.b16 %v77
  %v513 = vunpack.c.l.b16 %v78
  %v514 = vunpack.c.h.b16 %v78
  %v515 = vunpack.c.l.b16 %v79
  %v516 = vunpack.c.h.b16 %v79
  %v517 = vunpack.c.l.b16 %v80
  %v518 = vunpack.c.h.b16 %v80
  %v519 = vunpack.c.l.b16 %v81
  %v520 = vunpack.c.h.b16 %v81
  %v521 = vunpack.c.l.b16 %v82
  %v522 = vunpack.c.h.b16 %v82
  %v523 = vunpack.c.l.b16 %v83
  %v524 = vunpack.c.h.b16 %v83
  %v525 = vunpack.c.l.b16 %v84
  %v526 = vunpack.c.h.b16 %v84
  %v527 = vunpack.c.l.b16 %v85
  %v528 = vunpack.c.h.b16 %v85
  %v529 = vunpack.c.l.b16 %v86
  %v530 = vunpack.c.h.b16 %v86
  %v531 = vunpack.c.l.b16 %v87
  %v532 = vunpack.c.h.b16 %v87
  %v533 = vunpack.c.l.b16 %v88
  %v534 = vunpack.c.h.b16 %v88
  %v535 = vunpack.c.l.b16 %v89
  %v536 = vunpack.c.h.b16 %v89
  %v537 = vunpack.c.l.b16 %v90
  %v538 = vunpack.c.h.b16 %v90
  %v539 = vunpack.c.l.b16 %v91
  %v540 = vunpack.c.h.b16 %v91
  %v541 = vunpack.c.l.b16 %v92
  %v542 = vunpack.c.h.b16 %v92
  %v543 = vunpack.c.l.b16 %v93
  %v544 = vunpack.c.h.b16 %v93
  %v545 = vunpack.c.l.b16 %v94
  %v546 = vunpack.c.h.b16 %v94
  %v547 = vunpack.c.l.b16 %v95
  %v548 = vunpack.c.h.b16 %v95
  %v549 = vunpack.c.l.b16 %v96
  %v550 = vunpack.c.h.b16 %v96
  %v551 = vunpack.c.l.b16 %v97
  %v552 = vunpack.c.h.b16 %v97
  %v553 = vunpack.c.l.b16 %v98
  %v554 = vunpack.c.h.b16 %v98
  %v555 = vunpack.c.l.b16 %v99
  %v556 = vunpack.c.h.b16 %v99
  %v557 = vunpack.c.l.b16 %v100
  %v558 = vunpack.c.h.b16 %v100
  %v559 = vunpack.c.l.b16 %v101
  %v560 = vunpack.c.h.b16 %v101
  %v561 = vunpack.c.l.b16 %v102
  %v562 = vunpack.c.h.b16 %v102
  %v563 = vunpack.c.l.b16 %v103
  %v564 = vunpack.c.h.b16 %v103
  %v565 = vunpack.c.l.b16 %v104
  %v566 = vunpack.c.h.b16 %v104
  %v567 = vunpack.c.l.b16 %v105
  %v568 = vunpack.c.h.b16 %v105
  %v569 = vunpack.c.l.b16 %v106
  %v570 = vunpack.c.h.b16 %v106
  %v571 = vunpack.c.l.b16 %v107
  %v572 = vunpack.c.h.b16 %v107
  %v573 = vunpack.c.l.b16 %v108
  %v574 = vunpack.c.h.b16 %v108
  %v575 = vunpack.c.l.b16 %v109
  %v576 = vunpack.c.h.b16 %v109
  %v577 = vunpack.c.l.b16 %v110
  %v578 = vunpack.c.h.b16 %v110
  %v579 = vunpack.c.l.b16 %v111
  %v580 = vunpack.c.h.b16 %v111
  %v581 = vunpack.c.l.b16 %v112
  %v582 = vunpack.c.h.b16 %v112
  %v583 = vunpack.c.l.b16 %v113
  %v584 = vunpack.c.h.b16 %v113
  %v585 = vunpack.c.l.b16 %v114
  %v586 = vunpack.c.h.b16 %v114
  %v587 = vunpack.c.l.b16 %v115
  %v588 = vunpack.c.h.b16 %v115
  %v589 = vunpack.c.l.b16 %v116
  %v590 = vunpack.c.h.b16 %v116
  %v591 = vunpack.c.l.b16 %v117
  %v592 = vunpack.c.h.b16 %v117
  %v593 = vunpack.c.l.b16 %v118
  %v594 = vunpack.c.h.b16 %v118
  %v595 = vunpack.c.l.b16 %v119
  %v596 = vunpack.c.h.b16 %v119
  %v597 = vunpack.c.l.b16 %v120
  %v598 = vunpack.c.h.b16 %v120
  %v599 = vunpack.c.l.b16 %v121
  %v600 = vunpack.c.h.b16 %v121
  %v601 = vunpack.c.l.b16 %v122
  %v602 = vunpack.c.h.b16 %v122
  %v603 = vunpack.c.l.b16 %v123
  %v604 = vunpack.c.h.b16 %v123
  %v605 = vunpack.c.l.b16 %v124
  %v606 = vunpack.c.h.b16 %v124
  %v607 = vunpack.c.l.b16 %v125
  %v608 = vunpack.c.h.b16 %v125
  %v609 = vunpack.c.l.b16 %v126
  %v610 = vunpack.c.h.b16 %v126
  %v611 = vunpack.c.l.b16 %v127
  %v612 = vunpack.c.h.b16 %v127
  %v613 = vunpack.c.l.b16 %v128
  %v614 = vunpack.c.h.b16 %v128
  %v615 = vunpack.c.l.b16 %v129
  %v616 = vunpack.c.h.b16 %v129
  %v617 = vunpack.c.l.b16 %v130
  %v618 = vunpack.c.h.b16 %v130
  %v619 = vunpack.c.l.b16 %v131
  %v620 = vunpack.c.h.b16 %v131
  %v621 = vunpack.c.l.b16 %v132
  %v622 = vunpack.c.h.b16 %v132
  %v623 = vunpack.c.l.b16 %v133
  %v624 = vunpack.c.h.b16 %v133
  %v625 = vunpack.c.l.b16 %v134
  %v626 = vunpack.c.h.b16 %v134
  %v627 = vunpack.c.l.b16 %v135
  %v628 = vunpack.c.h.b16 %v135
  %v629 = vunpack.c.l.b16 %v136
  %v630 = vunpack.c.h.b16 %v136
  %v631 = vunpack.c.l.b16 %v137
  %v632 = vunpack.c.h.b16 %v137
  %v633 = vunpack.c.l.b16 %v138
  %v634 = vunpack.c.h.b16 %v138
  %v635 = vunpack.c.l.b16 %v139
  %v636 = vunpack.c.h.b16 %v139
  %v637 = vunpack.c.l.b16 %v140
  %v638 = vunpack.c.h.b16 %v140
  %v639 = vunpack.c.l.b16 %v141
  %v640 = vunpack.c.h.b16 %v141
  %v641 = vunpack.c.l.b16 %v142
  %v642 = vunpack.c.h.b16 %v142
  %v643 = vunpack.c.l.b16 %v143
  %v644 = vunpack.c.h.b16 %v143
  %v645 = vunpack.c.l.b16 %v144
  %v646 = vunpack.c.h.b16 %v144
  %v647 = vunpack.c.l.b16 %v145
  %v648 = vunpack.c.h.b16 %v145
  %v649 = vunpack.c.l.b16 %v146
  %v650 = vunpack.c.h.b16 %v146
  %v651 = vunpack.c.l.b16 %v147
  %v652 = vunpack.c.h.b16 %v147
  %v653 = vunpack.c.l.b16 %v148
  %v654 = vunpack.c.h.b16 %v148
  %v655 = vunpack.c.l.b16 %v149
  %v656 = vunpack.c.h.b16 %v149
  %v657 = vunpack.c.l.b16 %v150
  %v658 = vunpack.c.h.b16 %v150
  %v659 = vunpack.c.l.b16 %v151
  %v660 = vunpack.c.h.b16 %v151
  %v661 = vunpack.c.l.b16 %v152
  %v662 = vunpack.c.h.b16 %v152
  %v663 = vunpack.c.l.b16 %v153
  %v664 = vunpack.c.h.b16 %v153
  %v665 = vunpack.c.l.b16 %v154
  %v666 = vunpack.c.h.b16 %v154
  %v667 = vunpack.c.l.b16 %v155
  %v668 = vunpack.c.h.b16 %v155
  %v669 = vunpack.c.l.b16 %v156
  %v670 = vunpack.c.h.b16 %v156
  %v671 = vunpack.c.l.b16 %v157
  %v672 = vunpack.c.h.b16 %v157
  %v673 = vunpack.c.l.b16 %v158
  %v674 = vunpack.c.h.b16 %v158
  %v675 = vunpack.c.l.b16 %v159
  %v676 = vunpack.c.h.b16 %v159
  %v677 = vunpack.c.l.b16 %v160
  %v678 = vunpack.c.h.b16 %v160
  %v679 = vunpack.c.l.b16 %v161
  %v680 = vunpack.c.h.b16 %v161
  %v681 = vunpack.c.l.b16 %v162
  %v682 = vunpack.c.h.b16 %v162
  %v683 = vunpack.c.l.b16 %v163
  %v684 = vunpack.c.h.b16 %v163
  %v685 = vunpack.c.l.b16 %v164
  %v686 = vunpack.c.h.b16 %v164
  %v687 = vunpack.c.l.b16 %v165
  %v688 = vunpack.c.h.b16 %v165
  %v689 = vunpack.c.l.b16 %v166
  %v690 = vunpack.c.h.b16 %v166
  %v691 = vunpack.c.l.b16 %v167
  %v692 = vunpack.c.h.b16 %v167
  %v693 = vunpack.c.l.b16 %v168
  %v694 = vunpack.c.h.b16 %v168
  %v695 = vunpack.c.l.b16 %v169
  %v696 = vunpack.c.h.b16 %v169
  %v697 = vunpack.c.l.b16 %v170
  %v698 = vunpack.c.h.b16 %v170
  %v699 = vunpack.c.l.b16 %v171
  %v700 = vunpack.c.h.b16 %v171
  %v701 = vunpack.c.l.b16 %v172
  %v702 = vunpack.c.h.b16 %v172
  %v703 = vunpack.c.l.b16 %v173
  %v704 = vunpack.c.h.b16 %v173
  %v705 = vunpack.c.l.b16 %v174
  %v706 = vunpack.c.h.b16 %v174
  %v707 = vunpack.c.l.b16 %v175
  %v708 = vunpack.c.h.b16 %v175
  %v709 = vunpack.c.l.b16 %v176
  %v710 = vunpack.c.h.b16 %v176
  %v711 = vunpack.c.l.b16 %v177
  %v712 = vunpack.c.h.b16 %v177
  %v713 = vunpack.c.l.b16 %v178
  %v714 = vunpack.c.h.b16 %v178
  %v715 = vpack.c.b16 %v429, %v427
  %v716 = vpack.c.b16 %v430, %v428
  %v717 = vpack.c.b16 %v433, %v431
  %v718 = vpack.c.b16 %v434, %v432
  %v719 = vpack.c.b16 %v437, %v435
  %v720 = vpack.c.b16 %v438, %v436
  %v721 = vpack.c.b16 %v441, %v439
  %v722 = vpack.c.b16 %v442, %v440
  %v723 = vpack.c.b16 %v445, %v443
  %v724 = vpack.c.b16 %v446, %v444
  %v725 = vpack.c.b16 %v449, %v447
  %v726 = vpack.c.b16 %v450, %v448
  %v727 = vpack.c.b16 %v453, %v451
  %v728 = vpack.c.b16 %v454, %v452
  %v729 = vpack.c.b16 %v457, %v455
  %v730 = vpack.c.b16 %v458, %v456
  %v731 = vpack.c.b16 %v461, %v459
  %v732 = vpack.c.b16 %v462, %v460
  %v733 = vpack.c.b16 %v465, %v463
  %v734 = vpack.c.b16 %v466, %v464
  %v735 = vpack.c.b16 %v469, %v467
  %v736 = vpack.c.b16 %v470, %v468
  %v737 = vpack.c.b16 %v473, %v471
  %v738 = vpack.c.b16 %v474, %v472
  %v739 = vpack.c.b16 %v477, %v475
  %v740 = vpack.c.b16 %v478, %v476
  %v741 = vpack.c.b16 %v481, %v479
  %v742 = vpack.c.b16 %v482, %v480
  %v743 = vpack.c.b16 %v485, %v483
  %v744 = vpack.c.b16 %v486, %v484
  %v745 = vpack.c.b16 %v489, %v487
  %v746 = vpack.c.b16 %v490, %v488
  %v747 = vpack.c.b16 %v493, %v491
  %v748 = vpack.c.b16 %v494, %v492
  %v749 = vpack.c.b16 %v497, %v495
  %v750 = vpack.c.b16 %v498, %v496
  %v751 = vpack.c.b16 %v501, %v499
  %v752 = vpack.c.b16 %v502, %v500
  %v753 = vpack.c.b16 %v505, %v503
  %v754 = vpack.c.b16 %v506, %v504
  %v755 = vpack.c.b16 %v509, %v507
  %v756 = vpack.c.b16 %v510, %v508
  %v757 = vpack.c.b16 %v513, %v511
  %v758 = vpack.c.b16 %v514, %v512
  %v759 = vpack.c.b16 %v517, %v515
  %v760 = vpack.c.b16 %v518, %v516
  %v761 = vpack.c.b16 %v521, %v519
  %v762 = vpack.c.b16 %v522, %v520
  %v763 = vpack.c.b16 %v525, %v523
  %v764 = vpack.c.b16 %v526, %v524
  %v765 = vpack.c.b16 %v529, %v527
  %v766 = vpack.c.b16 %v530, %v528
  %v767 = vpack.c.b16 %v533, %v531
  %v768 = vpack.c.b16 %v534, %v532
  %v769 = vpack.c.b16 %v537, %v535
  %v770 = vpack.c.b16 %v538, %v536
  %v771 = vpack.c.b16 %v541, %v539
  %v772 = vpack.c.b16 %v542, %v540
  %v773 = vpack.c.b16 %v545, %v543
  %v774 = vpack.c.b16 %v546, %v544
  %v775 = vpack.c.b16 %v549, %v547
  %v776 = vpack.c.b16 %v550, %v548
  %v777 = vpack.c.b16 %v553, %v551
  %v778 = vpack.c.b16 %v554, %v552
  %v779 = vpack.c.b16 %v557, %v555
  %v780 = vpack.c.b16 %v558, %v556
  %v781 = vpack.c.b16 %v561, %v559
  %v782 = vpack.c.b16 %v562, %v560
  %v783 = vpack.c.b16 %v565, %v563
  %v784 = vpack.c.b16 %v566, %v564
  %v785 = vpack.c.b16 %v569, %v567
  %v786 = vpack.c.b16 %v570, %v568
  %v787 = vpack.c.b16 %v573, %v571
  %v788 = vpack.c.b16 %v574, %v572
  %v789 = vpack.c.b16 %v577, %v575
  %v790 = vpack.c.b16 %v578, %v576
  %v791 = vpack.c.b16 %v581, %v579
  %v792 = vpack.c.b16 %v582, %v580
  %v793 = vpack.c.b16 %v585, %v583
  %v794 = vpack.c.b16 %v586, %v584
  %v795 = vpack.c.b16 %v589, %v587
  %v796 = vpack.c.b16 %v590, %v588
  %v797 = vpack.c.b16 %v593, %v591
  %v798 = vpack.c.b16 %v594, %v592
  %v799 = vpack.c.b16 %v597, %v595
  %v800 = vpack.c.b16 %v598, %v596
  %v801 = vpack.c.b16 %v601, %v599
  %v802 = vpack.c.b16 %v602, %v600
  %v803 = vpack.c.b16 %v605, %v603
  %v804 = vpack.c.b16 %v606, %v604
  %v805 = vpack.c.b16 %v609, %v607
  %v806 = vpack.c.b16 %v610, %v608
  %v807 = vpack.c.b16 %v613, %v611
  %v808 = vpack.c.b16 %v614, %v612
  %v809 = vpack.c.b16 %v617, %v615
  %v810 = vpack.c.b16 %v618, %v616
  %v811 = vpack.c.b16 %v621, %v619
  %v812 = vpack.c.b16 %v622, %v620
  %v813 = vpack.c.b16 %v625, %v623
  %v814 = vpack.c.b16 %v626, %v624
  %v815 = vpack.c.b16 %v629, %v627
  %v816 = vpack.c.b16 %v630, %v628
  %v817 = vpack.c.b16 %v633, %v631
  %v818 = vpack.c.b16 %v634, %v632
  %v819 = vpack.c.b16 %v637, %v635
  %v820 = vpack.c.b16 %v638, %v636
  %v821 = vpack.c.b16 %v641, %v639
  %v822 = vpack.c.b16 %v642, %v640
  %v823 = vpack.c.b16 %v645, %v643
  %v824 = vpack.c.b16 %v646, %v644
  %v825 = vpack.c.b16 %v649, %v647
  %v826 = vpack.c.b16 %v650, %v648
  %v827 = vpack.c.b16 %v653, %v651
  %v828 = vpack.c.b16 %v654, %v652
  %v829 = vpack.c.b16 %v657, %v655
  %v830 = vpack.c.b16 %v658, %v656
  %v831 = vpack.c.b16 %v661, %v659
  %v832 = vpack.c.b16 %v662, %v660
  %v833 = vpack.c.b16 %v665, %v663
  %v834 = vpack.c.b16 %v666, %v664
  %v835 = vpack.c.b16 %v669, %v667
  %v836 = vpack.c.b16 %v670, %v668
  %v837 = vpack.c.b16 %v673, %v671
  %v838 = vpack.c.b16 %v674, %v672
  %v839 = vpack.c.b16 %v677, %v675
  %v840 = vpack.c.b16 %v678, %v676
  %v841 = vpack.c.b16 %v681, %v679
  %v842 = vpack.c.b16 %v682, %v680
  %v843 = vpack.c.b16 %v685, %v683
  %v844 = vpack.c.b16 %v686, %v684
  %v845 = vpack.c.b16 %v689, %v687
  %v846 = vpack.c.b16 %v690, %v688
  %v847 = vpack.c.b16 %v693, %v691
  %v848 = vpack.c.b16 %v694, %v692
  %v849 = vpack.c.b16 %v697, %v695
  %v850 = vpack.c.b16 %v698, %v696
  %v851 = vpack.c.b16 %v701, %v699
  %v852 = vpack.c.b16 %v702, %v700
  %v853 = vpack.c.b16 %v705, %v703
  %v854 = vpack.c.b16 %v706, %v704
  %v855 = vpack.c.b16 %v709, %v707
  %v856 = vpack.c.b16 %v710, %v708
  %v857 = vpack.c.b16 %v713, %v711
  %v858 = vpack.c.b16 %v714, %v712
  %1003 = vmatprep.subr.bf16.mxu0 %v730
  %1004 = vmatpush1.bf16.msra.mxu0 %v729
  %1005 = vmatprep.subr.bf16.mxu0 %v728
  %1006 = vmatpush1.bf16.msra.mxu0 %v727
  %1007 = vmatprep.subr.bf16.mxu0 %v726
  %1008 = vmatpush1.bf16.msra.mxu0 %v725
  %1009 = vmatprep.subr.bf16.mxu0 %v724
  %1010 = vmatpush1.bf16.msra.mxu0 %v723
  %1011 = vmatprep.subr.bf16.mxu0 %v722
  %1012 = vmatpush1.bf16.msra.mxu0 %v721
  %1013 = vmatprep.subr.bf16.mxu0 %v720
  %1014 = vmatpush1.bf16.msra.mxu0 %v719
  %1015 = vmatprep.subr.bf16.mxu0 %v718
  %1016 = vmatpush1.bf16.msra.mxu0 %v717
  %1017 = vmatprep.subr.bf16.mxu0 %v716
  %1018 = vmatpush1.bf16.msra.mxu0 %v715
  %1019 = vmatprep.subr.bf16.mxu0 %v746
  %1020 = vmatpush2.bf16.msra.mxu0 %v745
  %1021 = vmatprep.subr.bf16.mxu0 %v744
  %1022 = vmatpush2.bf16.msra.mxu0 %v743
  %1023 = vmatprep.subr.bf16.mxu0 %v742
  %1024 = vmatpush2.bf16.msra.mxu0 %v741
  %1025 = vmatprep.subr.bf16.mxu0 %v740
  %1026 = vmatpush2.bf16.msra.mxu0 %v739
  %1027 = vmatprep.subr.bf16.mxu0 %v738
  %1028 = vmatpush2.bf16.msra.mxu0 %v737
  %1029 = vmatprep.subr.bf16.mxu0 %v736
  %1030 = vmatpush2.bf16.msra.mxu0 %v735
  %1031 = vmatprep.subr.bf16.mxu0 %v734
  %1032 = vmatpush2.bf16.msra.mxu0 %v733
  %1033 = vmatprep.subr.bf16.mxu0 %v732
  %1034 = vmatpush2.bf16.msra.mxu0 %v731
  %1035 = vmatprep.mubr.bf16.mxu0 %v248
  %1036 = vmatmul.mubr.bf16.gmra.mxu0 %v247
  %v1037 = vpop.f32.mrf.mxu0
  %v1038 = vadd.f32 %v184, %v1037
  %v1039 = vpop.f32.mrf.mxu0
  %v1040 = vadd.f32 %v188, %v1039
  %v1041 = vpop.f32.mrf.mxu0
  %v1042 = vadd.f32 %v184, %v1041
  %v1043 = vpop.f32.mrf.mxu0
  %v1044 = vadd.f32 %v188, %v1043
  %1045 = vmatprep.mubr.bf16.mxu0 %v257
  %1046 = vmatmul.mubr.bf16.gmra.mxu0 %v256
  %v1047 = vpop.f32.mrf.mxu0
  %v1048 = vadd.f32 %v184, %v1047
  %v1049 = vpop.f32.mrf.mxu0
  %v1050 = vadd.f32 %v188, %v1049
  %v1051 = vpop.f32.mrf.mxu0
  %v1052 = vadd.f32 %v184, %v1051
  %v1053 = vpop.f32.mrf.mxu0
  %v1054 = vadd.f32 %v188, %v1053
  %1055 = vdwg.mxu0
  %1056 = vmatprep.subr.bf16.mxu0 %v762
  %1057 = vmatpush1.bf16.msra.mxu0 %v761
  %1058 = vmatprep.subr.bf16.mxu0 %v760
  %1059 = vmatpush1.bf16.msra.mxu0 %v759
  %1060 = vmatprep.subr.bf16.mxu0 %v758
  %1061 = vmatpush1.bf16.msra.mxu0 %v757
  %1062 = vmatprep.subr.bf16.mxu0 %v756
  %1063 = vmatpush1.bf16.msra.mxu0 %v755
  %1064 = vmatprep.subr.bf16.mxu0 %v754
  %1065 = vmatpush1.bf16.msra.mxu0 %v753
  %1066 = vmatprep.subr.bf16.mxu0 %v752
  %1067 = vmatpush1.bf16.msra.mxu0 %v751
  %1068 = vmatprep.subr.bf16.mxu0 %v750
  %1069 = vmatpush1.bf16.msra.mxu0 %v749
  %1070 = vmatprep.subr.bf16.mxu0 %v748
  %1071 = vmatpush1.bf16.msra.mxu0 %v747
  %1072 = vmatprep.subr.bf16.mxu0 %v778
  %1073 = vmatpush2.bf16.msra.mxu0 %v777
  %1074 = vmatprep.subr.bf16.mxu0 %v776
  %1075 = vmatpush2.bf16.msra.mxu0 %v775
  %1076 = vmatprep.subr.bf16.mxu0 %v774
  %1077 = vmatpush2.bf16.msra.mxu0 %v773
  %1078 = vmatprep.subr.bf16.mxu0 %v772
  %1079 = vmatpush2.bf16.msra.mxu0 %v771
  %1080 = vmatprep.subr.bf16.mxu0 %v770
  %1081 = vmatpush2.bf16.msra.mxu0 %v769
  %1082 = vmatprep.subr.bf16.mxu0 %v768
  %1083 = vmatpush2.bf16.msra.mxu0 %v767
  %1084 = vmatprep.subr.bf16.mxu0 %v766
  %1085 = vmatpush2.bf16.msra.mxu0 %v765
  %1086 = vmatprep.subr.bf16.mxu0 %v764
  %1087 = vmatpush2.bf16.msra.mxu0 %v763
  %1088 = vmatprep.mubr.bf16.mxu0 %v250
  %1089 = vmatmul.mubr.bf16.gmra.mxu0 %v249
  %v1090 = vpop.f32.mrf.mxu0
  %v1091 = vadd.f32 %v1038, %v1090
  %v1092 = vpop.f32.mrf.mxu0
  %v1093 = vadd.f32 %v1040, %v1092
  %v1094 = vpop.f32.mrf.mxu0
  %v1095 = vadd.f32 %v1042, %v1094
  %v1096 = vpop.f32.mrf.mxu0
  %v1097 = vadd.f32 %v1044, %v1096
  %1098 = vmatprep.mubr.bf16.mxu0 %v259
  %1099 = vmatmul.mubr.bf16.gmra.mxu0 %v258
  %v1100 = vpop.f32.mrf.mxu0
  %v1101 = vadd.f32 %v1048, %v1100
  %v1102 = vpop.f32.mrf.mxu0
  %v1103 = vadd.f32 %v1050, %v1102
  %v1104 = vpop.f32.mrf.mxu0
  %v1105 = vadd.f32 %v1052, %v1104
  %v1106 = vpop.f32.mrf.mxu0
  %v1107 = vadd.f32 %v1054, %v1106
  %1108 = vdwg.mxu0
  %1109 = vmatprep.subr.bf16.mxu0 %v794
  %1110 = vmatpush1.bf16.msra.mxu0 %v793
  %1111 = vmatprep.subr.bf16.mxu0 %v792
  %1112 = vmatpush1.bf16.msra.mxu0 %v791
  %1113 = vmatprep.subr.bf16.mxu0 %v790
  %1114 = vmatpush1.bf16.msra.mxu0 %v789
  %1115 = vmatprep.subr.bf16.mxu0 %v788
  %1116 = vmatpush1.bf16.msra.mxu0 %v787
  %1117 = vmatprep.subr.bf16.mxu0 %v786
  %1118 = vmatpush1.bf16.msra.mxu0 %v785
  %1119 = vmatprep.subr.bf16.mxu0 %v784
  %1120 = vmatpush1.bf16.msra.mxu0 %v783
  %1121 = vmatprep.subr.bf16.mxu0 %v782
  %1122 = vmatpush1.bf16.msra.mxu0 %v781
  %1123 = vmatprep.subr.bf16.mxu0 %v780
  %1124 = vmatpush1.bf16.msra.mxu0 %v779
  %1125 = vmatprep.subr.bf16.mxu0 %v810
  %1126 = vmatpush2.bf16.msra.mxu0 %v809
  %1127 = vmatprep.subr.bf16.mxu0 %v808
  %1128 = vmatpush2.bf16.msra.mxu0 %v807
  %1129 = vmatprep.subr.bf16.mxu0 %v806
  %1130 = vmatpush2.bf16.msra.mxu0 %v805
  %1131 = vmatprep.subr.bf16.mxu0 %v804
  %1132 = vmatpush2.bf16.msra.mxu0 %v803
  %1133 = vmatprep.subr.bf16.mxu0 %v802
  %1134 = vmatpush2.bf16.msra.mxu0 %v801
  %1135 = vmatprep.subr.bf16.mxu0 %v800
  %1136 = vmatpush2.bf16.msra.mxu0 %v799
  %1137 = vmatprep.subr.bf16.mxu0 %v798
  %1138 = vmatpush2.bf16.msra.mxu0 %v797
  %1139 = vmatprep.subr.bf16.mxu0 %v796
  %1140 = vmatpush2.bf16.msra.mxu0 %v795
  %1141 = vmatprep.mubr.bf16.mxu0 %v252
  %1142 = vmatmul.mubr.bf16.gmra.mxu0 %v251
  %v1143 = vpop.f32.mrf.mxu0
  %v1144 = vadd.f32 %v1091, %v1143
  %v1145 = vpop.f32.mrf.mxu0
  %v1146 = vadd.f32 %v1093, %v1145
  %v1147 = vpop.f32.mrf.mxu0
  %v1148 = vadd.f32 %v1095, %v1147
  %v1149 = vpop.f32.mrf.mxu0
  %v1150 = vadd.f32 %v1097, %v1149
  %1151 = vmatprep.mubr.bf16.mxu0 %v261
  %1152 = vmatmul.mubr.bf16.gmra.mxu0 %v260
  %v1153 = vpop.f32.mrf.mxu0
  %v1154 = vadd.f32 %v1101, %v1153
  %v1155 = vpop.f32.mrf.mxu0
  %v1156 = vadd.f32 %v1103, %v1155
  %v1157 = vpop.f32.mrf.mxu0
  %v1158 = vadd.f32 %v1105, %v1157
  %v1159 = vpop.f32.mrf.mxu0
  %v1160 = vadd.f32 %v1107, %v1159
  %1161 = vdwg.mxu0
  %1162 = vmatprep.subr.bf16.mxu0 %v826
  %1163 = vmatpush1.bf16.msra.mxu0 %v825
  %1164 = vmatprep.subr.bf16.mxu0 %v824
  %1165 = vmatpush1.bf16.msra.mxu0 %v823
  %1166 = vmatprep.subr.bf16.mxu0 %v822
  %1167 = vmatpush1.bf16.msra.mxu0 %v821
  %1168 = vmatprep.subr.bf16.mxu0 %v820
  %1169 = vmatpush1.bf16.msra.mxu0 %v819
  %1170 = vmatprep.subr.bf16.mxu0 %v818
  %1171 = vmatpush1.bf16.msra.mxu0 %v817
  %1172 = vmatprep.subr.bf16.mxu0 %v816
  %1173 = vmatpush1.bf16.msra.mxu0 %v815
  %1174 = vmatprep.subr.bf16.mxu0 %v814
  %1175 = vmatpush1.bf16.msra.mxu0 %v813
  %1176 = vmatprep.subr.bf16.mxu0 %v812
  %1177 = vmatpush1.bf16.msra.mxu0 %v811
  %1178 = vmatprep.subr.bf16.mxu0 %v842
  %1179 = vmatpush2.bf16.msra.mxu0 %v841
  %1180 = vmatprep.subr.bf16.mxu0 %v840
  %1181 = vmatpush2.bf16.msra.mxu0 %v839
  %1182 = vmatprep.subr.bf16.mxu0 %v838
  %1183 = vmatpush2.bf16.msra.mxu0 %v837
  %1184 = vmatprep.subr.bf16.mxu0 %v836
  %1185 = vmatpush2.bf16.msra.mxu0 %v835
  %1186 = vmatprep.subr.bf16.mxu0 %v834
  %1187 = vmatpush2.bf16.msra.mxu0 %v833
  %1188 = vmatprep.subr.bf16.mxu0 %v832
  %1189 = vmatpush2.bf16.msra.mxu0 %v831
  %1190 = vmatprep.subr.bf16.mxu0 %v830
  %1191 = vmatpush2.bf16.msra.mxu0 %v829
  %1192 = vmatprep.subr.bf16.mxu0 %v828
  %1193 = vmatpush2.bf16.msra.mxu0 %v827
  %1194 = vmatprep.mubr.bf16.mxu0 %v254
  %1195 = vmatmul.mubr.bf16.gmra.mxu0 %v253
  %v1196 = vpop.f32.mrf.mxu0
  %v1197 = vadd.f32 %v1144, %v1196
  %v1198 = vpop.f32.mrf.mxu0
  %v1199 = vadd.f32 %v1146, %v1198
  %v1200 = vpop.f32.mrf.mxu0
  %v1201 = vadd.f32 %v1148, %v1200
  %v1202 = vpop.f32.mrf.mxu0
  %v1203 = vadd.f32 %v1150, %v1202
  %1204 = vmatprep.mubr.bf16.mxu0 %v263
  %1205 = vmatmul.mubr.bf16.gmra.mxu0 %v262
  %v1206 = vpop.f32.mrf.mxu0
  %v1207 = vadd.f32 %v1154, %v1206
  %v1208 = vpop.f32.mrf.mxu0
  %v1209 = vadd.f32 %v1156, %v1208
  %v1210 = vpop.f32.mrf.mxu0
  %v1211 = vadd.f32 %v1158, %v1210
  %v1212 = vpop.f32.mrf.mxu0
  %v1213 = vadd.f32 %v1160, %v1212
  %1214 = vdwg.mxu0
  %1215 = vmatprep.subr.bf16.mxu0 %v858
  %1216 = vmatpush1.bf16.msra.mxu0 %v857
  %1217 = vmatprep.subr.bf16.mxu0 %v856
  %1218 = vmatpush1.bf16.msra.mxu0 %v855
  %1219 = vmatprep.subr.bf16.mxu0 %v854
  %1220 = vmatpush1.bf16.msra.mxu0 %v853
  %1221 = vmatprep.subr.bf16.mxu0 %v852
  %1222 = vmatpush1.bf16.msra.mxu0 %v851
  %1223 = vmatprep.subr.bf16.mxu0 %v850
  %1224 = vmatpush1.bf16.msra.mxu0 %v849
  %1225 = vmatprep.subr.bf16.mxu0 %v848
  %1226 = vmatpush1.bf16.msra.mxu0 %v847
  %1227 = vmatprep.subr.bf16.mxu0 %v846
  %1228 = vmatpush1.bf16.msra.mxu0 %v845
  %1229 = vmatprep.subr.bf16.mxu0 %v844
  %1230 = vmatpush1.bf16.msra.mxu0 %v843
  %1231 = vmatprep.subr.bf16.mxu0 0
  %1232 = vmatpush2.bf16.msra.mxu0 0
  %1233 = vmatprep.subr.bf16.mxu0 0
  %1234 = vmatpush2.bf16.msra.mxu0 0
  %1235 = vmatprep.subr.bf16.mxu0 0
  %1236 = vmatpush2.bf16.msra.mxu0 0
  %1237 = vmatprep.subr.bf16.mxu0 0
  %1238 = vmatpush2.bf16.msra.mxu0 0
  %1239 = vmatprep.subr.bf16.mxu0 0
  %1240 = vmatpush2.bf16.msra.mxu0 0
  %1241 = vmatprep.subr.bf16.mxu0 0
  %1242 = vmatpush2.bf16.msra.mxu0 0
  %1243 = vmatprep.subr.bf16.mxu0 0
  %1244 = vmatpush2.bf16.msra.mxu0 0
  %1245 = vmatprep.subr.bf16.mxu0 0
  %1246 = vmatpush2.bf16.msra.mxu0 0
  %1247 = vmatprep.mubr.bf16.mxu0 0
  %1248 = vmatmul.mubr.bf16.gmra.mxu0 %v255
  %v1249 = vpop.f32.mrf.mxu0
  %v1250 = vadd.f32 %v1197, %v1249
  %v1251 = vpop.f32.mrf.mxu0
  %v1252 = vadd.f32 %v1199, %v1251
  %v1253 = vpop.f32.mrf.mxu0
  %v1254 = vadd.f32 %v1201, %v1253
  %v1255 = vpop.f32.mrf.mxu0
  %v1256 = vadd.f32 %v1203, %v1255
  %1257 = vmatprep.mubr.bf16.mxu0 0
  %1258 = vmatmul.mubr.bf16.gmra.mxu0 %v264
  %v1259 = vpop.f32.mrf.mxu0
  %v1260 = vadd.f32 %v1207, %v1259
  %v1261 = vpop.f32.mrf.mxu0
  %v1262 = vadd.f32 %v1209, %v1261
  %v1263 = vpop.f32.mrf.mxu0
  %v1264 = vadd.f32 %v1211, %v1263
  %v1265 = vpop.f32.mrf.mxu0
  %v1266 = vadd.f32 %v1213, %v1265
  %1267 = vdwg.mxu0
  %v1268 = vmax.f32 %v1250, 0.0
  %v1269 = vmax.f32 %v1252, 0.0
  %v1270 = vmax.f32 %v1254, 0.0
  %v1271 = vmax.f32 %v1256, 0.0
  %v1272 = vmax.f32 %v1260, 0.0
  %v1273 = vmax.f32 %v1262, 0.0
  %v1274 = vmax.f32 %v1264, 0.0
  %v1275 = vmax.f32 %v1266, 0.0
  %1276 = vst [vmem:[%s3] sm:$0xff] %v1268
  %1277 = vst [vmem:[%s3 + $0x8] sm:$0xff] %v1269
  %1278 = vst [vmem:[%s3 + $0x10] sm:$0xff] %v1270
  %1279 = vst [vmem:[%s3 + $0x18] sm:$0xff] %v1271
  %1280 = vst [vmem:[%s3 + $0x20] sm:$0xff] %v1272
  %1281 = vst [vmem:[%s3 + $0x28] sm:$0xff] %v1273
  %1282 = vst [vmem:[%s3 + $0x30] sm:$0xff] %v1274
  %1283 = vst [vmem:[%s3 + $0x38] sm:$0xff] %v1275
  // Predicated region
  $region14: #{beta_vae_forward.15} parent=0 // pred_check
    _
  $region15: #{beta_vae_forward.15} parent=0 // pred_check_branch
    %1285 = sbr.rel (0) target = $region17
  $region16: #{beta_vae_forward.15} parent=0 // pred_region
    _
  $region17: #{beta_vae_forward.15} parent=0 // pred_fallthru
    _
  // Predicated region
  $region18: #{beta_vae_forward.15} parent=0 // pred_check
    _
  $region19: #{beta_vae_forward.15} parent=0 // pred_check_branch
    %1287 = sbr.rel (0) target = $region21
  $region20: #{beta_vae_forward.15} parent=0 // pred_region
    _
  $region21: #{beta_vae_forward.15} parent=0 // pred_fallthru
    _

// kernel: tile.23
$region0: #{tile.23}
  #allocation0 [shape = 's32[1]{0}', space=sflag, size = 0x4, scoped, tag = 'scoped memory for tile.23']
  %s0 = inlined_call_operand.vmem [shape: f32[32], index: 0, kind: input, shape index: {}]
  %s1 = inlined_call_operand.vmem [shape: f32[4,32], index: 1, kind: output, shape index: {}]
  // Predicated region
  $region2: #{tile.23} parent=0 // pred_check
    _
  $region3: #{tile.23} parent=0 // pred_check_branch
    %3 = sbr.rel (0) target = $region5
  $region4: #{tile.23} parent=0 // pred_region
    _
  $region5: #{tile.23} parent=0 // pred_fallthru
    _
  %v4 = vld [vmem:[%s0] ss:$0 sm:$0xff]
  %5 = vst [vmem:[%s1] sm:$0xf] %v4

// kernel: beta_vae_forward.16
$region0: #{beta_vae_forward.16}
  #allocation0 [shape = 'u32[]', space=smem, size = 0x4, offset = 0x4, fixed_abs, tag = 'smem constant byte address 0x4 - core index']
  #allocation1 [shape = 'u32[144,128]{1,0:T(1,128)}', space=vmem, size = 0x12000, scoped, tag = 'internal scratch']
  %s0 = inlined_call_operand.vmem [shape: bf16[128,576], index: 0, kind: input, shape index: {}]
  %s1 = inlined_call_operand.vmem [shape: bf16[576,128], index: 1, kind: input, shape index: {}]
  %s2 = inlined_call_operand.vmem [shape: f32[1,128], index: 2, kind: input, shape index: {}]
  %s3 = inlined_call_operand.vmem [shape: f32[128,128], index: 3, kind: output, shape index: {}]
  %s4 = sld [smem:[#allocation0]]
  $region22: #{beta_vae_forward.16} parent=0
    _
  %s6 = ssub.s32 1, %s4
  %s7 = scalar_select 0, %s6, %s4
  // Predicated region
  $region2: #{beta_vae_forward.16} parent=0 // pred_check
    _
  $region3: #{beta_vae_forward.16} parent=0 // pred_check_branch
    %9 = sbr.rel (0) target = $region5
  $region4: #{beta_vae_forward.16} parent=0 // pred_region
    _
  $region5: #{beta_vae_forward.16} parent=0 // pred_fallthru
    _
  // Predicated region
  $region6: #{beta_vae_forward.16} parent=0 // pred_check
    _
  $region7: #{beta_vae_forward.16} parent=0 // pred_check_branch
    %11 = sbr.rel (0) target = $region9
  $region8: #{beta_vae_forward.16} parent=0 // pred_region
    _
  $region9: #{beta_vae_forward.16} parent=0 // pred_fallthru
    _
  // Predicated region
  $region10: #{beta_vae_forward.16} parent=0 // pred_check
    _
  $region11: #{beta_vae_forward.16} parent=0 // pred_check_branch
    %13 = sbr.rel (0) target = $region13
  $region12: #{beta_vae_forward.16} parent=0 // pred_region
    _
  $region13: #{beta_vae_forward.16} parent=0 // pred_fallthru
    _
  %v15 = vld [vmem:[%s0] sm:$0xff]
  %v16 = vld [vmem:[%s0 + $0x8] sm:$0xff]
  %v17 = vld [vmem:[%s0 + $0x10] sm:$0xf]
  %v18 = vld [vmem:[%s0 + $0x14] sm:$0xff]
  %v19 = vld [vmem:[%s0 + $0x1c] sm:$0xff]
  %v20 = vld [vmem:[%s0 + $0x24] sm:$0xf]
  %v21 = vld [vmem:[%s0 + $0x28] sm:$0xff]
  %v22 = vld [vmem:[%s0 + $0x30] sm:$0xff]
  %v23 = vld [vmem:[%s0 + $0x38] sm:$0xf]
  %v24 = vld [vmem:[%s0 + $0x3c] sm:$0xff]
  %v25 = vld [vmem:[%s0 + $0x44] sm:$0xff]
  %v26 = vld [vmem:[%s0 + $0x4c] sm:$0xf]
  %v27 = vld [vmem:[%s0 + $0x50] sm:$0xff]
  %v28 = vld [vmem:[%s0 + $0x58] sm:$0xff]
  %v29 = vld [vmem:[%s0 + $0x60] sm:$0xf]
  %v30 = vld [vmem:[%s0 + $0x64] sm:$0xff]
  %v31 = vld [vmem:[%s0 + $0x6c] sm:$0xff]
  %v32 = vld [vmem:[%s0 + $0x74] sm:$0xf]
  %v33 = vld [vmem:[%s0 + $0x78] sm:$0xff]
  %v34 = vld [vmem:[%s0 + $0x80] sm:$0xff]
  %v35 = vld [vmem:[%s0 + $0x88] sm:$0xf]
  %v36 = vld [vmem:[%s0 + $0x8c] sm:$0xff]
  %v37 = vld [vmem:[%s0 + $0x94] sm:$0xff]
  %v38 = vld [vmem:[%s0 + $0x9c] sm:$0xf]
  %v39 = vld [vmem:[%s0 + $0xa0] sm:$0xff]
  %v40 = vld [vmem:[%s0 + $0xa8] sm:$0xff]
  %v41 = vld [vmem:[%s0 + $0xb0] sm:$0xf]
  %v42 = vld [vmem:[%s0 + $0xb4] sm:$0xff]
  %v43 = vld [vmem:[%s0 + $0xbc] sm:$0xff]
  %v44 = vld [vmem:[%s0 + $0xc4] sm:$0xf]
  %v45 = vld [vmem:[%s0 + $0xc8] sm:$0xff]
  %v46 = vld [vmem:[%s0 + $0xd0] sm:$0xff]
  %v47 = vld [vmem:[%s0 + $0xd8] sm:$0xf]
  %v48 = vld [vmem:[%s0 + $0xdc] sm:$0xff]
  %v49 = vld [vmem:[%s0 + $0xe4] sm:$0xff]
  %v50 = vld [vmem:[%s0 + $0xec] sm:$0xf]
  %v51 = vld [vmem:[%s0 + $0xf0] sm:$0xff]
  %v52 = vld [vmem:[%s0 + $0xf8] sm:$0xff]
  %v53 = vld [vmem:[%s0 + $0x100] sm:$0xf]
  %v54 = vld [vmem:[%s0 + $0x104] sm:$0xff]
  %v55 = vld [vmem:[%s0 + $0x10c] sm:$0xff]
  %v56 = vld [vmem:[%s0 + $0x114] sm:$0xf]
  %v57 = vld [vmem:[%s0 + $0x118] sm:$0xff]
  %v58 = vld [vmem:[%s0 + $0x120] sm:$0xff]
  %v59 = vld [vmem:[%s0 + $0x128] sm:$0xf]
  %v60 = vld [vmem:[%s0 + $0x12c] sm:$0xff]
  %v61 = vld [vmem:[%s0 + $0x134] sm:$0xff]
  %v62 = vld [vmem:[%s0 + $0x13c] sm:$0xf]
  %v63 = vld [vmem:[%s1] sm:$0xf]
  %v64 = vld [vmem:[%s1 + $0x4] sm:$0xf]
  %v65 = vld [vmem:[%s1 + $0x8] sm:$0xf]
  %v66 = vld [vmem:[%s1 + $0xc] sm:$0xf]
  %v67 = vld [vmem:[%s1 + $0x10] sm:$0xf]
  %v68 = vld [vmem:[%s1 + $0x14] sm:$0xf]
  %v69 = vld [vmem:[%s1 + $0x18] sm:$0xf]
  %v70 = vld [vmem:[%s1 + $0x1c] sm:$0xf]
  %v71 = vld [vmem:[%s1 + $0x20] sm:$0xf]
  %v72 = vld [vmem:[%s1 + $0x24] sm:$0xf]
  %v73 = vld [vmem:[%s1 + $0x28] sm:$0xf]
  %v74 = vld [vmem:[%s1 + $0x2c] sm:$0xf]
  %v75 = vld [vmem:[%s1 + $0x30] sm:$0xf]
  %v76 = vld [vmem:[%s1 + $0x34] sm:$0xf]
  %v77 = vld [vmem:[%s1 + $0x38] sm:$0xf]
  %v78 = vld [vmem:[%s1 + $0x3c] sm:$0xf]
  %v79 = vld [vmem:[%s1 + $0x40] sm:$0xf]
  %v80 = vld [vmem:[%s1 + $0x44] sm:$0xf]
  %v81 = vld [vmem:[%s1 + $0x48] sm:$0xf]
  %v82 = vld [vmem:[%s1 + $0x4c] sm:$0xf]
  %v83 = vld [vmem:[%s1 + $0x50] sm:$0xf]
  %v84 = vld [vmem:[%s1 + $0x54] sm:$0xf]
  %v85 = vld [vmem:[%s1 + $0x58] sm:$0xf]
  %v86 = vld [vmem:[%s1 + $0x5c] sm:$0xf]
  %v87 = vld [vmem:[%s1 + $0x60] sm:$0xf]
  %v88 = vld [vmem:[%s1 + $0x64] sm:$0xf]
  %v89 = vld [vmem:[%s1 + $0x68] sm:$0xf]
  %v90 = vld [vmem:[%s1 + $0x6c] sm:$0xf]
  %v91 = vld [vmem:[%s1 + $0x70] sm:$0xf]
  %v92 = vld [vmem:[%s1 + $0x74] sm:$0xf]
  %v93 = vld [vmem:[%s1 + $0x78] sm:$0xf]
  %v94 = vld [vmem:[%s1 + $0x7c] sm:$0xf]
  %v95 = vld [vmem:[%s1 + $0x80] sm:$0xf]
  %v96 = vld [vmem:[%s1 + $0x84] sm:$0xf]
  %v97 = vld [vmem:[%s1 + $0x88] sm:$0xf]
  %v98 = vld [vmem:[%s1 + $0x8c] sm:$0xf]
  %v99 = vld [vmem:[%s1 + $0x90] sm:$0xf]
  %v100 = vld [vmem:[%s1 + $0x94] sm:$0xf]
  %v101 = vld [vmem:[%s1 + $0x98] sm:$0xf]
  %v102 = vld [vmem:[%s1 + $0x9c] sm:$0xf]
  %v103 = vld [vmem:[%s1 + $0xa0] sm:$0xf]
  %v104 = vld [vmem:[%s1 + $0xa4] sm:$0xf]
  %v105 = vld [vmem:[%s1 + $0xa8] sm:$0xf]
  %v106 = vld [vmem:[%s1 + $0xac] sm:$0xf]
  %v107 = vld [vmem:[%s1 + $0xb0] sm:$0xf]
  %v108 = vld [vmem:[%s1 + $0xb4] sm:$0xf]
  %v109 = vld [vmem:[%s1 + $0xb8] sm:$0xf]
  %v110 = vld [vmem:[%s1 + $0xbc] sm:$0xf]
  %v111 = vld [vmem:[%s1 + $0xc0] sm:$0xf]
  %v112 = vld [vmem:[%s1 + $0xc4] sm:$0xf]
  %v113 = vld [vmem:[%s1 + $0xc8] sm:$0xf]
  %v114 = vld [vmem:[%s1 + $0xcc] sm:$0xf]
  %v115 = vld [vmem:[%s1 + $0xd0] sm:$0xf]
  %v116 = vld [vmem:[%s1 + $0xd4] sm:$0xf]
  %v117 = vld [vmem:[%s1 + $0xd8] sm:$0xf]
  %v118 = vld [vmem:[%s1 + $0xdc] sm:$0xf]
  %v119 = vld [vmem:[%s1 + $0xe0] sm:$0xf]
  %v120 = vld [vmem:[%s1 + $0xe4] sm:$0xf]
  %v121 = vld [vmem:[%s1 + $0xe8] sm:$0xf]
  %v122 = vld [vmem:[%s1 + $0xec] sm:$0xf]
  %v123 = vld [vmem:[%s1 + $0xf0] sm:$0xf]
  %v124 = vld [vmem:[%s1 + $0xf4] sm:$0xf]
  %v125 = vld [vmem:[%s1 + $0xf8] sm:$0xf]
  %v126 = vld [vmem:[%s1 + $0xfc] sm:$0xf]
  %v127 = vld [vmem:[%s1 + $0x100] sm:$0xf]
  %v128 = vld [vmem:[%s1 + $0x104] sm:$0xf]
  %v129 = vld [vmem:[%s1 + $0x108] sm:$0xf]
  %v130 = vld [vmem:[%s1 + $0x10c] sm:$0xf]
  %v131 = vld [vmem:[%s1 + $0x110] sm:$0xf]
  %v132 = vld [vmem:[%s1 + $0x114] sm:$0xf]
  %v133 = vld [vmem:[%s1 + $0x118] sm:$0xf]
  %v134 = vld [vmem:[%s1 + $0x11c] sm:$0xf]
  %v135 = vld [vmem:[%s2] sm:$0x1]
  %v137 = vlaneseq
  %v138 = vshrl.u32 %v137, 7
  %v139 = vsub.s32 0, %v138
  %v140 = vrot.slane %v135, %v139
  %v190 = vunpack.c.l.b16 %v15
  %v191 = vunpack.c.h.b16 %v15
  %v192 = vunpack.c.l.b16 %v16
  %v193 = vunpack.c.h.b16 %v16
  %v194 = vunpack.c.l.b16 %v17
  %v195 = vunpack.c.l.b16 %v18
  %v196 = vunpack.c.h.b16 %v18
  %v197 = vunpack.c.l.b16 %v19
  %v198 = vunpack.c.h.b16 %v19
  %v199 = vunpack.c.l.b16 %v20
  %v200 = vunpack.c.l.b16 %v21
  %v201 = vunpack.c.h.b16 %v21
  %v202 = vunpack.c.l.b16 %v22
  %v203 = vunpack.c.h.b16 %v22
  %v204 = vunpack.c.l.b16 %v23
  %v205 = vunpack.c.l.b16 %v24
  %v206 = vunpack.c.h.b16 %v24
  %v207 = vunpack.c.l.b16 %v25
  %v208 = vunpack.c.h.b16 %v25
  %v209 = vunpack.c.l.b16 %v26
  %v210 = vunpack.c.l.b16 %v27
  %v211 = vunpack.c.h.b16 %v27
  %v212 = vunpack.c.l.b16 %v28
  %v213 = vunpack.c.h.b16 %v28
  %v214 = vunpack.c.l.b16 %v29
  %v215 = vunpack.c.l.b16 %v30
  %v216 = vunpack.c.h.b16 %v30
  %v217 = vunpack.c.l.b16 %v31
  %v218 = vunpack.c.h.b16 %v31
  %v219 = vunpack.c.l.b16 %v32
  %v220 = vunpack.c.l.b16 %v33
  %v221 = vunpack.c.h.b16 %v33
  %v222 = vunpack.c.l.b16 %v34
  %v223 = vunpack.c.h.b16 %v34
  %v224 = vunpack.c.l.b16 %v35
  %v225 = vunpack.c.l.b16 %v36
  %v226 = vunpack.c.h.b16 %v36
  %v227 = vunpack.c.l.b16 %v37
  %v228 = vunpack.c.h.b16 %v37
  %v229 = vunpack.c.l.b16 %v38
  %v230 = vunpack.c.l.b16 %v39
  %v231 = vunpack.c.h.b16 %v39
  %v232 = vunpack.c.l.b16 %v40
  %v233 = vunpack.c.h.b16 %v40
  %v234 = vunpack.c.l.b16 %v41
  %v235 = vunpack.c.l.b16 %v42
  %v236 = vunpack.c.h.b16 %v42
  %v237 = vunpack.c.l.b16 %v43
  %v238 = vunpack.c.h.b16 %v43
  %v239 = vunpack.c.l.b16 %v44
  %v240 = vunpack.c.l.b16 %v45
  %v241 = vunpack.c.h.b16 %v45
  %v242 = vunpack.c.l.b16 %v46
  %v243 = vunpack.c.h.b16 %v46
  %v244 = vunpack.c.l.b16 %v47
  %v245 = vunpack.c.l.b16 %v48
  %v246 = vunpack.c.h.b16 %v48
  %v247 = vunpack.c.l.b16 %v49
  %v248 = vunpack.c.h.b16 %v49
  %v249 = vunpack.c.l.b16 %v50
  %v250 = vunpack.c.l.b16 %v51
  %v251 = vunpack.c.h.b16 %v51
  %v252 = vunpack.c.l.b16 %v52
  %v253 = vunpack.c.h.b16 %v52
  %v254 = vunpack.c.l.b16 %v53
  %v255 = vunpack.c.l.b16 %v54
  %v256 = vunpack.c.h.b16 %v54
  %v257 = vunpack.c.l.b16 %v55
  %v258 = vunpack.c.h.b16 %v55
  %v259 = vunpack.c.l.b16 %v56
  %v260 = vunpack.c.l.b16 %v57
  %v261 = vunpack.c.h.b16 %v57
  %v262 = vunpack.c.l.b16 %v58
  %v263 = vunpack.c.h.b16 %v58
  %v264 = vunpack.c.l.b16 %v59
  %v265 = vunpack.c.l.b16 %v60
  %v266 = vunpack.c.h.b16 %v60
  %v267 = vunpack.c.l.b16 %v61
  %v268 = vunpack.c.h.b16 %v61
  %v269 = vunpack.c.l.b16 %v62
  %v270 = vpack.c.b16 %v195, %v190
  %v271 = vpack.c.b16 %v196, %v191
  %v272 = vpack.c.b16 %v197, %v192
  %v273 = vpack.c.b16 %v198, %v193
  %v274 = vpack.c.b16 %v199, %v194
  %v275 = vpack.c.b16 %v205, %v200
  %v276 = vpack.c.b16 %v206, %v201
  %v277 = vpack.c.b16 %v207, %v202
  %v278 = vpack.c.b16 %v208, %v203
  %v279 = vpack.c.b16 %v209, %v204
  %v280 = vpack.c.b16 %v215, %v210
  %v281 = vpack.c.b16 %v216, %v211
  %v282 = vpack.c.b16 %v217, %v212
  %v283 = vpack.c.b16 %v218, %v213
  %v284 = vpack.c.b16 %v219, %v214
  %v285 = vpack.c.b16 %v225, %v220
  %v286 = vpack.c.b16 %v226, %v221
  %v287 = vpack.c.b16 %v227, %v222
  %v288 = vpack.c.b16 %v228, %v223
  %v289 = vpack.c.b16 %v229, %v224
  %v290 = vpack.c.b16 %v235, %v230
  %v291 = vpack.c.b16 %v236, %v231
  %v292 = vpack.c.b16 %v237, %v232
  %v293 = vpack.c.b16 %v238, %v233
  %v294 = vpack.c.b16 %v239, %v234
  %v295 = vpack.c.b16 %v245, %v240
  %v296 = vpack.c.b16 %v246, %v241
  %v297 = vpack.c.b16 %v247, %v242
  %v298 = vpack.c.b16 %v248, %v243
  %v299 = vpack.c.b16 %v249, %v244
  %v300 = vpack.c.b16 %v255, %v250
  %v301 = vpack.c.b16 %v256, %v251
  %v302 = vpack.c.b16 %v257, %v252
  %v303 = vpack.c.b16 %v258, %v253
  %v304 = vpack.c.b16 %v259, %v254
  %v305 = vpack.c.b16 %v265, %v260
  %v306 = vpack.c.b16 %v266, %v261
  %v307 = vpack.c.b16 %v267, %v262
  %v308 = vpack.c.b16 %v268, %v263
  %v309 = vpack.c.b16 %v269, %v264
  %v414 = vunpack.c.l.b16 %v63
  %v415 = vunpack.c.l.b16 %v64
  %v416 = vunpack.c.l.b16 %v65
  %v417 = vunpack.c.l.b16 %v66
  %v418 = vunpack.c.l.b16 %v67
  %v419 = vunpack.c.l.b16 %v68
  %v420 = vunpack.c.l.b16 %v69
  %v421 = vunpack.c.l.b16 %v70
  %v422 = vunpack.c.l.b16 %v71
  %v423 = vunpack.c.l.b16 %v72
  %v424 = vunpack.c.l.b16 %v73
  %v425 = vunpack.c.l.b16 %v74
  %v426 = vunpack.c.l.b16 %v75
  %v427 = vunpack.c.l.b16 %v76
  %v428 = vunpack.c.l.b16 %v77
  %v429 = vunpack.c.l.b16 %v78
  %v430 = vunpack.c.l.b16 %v79
  %v431 = vunpack.c.l.b16 %v80
  %v432 = vunpack.c.l.b16 %v81
  %v433 = vunpack.c.l.b16 %v82
  %v434 = vunpack.c.l.b16 %v83
  %v435 = vunpack.c.l.b16 %v84
  %v436 = vunpack.c.l.b16 %v85
  %v437 = vunpack.c.l.b16 %v86
  %v438 = vunpack.c.l.b16 %v87
  %v439 = vunpack.c.l.b16 %v88
  %v440 = vunpack.c.l.b16 %v89
  %v441 = vunpack.c.l.b16 %v90
  %v442 = vunpack.c.l.b16 %v91
  %v443 = vunpack.c.l.b16 %v92
  %v444 = vunpack.c.l.b16 %v93
  %v445 = vunpack.c.l.b16 %v94
  %v446 = vunpack.c.l.b16 %v95
  %v447 = vunpack.c.l.b16 %v96
  %v448 = vunpack.c.l.b16 %v97
  %v449 = vunpack.c.l.b16 %v98
  %v450 = vunpack.c.l.b16 %v99
  %v451 = vunpack.c.l.b16 %v100
  %v452 = vunpack.c.l.b16 %v101
  %v453 = vunpack.c.l.b16 %v102
  %v454 = vunpack.c.l.b16 %v103
  %v455 = vunpack.c.l.b16 %v104
  %v456 = vunpack.c.l.b16 %v105
  %v457 = vunpack.c.l.b16 %v106
  %v458 = vunpack.c.l.b16 %v107
  %v459 = vunpack.c.l.b16 %v108
  %v460 = vunpack.c.l.b16 %v109
  %v461 = vunpack.c.l.b16 %v110
  %v462 = vunpack.c.l.b16 %v111
  %v463 = vunpack.c.l.b16 %v112
  %v464 = vunpack.c.l.b16 %v113
  %v465 = vunpack.c.l.b16 %v114
  %v466 = vunpack.c.l.b16 %v115
  %v467 = vunpack.c.l.b16 %v116
  %v468 = vunpack.c.l.b16 %v117
  %v469 = vunpack.c.l.b16 %v118
  %v470 = vunpack.c.l.b16 %v119
  %v471 = vunpack.c.l.b16 %v120
  %v472 = vunpack.c.l.b16 %v121
  %v473 = vunpack.c.l.b16 %v122
  %v474 = vunpack.c.l.b16 %v123
  %v475 = vunpack.c.l.b16 %v124
  %v476 = vunpack.c.l.b16 %v125
  %v477 = vunpack.c.l.b16 %v126
  %v478 = vunpack.c.l.b16 %v127
  %v479 = vunpack.c.l.b16 %v128
  %v480 = vunpack.c.l.b16 %v129
  %v481 = vunpack.c.l.b16 %v130
  %v482 = vunpack.c.l.b16 %v131
  %v483 = vunpack.c.l.b16 %v132
  %v484 = vunpack.c.l.b16 %v133
  %v485 = vunpack.c.l.b16 %v134
  %v486 = vpack.c.b16 %v415, %v414
  %v487 = vpack.c.b16 %v417, %v416
  %v488 = vpack.c.b16 %v419, %v418
  %v489 = vpack.c.b16 %v421, %v420
  %v490 = vpack.c.b16 %v423, %v422
  %v491 = vpack.c.b16 %v425, %v424
  %v492 = vpack.c.b16 %v427, %v426
  %v493 = vpack.c.b16 %v429, %v428
  %v494 = vpack.c.b16 %v431, %v430
  %v495 = vpack.c.b16 %v433, %v432
  %v496 = vpack.c.b16 %v435, %v434
  %v497 = vpack.c.b16 %v437, %v436
  %v498 = vpack.c.b16 %v439, %v438
  %v499 = vpack.c.b16 %v441, %v440
  %v500 = vpack.c.b16 %v443, %v442
  %v501 = vpack.c.b16 %v445, %v444
  %v502 = vpack.c.b16 %v447, %v446
  %v503 = vpack.c.b16 %v449, %v448
  %v504 = vpack.c.b16 %v451, %v450
  %v505 = vpack.c.b16 %v453, %v452
  %v506 = vpack.c.b16 %v455, %v454
  %v507 = vpack.c.b16 %v457, %v456
  %v508 = vpack.c.b16 %v459, %v458
  %v509 = vpack.c.b16 %v461, %v460
  %v510 = vpack.c.b16 %v463, %v462
  %v511 = vpack.c.b16 %v465, %v464
  %v512 = vpack.c.b16 %v467, %v466
  %v513 = vpack.c.b16 %v469, %v468
  %v514 = vpack.c.b16 %v471, %v470
  %v515 = vpack.c.b16 %v473, %v472
  %v516 = vpack.c.b16 %v475, %v474
  %v517 = vpack.c.b16 %v477, %v476
  %v518 = vpack.c.b16 %v479, %v478
  %v519 = vpack.c.b16 %v481, %v480
  %v520 = vpack.c.b16 %v483, %v482
  %v521 = vpack.c.b16 %v485, %v484
  %vm558 = vcmask 523264
  %v560 = vsel %vm558, %v274, 0
  %v563 = vsel %vm558, %v279, 0
  %v566 = vsel %vm558, %v284, 0
  %v569 = vsel %vm558, %v289, 0
  %v572 = vsel %vm558, %v294, 0
  %v575 = vsel %vm558, %v299, 0
  %v578 = vsel %vm558, %v304, 0
  %v581 = vsel %vm558, %v309, 0
  %583 = vmatprep.subr.bf16.mxu0 0
  %584 = vmatpush1.bf16.msra.mxu0 %v493
  %585 = vmatprep.subr.bf16.mxu0 0
  %586 = vmatpush1.bf16.msra.mxu0 %v492
  %587 = vmatprep.subr.bf16.mxu0 0
  %588 = vmatpush1.bf16.msra.mxu0 %v491
  %589 = vmatprep.subr.bf16.mxu0 0
  %590 = vmatpush1.bf16.msra.mxu0 %v490
  %591 = vmatprep.subr.bf16.mxu0 0
  %592 = vmatpush1.bf16.msra.mxu0 %v489
  %593 = vmatprep.subr.bf16.mxu0 0
  %594 = vmatpush1.bf16.msra.mxu0 %v488
  %595 = vmatprep.subr.bf16.mxu0 0
  %596 = vmatpush1.bf16.msra.mxu0 %v487
  %597 = vmatprep.subr.bf16.mxu0 0
  %598 = vmatpush1.bf16.msra.mxu0 %v486
  %599 = vmatprep.subr.bf16.mxu0 0
  %600 = vmatpush2.bf16.msra.mxu0 %v501
  %601 = vmatprep.subr.bf16.mxu0 0
  %602 = vmatpush2.bf16.msra.mxu0 %v500
  %603 = vmatprep.subr.bf16.mxu0 0
  %604 = vmatpush2.bf16.msra.mxu0 %v499
  %605 = vmatprep.subr.bf16.mxu0 0
  %606 = vmatpush2.bf16.msra.mxu0 %v498
  %607 = vmatprep.subr.bf16.mxu0 0
  %608 = vmatpush2.bf16.msra.mxu0 %v497
  %609 = vmatprep.subr.bf16.mxu0 0
  %610 = vmatpush2.bf16.msra.mxu0 %v496
  %611 = vmatprep.subr.bf16.mxu0 0
  %612 = vmatpush2.bf16.msra.mxu0 %v495
  %613 = vmatprep.subr.bf16.mxu0 0
  %614 = vmatpush2.bf16.msra.mxu0 %v494
  %615 = vmatprep.mubr.bf16.mxu0 %v271
  %616 = vmatmul.mubr.bf16.gmra.mxu0 %v270
  %v617 = vpop.f32.mrf.mxu0
  %v618 = vadd.f32 %v140, %v617
  %v619 = vpop.f32.mrf.mxu0
  %v620 = vpop.f32.mrf.mxu0
  %v621 = vadd.f32 %v140, %v620
  %v622 = vpop.f32.mrf.mxu0
  %623 = vmatprep.mubr.bf16.mxu0 %v276
  %624 = vmatmul.mubr.bf16.gmra.mxu0 %v275
  %v625 = vpop.f32.mrf.mxu0
  %v626 = vadd.f32 %v140, %v625
  %v627 = vpop.f32.mrf.mxu0
  %v628 = vpop.f32.mrf.mxu0
  %v629 = vadd.f32 %v140, %v628
  %v630 = vpop.f32.mrf.mxu0
  %631 = vmatprep.mubr.bf16.mxu0 %v281
  %632 = vmatmul.mubr.bf16.gmra.mxu0 %v280
  %v633 = vpop.f32.mrf.mxu0
  %v634 = vadd.f32 %v140, %v633
  %v635 = vpop.f32.mrf.mxu0
  %v636 = vpop.f32.mrf.mxu0
  %v637 = vadd.f32 %v140, %v636
  %v638 = vpop.f32.mrf.mxu0
  %639 = vmatprep.mubr.bf16.mxu0 %v286
  %640 = vmatmul.mubr.bf16.gmra.mxu0 %v285
  %v641 = vpop.f32.mrf.mxu0
  %v642 = vadd.f32 %v140, %v641
  %v643 = vpop.f32.mrf.mxu0
  %v644 = vpop.f32.mrf.mxu0
  %v645 = vadd.f32 %v140, %v644
  %v646 = vpop.f32.mrf.mxu0
  %647 = vmatprep.mubr.bf16.mxu0 %v291
  %648 = vmatmul.mubr.bf16.gmra.mxu0 %v290
  %v649 = vpop.f32.mrf.mxu0
  %v650 = vadd.f32 %v140, %v649
  %v651 = vpop.f32.mrf.mxu0
  %v652 = vpop.f32.mrf.mxu0
  %v653 = vadd.f32 %v140, %v652
  %v654 = vpop.f32.mrf.mxu0
  %655 = vmatprep.mubr.bf16.mxu0 %v296
  %656 = vmatmul.mubr.bf16.gmra.mxu0 %v295
  %v657 = vpop.f32.mrf.mxu0
  %v658 = vadd.f32 %v140, %v657
  %v659 = vpop.f32.mrf.mxu0
  %v660 = vpop.f32.mrf.mxu0
  %v661 = vadd.f32 %v140, %v660
  %v662 = vpop.f32.mrf.mxu0
  %663 = vmatprep.mubr.bf16.mxu0 %v301
  %664 = vmatmul.mubr.bf16.gmra.mxu0 %v300
  %v665 = vpop.f32.mrf.mxu0
  %v666 = vadd.f32 %v140, %v665
  %v667 = vpop.f32.mrf.mxu0
  %v668 = vpop.f32.mrf.mxu0
  %v669 = vadd.f32 %v140, %v668
  %v670 = vpop.f32.mrf.mxu0
  %671 = vmatprep.mubr.bf16.mxu0 %v306
  %672 = vmatmul.mubr.bf16.gmra.mxu0 %v305
  %v673 = vpop.f32.mrf.mxu0
  %v674 = vadd.f32 %v140, %v673
  %v675 = vpop.f32.mrf.mxu0
  %v676 = vpop.f32.mrf.mxu0
  %v677 = vadd.f32 %v140, %v676
  %v678 = vpop.f32.mrf.mxu0
  %679 = vdwg.mxu0
  %680 = vmatprep.subr.bf16.mxu0 0
  %681 = vmatpush1.bf16.msra.mxu0 %v509
  %682 = vmatprep.subr.bf16.mxu0 0
  %683 = vmatpush1.bf16.msra.mxu0 %v508
  %684 = vmatprep.subr.bf16.mxu0 0
  %685 = vmatpush1.bf16.msra.mxu0 %v507
  %686 = vmatprep.subr.bf16.mxu0 0
  %687 = vmatpush1.bf16.msra.mxu0 %v506
  %688 = vmatprep.subr.bf16.mxu0 0
  %689 = vmatpush1.bf16.msra.mxu0 %v505
  %690 = vmatprep.subr.bf16.mxu0 0
  %691 = vmatpush1.bf16.msra.mxu0 %v504
  %692 = vmatprep.subr.bf16.mxu0 0
  %693 = vmatpush1.bf16.msra.mxu0 %v503
  %694 = vmatprep.subr.bf16.mxu0 0
  %695 = vmatpush1.bf16.msra.mxu0 %v502
  %696 = vmatprep.subr.bf16.mxu0 0
  %697 = vmatpush2.bf16.msra.mxu0 %v517
  %698 = vmatprep.subr.bf16.mxu0 0
  %699 = vmatpush2.bf16.msra.mxu0 %v516
  %700 = vmatprep.subr.bf16.mxu0 0
  %701 = vmatpush2.bf16.msra.mxu0 %v515
  %702 = vmatprep.subr.bf16.mxu0 0
  %703 = vmatpush2.bf16.msra.mxu0 %v514
  %704 = vmatprep.subr.bf16.mxu0 0
  %705 = vmatpush2.bf16.msra.mxu0 %v513
  %706 = vmatprep.subr.bf16.mxu0 0
  %707 = vmatpush2.bf16.msra.mxu0 %v512
  %708 = vmatprep.subr.bf16.mxu0 0
  %709 = vmatpush2.bf16.msra.mxu0 %v511
  %710 = vmatprep.subr.bf16.mxu0 0
  %711 = vmatpush2.bf16.msra.mxu0 %v510
  %712 = vmatprep.mubr.bf16.mxu0 %v273
  %713 = vmatmul.mubr.bf16.gmra.mxu0 %v272
  %v714 = vpop.f32.mrf.mxu0
  %v715 = vadd.f32 %v618, %v714
  %v716 = vpop.f32.mrf.mxu0
  %v717 = vpop.f32.mrf.mxu0
  %v718 = vadd.f32 %v621, %v717
  %v719 = vpop.f32.mrf.mxu0
  %720 = vmatprep.mubr.bf16.mxu0 %v278
  %721 = vmatmul.mubr.bf16.gmra.mxu0 %v277
  %v722 = vpop.f32.mrf.mxu0
  %v723 = vadd.f32 %v626, %v722
  %v724 = vpop.f32.mrf.mxu0
  %v725 = vpop.f32.mrf.mxu0
  %v726 = vadd.f32 %v629, %v725
  %v727 = vpop.f32.mrf.mxu0
  %728 = vmatprep.mubr.bf16.mxu0 %v283
  %729 = vmatmul.mubr.bf16.gmra.mxu0 %v282
  %v730 = vpop.f32.mrf.mxu0
  %v731 = vadd.f32 %v634, %v730
  %v732 = vpop.f32.mrf.mxu0
  %v733 = vpop.f32.mrf.mxu0
  %v734 = vadd.f32 %v637, %v733
  %v735 = vpop.f32.mrf.mxu0
  %736 = vmatprep.mubr.bf16.mxu0 %v288
  %737 = vmatmul.mubr.bf16.gmra.mxu0 %v287
  %v738 = vpop.f32.mrf.mxu0
  %v739 = vadd.f32 %v642, %v738
  %v740 = vpop.f32.mrf.mxu0
  %v741 = vpop.f32.mrf.mxu0
  %v742 = vadd.f32 %v645, %v741
  %v743 = vpop.f32.mrf.mxu0
  %744 = vmatprep.mubr.bf16.mxu0 %v293
  %745 = vmatmul.mubr.bf16.gmra.mxu0 %v292
  %v746 = vpop.f32.mrf.mxu0
  %v747 = vadd.f32 %v650, %v746
  %v748 = vpop.f32.mrf.mxu0
  %v749 = vpop.f32.mrf.mxu0
  %v750 = vadd.f32 %v653, %v749
  %v751 = vpop.f32.mrf.mxu0
  %752 = vmatprep.mubr.bf16.mxu0 %v298
  %753 = vmatmul.mubr.bf16.gmra.mxu0 %v297
  %v754 = vpop.f32.mrf.mxu0
  %v755 = vadd.f32 %v658, %v754
  %v756 = vpop.f32.mrf.mxu0
  %v757 = vpop.f32.mrf.mxu0
  %v758 = vadd.f32 %v661, %v757
  %v759 = vpop.f32.mrf.mxu0
  %760 = vmatprep.mubr.bf16.mxu0 %v303
  %761 = vmatmul.mubr.bf16.gmra.mxu0 %v302
  %v762 = vpop.f32.mrf.mxu0
  %v763 = vadd.f32 %v666, %v762
  %v764 = vpop.f32.mrf.mxu0
  %v765 = vpop.f32.mrf.mxu0
  %v766 = vadd.f32 %v669, %v765
  %v767 = vpop.f32.mrf.mxu0
  %768 = vmatprep.mubr.bf16.mxu0 %v308
  %769 = vmatmul.mubr.bf16.gmra.mxu0 %v307
  %v770 = vpop.f32.mrf.mxu0
  %v771 = vadd.f32 %v674, %v770
  %v772 = vpop.f32.mrf.mxu0
  %v773 = vpop.f32.mrf.mxu0
  %v774 = vadd.f32 %v677, %v773
  %v775 = vpop.f32.mrf.mxu0
  %776 = vdwg.mxu0
  %777 = vmatprep.subr.bf16.mxu0 0
  %778 = vmatpush1.bf16.msra.mxu0 0
  %779 = vmatprep.subr.bf16.mxu0 0
  %780 = vmatpush1.bf16.msra.mxu0 0
  %781 = vmatprep.subr.bf16.mxu0 0
  %782 = vmatpush1.bf16.msra.mxu0 0
  %783 = vmatprep.subr.bf16.mxu0 0
  %784 = vmatpush1.bf16.msra.mxu0 0
  %785 = vmatprep.subr.bf16.mxu0 0
  %786 = vmatpush1.bf16.msra.mxu0 %v521
  %787 = vmatprep.subr.bf16.mxu0 0
  %788 = vmatpush1.bf16.msra.mxu0 %v520
  %789 = vmatprep.subr.bf16.mxu0 0
  %790 = vmatpush1.bf16.msra.mxu0 %v519
  %791 = vmatprep.subr.bf16.mxu0 0
  %792 = vmatpush1.bf16.msra.mxu0 %v518
  %793 = vmatprep.subr.bf16.mxu0 0
  %794 = vmatpush2.bf16.msra.mxu0 0
  %795 = vmatprep.subr.bf16.mxu0 0
  %796 = vmatpush2.bf16.msra.mxu0 0
  %797 = vmatprep.subr.bf16.mxu0 0
  %798 = vmatpush2.bf16.msra.mxu0 0
  %799 = vmatprep.subr.bf16.mxu0 0
  %800 = vmatpush2.bf16.msra.mxu0 0
  %801 = vmatprep.subr.bf16.mxu0 0
  %802 = vmatpush2.bf16.msra.mxu0 0
  %803 = vmatprep.subr.bf16.mxu0 0
  %804 = vmatpush2.bf16.msra.mxu0 0
  %805 = vmatprep.subr.bf16.mxu0 0
  %806 = vmatpush2.bf16.msra.mxu0 0
  %807 = vmatprep.subr.bf16.mxu0 0
  %808 = vmatpush2.bf16.msra.mxu0 0
  %809 = vmatprep.mubr.bf16.mxu0 0
  %810 = vmatmul.mubr.bf16.gmra.mxu0 %v560
  %v811 = vpop.f32.mrf.mxu0
  %v812 = vadd.f32 %v715, %v811
  %v813 = vpop.f32.mrf.mxu0
  %v814 = vpop.f32.mrf.mxu0
  %v815 = vadd.f32 %v718, %v814
  %v816 = vpop.f32.mrf.mxu0
  %817 = vmatprep.mubr.bf16.mxu0 0
  %818 = vmatmul.mubr.bf16.gmra.mxu0 %v563
  %v819 = vpop.f32.mrf.mxu0
  %v820 = vadd.f32 %v723, %v819
  %v821 = vpop.f32.mrf.mxu0
  %v822 = vpop.f32.mrf.mxu0
  %v823 = vadd.f32 %v726, %v822
  %v824 = vpop.f32.mrf.mxu0
  %825 = vmatprep.mubr.bf16.mxu0 0
  %826 = vmatmul.mubr.bf16.gmra.mxu0 %v566
  %v827 = vpop.f32.mrf.mxu0
  %v828 = vadd.f32 %v731, %v827
  %v829 = vpop.f32.mrf.mxu0
  %v830 = vpop.f32.mrf.mxu0
  %v831 = vadd.f32 %v734, %v830
  %v832 = vpop.f32.mrf.mxu0
  %833 = vmatprep.mubr.bf16.mxu0 0
  %834 = vmatmul.mubr.bf16.gmra.mxu0 %v569
  %v835 = vpop.f32.mrf.mxu0
  %v836 = vadd.f32 %v739, %v835
  %v837 = vpop.f32.mrf.mxu0
  %v838 = vpop.f32.mrf.mxu0
  %v839 = vadd.f32 %v742, %v838
  %v840 = vpop.f32.mrf.mxu0
  %841 = vmatprep.mubr.bf16.mxu0 0
  %842 = vmatmul.mubr.bf16.gmra.mxu0 %v572
  %v843 = vpop.f32.mrf.mxu0
  %v844 = vadd.f32 %v747, %v843
  %v845 = vpop.f32.mrf.mxu0
  %v846 = vpop.f32.mrf.mxu0
  %v847 = vadd.f32 %v750, %v846
  %v848 = vpop.f32.mrf.mxu0
  %849 = vmatprep.mubr.bf16.mxu0 0
  %850 = vmatmul.mubr.bf16.gmra.mxu0 %v575
  %v851 = vpop.f32.mrf.mxu0
  %v852 = vadd.f32 %v755, %v851
  %v853 = vpop.f32.mrf.mxu0
  %v854 = vpop.f32.mrf.mxu0
  %v855 = vadd.f32 %v758, %v854
  %v856 = vpop.f32.mrf.mxu0
  %857 = vmatprep.mubr.bf16.mxu0 0
  %858 = vmatmul.mubr.bf16.gmra.mxu0 %v578
  %v859 = vpop.f32.mrf.mxu0
  %v860 = vadd.f32 %v763, %v859
  %v861 = vpop.f32.mrf.mxu0
  %v862 = vpop.f32.mrf.mxu0
  %v863 = vadd.f32 %v766, %v862
  %v864 = vpop.f32.mrf.mxu0
  %865 = vmatprep.mubr.bf16.mxu0 0
  %866 = vmatmul.mubr.bf16.gmra.mxu0 %v581
  %v867 = vpop.f32.mrf.mxu0
  %v868 = vadd.f32 %v771, %v867
  %v869 = vpop.f32.mrf.mxu0
  %v870 = vpop.f32.mrf.mxu0
  %v871 = vadd.f32 %v774, %v870
  %v872 = vpop.f32.mrf.mxu0
  %873 = vdwg.mxu0
  %v874 = vmax.f32 %v812, 0.0
  %v875 = vmax.f32 %v815, 0.0
  %v876 = vmax.f32 %v820, 0.0
  %v877 = vmax.f32 %v823, 0.0
  %v878 = vmax.f32 %v828, 0.0
  %v879 = vmax.f32 %v831, 0.0
  %v880 = vmax.f32 %v836, 0.0
  %v881 = vmax.f32 %v839, 0.0
  %v882 = vmax.f32 %v844, 0.0
  %v883 = vmax.f32 %v847, 0.0
  %v884 = vmax.f32 %v852, 0.0
  %v885 = vmax.f32 %v855, 0.0
  %v886 = vmax.f32 %v860, 0.0
  %v887 = vmax.f32 %v863, 0.0
  %v888 = vmax.f32 %v868, 0.0
  %v889 = vmax.f32 %v871, 0.0
  %890 = vst [vmem:[%s3] sm:$0xff] %v874
  %891 = vst [vmem:[%s3 + $0x8] sm:$0xff] %v875
  %892 = vst [vmem:[%s3 + $0x10] sm:$0xff] %v876
  %893 = vst [vmem:[%s3 + $0x18] sm:$0xff] %v877
  %894 = vst [vmem:[%s3 + $0x20] sm:$0xff] %v878
  %895 = vst [vmem:[%s3 + $0x28] sm:$0xff] %v879
  %896 = vst [vmem:[%s3 + $0x30] sm:$0xff] %v880
  %897 = vst [vmem:[%s3 + $0x38] sm:$0xff] %v881
  %898 = vst [vmem:[%s3 + $0x40] sm:$0xff] %v882
  %899 = vst [vmem:[%s3 + $0x48] sm:$0xff] %v883
  %900 = vst [vmem:[%s3 + $0x50] sm:$0xff] %v884
  %901 = vst [vmem:[%s3 + $0x58] sm:$0xff] %v885
  %902 = vst [vmem:[%s3 + $0x60] sm:$0xff] %v886
  %903 = vst [vmem:[%s3 + $0x68] sm:$0xff] %v887
  %904 = vst [vmem:[%s3 + $0x70] sm:$0xff] %v888
  %905 = vst [vmem:[%s3 + $0x78] sm:$0xff] %v889
  // Predicated region
  $region14: #{beta_vae_forward.16} parent=0 // pred_check
    _
  $region15: #{beta_vae_forward.16} parent=0 // pred_check_branch
    %907 = sbr.rel (0) target = $region17
  $region16: #{beta_vae_forward.16} parent=0 // pred_region
    _
  $region17: #{beta_vae_forward.16} parent=0 // pred_fallthru
    _
  // Predicated region
  $region18: #{beta_vae_forward.16} parent=0 // pred_check
    _
  $region19: #{beta_vae_forward.16} parent=0 // pred_check_branch
    %909 = sbr.rel (0) target = $region21
  $region20: #{beta_vae_forward.16} parent=0 // pred_region
    _
  $region21: #{beta_vae_forward.16} parent=0 // pred_fallthru
    _

// kernel: tile.28
$region0: #{tile.28}
  #allocation0 [shape = 's32[1]{0}', space=sflag, size = 0x4, scoped, tag = 'scoped memory for tile.28']
  %s0 = inlined_call_operand.vmem [shape: f32[3], index: 0, kind: input, shape index: {}]
  %s1 = inlined_call_operand.vmem [shape: f32[4,3], index: 1, kind: output, shape index: {}]
  // Predicated region
  $region2: #{tile.28} parent=0 // pred_check
    _
  $region3: #{tile.28} parent=0 // pred_check_branch
    %3 = sbr.rel (0) target = $region5
  $region4: #{tile.28} parent=0 // pred_region
    _
  $region5: #{tile.28} parent=0 // pred_fallthru
    _
  %v4 = vld [vmem:[%s0] ss:$0 sm:$0xff]
  %5 = vst [vmem:[%s1] sm:$0xf] %v4

// kernel: tile.29
$region0: #{tile.29}
  %s0 = inlined_call_operand.vmem [shape: f32[4,3], index: 0, kind: input, shape index: {}]
  %s1 = inlined_call_operand.vmem [shape: f32[12], index: 1, kind: output, shape index: {}]
  $region1: #{tile.29} parent=0
    #allocation0 [shape = 'u8[4096]{0}', space=vmem, size = 0x1000, scoped, tag = 'scoped mem for output reshape']
    #allocation1 [shape = 'u8[4096]{0}', space=vmem, size = 0x1000, scoped, tag = 'scoped mem for input reshape']
    %s3 = sshll.u32 1, 4
    %s4 = ssub.s32 %s3, 1
    %v5 = vld [vmem:[%s0] sm:%s4]
    %6 = vst [vmem:[#allocation1] sm:%s4] %v5
    %v7 = vld [vmem:[#allocation1] sm:$0x1]
    %vm8 = vcmask 23552
    %9 = vst.msk [vmem:[#allocation0] sm:$0x1] %vm8, %v7
    %s10 = scalar_lea.vmem [#allocation1], 3
    %v11 = vld [vmem:[%s10] sm:$0x1]
    %12 = vrot.lane.b32.xlu0 %v11, 9
    %v13 = vpop.permute.xlu0 %12
    %vm14 = vcmask 97352
    %15 = vst.msk [vmem:[#allocation0] sm:$0x1] %vm14, %v13
    %s16 = scalar_lea.vmem [#allocation1], 2
    %v17 = vld [vmem:[%s16] sm:$0x1]
    %18 = vrot.lane.b32.xlu0 %v17, 6
    %v19 = vpop.permute.xlu0 %18
    %vm20 = vcmask 72752
    %21 = vst.msk [vmem:[#allocation0] sm:$0x1] %vm20, %v19
    %s22 = scalar_lea.vmem [#allocation1], 1
    %v23 = vld [vmem:[%s22] sm:$0x1]
    %24 = vrot.lane.b32.xlu0 %v23, 3
    %v25 = vpop.permute.xlu0 %24
    %vm26 = vcmask 48152
    %27 = vst.msk [vmem:[#allocation0] sm:$0x1] %vm26, %v25
    %s29 = sshll.u32 1, 1
    %s30 = ssub.s32 %s29, 1
    %v32 = vld [vmem:[#allocation0] sm:%s30]
    %s33 = sshll.u32 1, 1
    %s34 = ssub.s32 %s33, 1
    %35 = vst [vmem:[%s1] sm:%s34] %v32

// kernel: beta_vae_forward.17
$region0: #{beta_vae_forward.17}
  #allocation0 [shape = 'u32[]', space=smem, size = 0x4, offset = 0x4, fixed_abs, tag = 'smem constant byte address 0x4 - core index']
  #allocation1 [shape = 'u32[144,128]{1,0:T(1,128)}', space=vmem, size = 0x12000, scoped, tag = 'internal scratch']
  %s0 = inlined_call_operand.vmem [shape: bf16[512,288], index: 0, kind: input, shape index: {}]
  %s1 = inlined_call_operand.vmem [shape: bf16[288,128], index: 1, kind: input, shape index: {}]
  %s2 = inlined_call_operand.vmem [shape: f32[1,128], index: 2, kind: input, shape index: {}]
  %s3 = inlined_call_operand.vmem [shape: f32[512,128], index: 3, kind: output, shape index: {}]
  %s4 = sld [smem:[#allocation0]]
  $region45: #{beta_vae_forward.17} parent=0
    _
  %s6 = ssub.s32 1, %s4
  %s7 = scalar_select 0, %s6, %s4
  loop: start=0, step=1, limit=4
  $region2: #{beta_vae_forward.17} parent=0 // loop_pre_header
    _
  $region3: #{beta_vae_forward.17} parent=0 // loop_header
    %s9 = sphi 0, %s13
    %p10 = scmp.ge.s32.totalorder %s9, 4
    %s19 = sphi 0, %s21
    %s22 = sphi 0, %s19
    %s23 = sphi 0, %s22
    %s39 = sphi 0, %s23
    %s43 = sphi 0, %s43
    %s45 = sphi 0, %s43
    %s46 = sphi 0, %s45
    %s60 = sphi 0, %s46
    %s64 = sphi 0, %s64
    %s66 = sphi 0, %s64
    %s67 = sphi 0, %s66
    %s81 = sphi 0, %s67
    %s87 = sphi 0, %s89
    %s90 = sphi 0, %s87
    %s91 = sphi 0, %s90
    %s107 = sphi 0, %s91
  $region4: #{beta_vae_forward.17} parent=0 // loop_header_branch
    %12 = sbr.rel (%p10) target = $region8
  $region5: #{beta_vae_forward.17} parent=0 // loop_body
    %s14 = ssub.s32 %s9, 1
    %s15 = ssub.s32 %s9, 2
    %s16 = sadd.s32 %s9, 1
    %s17 = ssub.s32 %s9, %s16
    %p18 = scmp.eq.s32.totalorder %s17, 0
    %s20 = sadd.s32 %s19, 1
    %s21 = scalar_select %p18, %s19, %s20
    %p24 = pneg %p18
    %p25 = scmp.eq.s32.totalorder %s9, 1
    %p26 = por %p24, %p25
    %p27 = scmp.ne.s32.totalorder %s19, %s22
    %p28 = scmp.eq.s32.totalorder %s9, 0
    %p29 = por %p27, %p28
    %p30 = scmp.ne.s32.totalorder %s19, %s22
    %p31 = scmp.eq.s32.totalorder %s14, 1
    %p32 = por %p30, %p31
    %p33 = scmp.ne.s32.totalorder %s22, %s23
    %p34 = scmp.eq.s32.totalorder %s14, 0
    %p35 = por %p33, %p34
    %p36 = scmp.ne.s32.totalorder %s22, %s23
    %p37 = scmp.eq.s32.totalorder %s15, 1
    %p38 = por %p36, %p37
    %p40 = scmp.ne.s32.totalorder %s23, %s39
    %p41 = scmp.eq.s32.totalorder %s15, 0
    %p42 = por %p40, %p41
    %s44 = sadd.s32 %s43, 1
    %p47 = scmp.eq.s32.totalorder %s9, 1
    %p48 = scmp.ne.s32.totalorder %s43, %s45
    %p49 = scmp.eq.s32.totalorder %s9, 0
    %p50 = por %p48, %p49
    %p51 = scmp.ne.s32.totalorder %s43, %s45
    %p52 = scmp.eq.s32.totalorder %s14, 1
    %p53 = por %p51, %p52
    %p54 = scmp.ne.s32.totalorder %s45, %s46
    %p55 = scmp.eq.s32.totalorder %s14, 0
    %p56 = por %p54, %p55
    %p57 = scmp.ne.s32.totalorder %s45, %s46
    %p58 = scmp.eq.s32.totalorder %s15, 1
    %p59 = por %p57, %p58
    %p61 = scmp.ne.s32.totalorder %s46, %s60
    %p62 = scmp.eq.s32.totalorder %s15, 0
    %p63 = por %p61, %p62
    %s65 = sadd.s32 %s64, 1
    %p68 = scmp.eq.s32.totalorder %s9, 1
    %p69 = scmp.ne.s32.totalorder %s64, %s66
    %p70 = scmp.eq.s32.totalorder %s9, 0
    %p71 = por %p69, %p70
    %p72 = scmp.ne.s32.totalorder %s64, %s66
    %p73 = scmp.eq.s32.totalorder %s14, 1
    %p74 = por %p72, %p73
    %p75 = scmp.ne.s32.totalorder %s66, %s67
    %p76 = scmp.eq.s32.totalorder %s14, 0
    %p77 = por %p75, %p76
    %p78 = scmp.ne.s32.totalorder %s66, %s67
    %p79 = scmp.eq.s32.totalorder %s15, 1
    %p80 = por %p78, %p79
    %p82 = scmp.ne.s32.totalorder %s67, %s81
    %p83 = scmp.eq.s32.totalorder %s15, 0
    %p84 = por %p82, %p83
    %s85 = ssub.s32 %s9, %s16
    %p86 = scmp.eq.s32.totalorder %s85, 0
    %s88 = sadd.s32 %s87, 1
    %s89 = scalar_select %p86, %s87, %s88
    %p92 = pneg %p86
    %p93 = scmp.eq.s32.totalorder %s9, 1
    %p94 = por %p92, %p93
    %p95 = scmp.ne.s32.totalorder %s87, %s90
    %p96 = scmp.eq.s32.totalorder %s9, 0
    %p97 = por %p95, %p96
    %p98 = scmp.ne.s32.totalorder %s87, %s90
    %p99 = scmp.eq.s32.totalorder %s14, 1
    %p100 = por %p98, %p99
    %p101 = scmp.ne.s32.totalorder %s90, %s91
    %p102 = scmp.eq.s32.totalorder %s14, 0
    %p103 = por %p101, %p102
    %p104 = scmp.ne.s32.totalorder %s90, %s91
    %p105 = scmp.eq.s32.totalorder %s15, 1
    %p106 = por %p104, %p105
    %p108 = scmp.ne.s32.totalorder %s91, %s107
    %p109 = scmp.eq.s32.totalorder %s15, 0
    %p110 = por %p108, %p109
    %p111 = scmp.le.s32.totalorder 1, %s9
    %p112 = scmp.lt.s32.totalorder %s9, 3
    %p113 = pnand %p111, %p112
    %p114 = pneg %p113
    // Predicated region
    $region9: #{beta_vae_forward.17} parent=5 // pred_check
      _
    $region10: #{beta_vae_forward.17} parent=5 // pred_check_branch
      %116 = sbr.rel (%p113) target = $region12
    $region11: #{beta_vae_forward.17} parent=5 // pred_region
      %s117 = ssub.s32 %s9, 1
      // Predicated region
      $region13: #{beta_vae_forward.17} parent=11 // pred_check
        %p118 = pneg %p56
      $region14: #{beta_vae_forward.17} parent=11 // pred_check_branch
        %120 = sbr.rel (%p118) target = $region16
      $region15: #{beta_vae_forward.17} parent=11 // pred_region
        _
      $region16: #{beta_vae_forward.17} parent=11 // pred_fallthru
        _
      // Predicated region
      $region17: #{beta_vae_forward.17} parent=11 // pred_check
        %p121 = pneg %p77
      $region18: #{beta_vae_forward.17} parent=11 // pred_check_branch
        %123 = sbr.rel (%p121) target = $region20
      $region19: #{beta_vae_forward.17} parent=11 // pred_region
        _
      $region20: #{beta_vae_forward.17} parent=11 // pred_fallthru
        _
    $region12: #{beta_vae_forward.17} parent=5 // pred_fallthru
      _
    %p124 = scmp.lt.s32.totalorder %s9, 2
    // Predicated region
    $region21: #{beta_vae_forward.17} parent=5 // pred_check
      %p125 = pneg %p124
    $region22: #{beta_vae_forward.17} parent=5 // pred_check_branch
      %127 = sbr.rel (%p125) target = $region24
    $region23: #{beta_vae_forward.17} parent=5 // pred_region
      // Predicated region
      $region25: #{beta_vae_forward.17} parent=23 // pred_check
        %p128 = pneg %p29
      $region26: #{beta_vae_forward.17} parent=23 // pred_check_branch
        %130 = sbr.rel (%p128) target = $region28
      $region27: #{beta_vae_forward.17} parent=23 // pred_region
        %s131 = smul.u32 32, %s9
        %p132 = scmp.lt.s32.totalorder %s131, 63
        %s133 = scalar_select %p132, %s131, 63
        %s134 = smul.addr %s133, 3
        %s135 = smul.addr %s134, 4
        %s136 = scalar_lea.vmem %s0, %s135
        %s137 = smul.u32 32, %s9
      $region28: #{beta_vae_forward.17} parent=23 // pred_fallthru
        _
    $region24: #{beta_vae_forward.17} parent=5 // pred_fallthru
      _
    %p138 = scmp.le.s32.totalorder 1, %s9
    %p139 = scmp.lt.s32.totalorder %s9, 3
    %p140 = pnand %p138, %p139
    %p141 = pneg %p140
    // Predicated region
    $region29: #{beta_vae_forward.17} parent=5 // pred_check
      _
    $region30: #{beta_vae_forward.17} parent=5 // pred_check_branch
      %143 = sbr.rel (%p140) target = $region32
    $region31: #{beta_vae_forward.17} parent=5 // pred_region
      %s144 = ssub.s32 %s9, 1
      %s145 = smul.u32 32, %s14
      %p146 = scmp.lt.s32.totalorder %s145, 63
      %s147 = scalar_select %p146, %s145, 63
      %s148 = smul.addr %s147, 3
      %s149 = smul.addr %s148, 4
      %s150 = scalar_lea.vmem %s0, %s149
      %p151 = pneg %p35
      %p152 = pneg %p32
      %p153 = pneg %p56
      %p154 = pneg %p53
      %p155 = pneg %p77
      %p156 = pneg %p74
      %p157 = pneg %p103
      %p158 = pneg %p100
      %s159 = smul.u32 32, %s14
      %p160 = scmp.lt.s32.totalorder %s159, 63
      %s161 = scalar_select %p160, %s159, 63
      %s162 = smul.addr %s161, 8
      %s163 = scalar_lea.vmem %s3, %s162
      %s164 = smul.u32 32, %s14
      %p165 = scmp.lt.s32.totalorder %s164, 63
      %s166 = scalar_select %p165, %s164, 63
      %s167 = smul.addr %s166, 3
      %s168 = smul.addr %s167, 4
      %s169 = scalar_lea.vmem %s0, %s168
      %s170 = smul.u32 32, %s14
      %s171 = smul.u32 32, %s14
      %p172 = scmp.lt.s32.totalorder %s171, 63
      %s173 = scalar_select %p172, %s171, 63
      %s174 = smul.addr %s173, 8
      %s175 = scalar_lea.vmem %s3, %s174
      %s176 = smul.u32 32, %s14
      %v178 = vld [vmem:[%s169] sm:$0xff]
      %v179 = vld [vmem:[%s169 + $0x8] sm:$0xf]
      %v180 = vld [vmem:[%s169 + $0xc] sm:$0xff]
      %v181 = vld [vmem:[%s169 + $0x14] sm:$0xf]
      %v182 = vld [vmem:[%s169 + $0x18] sm:$0xff]
      %v183 = vld [vmem:[%s169 + $0x20] sm:$0xf]
      %v184 = vld [vmem:[%s169 + $0x24] sm:$0xff]
      %v185 = vld [vmem:[%s169 + $0x2c] sm:$0xf]
      %v186 = vld [vmem:[%s169 + $0x30] sm:$0xff]
      %v187 = vld [vmem:[%s169 + $0x38] sm:$0xf]
      %v188 = vld [vmem:[%s169 + $0x3c] sm:$0xff]
      %v189 = vld [vmem:[%s169 + $0x44] sm:$0xf]
      %v190 = vld [vmem:[%s169 + $0x48] sm:$0xff]
      %v191 = vld [vmem:[%s169 + $0x50] sm:$0xf]
      %v192 = vld [vmem:[%s169 + $0x54] sm:$0xff]
      %v193 = vld [vmem:[%s169 + $0x5c] sm:$0xf]
      %v194 = vld [vmem:[%s169 + $0x60] sm:$0xff]
      %v195 = vld [vmem:[%s169 + $0x68] sm:$0xf]
      %v196 = vld [vmem:[%s169 + $0x6c] sm:$0xff]
      %v197 = vld [vmem:[%s169 + $0x74] sm:$0xf]
      %v198 = vld [vmem:[%s169 + $0x78] sm:$0xff]
      %v199 = vld [vmem:[%s169 + $0x80] sm:$0xf]
      %v200 = vld [vmem:[%s169 + $0x84] sm:$0xff]
      %v201 = vld [vmem:[%s169 + $0x8c] sm:$0xf]
      %v202 = vld [vmem:[%s169 + $0x90] sm:$0xff]
      %v203 = vld [vmem:[%s169 + $0x98] sm:$0xf]
      %v204 = vld [vmem:[%s169 + $0x9c] sm:$0xff]
      %v205 = vld [vmem:[%s169 + $0xa4] sm:$0xf]
      %v206 = vld [vmem:[%s169 + $0xa8] sm:$0xff]
      %v207 = vld [vmem:[%s169 + $0xb0] sm:$0xf]
      %v208 = vld [vmem:[%s169 + $0xb4] sm:$0xff]
      %v209 = vld [vmem:[%s169 + $0xbc] sm:$0xf]
      %v210 = vld [vmem:[%s169 + $0xc0] sm:$0xff]
      %v211 = vld [vmem:[%s169 + $0xc8] sm:$0xf]
      %v212 = vld [vmem:[%s169 + $0xcc] sm:$0xff]
      %v213 = vld [vmem:[%s169 + $0xd4] sm:$0xf]
      %v214 = vld [vmem:[%s169 + $0xd8] sm:$0xff]
      %v215 = vld [vmem:[%s169 + $0xe0] sm:$0xf]
      %v216 = vld [vmem:[%s169 + $0xe4] sm:$0xff]
      %v217 = vld [vmem:[%s169 + $0xec] sm:$0xf]
      %v218 = vld [vmem:[%s169 + $0xf0] sm:$0xff]
      %v219 = vld [vmem:[%s169 + $0xf8] sm:$0xf]
      %v220 = vld [vmem:[%s169 + $0xfc] sm:$0xff]
      %v221 = vld [vmem:[%s169 + $0x104] sm:$0xf]
      %v222 = vld [vmem:[%s169 + $0x108] sm:$0xff]
      %v223 = vld [vmem:[%s169 + $0x110] sm:$0xf]
      %v224 = vld [vmem:[%s169 + $0x114] sm:$0xff]
      %v225 = vld [vmem:[%s169 + $0x11c] sm:$0xf]
      %v226 = vld [vmem:[%s169 + $0x120] sm:$0xff]
      %v227 = vld [vmem:[%s169 + $0x128] sm:$0xf]
      %v228 = vld [vmem:[%s169 + $0x12c] sm:$0xff]
      %v229 = vld [vmem:[%s169 + $0x134] sm:$0xf]
      %v230 = vld [vmem:[%s169 + $0x138] sm:$0xff]
      %v231 = vld [vmem:[%s169 + $0x140] sm:$0xf]
      %v232 = vld [vmem:[%s169 + $0x144] sm:$0xff]
      %v233 = vld [vmem:[%s169 + $0x14c] sm:$0xf]
      %v234 = vld [vmem:[%s169 + $0x150] sm:$0xff]
      %v235 = vld [vmem:[%s169 + $0x158] sm:$0xf]
      %v236 = vld [vmem:[%s169 + $0x15c] sm:$0xff]
      %v237 = vld [vmem:[%s169 + $0x164] sm:$0xf]
      %v238 = vld [vmem:[%s169 + $0x168] sm:$0xff]
      %v239 = vld [vmem:[%s169 + $0x170] sm:$0xf]
      %v240 = vld [vmem:[%s169 + $0x174] sm:$0xff]
      %v241 = vld [vmem:[%s169 + $0x17c] sm:$0xf]
      %v242 = vld [vmem:[%s1] sm:$0xf]
      %v243 = vld [vmem:[%s1 + $0x4] sm:$0xf]
      %v244 = vld [vmem:[%s1 + $0x8] sm:$0xf]
      %v245 = vld [vmem:[%s1 + $0xc] sm:$0xf]
      %v246 = vld [vmem:[%s1 + $0x10] sm:$0xf]
      %v247 = vld [vmem:[%s1 + $0x14] sm:$0xf]
      %v248 = vld [vmem:[%s1 + $0x18] sm:$0xf]
      %v249 = vld [vmem:[%s1 + $0x1c] sm:$0xf]
      %v250 = vld [vmem:[%s1 + $0x20] sm:$0xf]
      %v251 = vld [vmem:[%s1 + $0x24] sm:$0xf]
      %v252 = vld [vmem:[%s1 + $0x28] sm:$0xf]
      %v253 = vld [vmem:[%s1 + $0x2c] sm:$0xf]
      %v254 = vld [vmem:[%s1 + $0x30] sm:$0xf]
      %v255 = vld [vmem:[%s1 + $0x34] sm:$0xf]
      %v256 = vld [vmem:[%s1 + $0x38] sm:$0xf]
      %v257 = vld [vmem:[%s1 + $0x3c] sm:$0xf]
      %v258 = vld [vmem:[%s1 + $0x40] sm:$0xf]
      %v259 = vld [vmem:[%s1 + $0x44] sm:$0xf]
      %v260 = vld [vmem:[%s1 + $0x48] sm:$0xf]
      %v261 = vld [vmem:[%s1 + $0x4c] sm:$0xf]
      %v262 = vld [vmem:[%s1 + $0x50] sm:$0xf]
      %v263 = vld [vmem:[%s1 + $0x54] sm:$0xf]
      %v264 = vld [vmem:[%s1 + $0x58] sm:$0xf]
      %v265 = vld [vmem:[%s1 + $0x5c] sm:$0xf]
      %v266 = vld [vmem:[%s1 + $0x60] sm:$0xf]
      %v267 = vld [vmem:[%s1 + $0x64] sm:$0xf]
      %v268 = vld [vmem:[%s1 + $0x68] sm:$0xf]
      %v269 = vld [vmem:[%s1 + $0x6c] sm:$0xf]
      %v270 = vld [vmem:[%s1 + $0x70] sm:$0xf]
      %v271 = vld [vmem:[%s1 + $0x74] sm:$0xf]
      %v272 = vld [vmem:[%s1 + $0x78] sm:$0xf]
      %v273 = vld [vmem:[%s1 + $0x7c] sm:$0xf]
      %v274 = vld [vmem:[%s1 + $0x80] sm:$0xf]
      %v275 = vld [vmem:[%s1 + $0x84] sm:$0xf]
      %v276 = vld [vmem:[%s1 + $0x88] sm:$0xf]
      %v277 = vld [vmem:[%s1 + $0x8c] sm:$0xf]
      %v278 = vld [vmem:[%s2] sm:$0x1]
      %v280 = vlaneseq
      %v281 = vshrl.u32 %v280, 7
      %v282 = vsub.s32 0, %v281
      %v283 = vrot.slane %v278, %v282
      %v349 = vunpack.c.l.b16 %v178
      %v350 = vunpack.c.h.b16 %v178
      %v351 = vunpack.c.l.b16 %v179
      %v352 = vunpack.c.l.b16 %v180
      %v353 = vunpack.c.h.b16 %v180
      %v354 = vunpack.c.l.b16 %v181
      %v355 = vunpack.c.l.b16 %v182
      %v356 = vunpack.c.h.b16 %v182
      %v357 = vunpack.c.l.b16 %v183
      %v358 = vunpack.c.l.b16 %v184
      %v359 = vunpack.c.h.b16 %v184
      %v360 = vunpack.c.l.b16 %v185
      %v361 = vunpack.c.l.b16 %v186
      %v362 = vunpack.c.h.b16 %v186
      %v363 = vunpack.c.l.b16 %v187
      %v364 = vunpack.c.l.b16 %v188
      %v365 = vunpack.c.h.b16 %v188
      %v366 = vunpack.c.l.b16 %v189
      %v367 = vunpack.c.l.b16 %v190
      %v368 = vunpack.c.h.b16 %v190
      %v369 = vunpack.c.l.b16 %v191
      %v370 = vunpack.c.l.b16 %v192
      %v371 = vunpack.c.h.b16 %v192
      %v372 = vunpack.c.l.b16 %v193
      %v373 = vunpack.c.l.b16 %v194
      %v374 = vunpack.c.h.b16 %v194
      %v375 = vunpack.c.l.b16 %v195
      %v376 = vunpack.c.l.b16 %v196
      %v377 = vunpack.c.h.b16 %v196
      %v378 = vunpack.c.l.b16 %v197
      %v379 = vunpack.c.l.b16 %v198
      %v380 = vunpack.c.h.b16 %v198
      %v381 = vunpack.c.l.b16 %v199
      %v382 = vunpack.c.l.b16 %v200
      %v383 = vunpack.c.h.b16 %v200
      %v384 = vunpack.c.l.b16 %v201
      %v385 = vunpack.c.l.b16 %v202
      %v386 = vunpack.c.h.b16 %v202
      %v387 = vunpack.c.l.b16 %v203
      %v388 = vunpack.c.l.b16 %v204
      %v389 = vunpack.c.h.b16 %v204
      %v390 = vunpack.c.l.b16 %v205
      %v391 = vunpack.c.l.b16 %v206
      %v392 = vunpack.c.h.b16 %v206
      %v393 = vunpack.c.l.b16 %v207
      %v394 = vunpack.c.l.b16 %v208
      %v395 = vunpack.c.h.b16 %v208
      %v396 = vunpack.c.l.b16 %v209
      %v397 = vunpack.c.l.b16 %v210
      %v398 = vunpack.c.h.b16 %v210
      %v399 = vunpack.c.l.b16 %v211
      %v400 = vunpack.c.l.b16 %v212
      %v401 = vunpack.c.h.b16 %v212
      %v402 = vunpack.c.l.b16 %v213
      %v403 = vunpack.c.l.b16 %v214
      %v404 = vunpack.c.h.b16 %v214
      %v405 = vunpack.c.l.b16 %v215
      %v406 = vunpack.c.l.b16 %v216
      %v407 = vunpack.c.h.b16 %v216
      %v408 = vunpack.c.l.b16 %v217
      %v409 = vunpack.c.l.b16 %v218
      %v410 = vunpack.c.h.b16 %v218
      %v411 = vunpack.c.l.b16 %v219
      %v412 = vunpack.c.l.b16 %v220
      %v413 = vunpack.c.h.b16 %v220
      %v414 = vunpack.c.l.b16 %v221
      %v415 = vunpack.c.l.b16 %v222
      %v416 = vunpack.c.h.b16 %v222
      %v417 = vunpack.c.l.b16 %v223
      %v418 = vunpack.c.l.b16 %v224
      %v419 = vunpack.c.h.b16 %v224
      %v420 = vunpack.c.l.b16 %v225
      %v421 = vunpack.c.l.b16 %v226
      %v422 = vunpack.c.h.b16 %v226
      %v423 = vunpack.c.l.b16 %v227
      %v424 = vunpack.c.l.b16 %v228
      %v425 = vunpack.c.h.b16 %v228
      %v426 = vunpack.c.l.b16 %v229
      %v427 = vunpack.c.l.b16 %v230
      %v428 = vunpack.c.h.b16 %v230
      %v429 = vunpack.c.l.b16 %v231
      %v430 = vunpack.c.l.b16 %v232
      %v431 = vunpack.c.h.b16 %v232
      %v432 = vunpack.c.l.b16 %v233
      %v433 = vunpack.c.l.b16 %v234
      %v434 = vunpack.c.h.b16 %v234
      %v435 = vunpack.c.l.b16 %v235
      %v436 = vunpack.c.l.b16 %v236
      %v437 = vunpack.c.h.b16 %v236
      %v438 = vunpack.c.l.b16 %v237
      %v439 = vunpack.c.l.b16 %v238
      %v440 = vunpack.c.h.b16 %v238
      %v441 = vunpack.c.l.b16 %v239
      %v442 = vunpack.c.l.b16 %v240
      %v443 = vunpack.c.h.b16 %v240
      %v444 = vunpack.c.l.b16 %v241
      %v445 = vpack.c.b16 %v352, %v349
      %v446 = vpack.c.b16 %v353, %v350
      %v447 = vpack.c.b16 %v354, %v351
      %v448 = vpack.c.b16 %v358, %v355
      %v449 = vpack.c.b16 %v359, %v356
      %v450 = vpack.c.b16 %v360, %v357
      %v451 = vpack.c.b16 %v364, %v361
      %v452 = vpack.c.b16 %v365, %v362
      %v453 = vpack.c.b16 %v366, %v363
      %v454 = vpack.c.b16 %v370, %v367
      %v455 = vpack.c.b16 %v371, %v368
      %v456 = vpack.c.b16 %v372, %v369
      %v457 = vpack.c.b16 %v376, %v373
      %v458 = vpack.c.b16 %v377, %v374
      %v459 = vpack.c.b16 %v378, %v375
      %v460 = vpack.c.b16 %v382, %v379
      %v461 = vpack.c.b16 %v383, %v380
      %v462 = vpack.c.b16 %v384, %v381
      %v463 = vpack.c.b16 %v388, %v385
      %v464 = vpack.c.b16 %v389, %v386
      %v465 = vpack.c.b16 %v390, %v387
      %v466 = vpack.c.b16 %v394, %v391
      %v467 = vpack.c.b16 %v395, %v392
      %v468 = vpack.c.b16 %v396, %v393
      %v469 = vpack.c.b16 %v400, %v397
      %v470 = vpack.c.b16 %v401, %v398
      %v471 = vpack.c.b16 %v402, %v399
      %v472 = vpack.c.b16 %v406, %v403
      %v473 = vpack.c.b16 %v407, %v404
      %v474 = vpack.c.b16 %v408, %v405
      %v475 = vpack.c.b16 %v412, %v409
      %v476 = vpack.c.b16 %v413, %v410
      %v477 = vpack.c.b16 %v414, %v411
      %v478 = vpack.c.b16 %v418, %v415
      %v479 = vpack.c.b16 %v419, %v416
      %v480 = vpack.c.b16 %v420, %v417
      %v481 = vpack.c.b16 %v424, %v421
      %v482 = vpack.c.b16 %v425, %v422
      %v483 = vpack.c.b16 %v426, %v423
      %v484 = vpack.c.b16 %v430, %v427
      %v485 = vpack.c.b16 %v431, %v428
      %v486 = vpack.c.b16 %v432, %v429
      %v487 = vpack.c.b16 %v436, %v433
      %v488 = vpack.c.b16 %v437, %v434
      %v489 = vpack.c.b16 %v438, %v435
      %v490 = vpack.c.b16 %v442, %v439
      %v491 = vpack.c.b16 %v443, %v440
      %v492 = vpack.c.b16 %v444, %v441
      %v561 = vunpack.c.l.b16 %v242
      %v562 = vunpack.c.l.b16 %v243
      %v563 = vunpack.c.l.b16 %v244
      %v564 = vunpack.c.l.b16 %v245
      %v565 = vunpack.c.l.b16 %v246
      %v566 = vunpack.c.l.b16 %v247
      %v567 = vunpack.c.l.b16 %v248
      %v568 = vunpack.c.l.b16 %v249
      %v569 = vunpack.c.l.b16 %v250
      %v570 = vunpack.c.l.b16 %v251
      %v571 = vunpack.c.l.b16 %v252
      %v572 = vunpack.c.l.b16 %v253
      %v573 = vunpack.c.l.b16 %v254
      %v574 = vunpack.c.l.b16 %v255
      %v575 = vunpack.c.l.b16 %v256
      %v576 = vunpack.c.l.b16 %v257
      %v577 = vunpack.c.l.b16 %v258
      %v578 = vunpack.c.l.b16 %v259
      %v579 = vunpack.c.l.b16 %v260
      %v580 = vunpack.c.l.b16 %v261
      %v581 = vunpack.c.l.b16 %v262
      %v582 = vunpack.c.l.b16 %v263
      %v583 = vunpack.c.l.b16 %v264
      %v584 = vunpack.c.l.b16 %v265
      %v585 = vunpack.c.l.b16 %v266
      %v586 = vunpack.c.l.b16 %v267
      %v587 = vunpack.c.l.b16 %v268
      %v588 = vunpack.c.l.b16 %v269
      %v589 = vunpack.c.l.b16 %v270
      %v590 = vunpack.c.l.b16 %v271
      %v591 = vunpack.c.l.b16 %v272
      %v592 = vunpack.c.l.b16 %v273
      %v593 = vunpack.c.l.b16 %v274
      %v594 = vunpack.c.l.b16 %v275
      %v595 = vunpack.c.l.b16 %v276
      %v596 = vunpack.c.l.b16 %v277
      %v597 = vpack.c.b16 %v562, %v561
      %v598 = vpack.c.b16 %v564, %v563
      %v599 = vpack.c.b16 %v566, %v565
      %v600 = vpack.c.b16 %v568, %v567
      %v601 = vpack.c.b16 %v570, %v569
      %v602 = vpack.c.b16 %v572, %v571
      %v603 = vpack.c.b16 %v574, %v573
      %v604 = vpack.c.b16 %v576, %v575
      %v605 = vpack.c.b16 %v578, %v577
      %v606 = vpack.c.b16 %v580, %v579
      %v607 = vpack.c.b16 %v582, %v581
      %v608 = vpack.c.b16 %v584, %v583
      %v609 = vpack.c.b16 %v586, %v585
      %v610 = vpack.c.b16 %v588, %v587
      %v611 = vpack.c.b16 %v590, %v589
      %v612 = vpack.c.b16 %v592, %v591
      %v613 = vpack.c.b16 %v594, %v593
      %v614 = vpack.c.b16 %v596, %v595
      %vm633 = vcmask 261120
      %v635 = vsel %vm633, %v447, 0
      %v638 = vsel %vm633, %v450, 0
      %v641 = vsel %vm633, %v453, 0
      %v644 = vsel %vm633, %v456, 0
      %v647 = vsel %vm633, %v459, 0
      %v650 = vsel %vm633, %v462, 0
      %v653 = vsel %vm633, %v465, 0
      %v656 = vsel %vm633, %v468, 0
      %v659 = vsel %vm633, %v471, 0
      %v662 = vsel %vm633, %v474, 0
      %v665 = vsel %vm633, %v477, 0
      %v668 = vsel %vm633, %v480, 0
      %v671 = vsel %vm633, %v483, 0
      %v674 = vsel %vm633, %v486, 0
      %v677 = vsel %vm633, %v489, 0
      %v680 = vsel %vm633, %v492, 0
      %682 = vmatprep.subr.bf16.mxu0 0
      %683 = vmatpush1.bf16.msra.mxu0 %v604
      %684 = vmatprep.subr.bf16.mxu0 0
      %685 = vmatpush1.bf16.msra.mxu0 %v603
      %686 = vmatprep.subr.bf16.mxu0 0
      %687 = vmatpush1.bf16.msra.mxu0 %v602
      %688 = vmatprep.subr.bf16.mxu0 0
      %689 = vmatpush1.bf16.msra.mxu0 %v601
      %690 = vmatprep.subr.bf16.mxu0 0
      %691 = vmatpush1.bf16.msra.mxu0 %v600
      %692 = vmatprep.subr.bf16.mxu0 0
      %693 = vmatpush1.bf16.msra.mxu0 %v599
      %694 = vmatprep.subr.bf16.mxu0 0
      %695 = vmatpush1.bf16.msra.mxu0 %v598
      %696 = vmatprep.subr.bf16.mxu0 0
      %697 = vmatpush1.bf16.msra.mxu0 %v597
      %698 = vmatprep.subr.bf16.mxu0 0
      %699 = vmatpush2.bf16.msra.mxu0 %v612
      %700 = vmatprep.subr.bf16.mxu0 0
      %701 = vmatpush2.bf16.msra.mxu0 %v611
      %702 = vmatprep.subr.bf16.mxu0 0
      %703 = vmatpush2.bf16.msra.mxu0 %v610
      %704 = vmatprep.subr.bf16.mxu0 0
      %705 = vmatpush2.bf16.msra.mxu0 %v609
      %706 = vmatprep.subr.bf16.mxu0 0
      %707 = vmatpush2.bf16.msra.mxu0 %v608
      %708 = vmatprep.subr.bf16.mxu0 0
      %709 = vmatpush2.bf16.msra.mxu0 %v607
      %710 = vmatprep.subr.bf16.mxu0 0
      %711 = vmatpush2.bf16.msra.mxu0 %v606
      %712 = vmatprep.subr.bf16.mxu0 0
      %713 = vmatpush2.bf16.msra.mxu0 %v605
      %714 = vmatprep.mubr.bf16.mxu0 %v446
      %715 = vmatmul.mubr.bf16.gmra.mxu0 %v445
      %v716 = vpop.f32.mrf.mxu0
      %v717 = vadd.f32 %v283, %v716
      %v718 = vpop.f32.mrf.mxu0
      %v719 = vpop.f32.mrf.mxu0
      %v720 = vadd.f32 %v283, %v719
      %v721 = vpop.f32.mrf.mxu0
      %722 = vmatprep.mubr.bf16.mxu0 %v449
      %723 = vmatmul.mubr.bf16.gmra.mxu0 %v448
      %v724 = vpop.f32.mrf.mxu0
      %v725 = vadd.f32 %v283, %v724
      %v726 = vpop.f32.mrf.mxu0
      %v727 = vpop.f32.mrf.mxu0
      %v728 = vadd.f32 %v283, %v727
      %v729 = vpop.f32.mrf.mxu0
      %730 = vmatprep.mubr.bf16.mxu0 %v452
      %731 = vmatmul.mubr.bf16.gmra.mxu0 %v451
      %v732 = vpop.f32.mrf.mxu0
      %v733 = vadd.f32 %v283, %v732
      %v734 = vpop.f32.mrf.mxu0
      %v735 = vpop.f32.mrf.mxu0
      %v736 = vadd.f32 %v283, %v735
      %v737 = vpop.f32.mrf.mxu0
      %738 = vmatprep.mubr.bf16.mxu0 %v455
      %739 = vmatmul.mubr.bf16.gmra.mxu0 %v454
      %v740 = vpop.f32.mrf.mxu0
      %v741 = vadd.f32 %v283, %v740
      %v742 = vpop.f32.mrf.mxu0
      %v743 = vpop.f32.mrf.mxu0
      %v744 = vadd.f32 %v283, %v743
      %v745 = vpop.f32.mrf.mxu0
      %746 = vmatprep.mubr.bf16.mxu0 %v458
      %747 = vmatmul.mubr.bf16.gmra.mxu0 %v457
      %v748 = vpop.f32.mrf.mxu0
      %v749 = vadd.f32 %v283, %v748
      %v750 = vpop.f32.mrf.mxu0
      %v751 = vpop.f32.mrf.mxu0
      %v752 = vadd.f32 %v283, %v751
      %v753 = vpop.f32.mrf.mxu0
      %754 = vmatprep.mubr.bf16.mxu0 %v461
      %755 = vmatmul.mubr.bf16.gmra.mxu0 %v460
      %v756 = vpop.f32.mrf.mxu0
      %v757 = vadd.f32 %v283, %v756
      %v758 = vpop.f32.mrf.mxu0
      %v759 = vpop.f32.mrf.mxu0
      %v760 = vadd.f32 %v283, %v759
      %v761 = vpop.f32.mrf.mxu0
      %762 = vmatprep.mubr.bf16.mxu0 %v464
      %763 = vmatmul.mubr.bf16.gmra.mxu0 %v463
      %v764 = vpop.f32.mrf.mxu0
      %v765 = vadd.f32 %v283, %v764
      %v766 = vpop.f32.mrf.mxu0
      %v767 = vpop.f32.mrf.mxu0
      %v768 = vadd.f32 %v283, %v767
      %v769 = vpop.f32.mrf.mxu0
      %770 = vmatprep.mubr.bf16.mxu0 %v467
      %771 = vmatmul.mubr.bf16.gmra.mxu0 %v466
      %v772 = vpop.f32.mrf.mxu0
      %v773 = vadd.f32 %v283, %v772
      %v774 = vpop.f32.mrf.mxu0
      %v775 = vpop.f32.mrf.mxu0
      %v776 = vadd.f32 %v283, %v775
      %v777 = vpop.f32.mrf.mxu0
      %778 = vmatprep.mubr.bf16.mxu0 %v470
      %779 = vmatmul.mubr.bf16.gmra.mxu0 %v469
      %v780 = vpop.f32.mrf.mxu0
      %v781 = vadd.f32 %v283, %v780
      %v782 = vpop.f32.mrf.mxu0
      %v783 = vpop.f32.mrf.mxu0
      %v784 = vadd.f32 %v283, %v783
      %v785 = vpop.f32.mrf.mxu0
      %786 = vmatprep.mubr.bf16.mxu0 %v473
      %787 = vmatmul.mubr.bf16.gmra.mxu0 %v472
      %v788 = vpop.f32.mrf.mxu0
      %v789 = vadd.f32 %v283, %v788
      %v790 = vpop.f32.mrf.mxu0
      %v791 = vpop.f32.mrf.mxu0
      %v792 = vadd.f32 %v283, %v791
      %v793 = vpop.f32.mrf.mxu0
      %794 = vmatprep.mubr.bf16.mxu0 %v476
      %795 = vmatmul.mubr.bf16.gmra.mxu0 %v475
      %v796 = vpop.f32.mrf.mxu0
      %v797 = vadd.f32 %v283, %v796
      %v798 = vpop.f32.mrf.mxu0
      %v799 = vpop.f32.mrf.mxu0
      %v800 = vadd.f32 %v283, %v799
      %v801 = vpop.f32.mrf.mxu0
      %802 = vmatprep.mubr.bf16.mxu0 %v479
      %803 = vmatmul.mubr.bf16.gmra.mxu0 %v478
      %v804 = vpop.f32.mrf.mxu0
      %v805 = vadd.f32 %v283, %v804
      %v806 = vpop.f32.mrf.mxu0
      %v807 = vpop.f32.mrf.mxu0
      %v808 = vadd.f32 %v283, %v807
      %v809 = vpop.f32.mrf.mxu0
      %810 = vmatprep.mubr.bf16.mxu0 %v482
      %811 = vmatmul.mubr.bf16.gmra.mxu0 %v481
      %v812 = vpop.f32.mrf.mxu0
      %v813 = vadd.f32 %v283, %v812
      %v814 = vpop.f32.mrf.mxu0
      %v815 = vpop.f32.mrf.mxu0
      %v816 = vadd.f32 %v283, %v815
      %v817 = vpop.f32.mrf.mxu0
      %818 = vmatprep.mubr.bf16.mxu0 %v485
      %819 = vmatmul.mubr.bf16.gmra.mxu0 %v484
      %v820 = vpop.f32.mrf.mxu0
      %v821 = vadd.f32 %v283, %v820
      %v822 = vpop.f32.mrf.mxu0
      %v823 = vpop.f32.mrf.mxu0
      %v824 = vadd.f32 %v283, %v823
      %v825 = vpop.f32.mrf.mxu0
      %826 = vmatprep.mubr.bf16.mxu0 %v488
      %827 = vmatmul.mubr.bf16.gmra.mxu0 %v487
      %v828 = vpop.f32.mrf.mxu0
      %v829 = vadd.f32 %v283, %v828
      %v830 = vpop.f32.mrf.mxu0
      %v831 = vpop.f32.mrf.mxu0
      %v832 = vadd.f32 %v283, %v831
      %v833 = vpop.f32.mrf.mxu0
      %834 = vmatprep.mubr.bf16.mxu0 %v491
      %835 = vmatmul.mubr.bf16.gmra.mxu0 %v490
      %v836 = vpop.f32.mrf.mxu0
      %v837 = vadd.f32 %v283, %v836
      %v838 = vpop.f32.mrf.mxu0
      %v839 = vpop.f32.mrf.mxu0
      %v840 = vadd.f32 %v283, %v839
      %v841 = vpop.f32.mrf.mxu0
      %842 = vdwg.mxu0
      %843 = vmatprep.subr.bf16.mxu0 0
      %844 = vmatpush1.bf16.msra.mxu0 0
      %845 = vmatprep.subr.bf16.mxu0 0
      %846 = vmatpush1.bf16.msra.mxu0 0
      %847 = vmatprep.subr.bf16.mxu0 0
      %848 = vmatpush1.bf16.msra.mxu0 0
      %849 = vmatprep.subr.bf16.mxu0 0
      %850 = vmatpush1.bf16.msra.mxu0 0
      %851 = vmatprep.subr.bf16.mxu0 0
      %852 = vmatpush1.bf16.msra.mxu0 0
      %853 = vmatprep.subr.bf16.mxu0 0
      %854 = vmatpush1.bf16.msra.mxu0 0
      %855 = vmatprep.subr.bf16.mxu0 0
      %856 = vmatpush1.bf16.msra.mxu0 %v614
      %857 = vmatprep.subr.bf16.mxu0 0
      %858 = vmatpush1.bf16.msra.mxu0 %v613
      %859 = vmatprep.subr.bf16.mxu0 0
      %860 = vmatpush2.bf16.msra.mxu0 0
      %861 = vmatprep.subr.bf16.mxu0 0
      %862 = vmatpush2.bf16.msra.mxu0 0
      %863 = vmatprep.subr.bf16.mxu0 0
      %864 = vmatpush2.bf16.msra.mxu0 0
      %865 = vmatprep.subr.bf16.mxu0 0
      %866 = vmatpush2.bf16.msra.mxu0 0
      %867 = vmatprep.subr.bf16.mxu0 0
      %868 = vmatpush2.bf16.msra.mxu0 0
      %869 = vmatprep.subr.bf16.mxu0 0
      %870 = vmatpush2.bf16.msra.mxu0 0
      %871 = vmatprep.subr.bf16.mxu0 0
      %872 = vmatpush2.bf16.msra.mxu0 0
      %873 = vmatprep.subr.bf16.mxu0 0
      %874 = vmatpush2.bf16.msra.mxu0 0
      %875 = vmatprep.mubr.bf16.mxu0 0
      %876 = vmatmul.mubr.bf16.gmra.mxu0 %v635
      %v877 = vpop.f32.mrf.mxu0
      %v878 = vadd.f32 %v717, %v877
      %v879 = vpop.f32.mrf.mxu0
      %v880 = vpop.f32.mrf.mxu0
      %v881 = vadd.f32 %v720, %v880
      %v882 = vpop.f32.mrf.mxu0
      %883 = vmatprep.mubr.bf16.mxu0 0
      %884 = vmatmul.mubr.bf16.gmra.mxu0 %v638
      %v885 = vpop.f32.mrf.mxu0
      %v886 = vadd.f32 %v725, %v885
      %v887 = vpop.f32.mrf.mxu0
      %v888 = vpop.f32.mrf.mxu0
      %v889 = vadd.f32 %v728, %v888
      %v890 = vpop.f32.mrf.mxu0
      %891 = vmatprep.mubr.bf16.mxu0 0
      %892 = vmatmul.mubr.bf16.gmra.mxu0 %v641
      %v893 = vpop.f32.mrf.mxu0
      %v894 = vadd.f32 %v733, %v893
      %v895 = vpop.f32.mrf.mxu0
      %v896 = vpop.f32.mrf.mxu0
      %v897 = vadd.f32 %v736, %v896
      %v898 = vpop.f32.mrf.mxu0
      %899 = vmatprep.mubr.bf16.mxu0 0
      %900 = vmatmul.mubr.bf16.gmra.mxu0 %v644
      %v901 = vpop.f32.mrf.mxu0
      %v902 = vadd.f32 %v741, %v901
      %v903 = vpop.f32.mrf.mxu0
      %v904 = vpop.f32.mrf.mxu0
      %v905 = vadd.f32 %v744, %v904
      %v906 = vpop.f32.mrf.mxu0
      %907 = vmatprep.mubr.bf16.mxu0 0
      %908 = vmatmul.mubr.bf16.gmra.mxu0 %v647
      %v909 = vpop.f32.mrf.mxu0
      %v910 = vadd.f32 %v749, %v909
      %v911 = vpop.f32.mrf.mxu0
      %v912 = vpop.f32.mrf.mxu0
      %v913 = vadd.f32 %v752, %v912
      %v914 = vpop.f32.mrf.mxu0
      %915 = vmatprep.mubr.bf16.mxu0 0
      %916 = vmatmul.mubr.bf16.gmra.mxu0 %v650
      %v917 = vpop.f32.mrf.mxu0
      %v918 = vadd.f32 %v757, %v917
      %v919 = vpop.f32.mrf.mxu0
      %v920 = vpop.f32.mrf.mxu0
      %v921 = vadd.f32 %v760, %v920
      %v922 = vpop.f32.mrf.mxu0
      %923 = vmatprep.mubr.bf16.mxu0 0
      %924 = vmatmul.mubr.bf16.gmra.mxu0 %v653
      %v925 = vpop.f32.mrf.mxu0
      %v926 = vadd.f32 %v765, %v925
      %v927 = vpop.f32.mrf.mxu0
      %v928 = vpop.f32.mrf.mxu0
      %v929 = vadd.f32 %v768, %v928
      %v930 = vpop.f32.mrf.mxu0
      %931 = vmatprep.mubr.bf16.mxu0 0
      %932 = vmatmul.mubr.bf16.gmra.mxu0 %v656
      %v933 = vpop.f32.mrf.mxu0
      %v934 = vadd.f32 %v773, %v933
      %v935 = vpop.f32.mrf.mxu0
      %v936 = vpop.f32.mrf.mxu0
      %v937 = vadd.f32 %v776, %v936
      %v938 = vpop.f32.mrf.mxu0
      %939 = vmatprep.mubr.bf16.mxu0 0
      %940 = vmatmul.mubr.bf16.gmra.mxu0 %v659
      %v941 = vpop.f32.mrf.mxu0
      %v942 = vadd.f32 %v781, %v941
      %v943 = vpop.f32.mrf.mxu0
      %v944 = vpop.f32.mrf.mxu0
      %v945 = vadd.f32 %v784, %v944
      %v946 = vpop.f32.mrf.mxu0
      %947 = vmatprep.mubr.bf16.mxu0 0
      %948 = vmatmul.mubr.bf16.gmra.mxu0 %v662
      %v949 = vpop.f32.mrf.mxu0
      %v950 = vadd.f32 %v789, %v949
      %v951 = vpop.f32.mrf.mxu0
      %v952 = vpop.f32.mrf.mxu0
      %v953 = vadd.f32 %v792, %v952
      %v954 = vpop.f32.mrf.mxu0
      %955 = vmatprep.mubr.bf16.mxu0 0
      %956 = vmatmul.mubr.bf16.gmra.mxu0 %v665
      %v957 = vpop.f32.mrf.mxu0
      %v958 = vadd.f32 %v797, %v957
      %v959 = vpop.f32.mrf.mxu0
      %v960 = vpop.f32.mrf.mxu0
      %v961 = vadd.f32 %v800, %v960
      %v962 = vpop.f32.mrf.mxu0
      %963 = vmatprep.mubr.bf16.mxu0 0
      %964 = vmatmul.mubr.bf16.gmra.mxu0 %v668
      %v965 = vpop.f32.mrf.mxu0
      %v966 = vadd.f32 %v805, %v965
      %v967 = vpop.f32.mrf.mxu0
      %v968 = vpop.f32.mrf.mxu0
      %v969 = vadd.f32 %v808, %v968
      %v970 = vpop.f32.mrf.mxu0
      %971 = vmatprep.mubr.bf16.mxu0 0
      %972 = vmatmul.mubr.bf16.gmra.mxu0 %v671
      %v973 = vpop.f32.mrf.mxu0
      %v974 = vadd.f32 %v813, %v973
      %v975 = vpop.f32.mrf.mxu0
      %v976 = vpop.f32.mrf.mxu0
      %v977 = vadd.f32 %v816, %v976
      %v978 = vpop.f32.mrf.mxu0
      %979 = vmatprep.mubr.bf16.mxu0 0
      %980 = vmatmul.mubr.bf16.gmra.mxu0 %v674
      %v981 = vpop.f32.mrf.mxu0
      %v982 = vadd.f32 %v821, %v981
      %v983 = vpop.f32.mrf.mxu0
      %v984 = vpop.f32.mrf.mxu0
      %v985 = vadd.f32 %v824, %v984
      %v986 = vpop.f32.mrf.mxu0
      %987 = vmatprep.mubr.bf16.mxu0 0
      %988 = vmatmul.mubr.bf16.gmra.mxu0 %v677
      %v989 = vpop.f32.mrf.mxu0
      %v990 = vadd.f32 %v829, %v989
      %v991 = vpop.f32.mrf.mxu0
      %v992 = vpop.f32.mrf.mxu0
      %v993 = vadd.f32 %v832, %v992
      %v994 = vpop.f32.mrf.mxu0
      %995 = vmatprep.mubr.bf16.mxu0 0
      %996 = vmatmul.mubr.bf16.gmra.mxu0 %v680
      %v997 = vpop.f32.mrf.mxu0
      %v998 = vadd.f32 %v837, %v997
      %v999 = vpop.f32.mrf.mxu0
      %v1000 = vpop.f32.mrf.mxu0
      %v1001 = vadd.f32 %v840, %v1000
      %v1002 = vpop.f32.mrf.mxu0
      %1003 = vdwg.mxu0
      %v1004 = vxor.u32 %v878, 2147483648
      %v1005 = vxor.u32 %v881, 2147483648
      %v1006 = vxor.u32 %v886, 2147483648
      %v1007 = vxor.u32 %v889, 2147483648
      %v1008 = vxor.u32 %v894, 2147483648
      %v1009 = vxor.u32 %v897, 2147483648
      %v1010 = vxor.u32 %v902, 2147483648
      %v1011 = vxor.u32 %v905, 2147483648
      %v1012 = vxor.u32 %v910, 2147483648
      %v1013 = vxor.u32 %v913, 2147483648
      %v1014 = vxor.u32 %v918, 2147483648
      %v1015 = vxor.u32 %v921, 2147483648
      %v1016 = vxor.u32 %v926, 2147483648
      %v1017 = vxor.u32 %v929, 2147483648
      %v1018 = vxor.u32 %v934, 2147483648
      %v1019 = vxor.u32 %v937, 2147483648
      %v1020 = vxor.u32 %v942, 2147483648
      %v1021 = vxor.u32 %v945, 2147483648
      %v1022 = vxor.u32 %v950, 2147483648
      %v1023 = vxor.u32 %v953, 2147483648
      %v1024 = vxor.u32 %v958, 2147483648
      %v1025 = vxor.u32 %v961, 2147483648
      %v1026 = vxor.u32 %v966, 2147483648
      %v1027 = vxor.u32 %v969, 2147483648
      %v1028 = vxor.u32 %v974, 2147483648
      %v1029 = vxor.u32 %v977, 2147483648
      %v1030 = vxor.u32 %v982, 2147483648
      %v1031 = vxor.u32 %v985, 2147483648
      %v1032 = vxor.u32 %v990, 2147483648
      %v1033 = vxor.u32 %v993, 2147483648
      %v1034 = vxor.u32 %v998, 2147483648
      %v1035 = vxor.u32 %v1001, 2147483648
      %v1036 = vmul.f32 %v1004, 1.442695
      %v1037 = vpow.pop %v1036
      %v1038 = vmul.f32 %v1005, 1.442695
      %v1039 = vpow.pop %v1038
      %v1040 = vmul.f32 %v1006, 1.442695
      %v1041 = vpow.pop %v1040
      %v1042 = vmul.f32 %v1007, 1.442695
      %v1043 = vpow.pop %v1042
      %v1044 = vmul.f32 %v1008, 1.442695
      %v1045 = vpow.pop %v1044
      %v1046 = vmul.f32 %v1009, 1.442695
      %v1047 = vpow.pop %v1046
      %v1048 = vmul.f32 %v1010, 1.442695
      %v1049 = vpow.pop %v1048
      %v1050 = vmul.f32 %v1011, 1.442695
      %v1051 = vpow.pop %v1050
      %v1052 = vmul.f32 %v1012, 1.442695
      %v1053 = vpow.pop %v1052
      %v1054 = vmul.f32 %v1013, 1.442695
      %v1055 = vpow.pop %v1054
      %v1056 = vmul.f32 %v1014, 1.442695
      %v1057 = vpow.pop %v1056
      %v1058 = vmul.f32 %v1015, 1.442695
      %v1059 = vpow.pop %v1058
      %v1060 = vmul.f32 %v1016, 1.442695
      %v1061 = vpow.pop %v1060
      %v1062 = vmul.f32 %v1017, 1.442695
      %v1063 = vpow.pop %v1062
      %v1064 = vmul.f32 %v1018, 1.442695
      %v1065 = vpow.pop %v1064
      %v1066 = vmul.f32 %v1019, 1.442695
      %v1067 = vpow.pop %v1066
      %v1068 = vmul.f32 %v1020, 1.442695
      %v1069 = vpow.pop %v1068
      %v1070 = vmul.f32 %v1021, 1.442695
      %v1071 = vpow.pop %v1070
      %v1072 = vmul.f32 %v1022, 1.442695
      %v1073 = vpow.pop %v1072
      %v1074 = vmul.f32 %v1023, 1.442695
      %v1075 = vpow.pop %v1074
      %v1076 = vmul.f32 %v1024, 1.442695
      %v1077 = vpow.pop %v1076
      %v1078 = vmul.f32 %v1025, 1.442695
      %v1079 = vpow.pop %v1078
      %v1080 = vmul.f32 %v1026, 1.442695
      %v1081 = vpow.pop %v1080
      %v1082 = vmul.f32 %v1027, 1.442695
      %v1083 = vpow.pop %v1082
      %v1084 = vmul.f32 %v1028, 1.442695
      %v1085 = vpow.pop %v1084
      %v1086 = vmul.f32 %v1029, 1.442695
      %v1087 = vpow.pop %v1086
      %v1088 = vmul.f32 %v1030, 1.442695
      %v1089 = vpow.pop %v1088
      %v1090 = vmul.f32 %v1031, 1.442695
      %v1091 = vpow.pop %v1090
      %v1092 = vmul.f32 %v1032, 1.442695
      %v1093 = vpow.pop %v1092
      %v1094 = vmul.f32 %v1033, 1.442695
      %v1095 = vpow.pop %v1094
      %v1096 = vmul.f32 %v1034, 1.442695
      %v1097 = vpow.pop %v1096
      %v1098 = vmul.f32 %v1035, 1.442695
      %v1099 = vpow.pop %v1098
      %v1100 = vadd.f32 %v1037, 1.0
      %v1101 = vadd.f32 %v1039, 1.0
      %v1102 = vadd.f32 %v1041, 1.0
      %v1103 = vadd.f32 %v1043, 1.0
      %v1104 = vadd.f32 %v1045, 1.0
      %v1105 = vadd.f32 %v1047, 1.0
      %v1106 = vadd.f32 %v1049, 1.0
      %v1107 = vadd.f32 %v1051, 1.0
      %v1108 = vadd.f32 %v1053, 1.0
      %v1109 = vadd.f32 %v1055, 1.0
      %v1110 = vadd.f32 %v1057, 1.0
      %v1111 = vadd.f32 %v1059, 1.0
      %v1112 = vadd.f32 %v1061, 1.0
      %v1113 = vadd.f32 %v1063, 1.0
      %v1114 = vadd.f32 %v1065, 1.0
      %v1115 = vadd.f32 %v1067, 1.0
      %v1116 = vadd.f32 %v1069, 1.0
      %v1117 = vadd.f32 %v1071, 1.0
      %v1118 = vadd.f32 %v1073, 1.0
      %v1119 = vadd.f32 %v1075, 1.0
      %v1120 = vadd.f32 %v1077, 1.0
      %v1121 = vadd.f32 %v1079, 1.0
      %v1122 = vadd.f32 %v1081, 1.0
      %v1123 = vadd.f32 %v1083, 1.0
      %v1124 = vadd.f32 %v1085, 1.0
      %v1125 = vadd.f32 %v1087, 1.0
      %v1126 = vadd.f32 %v1089, 1.0
      %v1127 = vadd.f32 %v1091, 1.0
      %v1128 = vadd.f32 %v1093, 1.0
      %v1129 = vadd.f32 %v1095, 1.0
      %v1130 = vadd.f32 %v1097, 1.0
      %v1131 = vadd.f32 %v1099, 1.0
      %v1132 = vrcp.pop %v1100
      %v1133 = vmul.f32 1.0, %v1132
      %v1134 = vrcp.pop %v1101
      %v1135 = vmul.f32 1.0, %v1134
      %v1136 = vrcp.pop %v1102
      %v1137 = vmul.f32 1.0, %v1136
      %v1138 = vrcp.pop %v1103
      %v1139 = vmul.f32 1.0, %v1138
      %v1140 = vrcp.pop %v1104
      %v1141 = vmul.f32 1.0, %v1140
      %v1142 = vrcp.pop %v1105
      %v1143 = vmul.f32 1.0, %v1142
      %v1144 = vrcp.pop %v1106
      %v1145 = vmul.f32 1.0, %v1144
      %v1146 = vrcp.pop %v1107
      %v1147 = vmul.f32 1.0, %v1146
      %v1148 = vrcp.pop %v1108
      %v1149 = vmul.f32 1.0, %v1148
      %v1150 = vrcp.pop %v1109
      %v1151 = vmul.f32 1.0, %v1150
      %v1152 = vrcp.pop %v1110
      %v1153 = vmul.f32 1.0, %v1152
      %v1154 = vrcp.pop %v1111
      %v1155 = vmul.f32 1.0, %v1154
      %v1156 = vrcp.pop %v1112
      %v1157 = vmul.f32 1.0, %v1156
      %v1158 = vrcp.pop %v1113
      %v1159 = vmul.f32 1.0, %v1158
      %v1160 = vrcp.pop %v1114
      %v1161 = vmul.f32 1.0, %v1160
      %v1162 = vrcp.pop %v1115
      %v1163 = vmul.f32 1.0, %v1162
      %v1164 = vrcp.pop %v1116
      %v1165 = vmul.f32 1.0, %v1164
      %v1166 = vrcp.pop %v1117
      %v1167 = vmul.f32 1.0, %v1166
      %v1168 = vrcp.pop %v1118
      %v1169 = vmul.f32 1.0, %v1168
      %v1170 = vrcp.pop %v1119
      %v1171 = vmul.f32 1.0, %v1170
      %v1172 = vrcp.pop %v1120
      %v1173 = vmul.f32 1.0, %v1172
      %v1174 = vrcp.pop %v1121
      %v1175 = vmul.f32 1.0, %v1174
      %v1176 = vrcp.pop %v1122
      %v1177 = vmul.f32 1.0, %v1176
      %v1178 = vrcp.pop %v1123
      %v1179 = vmul.f32 1.0, %v1178
      %v1180 = vrcp.pop %v1124
      %v1181 = vmul.f32 1.0, %v1180
      %v1182 = vrcp.pop %v1125
      %v1183 = vmul.f32 1.0, %v1182
      %v1184 = vrcp.pop %v1126
      %v1185 = vmul.f32 1.0, %v1184
      %v1186 = vrcp.pop %v1127
      %v1187 = vmul.f32 1.0, %v1186
      %v1188 = vrcp.pop %v1128
      %v1189 = vmul.f32 1.0, %v1188
      %v1190 = vrcp.pop %v1129
      %v1191 = vmul.f32 1.0, %v1190
      %v1192 = vrcp.pop %v1130
      %v1193 = vmul.f32 1.0, %v1192
      %v1194 = vrcp.pop %v1131
      %v1195 = vmul.f32 1.0, %v1194
      %1196 = vst [vmem:[%s175] sm:$0xff] %v1133
      %1197 = vst [vmem:[%s175 + $0x8] sm:$0xff] %v1135
      %1198 = vst [vmem:[%s175 + $0x10] sm:$0xff] %v1137
      %1199 = vst [vmem:[%s175 + $0x18] sm:$0xff] %v1139
      %1200 = vst [vmem:[%s175 + $0x20] sm:$0xff] %v1141
      %1201 = vst [vmem:[%s175 + $0x28] sm:$0xff] %v1143
      %1202 = vst [vmem:[%s175 + $0x30] sm:$0xff] %v1145
      %1203 = vst [vmem:[%s175 + $0x38] sm:$0xff] %v1147
      %1204 = vst [vmem:[%s175 + $0x40] sm:$0xff] %v1149
      %1205 = vst [vmem:[%s175 + $0x48] sm:$0xff] %v1151
      %1206 = vst [vmem:[%s175 + $0x50] sm:$0xff] %v1153
      %1207 = vst [vmem:[%s175 + $0x58] sm:$0xff] %v1155
      %1208 = vst [vmem:[%s175 + $0x60] sm:$0xff] %v1157
      %1209 = vst [vmem:[%s175 + $0x68] sm:$0xff] %v1159
      %1210 = vst [vmem:[%s175 + $0x70] sm:$0xff] %v1161
      %1211 = vst [vmem:[%s175 + $0x78] sm:$0xff] %v1163
      %1212 = vst [vmem:[%s175 + $0x80] sm:$0xff] %v1165
      %1213 = vst [vmem:[%s175 + $0x88] sm:$0xff] %v1167
      %1214 = vst [vmem:[%s175 + $0x90] sm:$0xff] %v1169
      %1215 = vst [vmem:[%s175 + $0x98] sm:$0xff] %v1171
      %1216 = vst [vmem:[%s175 + $0xa0] sm:$0xff] %v1173
      %1217 = vst [vmem:[%s175 + $0xa8] sm:$0xff] %v1175
      %1218 = vst [vmem:[%s175 + $0xb0] sm:$0xff] %v1177
      %1219 = vst [vmem:[%s175 + $0xb8] sm:$0xff] %v1179
      %1220 = vst [vmem:[%s175 + $0xc0] sm:$0xff] %v1181
      %1221 = vst [vmem:[%s175 + $0xc8] sm:$0xff] %v1183
      %1222 = vst [vmem:[%s175 + $0xd0] sm:$0xff] %v1185
      %1223 = vst [vmem:[%s175 + $0xd8] sm:$0xff] %v1187
      %1224 = vst [vmem:[%s175 + $0xe0] sm:$0xff] %v1189
      %1225 = vst [vmem:[%s175 + $0xe8] sm:$0xff] %v1191
      %1226 = vst [vmem:[%s175 + $0xf0] sm:$0xff] %v1193
      %1227 = vst [vmem:[%s175 + $0xf8] sm:$0xff] %v1195
      %s1228 = smul.u32 32, %s14
      %p1229 = scmp.lt.s32.totalorder %s1228, 63
      %s1230 = scalar_select %p1229, %s1228, 63
      %s1231 = smul.addr %s1230, 8
      %s1232 = scalar_lea.vmem %s3, %s1231
      // Predicated region
      $region33: #{beta_vae_forward.17} parent=31 // pred_check
        %p1233 = pneg %p100
      $region34: #{beta_vae_forward.17} parent=31 // pred_check_branch
        %1235 = sbr.rel (%p1233) target = $region36
      $region35: #{beta_vae_forward.17} parent=31 // pred_region
        %s1236 = smul.u32 32, %s14
      $region36: #{beta_vae_forward.17} parent=31 // pred_fallthru
        _
    $region32: #{beta_vae_forward.17} parent=5 // pred_fallthru
      _
    %p1237 = scmp.le.s32.totalorder 2, %s9
    // Predicated region
    $region37: #{beta_vae_forward.17} parent=5 // pred_check
      %p1238 = pneg %p1237
    $region38: #{beta_vae_forward.17} parent=5 // pred_check_branch
      %1240 = sbr.rel (%p1238) target = $region40
    $region39: #{beta_vae_forward.17} parent=5 // pred_region
      %s1241 = ssub.s32 %s9, 2
      // Predicated region
      $region41: #{beta_vae_forward.17} parent=39 // pred_check
        %p1242 = pneg %p106
      $region42: #{beta_vae_forward.17} parent=39 // pred_check_branch
        %1244 = sbr.rel (%p1242) target = $region44
      $region43: #{beta_vae_forward.17} parent=39 // pred_region
        %s1245 = smul.u32 32, %s15
        %p1246 = scmp.lt.s32.totalorder %s1245, 63
        %s1247 = scalar_select %p1246, %s1245, 63
        %s1248 = smul.addr %s1247, 8
        %s1249 = scalar_lea.vmem %s3, %s1248
      $region44: #{beta_vae_forward.17} parent=39 // pred_fallthru
        _
    $region40: #{beta_vae_forward.17} parent=5 // pred_fallthru
      _
  $region6: #{beta_vae_forward.17} parent=0 // loop_footer
    %s13 = sadd.s32 1, %s9
  $region7: #{beta_vae_forward.17} parent=0 // loop_footer_branch
    %8 = sbr.rel target = $region3
  $region8: #{beta_vae_forward.17} parent=0 // loop_exit
    _

</llo_original>
